<compile_context>
chip_gen: v7x
topology: tpu7x:2x2x1
jax: 0.10.0
libtpu: 0.0.40
codegen_flags: <defaults>
</compile_context>

<pallas_src>
import functools

import jax
import jax.numpy as jnp
from jax.experimental import pallas as pl
from jax.experimental.pallas import tpu as pltpu

F32 = jnp.float32
BF16 = jnp.bfloat16


def _round_up(a, b):
    return (a + b - 1) // b * b


# ---------------------------------------------------------------------------
# Conv1d (+ folded BN + ReLU) without im2col: K taps accumulated in-kernel
# ---------------------------------------------------------------------------
def _conv1d_kernel(x_ref, w_ref, b_ref, o_ref, *, ktaps, out_len, relu):
    acc = jnp.zeros((out_len, o_ref.shape[2]), jnp.float32)
    for kk in range(ktaps):                      # static, ktaps <= 7
        acc = acc + jnp.dot(x_ref[0, kk:kk + out_len, :], w_ref[kk],
                            preferred_element_type=jnp.float32)
    acc = acc + b_ref[...]
    if relu:
        acc = jnp.maximum(acc, 0.0)
    o_ref[0] = acc.astype(o_ref.dtype)


def bn_fold(bn, cout):
    """Return (scale, shift) so that y*scale + shift == BN(y) (eval mode)."""
    if bn is None:
        return jnp.ones((cout,), F32), jnp.zeros((cout,), F32)
    eps = 1e-5
    scale = bn["gamma"] * jax.lax.rsqrt(bn["var"] + eps)
    shift = bn["beta"] - bn["mean"] * scale
    return scale, shift


def conv_apply(x, w, conv_bias, scale, shift, relu):
    # x: (B, L, Cin) channels-last; w: PyTorch layout (Cout, Cin, K), same pad.
    B, L, Cin = x.shape
    Cout, _, Kt = w.shape
    pad = (Kt - 1) // 2
    Lp = L + 2 * pad
    xp = jnp.pad(x.astype(F32), ((0, 0), (pad, pad), (0, 0))).astype(BF16)

    cb = conv_bias if conv_bias is not None else jnp.zeros((Cout,), F32)
    bias_total = (cb * scale + shift).reshape(1, Cout)          # stays f32
    # (Kt, Cin, Cout) with BN scale folded into the weights, bf16 for the MXU.
    w3 = (jnp.transpose(w, (2, 1, 0)) * scale[None, None, :]).astype(BF16)

    if Cout % 256 == 0:
        tn = 256
    elif Cout % 128 == 0:
        tn = 128
    else:
        tn = Cout
    grid = (B, Cout // tn)

    return pl.pallas_call(
        functools.partial(_conv1d_kernel, ktaps=Kt, out_len=L, relu=relu),
        out_shape=jax.ShapeDtypeStruct((B, L, Cout), F32),
        grid=grid,
        in_specs=[
            pl.BlockSpec((1, Lp, Cin), lambda b, n: (b, 0, 0)),   # act read once
            pl.BlockSpec((Kt, Cin, tn), lambda b, n: (0, 0, n)),
            pl.BlockSpec((1, tn), lambda b, n: (0, n)),
        ],
        out_specs=pl.BlockSpec((1, L, tn), lambda b, n: (b, 0, n)),
        compiler_params=pltpu.CompilerParams(
            dimension_semantics=("parallel", "parallel")),
    )(xp, w3, bias_total)


# ---------------------------------------------------------------------------
# Fused GAT layer: projection + attention + graph-LayerNorm (+ optional ReLU)
# ---------------------------------------------------------------------------
def _gat_block_kernel(x_ref, w_ref, asrc_ref, adst_ref, bgat_ref, mask_ref,
                      gt_ref, lnw_ref, lnb_ref, o_ref, *, n_graphs, relu, eps):
    # ---- GATConv (heads=1) -------------------------------------------------
    xw = jnp.dot(x_ref[...], w_ref[...],
                 preferred_element_type=jnp.float32)            # (Np, C)
    a_dst = jnp.sum(xw * adst_ref[...], axis=-1, keepdims=True)  # (Np, 1)
    # a_src[j] = <xw[j], att_src>, computed without any transpose of xw.
    a_src = jax.lax.dot_general(
        asrc_ref[...], xw,
        dimension_numbers=(((1,), (1,)), ((), ())),
        preferred_element_type=jnp.float32)                     # (1, Np)
    s = a_dst + a_src
    s = jnp.where(s > 0, s, 0.2 * s)                            # LeakyReLU(0.2)
    s = s + mask_ref[...].astype(jnp.float32)                   # additive -1e30 mask
    s = s - jnp.max(s, axis=-1, keepdims=True)
    p = jnp.exp(s)                                              # masked -> exp underflows to 0
    attn = p * pl.reciprocal(jnp.sum(p, axis=-1, keepdims=True), approx=True)
    h = jnp.dot(attn, xw, preferred_element_type=jnp.float32) + bgat_ref[...]

    # ---- torch_geometric LayerNorm (mode='graph') --------------------------
    gt = gt_ref[...]                          # (Np, G) one-hot, zero for padded rows
    C = h.shape[1]
    mean_n = jnp.zeros_like(h[:, :1])
    for g in range(n_graphs):                 # small & static -> unrolled
        col = gt[:, g:g + 1]
        ng = jnp.maximum(jnp.sum(col), 1.0)
        mean_n = mean_n + col * (jnp.sum(h * col) / (ng * C))
    hc = h - mean_n
    istd_n = jnp.zeros_like(mean_n)
    for g in range(n_graphs):
        col = gt[:, g:g + 1]
        ng = jnp.maximum(jnp.sum(col), 1.0)
        var = jnp.sum(hc * hc * col) / (ng * C)
        istd_n = istd_n + col * jax.lax.rsqrt(var + eps)
    y = hc * istd_n * lnw_ref[...] + lnb_ref[...]
    if relu:
        y = jnp.maximum(y, 0.0)
    o_ref[...] = y.astype(o_ref.dtype)


def gat_block(x_pad, gp, lnp, mask_bias, gt_onehot, relu):
    # TODO(synk): whole (padded) graph is one VMEM block; very large graphs
    # would need a row-tiled two-pass variant for the per-graph LN statistics.
    n_pad, fin = x_pad.shape
    C = gp["w"].shape[1]
    Gn = gt_onehot.shape[1]
    return pl.pallas_call(
        functools.partial(_gat_block_kernel, n_graphs=Gn, relu=relu, eps=1e-5),
        out_shape=jax.ShapeDtypeStruct((n_pad, C), F32),
        grid=(1,),
        in_specs=[
            pl.BlockSpec((n_pad, fin), lambda i: (0, 0)),
            pl.BlockSpec((fin, C), lambda i: (0, 0)),
            pl.BlockSpec((1, C), lambda i: (0, 0)),
            pl.BlockSpec((1, C), lambda i: (0, 0)),
            pl.BlockSpec((1, C), lambda i: (0, 0)),
            pl.BlockSpec((n_pad, n_pad), lambda i: (0, 0)),     # bf16 mask
            pl.BlockSpec((n_pad, Gn), lambda i: (0, 0)),
            pl.BlockSpec((1, C), lambda i: (0, 0)),
            pl.BlockSpec((1, C), lambda i: (0, 0)),
        ],
        out_specs=pl.BlockSpec((n_pad, C), lambda i: (0, 0)),
        compiler_params=pltpu.CompilerParams(dimension_semantics=("arbitrary",)),
    )(x_pad, gp["w"], gp["att_src"], gp["att_dst"], gp["bias"],
      mask_bias, gt_onehot, lnp["w"], lnp["b"])


# ---------------------------------------------------------------------------
# Fused MLP head: lin0+ReLU -> lin1+ReLU -> lin+sigmoid, emits (z, out)
# ---------------------------------------------------------------------------
def _mlp_head_kernel(x_ref, w0_ref, b0_ref, w1_ref, b1_ref, w2_ref, b2_ref,
                     z_ref, o_ref):
    h = jnp.dot(x_ref[...], w0_ref[...],
                preferred_element_type=jnp.float32) + b0_ref[...]
    h = jnp.maximum(h, 0.0)
    z = jnp.dot(h, w1_ref[...],
                preferred_element_type=jnp.float32) + b1_ref[...]
    z = jnp.maximum(z, 0.0)
    o = jnp.dot(z, w2_ref[...],
                preferred_element_type=jnp.float32) + b2_ref[...]
    o = 1.0 / (1.0 + jnp.exp(-o))
    z_ref[...] = z.astype(z_ref.dtype)
    o_ref[...] = o.astype(o_ref.dtype)


def mlp_head(hv, params):
    Gb, Kin = hv.shape
    hid = params["lin1_w"].shape[0]
    od = params["lin_w"].shape[1]
    z, out = pl.pallas_call(
        _mlp_head_kernel,
        out_shape=(jax.ShapeDtypeStruct((Gb, hid), F32),
                   jax.ShapeDtypeStruct((Gb, od), F32)),
        grid=(1,),
        in_specs=[
            pl.BlockSpec((Gb, Kin), lambda i: (0, 0)),
            pl.BlockSpec((Kin, hid), lambda i: (0, 0)),
            pl.BlockSpec((1, hid), lambda i: (0, 0)),
            pl.BlockSpec((hid, hid), lambda i: (0, 0)),
            pl.BlockSpec((1, hid), lambda i: (0, 0)),
            pl.BlockSpec((hid, od), lambda i: (0, 0)),
            pl.BlockSpec((1, od), lambda i: (0, 0)),
        ],
        out_specs=(pl.BlockSpec((Gb, hid), lambda i: (0, 0)),
                   pl.BlockSpec((Gb, od), lambda i: (0, 0))),
        compiler_params=pltpu.CompilerParams(dimension_semantics=("arbitrary",)),
    )(hv, params["lin0_w"], params["lin0_b"].reshape(1, -1),
      params["lin1_w"], params["lin1_b"].reshape(1, -1),
      params["lin_w"], params["lin_b"].reshape(1, -1))
    return out, z


# ---------------------------------------------------------------------------
# Parameter construction (deterministic, in-script)
# ---------------------------------------------------------------------------
class KeyGen:
    def __init__(self, key):
        self._key = key

    def next(self):
        self._key, sub = jax.random.split(self._key)
        return sub


def normal(kg, shape, std):
    return std * jax.random.normal(kg.next(), shape, F32)


def make_bn(c):
    return dict(gamma=jnp.ones((c,), F32), beta=jnp.zeros((c,), F32),
                mean=jnp.zeros((c,), F32), var=jnp.ones((c,), F32))


def make_cnnblock(kg):
    return dict(
        w0=normal(kg, (256, 1024, 3), 0.02), b0=jnp.zeros((256,), F32), bn0=make_bn(256),
        w1=normal(kg, (64, 256, 3), 0.05), b1=jnp.zeros((64,), F32), bn1=make_bn(64),
    )


def make_multiscale(kg, cin=64, cout=16):
    def w(ci, co, k):
        return normal(kg, (co, ci, k), 0.05)
    return dict(
        c0_w=w(cin, cout, 1), c0_bn=make_bn(cout),
        c1a_w=w(cin, cout, 1),                                  # bn=False branch
        c1b_w=w(cout, cout, 3), c1b_bn=make_bn(cout),
        c2a_w=w(cin, cout, 1), c2a_bn=make_bn(cout),
        c2b_w=w(cout, cout, 5), c2b_bn=make_bn(cout),
        c2c_w=w(cout, cout, 5), c2c_bn=make_bn(cout),
        c3a_w=w(cin, cout, 1), c3a_bn=make_bn(cout),
        c3b_w=w(cout, cout, 7), c3b_bn=make_bn(cout),
        c3c_w=w(cout, cout, 7), c3c_bn=make_bn(cout),
        c3d_w=w(cout, cout, 7), c3d_bn=make_bn(cout),
    )


def make_gat(kg, fin, fout):
    return dict(w=normal(kg, (fin, fout), 0.1),
                att_src=normal(kg, (1, fout), 0.1),
                att_dst=normal(kg, (1, fout), 0.1),
                bias=jnp.zeros((1, fout), F32))


def make_params(kg, node_feature_dim, hidden, out_dim, k):
    return dict(
        cnn=dict(cnn_s2v=make_cnnblock(kg), cnn_lm=make_cnnblock(kg),
                 ms_s2v=make_multiscale(kg), ms_lm=make_multiscale(kg)),
        gat1=make_gat(kg, node_feature_dim, hidden),
        gat2=make_gat(kg, hidden, hidden),
        gat3=make_gat(kg, hidden, hidden),
        ln1=dict(w=jnp.ones((1, hidden), F32), b=jnp.zeros((1, hidden), F32)),
        ln2=dict(w=jnp.ones((1, hidden), F32), b=jnp.zeros((1, hidden), F32)),
        ln3=dict(w=jnp.ones((1, hidden), F32), b=jnp.zeros((1, hidden), F32)),
        pool_w=normal(kg, (hidden,), 0.1),
        lin0_w=normal(kg, (k * hidden, hidden), 0.1), lin0_b=jnp.zeros((hidden,), F32),
        lin1_w=normal(kg, (hidden, hidden), 0.1), lin1_b=jnp.zeros((hidden,), F32),
        lin_w=normal(kg, (hidden, out_dim), 0.1), lin_b=jnp.zeros((out_dim,), F32),
    )


# ---------------------------------------------------------------------------
# Forward passes (CNNblock / multiscale / Net1 / GATModelMll)
# ---------------------------------------------------------------------------
def cnnblock_forward(p, x):
    x = conv_apply(x, p["w0"], p["b0"], *bn_fold(p["bn0"], 256), relu=True)
    x = conv_apply(x, p["w1"], p["b1"], *bn_fold(p["bn1"], 64), relu=True)
    return x


def multiscale_forward(p, x):
    co = p["c0_w"].shape[0]
    # Fuse the four 1x1 entry convs (same input) into one lane-denser matmul.
    w_entry = jnp.concatenate([p["c0_w"], p["c1a_w"], p["c2a_w"], p["c3a_w"]], axis=0)
    scales, shifts = zip(bn_fold(p["c0_bn"], co), bn_fold(None, co),
                         bn_fold(p["c2a_bn"], co), bn_fold(p["c3a_bn"], co))
    y = conv_apply(x, w_entry, None, jnp.concatenate(scales),
                   jnp.concatenate(shifts), relu=True)              # (B, L, 4*co)
    x0, y1, y2, y3 = (y[..., i * co:(i + 1) * co] for i in range(4))

    x1 = conv_apply(y1, p["c1b_w"], None, *bn_fold(p["c1b_bn"], co), relu=True)
    t = conv_apply(y2, p["c2b_w"], None, *bn_fold(p["c2b_bn"], co), relu=True)
    x2 = conv_apply(t, p["c2c_w"], None, *bn_fold(p["c2c_bn"], co), relu=True)
    t = conv_apply(y3, p["c3b_w"], None, *bn_fold(p["c3b_bn"], co), relu=True)
    t = conv_apply(t, p["c3c_w"], None, *bn_fold(p["c3c_bn"], co), relu=True)
    x3 = conv_apply(t, p["c3d_w"], None, *bn_fold(p["c3d_bn"], co), relu=True)
    return jnp.concatenate([x0, x1, x2, x3], axis=-1) + x


def net1_forward(p, s2v, lm):
    x0 = cnnblock_forward(p["cnn_s2v"], s2v)
    x1 = cnnblock_forward(p["cnn_lm"], lm)
    x0 = multiscale_forward(p["ms_s2v"], x0)
    x1 = multiscale_forward(p["ms_lm"], x1)
    return jnp.concatenate([x0, x1], axis=-1)          # (B, L, 128)


def gat_model_mll_forward(params, x, edge_index, s2v, lm, node_num, batch, *, k, hidden):
    # --- CNN embedding -----------------------------------------------------
    e = net1_forward(params["cnn"], s2v, lm)                       # (B, L, 128)
    f_list = [e[i, : int(n), :] for i, n in enumerate(node_num)]
    emb = jnp.concatenate(f_list, axis=0)                          # (N, 128)
    x = jnp.concatenate([x.astype(F32), emb], axis=1)              # (N, node_feature_dim)

    N = x.shape[0]
    G = len(node_num)
    n_pad = _round_up(N, 8)

    # Dense adjacency -> additive attention bias (bf16): 0 on edges, -1e30 off.
    src, dst = edge_index[0], edge_index[1]
    adj = jnp.zeros((n_pad, n_pad), F32).at[dst, src].set(1.0)
    eye = jnp.eye(n_pad, dtype=F32)
    adj = adj * (1.0 - eye) + eye                                  # remove+add self loops
    mask_bias = jnp.where(adj > 0, 0.0, -1e30).astype(BF16)

    # Padded rows get an all-zero one-hot -> excluded from per-graph LN stats.
    batch_pad = jnp.pad(batch, (0, n_pad - N), constant_values=-1)
    gt_onehot = (batch_pad[:, None] == jnp.arange(G)[None, :]).astype(F32)  # (n_pad, G)

    # --- 3 fused GAT blocks (projection + attention + graph-LN + ReLU) ------
    h = jnp.pad(x, ((0, n_pad - N), (0, 0)))
    h = gat_block(h, params["gat1"], params["ln1"], mask_bias, gt_onehot, relu=True)
    h = gat_block(h, params["gat2"], params["ln2"], mask_bias, gt_onehot, relu=True)
    h = gat_block(h, params["gat3"], params["ln3"], mask_bias, gt_onehot, relu=False)
    h = h[:N]                                   # drop padded rows once, at the end

    # --- TopKPooling: score = tanh(x·w / ||w||), keep top-k per graph -------
    # TODO(synk): per-graph top-k (argsort) stays in plain JAX; no clean Pallas sort.
    pw = params["pool_w"]
    score = jnp.tanh(h @ pw / jnp.linalg.norm(pw))
    sel, off = [], 0
    for n in [int(v) for v in node_num]:
        idx = jnp.argsort(-score[off:off + n])[:k] + off
        sel.append(idx)
        off += n
    perm = jnp.concatenate(sel)
    hp = h[perm] * score[perm][:, None]
    hv = hp.reshape(G, k * hidden)              # x.view(batch[-1]+1, -1)

    # --- fused MLP head: lin0+ReLU -> lin1+ReLU -> lin+sigmoid --------------
    out, z = mlp_head(hv, params)
    return out, z


# ---------------------------------------------------------------------------
# Main
# ---------------------------------------------------------------------------
if __name__ == "__main__":
    hidden = 16
    out_dim = 4
    k = 4                      # TopKPooling ratio / lin0 input factor
    G = 2                      # number of graphs
    n_per_graph = 8
    L = 8                      # sequence length for CNN embeddings (>= max node_num)
    x_raw_dim = 32
    node_feature_dim = x_raw_dim + 128   # GATConv1 input dim (use_lm != 'both')

    kg = KeyGen(jax.random.PRNGKey(0))
    params = make_params(kg, node_feature_dim, hidden, out_dim, k)

    k1, k2, k3 = jax.random.split(jax.random.PRNGKey(0), 3)
    s2v = jax.random.normal(k1, (G, L, 1024), F32)     # torch layout would be (G, 1024, L)
    lm = jax.random.normal(k2, (G, L, 1024), F32)
    x = jax.random.normal(k3, (G * n_per_graph, x_raw_dim), F32)
    node_num = tuple([n_per_graph] * G)
    batch = jnp.repeat(jnp.arange(G, dtype=jnp.int32), n_per_graph)

    # bidirectional ring within each graph
    edges = []
    for g in range(G):
        o = g * n_per_graph
        for i in range(n_per_graph):
            j = (i + 1) % n_per_graph
            edges.append((o + i, o + j))
            edges.append((o + j, o + i))
    edge_index = jnp.array(edges, dtype=jnp.int32).T   # (2, E)

    fwd = jax.jit(gat_model_mll_forward, static_argnames=("node_num", "k", "hidden"))
    out, z = fwd(params, x, edge_index, s2v, lm,
                 node_num=node_num, batch=batch, k=k, hidden=hidden)
    jax.block_until_ready((out, z))
    assert out.shape == (G, out_dim), out.shape
    assert z.shape == (G, hidden), z.shape
    assert bool(jnp.all(jnp.isfinite(out))) and bool(jnp.all(jnp.isfinite(z)))
    assert bool(jnp.all((out >= 0.0) & (out <= 1.0)))   # sigmoid output range
    print("KERNEL_OK")
</pallas_src>

<mosaic_0001>
module attributes {stable_mosaic.version = 11 : i64} {
  func.func @_conv1d_kernel(%arg0: i32, %arg1: i32, %arg2: memref<1x10x1024xbf16, #tpu.memory_space<vmem>>, %arg3: memref<3x1024x256xbf16, #tpu.memory_space<vmem>>, %arg4: memref<1x256xf32, #tpu.memory_space<vmem>>, %arg5: memref<1x8x256xf32, #tpu.memory_space<vmem>>) attributes {dimension_semantics = [#tpu.dimension_semantics<parallel>, #tpu.dimension_semantics<parallel>], iteration_bounds = array<i64: 2, 1>, scalar_prefetch = 0 : i64, scratch_operands = 0 : i64, tpu.core_type = #tpu.core_type<tc>, window_params = [{transform_indices = @transform_0, window_bounds = array<i64: 1, 10, 1024>}, {transform_indices = @transform_1, window_bounds = array<i64: 3, 1024, 256>}, {transform_indices = @transform_2, window_bounds = array<i64: 1, 256>}, {transform_indices = @transform_3, window_bounds = array<i64: 1, 8, 256>}]} {
    %cst = arith.constant 0.000000e+00 : f32
    %0 = vector.broadcast %cst : f32 to vector<8x256xf32>
    %c0 = arith.constant 0 : index
    %c0_0 = arith.constant 0 : index
    %c0_1 = arith.constant 0 : index
    %1 = vector.load %arg2[%c0, %c0_0, %c0_1] : memref<1x10x1024xbf16, #tpu.memory_space<vmem>>, vector<1x8x1024xbf16>
    %2 = vector.shape_cast %1 : vector<1x8x1024xbf16> to vector<8x1024xbf16>
    %c0_2 = arith.constant 0 : index
    %c0_3 = arith.constant 0 : index
    %c0_4 = arith.constant 0 : index
    %3 = vector.load %arg3[%c0_2, %c0_3, %c0_4] : memref<3x1024x256xbf16, #tpu.memory_space<vmem>>, vector<1x1024x256xbf16>
    %4 = vector.shape_cast %3 : vector<1x1024x256xbf16> to vector<1024x256xbf16>
    %cst_5 = arith.constant dense<0.000000e+00> : vector<8x256xf32>
    %5 = tpu.matmul %2, %4, %cst_5 {dimension_numbers = #tpu.dot_dimension_numbers<[1], [0], [0], [1], [0, 0, 1, 1], [], []>} : vector<8x1024xbf16>, vector<1024x256xbf16>, vector<8x256xf32> -> vector<8x256xf32>
    %6 = arith.addf %0, %5 : vector<8x256xf32>
    %c0_6 = arith.constant 0 : index
    %c1 = arith.constant 1 : index
    %c0_7 = arith.constant 0 : index
    %7 = vector.load %arg2[%c0_6, %c1, %c0_7] : memref<1x10x1024xbf16, #tpu.memory_space<vmem>>, vector<1x8x1024xbf16>
    %8 = vector.shape_cast %7 : vector<1x8x1024xbf16> to vector<8x1024xbf16>
    %c1_8 = arith.constant 1 : index
    %c0_9 = arith.constant 0 : index
    %c0_10 = arith.constant 0 : index
    %9 = vector.load %arg3[%c1_8, %c0_9, %c0_10] : memref<3x1024x256xbf16, #tpu.memory_space<vmem>>, vector<1x1024x256xbf16>
    %10 = vector.shape_cast %9 : vector<1x1024x256xbf16> to vector<1024x256xbf16>
    %cst_11 = arith.constant dense<0.000000e+00> : vector<8x256xf32>
    %11 = tpu.matmul %8, %10, %cst_11 {dimension_numbers = #tpu.dot_dimension_numbers<[1], [0], [0], [1], [0, 0, 1, 1], [], []>} : vector<8x1024xbf16>, vector<1024x256xbf16>, vector<8x256xf32> -> vector<8x256xf32>
    %12 = arith.addf %6, %11 : vector<8x256xf32>
    %c0_12 = arith.constant 0 : index
    %c2 = arith.constant 2 : index
    %c0_13 = arith.constant 0 : index
    %13 = vector.load %arg2[%c0_12, %c2, %c0_13] : memref<1x10x1024xbf16, #tpu.memory_space<vmem>>, vector<1x8x1024xbf16>
    %14 = vector.shape_cast %13 : vector<1x8x1024xbf16> to vector<8x1024xbf16>
    %c2_14 = arith.constant 2 : index
    %c0_15 = arith.constant 0 : index
    %c0_16 = arith.constant 0 : index
    %15 = vector.load %arg3[%c2_14, %c0_15, %c0_16] : memref<3x1024x256xbf16, #tpu.memory_space<vmem>>, vector<1x1024x256xbf16>
    %16 = vector.shape_cast %15 : vector<1x1024x256xbf16> to vector<1024x256xbf16>
    %cst_17 = arith.constant dense<0.000000e+00> : vector<8x256xf32>
    %17 = tpu.matmul %14, %16, %cst_17 {dimension_numbers = #tpu.dot_dimension_numbers<[1], [0], [0], [1], [0, 0, 1, 1], [], []>} : vector<8x1024xbf16>, vector<1024x256xbf16>, vector<8x256xf32> -> vector<8x256xf32>
    %18 = arith.addf %12, %17 : vector<8x256xf32>
    %c0_18 = arith.constant 0 : index
    %c0_19 = arith.constant 0 : index
    %19 = vector.load %arg4[%c0_18, %c0_19] : memref<1x256xf32, #tpu.memory_space<vmem>>, vector<1x256xf32>
    %20 = vector.broadcast %19 : vector<1x256xf32> to vector<8x256xf32>
    %21 = arith.addf %18, %20 : vector<8x256xf32>
    %cst_20 = arith.constant 0.000000e+00 : f32
    %22 = vector.broadcast %cst_20 : f32 to vector<8x256xf32>
    %23 = arith.maximumf %21, %22 : vector<8x256xf32>
    %c0_21 = arith.constant 0 : index
    %c0_22 = arith.constant 0 : index
    %c0_23 = arith.constant 0 : index
    %24 = vector.load %arg5[%c0_21, %c0_22, %c0_23] : memref<1x8x256xf32, #tpu.memory_space<vmem>>, vector<1x8x256xf32>
    %25 = vector.shape_cast %24 : vector<1x8x256xf32> to vector<8x256xf32>
    %26 = vector.shape_cast %23 : vector<8x256xf32> to vector<1x8x256xf32>
    tpu.vector_store %arg5[%c0_21, %c0_22, %c0_23], %26 {strides = array<i32>} : memref<1x8x256xf32, #tpu.memory_space<vmem>>, vector<1x8x256xf32>,
    return
  }
  func.func @transform_0(%arg0: i32, %arg1: i32) -> (i32, i32, i32) {
    %c0_i32 = arith.constant 0 : i32
    %c0_i32_0 = arith.constant 0 : i32
    %c0_i32_1 = arith.constant 0 : i32
    return %arg0, %c0_i32, %c0_i32_0 : i32, i32, i32
  }
  func.func @transform_1(%arg0: i32, %arg1: i32) -> (i32, i32, i32) {
    %c0_i32 = arith.constant 0 : i32
    %c0_i32_0 = arith.constant 0 : i32
    %c0_i32_1 = arith.constant 0 : i32
    return %c0_i32, %c0_i32_0, %arg1 : i32, i32, i32
  }
  func.func @transform_2(%arg0: i32, %arg1: i32) -> (i32, i32) {
    %c0_i32 = arith.constant 0 : i32
    %c0_i32_0 = arith.constant 0 : i32
    return %c0_i32, %arg1 : i32, i32
  }
  func.func @transform_3(%arg0: i32, %arg1: i32) -> (i32, i32, i32) {
    %c0_i32 = arith.constant 0 : i32
    %c0_i32_0 = arith.constant 0 : i32
    return %arg0, %c0_i32, %arg1 : i32, i32, i32
  }
}

module attributes {stable_mosaic.version = 11 : i64} {
  func.func @_conv1d_kernel(%arg0: i32, %arg1: i32, %arg2: memref<1x10x256xbf16, #tpu.memory_space<vmem>>, %arg3: memref<3x256x64xbf16, #tpu.memory_space<vmem>>, %arg4: memref<1x64xf32, #tpu.memory_space<vmem>>, %arg5: memref<1x8x64xf32, #tpu.memory_space<vmem>>) attributes {dimension_semantics = [#tpu.dimension_semantics<parallel>, #tpu.dimension_semantics<parallel>], iteration_bounds = array<i64: 2, 1>, scalar_prefetch = 0 : i64, scratch_operands = 0 : i64, tpu.core_type = #tpu.core_type<tc>, window_params = [{transform_indices = @transform_0, window_bounds = array<i64: 1, 10, 256>}, {transform_indices = @transform_1, window_bounds = array<i64: 3, 256, 64>}, {transform_indices = @transform_2, window_bounds = array<i64: 1, 64>}, {transform_indices = @transform_3, window_bounds = array<i64: 1, 8, 64>}]} {
    %cst = arith.constant 0.000000e+00 : f32
    %0 = vector.broadcast %cst : f32 to vector<8x64xf32>
    %c0 = arith.constant 0 : index
    %c0_0 = arith.constant 0 : index
    %c0_1 = arith.constant 0 : index
    %1 = vector.load %arg2[%c0, %c0_0, %c0_1] : memref<1x10x256xbf16, #tpu.memory_space<vmem>>, vector<1x8x256xbf16>
    %2 = vector.shape_cast %1 : vector<1x8x256xbf16> to vector<8x256xbf16>
    %c0_2 = arith.constant 0 : index
    %c0_3 = arith.constant 0 : index
    %c0_4 = arith.constant 0 : index
    %3 = vector.load %arg3[%c0_2, %c0_3, %c0_4] : memref<3x256x64xbf16, #tpu.memory_space<vmem>>, vector<1x256x64xbf16>
    %4 = vector.shape_cast %3 : vector<1x256x64xbf16> to vector<256x64xbf16>
    %cst_5 = arith.constant dense<0.000000e+00> : vector<8x64xf32>
    %5 = tpu.matmul %2, %4, %cst_5 {dimension_numbers = #tpu.dot_dimension_numbers<[1], [0], [0], [1], [0, 0, 1, 1], [], []>} : vector<8x256xbf16>, vector<256x64xbf16>, vector<8x64xf32> -> vector<8x64xf32>
    %6 = arith.addf %0, %5 : vector<8x64xf32>
    %c0_6 = arith.constant 0 : index
    %c1 = arith.constant 1 : index
    %c0_7 = arith.constant 0 : index
    %7 = vector.load %arg2[%c0_6, %c1, %c0_7] : memref<1x10x256xbf16, #tpu.memory_space<vmem>>, vector<1x8x256xbf16>
    %8 = vector.shape_cast %7 : vector<1x8x256xbf16> to vector<8x256xbf16>
    %c1_8 = arith.constant 1 : index
    %c0_9 = arith.constant 0 : index
    %c0_10 = arith.constant 0 : index
    %9 = vector.load %arg3[%c1_8, %c0_9, %c0_10] : memref<3x256x64xbf16, #tpu.memory_space<vmem>>, vector<1x256x64xbf16>
    %10 = vector.shape_cast %9 : vector<1x256x64xbf16> to vector<256x64xbf16>
    %cst_11 = arith.constant dense<0.000000e+00> : vector<8x64xf32>
    %11 = tpu.matmul %8, %10, %cst_11 {dimension_numbers = #tpu.dot_dimension_numbers<[1], [0], [0], [1], [0, 0, 1, 1], [], []>} : vector<8x256xbf16>, vector<256x64xbf16>, vector<8x64xf32> -> vector<8x64xf32>
    %12 = arith.addf %6, %11 : vector<8x64xf32>
    %c0_12 = arith.constant 0 : index
    %c2 = arith.constant 2 : index
    %c0_13 = arith.constant 0 : index
    %13 = vector.load %arg2[%c0_12, %c2, %c0_13] : memref<1x10x256xbf16, #tpu.memory_space<vmem>>, vector<1x8x256xbf16>
    %14 = vector.shape_cast %13 : vector<1x8x256xbf16> to vector<8x256xbf16>
    %c2_14 = arith.constant 2 : index
    %c0_15 = arith.constant 0 : index
    %c0_16 = arith.constant 0 : index
    %15 = vector.load %arg3[%c2_14, %c0_15, %c0_16] : memref<3x256x64xbf16, #tpu.memory_space<vmem>>, vector<1x256x64xbf16>
    %16 = vector.shape_cast %15 : vector<1x256x64xbf16> to vector<256x64xbf16>
    %cst_17 = arith.constant dense<0.000000e+00> : vector<8x64xf32>
    %17 = tpu.matmul %14, %16, %cst_17 {dimension_numbers = #tpu.dot_dimension_numbers<[1], [0], [0], [1], [0, 0, 1, 1], [], []>} : vector<8x256xbf16>, vector<256x64xbf16>, vector<8x64xf32> -> vector<8x64xf32>
    %18 = arith.addf %12, %17 : vector<8x64xf32>
    %c0_18 = arith.constant 0 : index
    %c0_19 = arith.constant 0 : index
    %19 = vector.load %arg4[%c0_18, %c0_19] : memref<1x64xf32, #tpu.memory_space<vmem>>, vector<1x64xf32>
    %20 = vector.broadcast %19 : vector<1x64xf32> to vector<8x64xf32>
    %21 = arith.addf %18, %20 : vector<8x64xf32>
    %cst_20 = arith.constant 0.000000e+00 : f32
    %22 = vector.broadcast %cst_20 : f32 to vector<8x64xf32>
    %23 = arith.maximumf %21, %22 : vector<8x64xf32>
    %c0_21 = arith.constant 0 : index
    %c0_22 = arith.constant 0 : index
    %c0_23 = arith.constant 0 : index
    %24 = vector.load %arg5[%c0_21, %c0_22, %c0_23] : memref<1x8x64xf32, #tpu.memory_space<vmem>>, vector<1x8x64xf32>
    %25 = vector.shape_cast %24 : vector<1x8x64xf32> to vector<8x64xf32>
    %26 = vector.shape_cast %23 : vector<8x64xf32> to vector<1x8x64xf32>
    tpu.vector_store %arg5[%c0_21, %c0_22, %c0_23], %26 {strides = array<i32>} : memref<1x8x64xf32, #tpu.memory_space<vmem>>, vector<1x8x64xf32>,
    return
  }
  func.func @transform_0(%arg0: i32, %arg1: i32) -> (i32, i32, i32) {
    %c0_i32 = arith.constant 0 : i32
    %c0_i32_0 = arith.constant 0 : i32
    %c0_i32_1 = arith.constant 0 : i32
    return %arg0, %c0_i32, %c0_i32_0 : i32, i32, i32
  }
  func.func @transform_1(%arg0: i32, %arg1: i32) -> (i32, i32, i32) {
    %c0_i32 = arith.constant 0 : i32
    %c0_i32_0 = arith.constant 0 : i32
    %c0_i32_1 = arith.constant 0 : i32
    return %c0_i32, %c0_i32_0, %arg1 : i32, i32, i32
  }
  func.func @transform_2(%arg0: i32, %arg1: i32) -> (i32, i32) {
    %c0_i32 = arith.constant 0 : i32
    %c0_i32_0 = arith.constant 0 : i32
    return %c0_i32, %arg1 : i32, i32
  }
  func.func @transform_3(%arg0: i32, %arg1: i32) -> (i32, i32, i32) {
    %c0_i32 = arith.constant 0 : i32
    %c0_i32_0 = arith.constant 0 : i32
    return %arg0, %c0_i32, %arg1 : i32, i32, i32
  }
}

module attributes {stable_mosaic.version = 11 : i64} {
  func.func @_conv1d_kernel(%arg0: i32, %arg1: i32, %arg2: memref<1x8x64xbf16, #tpu.memory_space<vmem>>, %arg3: memref<1x64x64xbf16, #tpu.memory_space<vmem>>, %arg4: memref<1x64xf32, #tpu.memory_space<vmem>>, %arg5: memref<1x8x64xf32, #tpu.memory_space<vmem>>) attributes {dimension_semantics = [#tpu.dimension_semantics<parallel>, #tpu.dimension_semantics<parallel>], iteration_bounds = array<i64: 2, 1>, scalar_prefetch = 0 : i64, scratch_operands = 0 : i64, tpu.core_type = #tpu.core_type<tc>, window_params = [{transform_indices = @transform_0, window_bounds = array<i64: 1, 8, 64>}, {transform_indices = @transform_1, window_bounds = array<i64: 1, 64, 64>}, {transform_indices = @transform_2, window_bounds = array<i64: 1, 64>}, {transform_indices = @transform_3, window_bounds = array<i64: 1, 8, 64>}]} {
    %cst = arith.constant 0.000000e+00 : f32
    %0 = vector.broadcast %cst : f32 to vector<8x64xf32>
    %c0 = arith.constant 0 : index
    %c0_0 = arith.constant 0 : index
    %c0_1 = arith.constant 0 : index
    %1 = vector.load %arg2[%c0, %c0_0, %c0_1] : memref<1x8x64xbf16, #tpu.memory_space<vmem>>, vector<1x8x64xbf16>
    %2 = vector.shape_cast %1 : vector<1x8x64xbf16> to vector<8x64xbf16>
    %c0_2 = arith.constant 0 : index
    %c0_3 = arith.constant 0 : index
    %c0_4 = arith.constant 0 : index
    %3 = vector.load %arg3[%c0_2, %c0_3, %c0_4] : memref<1x64x64xbf16, #tpu.memory_space<vmem>>, vector<1x64x64xbf16>
    %4 = vector.shape_cast %3 : vector<1x64x64xbf16> to vector<64x64xbf16>
    %cst_5 = arith.constant dense<0.000000e+00> : vector<8x64xf32>
    %5 = tpu.matmul %2, %4, %cst_5 {dimension_numbers = #tpu.dot_dimension_numbers<[1], [0], [0], [1], [0, 0, 1, 1], [], []>} : vector<8x64xbf16>, vector<64x64xbf16>, vector<8x64xf32> -> vector<8x64xf32>
    %6 = arith.addf %0, %5 : vector<8x64xf32>
    %c0_6 = arith.constant 0 : index
    %c0_7 = arith.constant 0 : index
    %7 = vector.load %arg4[%c0_6, %c0_7] : memref<1x64xf32, #tpu.memory_space<vmem>>, vector<1x64xf32>
    %8 = vector.broadcast %7 : vector<1x64xf32> to vector<8x64xf32>
    %9 = arith.addf %6, %8 : vector<8x64xf32>
    %cst_8 = arith.constant 0.000000e+00 : f32
    %10 = vector.broadcast %cst_8 : f32 to vector<8x64xf32>
    %11 = arith.maximumf %9, %10 : vector<8x64xf32>
    %c0_9 = arith.constant 0 : index
    %c0_10 = arith.constant 0 : index
    %c0_11 = arith.constant 0 : index
    %12 = vector.load %arg5[%c0_9, %c0_10, %c0_11] : memref<1x8x64xf32, #tpu.memory_space<vmem>>, vector<1x8x64xf32>
    %13 = vector.shape_cast %12 : vector<1x8x64xf32> to vector<8x64xf32>
    %14 = vector.shape_cast %11 : vector<8x64xf32> to vector<1x8x64xf32>
    tpu.vector_store %arg5[%c0_9, %c0_10, %c0_11], %14 {strides = array<i32>} : memref<1x8x64xf32, #tpu.memory_space<vmem>>, vector<1x8x64xf32>,
    return
  }
  func.func @transform_0(%arg0: i32, %arg1: i32) -> (i32, i32, i32) {
    %c0_i32 = arith.constant 0 : i32
    %c0_i32_0 = arith.constant 0 : i32
    %c0_i32_1 = arith.constant 0 : i32
    return %arg0, %c0_i32, %c0_i32_0 : i32, i32, i32
  }
  func.func @transform_1(%arg0: i32, %arg1: i32) -> (i32, i32, i32) {
    %c0_i32 = arith.constant 0 : i32
    %c0_i32_0 = arith.constant 0 : i32
    %c0_i32_1 = arith.constant 0 : i32
    return %c0_i32, %c0_i32_0, %arg1 : i32, i32, i32
  }
  func.func @transform_2(%arg0: i32, %arg1: i32) -> (i32, i32) {
    %c0_i32 = arith.constant 0 : i32
    %c0_i32_0 = arith.constant 0 : i32
    return %c0_i32, %arg1 : i32, i32
  }
  func.func @transform_3(%arg0: i32, %arg1: i32) -> (i32, i32, i32) {
    %c0_i32 = arith.constant 0 : i32
    %c0_i32_0 = arith.constant 0 : i32
    return %arg0, %c0_i32, %arg1 : i32, i32, i32
  }
}

module attributes {stable_mosaic.version = 11 : i64} {
  func.func @_conv1d_kernel(%arg0: i32, %arg1: i32, %arg2: memref<1x14x16xbf16, #tpu.memory_space<vmem>>, %arg3: memref<7x16x16xbf16, #tpu.memory_space<vmem>>, %arg4: memref<1x16xf32, #tpu.memory_space<vmem>>, %arg5: memref<1x8x16xf32, #tpu.memory_space<vmem>>) attributes {dimension_semantics = [#tpu.dimension_semantics<parallel>, #tpu.dimension_semantics<parallel>], iteration_bounds = array<i64: 2, 1>, scalar_prefetch = 0 : i64, scratch_operands = 0 : i64, tpu.core_type = #tpu.core_type<tc>, window_params = [{transform_indices = @transform_0, window_bounds = array<i64: 1, 14, 16>}, {transform_indices = @transform_1, window_bounds = array<i64: 7, 16, 16>}, {transform_indices = @transform_2, window_bounds = array<i64: 1, 16>}, {transform_indices = @transform_3, window_bounds = array<i64: 1, 8, 16>}]} {
    %cst = arith.constant 0.000000e+00 : f32
    %0 = vector.broadcast %cst : f32 to vector<8x16xf32>
    %c0 = arith.constant 0 : index
    %c0_0 = arith.constant 0 : index
    %c0_1 = arith.constant 0 : index
    %1 = vector.load %arg2[%c0, %c0_0, %c0_1] : memref<1x14x16xbf16, #tpu.memory_space<vmem>>, vector<1x8x16xbf16>
    %2 = vector.shape_cast %1 : vector<1x8x16xbf16> to vector<8x16xbf16>
    %c0_2 = arith.constant 0 : index
    %c0_3 = arith.constant 0 : index
    %c0_4 = arith.constant 0 : index
    %3 = vector.load %arg3[%c0_2, %c0_3, %c0_4] : memref<7x16x16xbf16, #tpu.memory_space<vmem>>, vector<1x16x16xbf16>
    %4 = vector.shape_cast %3 : vector<1x16x16xbf16> to vector<16x16xbf16>
    %cst_5 = arith.constant dense<0.000000e+00> : vector<8x16xf32>
    %5 = tpu.matmul %2, %4, %cst_5 {dimension_numbers = #tpu.dot_dimension_numbers<[1], [0], [0], [1], [0, 0, 1, 1], [], []>} : vector<8x16xbf16>, vector<16x16xbf16>, vector<8x16xf32> -> vector<8x16xf32>
    %6 = arith.addf %0, %5 : vector<8x16xf32>
    %c0_6 = arith.constant 0 : index
    %c1 = arith.constant 1 : index
    %c0_7 = arith.constant 0 : index
    %7 = vector.load %arg2[%c0_6, %c1, %c0_7] : memref<1x14x16xbf16, #tpu.memory_space<vmem>>, vector<1x8x16xbf16>
    %8 = vector.shape_cast %7 : vector<1x8x16xbf16> to vector<8x16xbf16>
    %c1_8 = arith.constant 1 : index
    %c0_9 = arith.constant 0 : index
    %c0_10 = arith.constant 0 : index
    %9 = vector.load %arg3[%c1_8, %c0_9, %c0_10] : memref<7x16x16xbf16, #tpu.memory_space<vmem>>, vector<1x16x16xbf16>
    %10 = vector.shape_cast %9 : vector<1x16x16xbf16> to vector<16x16xbf16>
    %cst_11 = arith.constant dense<0.000000e+00> : vector<8x16xf32>
    %11 = tpu.matmul %8, %10, %cst_11 {dimension_numbers = #tpu.dot_dimension_numbers<[1], [0], [0], [1], [0, 0, 1, 1], [], []>} : vector<8x16xbf16>, vector<16x16xbf16>, vector<8x16xf32> -> vector<8x16xf32>
    %12 = arith.addf %6, %11 : vector<8x16xf32>
    %c0_12 = arith.constant 0 : index
    %c2 = arith.constant 2 : index
    %c0_13 = arith.constant 0 : index
    %13 = vector.load %arg2[%c0_12, %c2, %c0_13] : memref<1x14x16xbf16, #tpu.memory_space<vmem>>, vector<1x8x16xbf16>
    %14 = vector.shape_cast %13 : vector<1x8x16xbf16> to vector<8x16xbf16>
    %c2_14 = arith.constant 2 : index
    %c0_15 = arith.constant 0 : index
    %c0_16 = arith.constant 0 : index
    %15 = vector.load %arg3[%c2_14, %c0_15, %c0_16] : memref<7x16x16xbf16, #tpu.memory_space<vmem>>, vector<1x16x16xbf16>
    %16 = vector.shape_cast %15 : vector<1x16x16xbf16> to vector<16x16xbf16>
    %cst_17 = arith.constant dense<0.000000e+00> : vector<8x16xf32>
    %17 = tpu.matmul %14, %16, %cst_17 {dimension_numbers = #tpu.dot_dimension_numbers<[1], [0], [0], [1], [0, 0, 1, 1], [], []>} : vector<8x16xbf16>, vector<16x16xbf16>, vector<8x16xf32> -> vector<8x16xf32>
    %18 = arith.addf %12, %17 : vector<8x16xf32>
    %c0_18 = arith.constant 0 : index
    %c3 = arith.constant 3 : index
    %c0_19 = arith.constant 0 : index
    %19 = vector.load %arg2[%c0_18, %c3, %c0_19] : memref<1x14x16xbf16, #tpu.memory_space<vmem>>, vector<1x8x16xbf16>
    %20 = vector.shape_cast %19 : vector<1x8x16xbf16> to vector<8x16xbf16>
    %c3_20 = arith.constant 3 : index
    %c0_21 = arith.constant 0 : index
    %c0_22 = arith.constant 0 : index
    %21 = vector.load %arg3[%c3_20, %c0_21, %c0_22] : memref<7x16x16xbf16, #tpu.memory_space<vmem>>, vector<1x16x16xbf16>
    %22 = vector.shape_cast %21 : vector<1x16x16xbf16> to vector<16x16xbf16>
    %cst_23 = arith.constant dense<0.000000e+00> : vector<8x16xf32>
    %23 = tpu.matmul %20, %22, %cst_23 {dimension_numbers = #tpu.dot_dimension_numbers<[1], [0], [0], [1], [0, 0, 1, 1], [], []>} : vector<8x16xbf16>, vector<16x16xbf16>, vector<8x16xf32> -> vector<8x16xf32>
    %24 = arith.addf %18, %23 : vector<8x16xf32>
    %c0_24 = arith.constant 0 : index
    %c4 = arith.constant 4 : index
    %c0_25 = arith.constant 0 : index
    %25 = vector.load %arg2[%c0_24, %c4, %c0_25] : memref<1x14x16xbf16, #tpu.memory_space<vmem>>, vector<1x8x16xbf16>
    %26 = vector.shape_cast %25 : vector<1x8x16xbf16> to vector<8x16xbf16>
    %c4_26 = arith.constant 4 : index
    %c0_27 = arith.constant 0 : index
    %c0_28 = arith.constant 0 : index
    %27 = vector.load %arg3[%c4_26, %c0_27, %c0_28] : memref<7x16x16xbf16, #tpu.memory_space<vmem>>, vector<1x16x16xbf16>
    %28 = vector.shape_cast %27 : vector<1x16x16xbf16> to vector<16x16xbf16>
    %cst_29 = arith.constant dense<0.000000e+00> : vector<8x16xf32>
    %29 = tpu.matmul %26, %28, %cst_29 {dimension_numbers = #tpu.dot_dimension_numbers<[1], [0], [0], [1], [0, 0, 1, 1], [], []>} : vector<8x16xbf16>, vector<16x16xbf16>, vector<8x16xf32> -> vector<8x16xf32>
    %30 = arith.addf %24, %29 : vector<8x16xf32>
    %c0_30 = arith.constant 0 : index
    %c5 = arith.constant 5 : index
    %c0_31 = arith.constant 0 : index
    %31 = vector.load %arg2[%c0_30, %c5, %c0_31] : memref<1x14x16xbf16, #tpu.memory_space<vmem>>, vector<1x8x16xbf16>
    %32 = vector.shape_cast %31 : vector<1x8x16xbf16> to vector<8x16xbf16>
    %c5_32 = arith.constant 5 : index
    %c0_33 = arith.constant 0 : index
    %c0_34 = arith.constant 0 : index
    %33 = vector.load %arg3[%c5_32, %c0_33, %c0_34] : memref<7x16x16xbf16, #tpu.memory_space<vmem>>, vector<1x16x16xbf16>
    %34 = vector.shape_cast %33 : vector<1x16x16xbf16> to vector<16x16xbf16>
    %cst_35 = arith.constant dense<0.000000e+00> : vector<8x16xf32>
    %35 = tpu.matmul %32, %34, %cst_35 {dimension_numbers = #tpu.dot_dimension_numbers<[1], [0], [0], [1], [0, 0, 1, 1], [], []>} : vector<8x16xbf16>, vector<16x16xbf16>, vector<8x16xf32> -> vector<8x16xf32>
    %36 = arith.addf %30, %35 : vector<8x16xf32>
    %c0_36 = arith.constant 0 : index
    %c6 = arith.constant 6 : index
    %c0_37 = arith.constant 0 : index
    %37 = vector.load %arg2[%c0_36, %c6, %c0_37] : memref<1x14x16xbf16, #tpu.memory_space<vmem>>, vector<1x8x16xbf16>
    %38 = vector.shape_cast %37 : vector<1x8x16xbf16> to vector<8x16xbf16>
    %c6_38 = arith.constant 6 : index
    %c0_39 = arith.constant 0 : index
    %c0_40 = arith.constant 0 : index
    %39 = vector.load %arg3[%c6_38, %c0_39, %c0_40] : memref<7x16x16xbf16, #tpu.memory_space<vmem>>, vector<1x16x16xbf16>
    %40 = vector.shape_cast %39 : vector<1x16x16xbf16> to vector<16x16xbf16>
    %cst_41 = arith.constant dense<0.000000e+00> : vector<8x16xf32>
    %41 = tpu.matmul %38, %40, %cst_41 {dimension_numbers = #tpu.dot_dimension_numbers<[1], [0], [0], [1], [0, 0, 1, 1], [], []>} : vector<8x16xbf16>, vector<16x16xbf16>, vector<8x16xf32> -> vector<8x16xf32>
    %42 = arith.addf %36, %41 : vector<8x16xf32>
    %c0_42 = arith.constant 0 : index
    %c0_43 = arith.constant 0 : index
    %43 = vector.load %arg4[%c0_42, %c0_43] : memref<1x16xf32, #tpu.memory_space<vmem>>, vector<1x16xf32>
    %44 = vector.broadcast %43 : vector<1x16xf32> to vector<8x16xf32>
    %45 = arith.addf %42, %44 : vector<8x16xf32>
    %cst_44 = arith.constant 0.000000e+00 : f32
    %46 = vector.broadcast %cst_44 : f32 to vector<8x16xf32>
    %47 = arith.maximumf %45, %46 : vector<8x16xf32>
    %c0_45 = arith.constant 0 : index
    %c0_46 = arith.constant 0 : index
    %c0_47 = arith.constant 0 : index
    %48 = vector.load %arg5[%c0_45, %c0_46, %c0_47] : memref<1x8x16xf32, #tpu.memory_space<vmem>>, vector<1x8x16xf32>
    %49 = vector.shape_cast %48 : vector<1x8x16xf32> to vector<8x16xf32>
    %50 = vector.shape_cast %47 : vector<8x16xf32> to vector<1x8x16xf32>
    tpu.vector_store %arg5[%c0_45, %c0_46, %c0_47], %50 {strides = array<i32>} : memref<1x8x16xf32, #tpu.memory_space<vmem>>, vector<1x8x16xf32>,
    return
  }
  func.func @transform_0(%arg0: i32, %arg1: i32) -> (i32, i32, i32) {
    %c0_i32 = arith.constant 0 : i32
    %c0_i32_0 = arith.constant 0 : i32
    %c0_i32_1 = arith.constant 0 : i32
    return %arg0, %c0_i32, %c0_i32_0 : i32, i32, i32
  }
  func.func @transform_1(%arg0: i32, %arg1: i32) -> (i32, i32, i32) {
    %c0_i32 = arith.constant 0 : i32
    %c0_i32_0 = arith.constant 0 : i32
    %c0_i32_1 = arith.constant 0 : i32
    return %c0_i32, %c0_i32_0, %arg1 : i32, i32, i32
  }
  func.func @transform_2(%arg0: i32, %arg1: i32) -> (i32, i32) {
    %c0_i32 = arith.constant 0 : i32
    %c0_i32_0 = arith.constant 0 : i32
    return %c0_i32, %arg1 : i32, i32
  }
  func.func @transform_3(%arg0: i32, %arg1: i32) -> (i32, i32, i32) {
    %c0_i32 = arith.constant 0 : i32
    %c0_i32_0 = arith.constant 0 : i32
    return %arg0, %c0_i32, %arg1 : i32, i32, i32
  }
}

module attributes {stable_mosaic.version = 11 : i64} {
  func.func @_conv1d_kernel(%arg0: i32, %arg1: i32, %arg2: memref<1x12x16xbf16, #tpu.memory_space<vmem>>, %arg3: memref<5x16x16xbf16, #tpu.memory_space<vmem>>, %arg4: memref<1x16xf32, #tpu.memory_space<vmem>>, %arg5: memref<1x8x16xf32, #tpu.memory_space<vmem>>) attributes {dimension_semantics = [#tpu.dimension_semantics<parallel>, #tpu.dimension_semantics<parallel>], iteration_bounds = array<i64: 2, 1>, scalar_prefetch = 0 : i64, scratch_operands = 0 : i64, tpu.core_type = #tpu.core_type<tc>, window_params = [{transform_indices = @transform_0, window_bounds = array<i64: 1, 12, 16>}, {transform_indices = @transform_1, window_bounds = array<i64: 5, 16, 16>}, {transform_indices = @transform_2, window_bounds = array<i64: 1, 16>}, {transform_indices = @transform_3, window_bounds = array<i64: 1, 8, 16>}]} {
    %cst = arith.constant 0.000000e+00 : f32
    %0 = vector.broadcast %cst : f32 to vector<8x16xf32>
    %c0 = arith.constant 0 : index
    %c0_0 = arith.constant 0 : index
    %c0_1 = arith.constant 0 : index
    %1 = vector.load %arg2[%c0, %c0_0, %c0_1] : memref<1x12x16xbf16, #tpu.memory_space<vmem>>, vector<1x8x16xbf16>
    %2 = vector.shape_cast %1 : vector<1x8x16xbf16> to vector<8x16xbf16>
    %c0_2 = arith.constant 0 : index
    %c0_3 = arith.constant 0 : index
    %c0_4 = arith.constant 0 : index
    %3 = vector.load %arg3[%c0_2, %c0_3, %c0_4] : memref<5x16x16xbf16, #tpu.memory_space<vmem>>, vector<1x16x16xbf16>
    %4 = vector.shape_cast %3 : vector<1x16x16xbf16> to vector<16x16xbf16>
    %cst_5 = arith.constant dense<0.000000e+00> : vector<8x16xf32>
    %5 = tpu.matmul %2, %4, %cst_5 {dimension_numbers = #tpu.dot_dimension_numbers<[1], [0], [0], [1], [0, 0, 1, 1], [], []>} : vector<8x16xbf16>, vector<16x16xbf16>, vector<8x16xf32> -> vector<8x16xf32>
    %6 = arith.addf %0, %5 : vector<8x16xf32>
    %c0_6 = arith.constant 0 : index
    %c1 = arith.constant 1 : index
    %c0_7 = arith.constant 0 : index
    %7 = vector.load %arg2[%c0_6, %c1, %c0_7] : memref<1x12x16xbf16, #tpu.memory_space<vmem>>, vector<1x8x16xbf16>
    %8 = vector.shape_cast %7 : vector<1x8x16xbf16> to vector<8x16xbf16>
    %c1_8 = arith.constant 1 : index
    %c0_9 = arith.constant 0 : index
    %c0_10 = arith.constant 0 : index
    %9 = vector.load %arg3[%c1_8, %c0_9, %c0_10] : memref<5x16x16xbf16, #tpu.memory_space<vmem>>, vector<1x16x16xbf16>
    %10 = vector.shape_cast %9 : vector<1x16x16xbf16> to vector<16x16xbf16>
    %cst_11 = arith.constant dense<0.000000e+00> : vector<8x16xf32>
    %11 = tpu.matmul %8, %10, %cst_11 {dimension_numbers = #tpu.dot_dimension_numbers<[1], [0], [0], [1], [0, 0, 1, 1], [], []>} : vector<8x16xbf16>, vector<16x16xbf16>, vector<8x16xf32> -> vector<8x16xf32>
    %12 = arith.addf %6, %11 : vector<8x16xf32>
    %c0_12 = arith.constant 0 : index
    %c2 = arith.constant 2 : index
    %c0_13 = arith.constant 0 : index
    %13 = vector.load %arg2[%c0_12, %c2, %c0_13] : memref<1x12x16xbf16, #tpu.memory_space<vmem>>, vector<1x8x16xbf16>
    %14 = vector.shape_cast %13 : vector<1x8x16xbf16> to vector<8x16xbf16>
    %c2_14 = arith.constant 2 : index
    %c0_15 = arith.constant 0 : index
    %c0_16 = arith.constant 0 : index
    %15 = vector.load %arg3[%c2_14, %c0_15, %c0_16] : memref<5x16x16xbf16, #tpu.memory_space<vmem>>, vector<1x16x16xbf16>
    %16 = vector.shape_cast %15 : vector<1x16x16xbf16> to vector<16x16xbf16>
    %cst_17 = arith.constant dense<0.000000e+00> : vector<8x16xf32>
    %17 = tpu.matmul %14, %16, %cst_17 {dimension_numbers = #tpu.dot_dimension_numbers<[1], [0], [0], [1], [0, 0, 1, 1], [], []>} : vector<8x16xbf16>, vector<16x16xbf16>, vector<8x16xf32> -> vector<8x16xf32>
    %18 = arith.addf %12, %17 : vector<8x16xf32>
    %c0_18 = arith.constant 0 : index
    %c3 = arith.constant 3 : index
    %c0_19 = arith.constant 0 : index
    %19 = vector.load %arg2[%c0_18, %c3, %c0_19] : memref<1x12x16xbf16, #tpu.memory_space<vmem>>, vector<1x8x16xbf16>
    %20 = vector.shape_cast %19 : vector<1x8x16xbf16> to vector<8x16xbf16>
    %c3_20 = arith.constant 3 : index
    %c0_21 = arith.constant 0 : index
    %c0_22 = arith.constant 0 : index
    %21 = vector.load %arg3[%c3_20, %c0_21, %c0_22] : memref<5x16x16xbf16, #tpu.memory_space<vmem>>, vector<1x16x16xbf16>
    %22 = vector.shape_cast %21 : vector<1x16x16xbf16> to vector<16x16xbf16>
    %cst_23 = arith.constant dense<0.000000e+00> : vector<8x16xf32>
    %23 = tpu.matmul %20, %22, %cst_23 {dimension_numbers = #tpu.dot_dimension_numbers<[1], [0], [0], [1], [0, 0, 1, 1], [], []>} : vector<8x16xbf16>, vector<16x16xbf16>, vector<8x16xf32> -> vector<8x16xf32>
    %24 = arith.addf %18, %23 : vector<8x16xf32>
    %c0_24 = arith.constant 0 : index
    %c4 = arith.constant 4 : index
    %c0_25 = arith.constant 0 : index
    %25 = vector.load %arg2[%c0_24, %c4, %c0_25] : memref<1x12x16xbf16, #tpu.memory_space<vmem>>, vector<1x8x16xbf16>
    %26 = vector.shape_cast %25 : vector<1x8x16xbf16> to vector<8x16xbf16>
    %c4_26 = arith.constant 4 : index
    %c0_27 = arith.constant 0 : index
    %c0_28 = arith.constant 0 : index
    %27 = vector.load %arg3[%c4_26, %c0_27, %c0_28] : memref<5x16x16xbf16, #tpu.memory_space<vmem>>, vector<1x16x16xbf16>
    %28 = vector.shape_cast %27 : vector<1x16x16xbf16> to vector<16x16xbf16>
    %cst_29 = arith.constant dense<0.000000e+00> : vector<8x16xf32>
    %29 = tpu.matmul %26, %28, %cst_29 {dimension_numbers = #tpu.dot_dimension_numbers<[1], [0], [0], [1], [0, 0, 1, 1], [], []>} : vector<8x16xbf16>, vector<16x16xbf16>, vector<8x16xf32> -> vector<8x16xf32>
    %30 = arith.addf %24, %29 : vector<8x16xf32>
    %c0_30 = arith.constant 0 : index
    %c0_31 = arith.constant 0 : index
    %31 = vector.load %arg4[%c0_30, %c0_31] : memref<1x16xf32, #tpu.memory_space<vmem>>, vector<1x16xf32>
    %32 = vector.broadcast %31 : vector<1x16xf32> to vector<8x16xf32>
    %33 = arith.addf %30, %32 : vector<8x16xf32>
    %cst_32 = arith.constant 0.000000e+00 : f32
    %34 = vector.broadcast %cst_32 : f32 to vector<8x16xf32>
    %35 = arith.maximumf %33, %34 : vector<8x16xf32>
    %c0_33 = arith.constant 0 : index
    %c0_34 = arith.constant 0 : index
    %c0_35 = arith.constant 0 : index
    %36 = vector.load %arg5[%c0_33, %c0_34, %c0_35] : memref<1x8x16xf32, #tpu.memory_space<vmem>>, vector<1x8x16xf32>
    %37 = vector.shape_cast %36 : vector<1x8x16xf32> to vector<8x16xf32>
    %38 = vector.shape_cast %35 : vector<8x16xf32> to vector<1x8x16xf32>
    tpu.vector_store %arg5[%c0_33, %c0_34, %c0_35], %38 {strides = array<i32>} : memref<1x8x16xf32, #tpu.memory_space<vmem>>, vector<1x8x16xf32>,
    return
  }
  func.func @transform_0(%arg0: i32, %arg1: i32) -> (i32, i32, i32) {
    %c0_i32 = arith.constant 0 : i32
    %c0_i32_0 = arith.constant 0 : i32
    %c0_i32_1 = arith.constant 0 : i32
    return %arg0, %c0_i32, %c0_i32_0 : i32, i32, i32
  }
  func.func @transform_1(%arg0: i32, %arg1: i32) -> (i32, i32, i32) {
    %c0_i32 = arith.constant 0 : i32
    %c0_i32_0 = arith.constant 0 : i32
    %c0_i32_1 = arith.constant 0 : i32
    return %c0_i32, %c0_i32_0, %arg1 : i32, i32, i32
  }
  func.func @transform_2(%arg0: i32, %arg1: i32) -> (i32, i32) {
    %c0_i32 = arith.constant 0 : i32
    %c0_i32_0 = arith.constant 0 : i32
    return %c0_i32, %arg1 : i32, i32
  }
  func.func @transform_3(%arg0: i32, %arg1: i32) -> (i32, i32, i32) {
    %c0_i32 = arith.constant 0 : i32
    %c0_i32_0 = arith.constant 0 : i32
    return %arg0, %c0_i32, %arg1 : i32, i32, i32
  }
}

module attributes {stable_mosaic.version = 11 : i64} {
  func.func @_conv1d_kernel(%arg0: i32, %arg1: i32, %arg2: memref<1x10x16xbf16, #tpu.memory_space<vmem>>, %arg3: memref<3x16x16xbf16, #tpu.memory_space<vmem>>, %arg4: memref<1x16xf32, #tpu.memory_space<vmem>>, %arg5: memref<1x8x16xf32, #tpu.memory_space<vmem>>) attributes {dimension_semantics = [#tpu.dimension_semantics<parallel>, #tpu.dimension_semantics<parallel>], iteration_bounds = array<i64: 2, 1>, scalar_prefetch = 0 : i64, scratch_operands = 0 : i64, tpu.core_type = #tpu.core_type<tc>, window_params = [{transform_indices = @transform_0, window_bounds = array<i64: 1, 10, 16>}, {transform_indices = @transform_1, window_bounds = array<i64: 3, 16, 16>}, {transform_indices = @transform_2, window_bounds = array<i64: 1, 16>}, {transform_indices = @transform_3, window_bounds = array<i64: 1, 8, 16>}]} {
    %cst = arith.constant 0.000000e+00 : f32
    %0 = vector.broadcast %cst : f32 to vector<8x16xf32>
    %c0 = arith.constant 0 : index
    %c0_0 = arith.constant 0 : index
    %c0_1 = arith.constant 0 : index
    %1 = vector.load %arg2[%c0, %c0_0, %c0_1] : memref<1x10x16xbf16, #tpu.memory_space<vmem>>, vector<1x8x16xbf16>
    %2 = vector.shape_cast %1 : vector<1x8x16xbf16> to vector<8x16xbf16>
    %c0_2 = arith.constant 0 : index
    %c0_3 = arith.constant 0 : index
    %c0_4 = arith.constant 0 : index
    %3 = vector.load %arg3[%c0_2, %c0_3, %c0_4] : memref<3x16x16xbf16, #tpu.memory_space<vmem>>, vector<1x16x16xbf16>
    %4 = vector.shape_cast %3 : vector<1x16x16xbf16> to vector<16x16xbf16>
    %cst_5 = arith.constant dense<0.000000e+00> : vector<8x16xf32>
    %5 = tpu.matmul %2, %4, %cst_5 {dimension_numbers = #tpu.dot_dimension_numbers<[1], [0], [0], [1], [0, 0, 1, 1], [], []>} : vector<8x16xbf16>, vector<16x16xbf16>, vector<8x16xf32> -> vector<8x16xf32>
    %6 = arith.addf %0, %5 : vector<8x16xf32>
    %c0_6 = arith.constant 0 : index
    %c1 = arith.constant 1 : index
    %c0_7 = arith.constant 0 : index
    %7 = vector.load %arg2[%c0_6, %c1, %c0_7] : memref<1x10x16xbf16, #tpu.memory_space<vmem>>, vector<1x8x16xbf16>
    %8 = vector.shape_cast %7 : vector<1x8x16xbf16> to vector<8x16xbf16>
    %c1_8 = arith.constant 1 : index
    %c0_9 = arith.constant 0 : index
    %c0_10 = arith.constant 0 : index
    %9 = vector.load %arg3[%c1_8, %c0_9, %c0_10] : memref<3x16x16xbf16, #tpu.memory_space<vmem>>, vector<1x16x16xbf16>
    %10 = vector.shape_cast %9 : vector<1x16x16xbf16> to vector<16x16xbf16>
    %cst_11 = arith.constant dense<0.000000e+00> : vector<8x16xf32>
    %11 = tpu.matmul %8, %10, %cst_11 {dimension_numbers = #tpu.dot_dimension_numbers<[1], [0], [0], [1], [0, 0, 1, 1], [], []>} : vector<8x16xbf16>, vector<16x16xbf16>, vector<8x16xf32> -> vector<8x16xf32>
    %12 = arith.addf %6, %11 : vector<8x16xf32>
    %c0_12 = arith.constant 0 : index
    %c2 = arith.constant 2 : index
    %c0_13 = arith.constant 0 : index
    %13 = vector.load %arg2[%c0_12, %c2, %c0_13] : memref<1x10x16xbf16, #tpu.memory_space<vmem>>, vector<1x8x16xbf16>
    %14 = vector.shape_cast %13 : vector<1x8x16xbf16> to vector<8x16xbf16>
    %c2_14 = arith.constant 2 : index
    %c0_15 = arith.constant 0 : index
    %c0_16 = arith.constant 0 : index
    %15 = vector.load %arg3[%c2_14, %c0_15, %c0_16] : memref<3x16x16xbf16, #tpu.memory_space<vmem>>, vector<1x16x16xbf16>
    %16 = vector.shape_cast %15 : vector<1x16x16xbf16> to vector<16x16xbf16>
    %cst_17 = arith.constant dense<0.000000e+00> : vector<8x16xf32>
    %17 = tpu.matmul %14, %16, %cst_17 {dimension_numbers = #tpu.dot_dimension_numbers<[1], [0], [0], [1], [0, 0, 1, 1], [], []>} : vector<8x16xbf16>, vector<16x16xbf16>, vector<8x16xf32> -> vector<8x16xf32>
    %18 = arith.addf %12, %17 : vector<8x16xf32>
    %c0_18 = arith.constant 0 : index
    %c0_19 = arith.constant 0 : index
    %19 = vector.load %arg4[%c0_18, %c0_19] : memref<1x16xf32, #tpu.memory_space<vmem>>, vector<1x16xf32>
    %20 = vector.broadcast %19 : vector<1x16xf32> to vector<8x16xf32>
    %21 = arith.addf %18, %20 : vector<8x16xf32>
    %cst_20 = arith.constant 0.000000e+00 : f32
    %22 = vector.broadcast %cst_20 : f32 to vector<8x16xf32>
    %23 = arith.maximumf %21, %22 : vector<8x16xf32>
    %c0_21 = arith.constant 0 : index
    %c0_22 = arith.constant 0 : index
    %c0_23 = arith.constant 0 : index
    %24 = vector.load %arg5[%c0_21, %c0_22, %c0_23] : memref<1x8x16xf32, #tpu.memory_space<vmem>>, vector<1x8x16xf32>
    %25 = vector.shape_cast %24 : vector<1x8x16xf32> to vector<8x16xf32>
    %26 = vector.shape_cast %23 : vector<8x16xf32> to vector<1x8x16xf32>
    tpu.vector_store %arg5[%c0_21, %c0_22, %c0_23], %26 {strides = array<i32>} : memref<1x8x16xf32, #tpu.memory_space<vmem>>, vector<1x8x16xf32>,
    return
  }
  func.func @transform_0(%arg0: i32, %arg1: i32) -> (i32, i32, i32) {
    %c0_i32 = arith.constant 0 : i32
    %c0_i32_0 = arith.constant 0 : i32
    %c0_i32_1 = arith.constant 0 : i32
    return %arg0, %c0_i32, %c0_i32_0 : i32, i32, i32
  }
  func.func @transform_1(%arg0: i32, %arg1: i32) -> (i32, i32, i32) {
    %c0_i32 = arith.constant 0 : i32
    %c0_i32_0 = arith.constant 0 : i32
    %c0_i32_1 = arith.constant 0 : i32
    return %c0_i32, %c0_i32_0, %arg1 : i32, i32, i32
  }
  func.func @transform_2(%arg0: i32, %arg1: i32) -> (i32, i32) {
    %c0_i32 = arith.constant 0 : i32
    %c0_i32_0 = arith.constant 0 : i32
    return %c0_i32, %arg1 : i32, i32
  }
  func.func @transform_3(%arg0: i32, %arg1: i32) -> (i32, i32, i32) {
    %c0_i32 = arith.constant 0 : i32
    %c0_i32_0 = arith.constant 0 : i32
    return %arg0, %c0_i32, %arg1 : i32, i32, i32
  }
}

module attributes {stable_mosaic.version = 11 : i64} {
  func.func @_gat_block_kernel(%arg0: i32, %arg1: memref<16x160xf32, #tpu.memory_space<vmem>>, %arg2: memref<160x16xf32, #tpu.memory_space<vmem>>, %arg3: memref<1x16xf32, #tpu.memory_space<vmem>>, %arg4: memref<1x16xf32, #tpu.memory_space<vmem>>, %arg5: memref<1x16xf32, #tpu.memory_space<vmem>>, %arg6: memref<16x16xbf16, #tpu.memory_space<vmem>>, %arg7: memref<16x2xf32, #tpu.memory_space<vmem>>, %arg8: memref<1x16xf32, #tpu.memory_space<vmem>>, %arg9: memref<1x16xf32, #tpu.memory_space<vmem>>, %arg10: memref<16x16xf32, #tpu.memory_space<vmem>>) attributes {dimension_semantics = [#tpu.dimension_semantics<arbitrary>], iteration_bounds = array<i64: 1>, scalar_prefetch = 0 : i64, scratch_operands = 0 : i64, tpu.core_type = #tpu.core_type<tc>, window_params = [{pipeline_mode = #tpu.pipeline_mode<synchronous>, transform_indices = @transform_0, window_bounds = array<i64: 16, 160>}, {pipeline_mode = #tpu.pipeline_mode<synchronous>, transform_indices = @transform_1, window_bounds = array<i64: 160, 16>}, {pipeline_mode = #tpu.pipeline_mode<synchronous>, transform_indices = @transform_2, window_bounds = array<i64: 1, 16>}, {pipeline_mode = #tpu.pipeline_mode<synchronous>, transform_indices = @transform_3, window_bounds = array<i64: 1, 16>}, {pipeline_mode = #tpu.pipeline_mode<synchronous>, transform_indices = @transform_4, window_bounds = array<i64: 1, 16>}, {pipeline_mode = #tpu.pipeline_mode<synchronous>, transform_indices = @transform_5, window_bounds = array<i64: 16, 16>}, {pipeline_mode = #tpu.pipeline_mode<synchronous>, transform_indices = @transform_6, window_bounds = array<i64: 16, 2>}, {pipeline_mode = #tpu.pipeline_mode<synchronous>, transform_indices = @transform_7, window_bounds = array<i64: 1, 16>}, {pipeline_mode = #tpu.pipeline_mode<synchronous>, transform_indices = @transform_8, window_bounds = array<i64: 1, 16>}, {pipeline_mode = #tpu.pipeline_mode<synchronous>, transform_indices = @transform_9, window_bounds = array<i64: 16, 16>}]} {
    %c0 = arith.constant 0 : index
    %c0_0 = arith.constant 0 : index
    %0 = vector.load %arg1[%c0, %c0_0] : memref<16x160xf32, #tpu.memory_space<vmem>>, vector<16x160xf32>
    %c0_1 = arith.constant 0 : index
    %c0_2 = arith.constant 0 : index
    %1 = vector.load %arg2[%c0_1, %c0_2] : memref<160x16xf32, #tpu.memory_space<vmem>>, vector<160x16xf32>
    %cst = arith.constant dense<0.000000e+00> : vector<16x16xf32>
    %2 = tpu.matmul %0, %1, %cst {dimension_numbers = #tpu.dot_dimension_numbers<[1], [0], [0], [1], [0, 0, 1, 1], [], []>} : vector<16x160xf32>, vector<160x16xf32>, vector<16x16xf32> -> vector<16x16xf32>
    %c0_3 = arith.constant 0 : index
    %c0_4 = arith.constant 0 : index
    %3 = vector.load %arg4[%c0_3, %c0_4] : memref<1x16xf32, #tpu.memory_space<vmem>>, vector<1x16xf32>
    %4 = vector.broadcast %3 : vector<1x16xf32> to vector<16x16xf32>
    %5 = arith.mulf %2, %4 : vector<16x16xf32>
    %cst_5 = arith.constant dense<0.000000e+00> : vector<16xf32>
    %6 = vector.multi_reduction <add>, %5, %cst_5 [1] : vector<16x16xf32> to vector<16xf32>
    %7 = vector.shape_cast %6 : vector<16xf32> to vector<16x1xf32>
    %c0_6 = arith.constant 0 : index
    %c0_7 = arith.constant 0 : index
    %8 = vector.load %arg3[%c0_6, %c0_7] : memref<1x16xf32, #tpu.memory_space<vmem>>, vector<1x16xf32>
    %cst_8 = arith.constant dense<0.000000e+00> : vector<1x16xf32>
    %9 = tpu.matmul %8, %2, %cst_8 {dimension_numbers = #tpu.dot_dimension_numbers<[1], [1], [0], [0], [0, 0, 1, 0], [], []>} : vector<1x16xf32>, vector<16x16xf32>, vector<1x16xf32> -> vector<1x16xf32>
    %10 = vector.broadcast %7 : vector<16x1xf32> to vector<16x16xf32>
    %11 = vector.broadcast %9 : vector<1x16xf32> to vector<16x16xf32>
    %12 = arith.addf %10, %11 : vector<16x16xf32>
    %cst_9 = arith.constant 0.000000e+00 : f32
    %13 = vector.broadcast %cst_9 : f32 to vector<16x16xf32>
    %14 = arith.cmpf ogt, %12, %13 : vector<16x16xf32>
    %cst_10 = arith.constant 2.000000e-01 : f32
    %15 = vector.broadcast %cst_10 : f32 to vector<16x16xf32>
    %16 = arith.mulf %15, %12 : vector<16x16xf32>
    %17 = arith.select %14, %12, %16 : vector<16x16xi1>, vector<16x16xf32>
    %c0_11 = arith.constant 0 : index
    %c0_12 = arith.constant 0 : index
    %18 = vector.load %arg6[%c0_11, %c0_12] : memref<16x16xbf16, #tpu.memory_space<vmem>>, vector<16x16xbf16>
    %19 = arith.extf %18 : vector<16x16xbf16> to vector<16x16xf32>
    %20 = arith.addf %17, %19 : vector<16x16xf32>
    %cst_13 = arith.constant dense<0xFF800000> : vector<16xf32>
    %21 = vector.multi_reduction <maximumf>, %20, %cst_13 [1] : vector<16x16xf32> to vector<16xf32>
    %22 = vector.shape_cast %21 : vector<16xf32> to vector<16x1xf32>
    %23 = vector.broadcast %22 : vector<16x1xf32> to vector<16x16xf32>
    %24 = arith.subf %20, %23 : vector<16x16xf32>
    %25 = math.exp %24 : vector<16x16xf32>
    %cst_14 = arith.constant dense<0.000000e+00> : vector<16xf32>
    %26 = vector.multi_reduction <add>, %25, %cst_14 [1] : vector<16x16xf32> to vector<16xf32>
    %27 = vector.shape_cast %26 : vector<16xf32> to vector<16x1xf32>
    %28 = tpu.reciprocal %27 {approx = true} : vector<16x1xf32> -> vector<16x1xf32>
    %29 = vector.broadcast %28 : vector<16x1xf32> to vector<16x16xf32>
    %30 = arith.mulf %25, %29 : vector<16x16xf32>
    %cst_15 = arith.constant dense<0.000000e+00> : vector<16x16xf32>
    %31 = tpu.matmul %30, %2, %cst_15 {dimension_numbers = #tpu.dot_dimension_numbers<[1], [0], [0], [1], [0, 0, 1, 1], [], []>} : vector<16x16xf32>, vector<16x16xf32>, vector<16x16xf32> -> vector<16x16xf32>
    %c0_16 = arith.constant 0 : index
    %c0_17 = arith.constant 0 : index
    %32 = vector.load %arg5[%c0_16, %c0_17] : memref<1x16xf32, #tpu.memory_space<vmem>>, vector<1x16xf32>
    %33 = vector.broadcast %32 : vector<1x16xf32> to vector<16x16xf32>
    %34 = arith.addf %31, %33 : vector<16x16xf32>
    %c0_18 = arith.constant 0 : index
    %c0_19 = arith.constant 0 : index
    %35 = vector.load %arg7[%c0_18, %c0_19] : memref<16x2xf32, #tpu.memory_space<vmem>>, vector<16x2xf32>
    %cst_20 = arith.constant 0.000000e+00 : f32
    %36 = vector.broadcast %cst_20 : f32 to vector<16x1xf32>
    %37 = vector.extract_strided_slice %35 {offsets = [0, 0], sizes = [16, 1], strides = [1, 1]} : vector<16x2xf32> to vector<16x1xf32>
    %38 = vector.shape_cast %37 : vector<16x1xf32> to vector<1x16x1xf32>
    %cst_21 = arith.constant dense<0.000000e+00> : vector<1xf32>
    %39 = vector.multi_reduction <add>, %38, %cst_21 [1, 2] : vector<1x16x1xf32> to vector<1xf32>
    %40 = vector.shape_cast %39 : vector<1xf32> to vector<1x1x1xf32>
    %41 = vector.extract %40[0, 0, 0] : f32 from vector<1x1x1xf32>
    %cst_22 = arith.constant 1.000000e+00 : f32
    %42 = arith.maximumf %41, %cst_22 : f32
    %43 = vector.broadcast %37 : vector<16x1xf32> to vector<16x16xf32>
    %44 = arith.mulf %34, %43 : vector<16x16xf32>
    %45 = vector.shape_cast %44 : vector<16x16xf32> to vector<1x16x16xf32>
    %cst_23 = arith.constant dense<0.000000e+00> : vector<1xf32>
    %46 = vector.multi_reduction <add>, %45, %cst_23 [1, 2] : vector<1x16x16xf32> to vector<1xf32>
    %47 = vector.shape_cast %46 : vector<1xf32> to vector<1x1x1xf32>
    %48 = vector.extract %47[0, 0, 0] : f32 from vector<1x1x1xf32>
    %cst_24 = arith.constant 1.600000e+01 : f32
    %49 = arith.mulf %42, %cst_24 : f32
    %50 = arith.divf %48, %49 : f32
    %51 = vector.broadcast %50 : f32 to vector<16x1xf32>
    %52 = arith.mulf %37, %51 : vector<16x1xf32>
    %53 = arith.addf %36, %52 : vector<16x1xf32>
    %54 = vector.extract_strided_slice %35 {offsets = [0, 1], sizes = [16, 1], strides = [1, 1]} : vector<16x2xf32> to vector<16x1xf32>
    %55 = vector.shape_cast %54 : vector<16x1xf32> to vector<1x16x1xf32>
    %cst_25 = arith.constant dense<0.000000e+00> : vector<1xf32>
    %56 = vector.multi_reduction <add>, %55, %cst_25 [1, 2] : vector<1x16x1xf32> to vector<1xf32>
    %57 = vector.shape_cast %56 : vector<1xf32> to vector<1x1x1xf32>
    %58 = vector.extract %57[0, 0, 0] : f32 from vector<1x1x1xf32>
    %cst_26 = arith.constant 1.000000e+00 : f32
    %59 = arith.maximumf %58, %cst_26 : f32
    %60 = vector.broadcast %54 : vector<16x1xf32> to vector<16x16xf32>
    %61 = arith.mulf %34, %60 : vector<16x16xf32>
    %62 = vector.shape_cast %61 : vector<16x16xf32> to vector<1x16x16xf32>
    %cst_27 = arith.constant dense<0.000000e+00> : vector<1xf32>
    %63 = vector.multi_reduction <add>, %62, %cst_27 [1, 2] : vector<1x16x16xf32> to vector<1xf32>
    %64 = vector.shape_cast %63 : vector<1xf32> to vector<1x1x1xf32>
    %65 = vector.extract %64[0, 0, 0] : f32 from vector<1x1x1xf32>
    %cst_28 = arith.constant 1.600000e+01 : f32
    %66 = arith.mulf %59, %cst_28 : f32
    %67 = arith.divf %65, %66 : f32
    %68 = vector.broadcast %67 : f32 to vector<16x1xf32>
    %69 = arith.mulf %54, %68 : vector<16x1xf32>
    %70 = arith.addf %53, %69 : vector<16x1xf32>
    %71 = vector.broadcast %70 : vector<16x1xf32> to vector<16x16xf32>
    %72 = arith.subf %34, %71 : vector<16x16xf32>
    %cst_29 = arith.constant 0.000000e+00 : f32
    %73 = vector.broadcast %cst_29 : f32 to vector<16x1xf32>
    %74 = vector.extract_strided_slice %35 {offsets = [0, 0], sizes = [16, 1], strides = [1, 1]} : vector<16x2xf32> to vector<16x1xf32>
    %75 = vector.shape_cast %74 : vector<16x1xf32> to vector<1x16x1xf32>
    %cst_30 = arith.constant dense<0.000000e+00> : vector<1xf32>
    %76 = vector.multi_reduction <add>, %75, %cst_30 [1, 2] : vector<1x16x1xf32> to vector<1xf32>
    %77 = vector.shape_cast %76 : vector<1xf32> to vector<1x1x1xf32>
    %78 = vector.extract %77[0, 0, 0] : f32 from vector<1x1x1xf32>
    %cst_31 = arith.constant 1.000000e+00 : f32
    %79 = arith.maximumf %78, %cst_31 : f32
    %80 = arith.mulf %72, %72 : vector<16x16xf32>
    %81 = vector.broadcast %74 : vector<16x1xf32> to vector<16x16xf32>
    %82 = arith.mulf %80, %81 : vector<16x16xf32>
    %83 = vector.shape_cast %82 : vector<16x16xf32> to vector<1x16x16xf32>
    %cst_32 = arith.constant dense<0.000000e+00> : vector<1xf32>
    %84 = vector.multi_reduction <add>, %83, %cst_32 [1, 2] : vector<1x16x16xf32> to vector<1xf32>
    %85 = vector.shape_cast %84 : vector<1xf32> to vector<1x1x1xf32>
    %86 = vector.extract %85[0, 0, 0] : f32 from vector<1x1x1xf32>
    %cst_33 = arith.constant 1.600000e+01 : f32
    %87 = arith.mulf %79, %cst_33 : f32
    %88 = arith.divf %86, %87 : f32
    %cst_34 = arith.constant 9.99999974E-6 : f32
    %89 = arith.addf %88, %cst_34 : f32
    %90 = math.rsqrt %89 : f32
    %91 = vector.broadcast %90 : f32 to vector<16x1xf32>
    %92 = arith.mulf %74, %91 : vector<16x1xf32>
    %93 = arith.addf %73, %92 : vector<16x1xf32>
    %94 = vector.extract_strided_slice %35 {offsets = [0, 1], sizes = [16, 1], strides = [1, 1]} : vector<16x2xf32> to vector<16x1xf32>
    %95 = vector.shape_cast %94 : vector<16x1xf32> to vector<1x16x1xf32>
    %cst_35 = arith.constant dense<0.000000e+00> : vector<1xf32>
    %96 = vector.multi_reduction <add>, %95, %cst_35 [1, 2] : vector<1x16x1xf32> to vector<1xf32>
    %97 = vector.shape_cast %96 : vector<1xf32> to vector<1x1x1xf32>
    %98 = vector.extract %97[0, 0, 0] : f32 from vector<1x1x1xf32>
    %cst_36 = arith.constant 1.000000e+00 : f32
    %99 = arith.maximumf %98, %cst_36 : f32
    %100 = arith.mulf %72, %72 : vector<16x16xf32>
    %101 = vector.broadcast %94 : vector<16x1xf32> to vector<16x16xf32>
    %102 = arith.mulf %100, %101 : vector<16x16xf32>
    %103 = vector.shape_cast %102 : vector<16x16xf32> to vector<1x16x16xf32>
    %cst_37 = arith.constant dense<0.000000e+00> : vector<1xf32>
    %104 = vector.multi_reduction <add>, %103, %cst_37 [1, 2] : vector<1x16x16xf32> to vector<1xf32>
    %105 = vector.shape_cast %104 : vector<1xf32> to vector<1x1x1xf32>
    %106 = vector.extract %105[0, 0, 0] : f32 from vector<1x1x1xf32>
    %cst_38 = arith.constant 1.600000e+01 : f32
    %107 = arith.mulf %99, %cst_38 : f32
    %108 = arith.divf %106, %107 : f32
    %cst_39 = arith.constant 9.99999974E-6 : f32
    %109 = arith.addf %108, %cst_39 : f32
    %110 = math.rsqrt %109 : f32
    %111 = vector.broadcast %110 : f32 to vector<16x1xf32>
    %112 = arith.mulf %94, %111 : vector<16x1xf32>
    %113 = arith.addf %93, %112 : vector<16x1xf32>
    %114 = vector.broadcast %113 : vector<16x1xf32> to vector<16x16xf32>
    %115 = arith.mulf %72, %114 : vector<16x16xf32>
    %c0_40 = arith.constant 0 : index
    %c0_41 = arith.constant 0 : index
    %116 = vector.load %arg8[%c0_40, %c0_41] : memref<1x16xf32, #tpu.memory_space<vmem>>, vector<1x16xf32>
    %117 = vector.broadcast %116 : vector<1x16xf32> to vector<16x16xf32>
    %118 = arith.mulf %115, %117 : vector<16x16xf32>
    %c0_42 = arith.constant 0 : index
    %c0_43 = arith.constant 0 : index
    %119 = vector.load %arg9[%c0_42, %c0_43] : memref<1x16xf32, #tpu.memory_space<vmem>>, vector<1x16xf32>
    %120 = vector.broadcast %119 : vector<1x16xf32> to vector<16x16xf32>
    %121 = arith.addf %118, %120 : vector<16x16xf32>
    %cst_44 = arith.constant 0.000000e+00 : f32
    %122 = vector.broadcast %cst_44 : f32 to vector<16x16xf32>
    %123 = arith.maximumf %121, %122 : vector<16x16xf32>
    %c0_45 = arith.constant 0 : index
    %c0_46 = arith.constant 0 : index
    %124 = vector.load %arg10[%c0_45, %c0_46] : memref<16x16xf32, #tpu.memory_space<vmem>>, vector<16x16xf32>
    tpu.vector_store %arg10[%c0_45, %c0_46], %123 {strides = array<i32>} : memref<16x16xf32, #tpu.memory_space<vmem>>, vector<16x16xf32>,
    return
  }
  func.func @transform_0(%arg0: i32) -> (i32, i32) {
    %c0_i32 = arith.constant 0 : i32
    %c0_i32_0 = arith.constant 0 : i32
    %c0_i32_1 = arith.constant 0 : i32
    return %c0_i32, %c0_i32_0 : i32, i32
  }
  func.func @transform_1(%arg0: i32) -> (i32, i32) {
    %c0_i32 = arith.constant 0 : i32
    %c0_i32_0 = arith.constant 0 : i32
    %c0_i32_1 = arith.constant 0 : i32
    return %c0_i32, %c0_i32_0 : i32, i32
  }
  func.func @transform_2(%arg0: i32) -> (i32, i32) {
    %c0_i32 = arith.constant 0 : i32
    %c0_i32_0 = arith.constant 0 : i32
    %c0_i32_1 = arith.constant 0 : i32
    return %c0_i32, %c0_i32_0 : i32, i32
  }
  func.func @transform_3(%arg0: i32) -> (i32, i32) {
    %c0_i32 = arith.constant 0 : i32
    %c0_i32_0 = arith.constant 0 : i32
    %c0_i32_1 = arith.constant 0 : i32
    return %c0_i32, %c0_i32_0 : i32, i32
  }
  func.func @transform_4(%arg0: i32) -> (i32, i32) {
    %c0_i32 = arith.constant 0 : i32
    %c0_i32_0 = arith.constant 0 : i32
    %c0_i32_1 = arith.constant 0 : i32
    return %c0_i32, %c0_i32_0 : i32, i32
  }
  func.func @transform_5(%arg0: i32) -> (i32, i32) {
    %c0_i32 = arith.constant 0 : i32
    %c0_i32_0 = arith.constant 0 : i32
    %c0_i32_1 = arith.constant 0 : i32
    return %c0_i32, %c0_i32_0 : i32, i32
  }
  func.func @transform_6(%arg0: i32) -> (i32, i32) {
    %c0_i32 = arith.constant 0 : i32
    %c0_i32_0 = arith.constant 0 : i32
    %c0_i32_1 = arith.constant 0 : i32
    return %c0_i32, %c0_i32_0 : i32, i32
  }
  func.func @transform_7(%arg0: i32) -> (i32, i32) {
    %c0_i32 = arith.constant 0 : i32
    %c0_i32_0 = arith.constant 0 : i32
    %c0_i32_1 = arith.constant 0 : i32
    return %c0_i32, %c0_i32_0 : i32, i32
  }
  func.func @transform_8(%arg0: i32) -> (i32, i32) {
    %c0_i32 = arith.constant 0 : i32
    %c0_i32_0 = arith.constant 0 : i32
    %c0_i32_1 = arith.constant 0 : i32
    return %c0_i32, %c0_i32_0 : i32, i32
  }
  func.func @transform_9(%arg0: i32) -> (i32, i32) {
    %c0_i32 = arith.constant 0 : i32
    %c0_i32_0 = arith.constant 0 : i32
    %c0_i32_1 = arith.constant 0 : i32
    return %c0_i32, %c0_i32_0 : i32, i32
  }
}

module attributes {stable_mosaic.version = 11 : i64} {
  func.func @_gat_block_kernel(%arg0: i32, %arg1: memref<16x16xf32, #tpu.memory_space<vmem>>, %arg2: memref<16x16xf32, #tpu.memory_space<vmem>>, %arg3: memref<1x16xf32, #tpu.memory_space<vmem>>, %arg4: memref<1x16xf32, #tpu.memory_space<vmem>>, %arg5: memref<1x16xf32, #tpu.memory_space<vmem>>, %arg6: memref<16x16xbf16, #tpu.memory_space<vmem>>, %arg7: memref<16x2xf32, #tpu.memory_space<vmem>>, %arg8: memref<1x16xf32, #tpu.memory_space<vmem>>, %arg9: memref<1x16xf32, #tpu.memory_space<vmem>>, %arg10: memref<16x16xf32, #tpu.memory_space<vmem>>) attributes {dimension_semantics = [#tpu.dimension_semantics<arbitrary>], iteration_bounds = array<i64: 1>, scalar_prefetch = 0 : i64, scratch_operands = 0 : i64, tpu.core_type = #tpu.core_type<tc>, window_params = [{pipeline_mode = #tpu.pipeline_mode<synchronous>, transform_indices = @transform_0, window_bounds = array<i64: 16, 16>}, {pipeline_mode = #tpu.pipeline_mode<synchronous>, transform_indices = @transform_1, window_bounds = array<i64: 16, 16>}, {pipeline_mode = #tpu.pipeline_mode<synchronous>, transform_indices = @transform_2, window_bounds = array<i64: 1, 16>}, {pipeline_mode = #tpu.pipeline_mode<synchronous>, transform_indices = @transform_3, window_bounds = array<i64: 1, 16>}, {pipeline_mode = #tpu.pipeline_mode<synchronous>, transform_indices = @transform_4, window_bounds = array<i64: 1, 16>}, {pipeline_mode = #tpu.pipeline_mode<synchronous>, transform_indices = @transform_5, window_bounds = array<i64: 16, 16>}, {pipeline_mode = #tpu.pipeline_mode<synchronous>, transform_indices = @transform_6, window_bounds = array<i64: 16, 2>}, {pipeline_mode = #tpu.pipeline_mode<synchronous>, transform_indices = @transform_7, window_bounds = array<i64: 1, 16>}, {pipeline_mode = #tpu.pipeline_mode<synchronous>, transform_indices = @transform_8, window_bounds = array<i64: 1, 16>}, {pipeline_mode = #tpu.pipeline_mode<synchronous>, transform_indices = @transform_9, window_bounds = array<i64: 16, 16>}]} {
    %c0 = arith.constant 0 : index
    %c0_0 = arith.constant 0 : index
    %0 = vector.load %arg1[%c0, %c0_0] : memref<16x16xf32, #tpu.memory_space<vmem>>, vector<16x16xf32>
    %c0_1 = arith.constant 0 : index
    %c0_2 = arith.constant 0 : index
    %1 = vector.load %arg2[%c0_1, %c0_2] : memref<16x16xf32, #tpu.memory_space<vmem>>, vector<16x16xf32>
    %cst = arith.constant dense<0.000000e+00> : vector<16x16xf32>
    %2 = tpu.matmul %0, %1, %cst {dimension_numbers = #tpu.dot_dimension_numbers<[1], [0], [0], [1], [0, 0, 1, 1], [], []>} : vector<16x16xf32>, vector<16x16xf32>, vector<16x16xf32> -> vector<16x16xf32>
    %c0_3 = arith.constant 0 : index
    %c0_4 = arith.constant 0 : index
    %3 = vector.load %arg4[%c0_3, %c0_4] : memref<1x16xf32, #tpu.memory_space<vmem>>, vector<1x16xf32>
    %4 = vector.broadcast %3 : vector<1x16xf32> to vector<16x16xf32>
    %5 = arith.mulf %2, %4 : vector<16x16xf32>
    %cst_5 = arith.constant dense<0.000000e+00> : vector<16xf32>
    %6 = vector.multi_reduction <add>, %5, %cst_5 [1] : vector<16x16xf32> to vector<16xf32>
    %7 = vector.shape_cast %6 : vector<16xf32> to vector<16x1xf32>
    %c0_6 = arith.constant 0 : index
    %c0_7 = arith.constant 0 : index
    %8 = vector.load %arg3[%c0_6, %c0_7] : memref<1x16xf32, #tpu.memory_space<vmem>>, vector<1x16xf32>
    %cst_8 = arith.constant dense<0.000000e+00> : vector<1x16xf32>
    %9 = tpu.matmul %8, %2, %cst_8 {dimension_numbers = #tpu.dot_dimension_numbers<[1], [1], [0], [0], [0, 0, 1, 0], [], []>} : vector<1x16xf32>, vector<16x16xf32>, vector<1x16xf32> -> vector<1x16xf32>
    %10 = vector.broadcast %7 : vector<16x1xf32> to vector<16x16xf32>
    %11 = vector.broadcast %9 : vector<1x16xf32> to vector<16x16xf32>
    %12 = arith.addf %10, %11 : vector<16x16xf32>
    %cst_9 = arith.constant 0.000000e+00 : f32
    %13 = vector.broadcast %cst_9 : f32 to vector<16x16xf32>
    %14 = arith.cmpf ogt, %12, %13 : vector<16x16xf32>
    %cst_10 = arith.constant 2.000000e-01 : f32
    %15 = vector.broadcast %cst_10 : f32 to vector<16x16xf32>
    %16 = arith.mulf %15, %12 : vector<16x16xf32>
    %17 = arith.select %14, %12, %16 : vector<16x16xi1>, vector<16x16xf32>
    %c0_11 = arith.constant 0 : index
    %c0_12 = arith.constant 0 : index
    %18 = vector.load %arg6[%c0_11, %c0_12] : memref<16x16xbf16, #tpu.memory_space<vmem>>, vector<16x16xbf16>
    %19 = arith.extf %18 : vector<16x16xbf16> to vector<16x16xf32>
    %20 = arith.addf %17, %19 : vector<16x16xf32>
    %cst_13 = arith.constant dense<0xFF800000> : vector<16xf32>
    %21 = vector.multi_reduction <maximumf>, %20, %cst_13 [1] : vector<16x16xf32> to vector<16xf32>
    %22 = vector.shape_cast %21 : vector<16xf32> to vector<16x1xf32>
    %23 = vector.broadcast %22 : vector<16x1xf32> to vector<16x16xf32>
    %24 = arith.subf %20, %23 : vector<16x16xf32>
    %25 = math.exp %24 : vector<16x16xf32>
    %cst_14 = arith.constant dense<0.000000e+00> : vector<16xf32>
    %26 = vector.multi_reduction <add>, %25, %cst_14 [1] : vector<16x16xf32> to vector<16xf32>
    %27 = vector.shape_cast %26 : vector<16xf32> to vector<16x1xf32>
    %28 = tpu.reciprocal %27 {approx = true} : vector<16x1xf32> -> vector<16x1xf32>
    %29 = vector.broadcast %28 : vector<16x1xf32> to vector<16x16xf32>
    %30 = arith.mulf %25, %29 : vector<16x16xf32>
    %cst_15 = arith.constant dense<0.000000e+00> : vector<16x16xf32>
    %31 = tpu.matmul %30, %2, %cst_15 {dimension_numbers = #tpu.dot_dimension_numbers<[1], [0], [0], [1], [0, 0, 1, 1], [], []>} : vector<16x16xf32>, vector<16x16xf32>, vector<16x16xf32> -> vector<16x16xf32>
    %c0_16 = arith.constant 0 : index
    %c0_17 = arith.constant 0 : index
    %32 = vector.load %arg5[%c0_16, %c0_17] : memref<1x16xf32, #tpu.memory_space<vmem>>, vector<1x16xf32>
    %33 = vector.broadcast %32 : vector<1x16xf32> to vector<16x16xf32>
    %34 = arith.addf %31, %33 : vector<16x16xf32>
    %c0_18 = arith.constant 0 : index
    %c0_19 = arith.constant 0 : index
    %35 = vector.load %arg7[%c0_18, %c0_19] : memref<16x2xf32, #tpu.memory_space<vmem>>, vector<16x2xf32>
    %cst_20 = arith.constant 0.000000e+00 : f32
    %36 = vector.broadcast %cst_20 : f32 to vector<16x1xf32>
    %37 = vector.extract_strided_slice %35 {offsets = [0, 0], sizes = [16, 1], strides = [1, 1]} : vector<16x2xf32> to vector<16x1xf32>
    %38 = vector.shape_cast %37 : vector<16x1xf32> to vector<1x16x1xf32>
    %cst_21 = arith.constant dense<0.000000e+00> : vector<1xf32>
    %39 = vector.multi_reduction <add>, %38, %cst_21 [1, 2] : vector<1x16x1xf32> to vector<1xf32>
    %40 = vector.shape_cast %39 : vector<1xf32> to vector<1x1x1xf32>
    %41 = vector.extract %40[0, 0, 0] : f32 from vector<1x1x1xf32>
    %cst_22 = arith.constant 1.000000e+00 : f32
    %42 = arith.maximumf %41, %cst_22 : f32
    %43 = vector.broadcast %37 : vector<16x1xf32> to vector<16x16xf32>
    %44 = arith.mulf %34, %43 : vector<16x16xf32>
    %45 = vector.shape_cast %44 : vector<16x16xf32> to vector<1x16x16xf32>
    %cst_23 = arith.constant dense<0.000000e+00> : vector<1xf32>
    %46 = vector.multi_reduction <add>, %45, %cst_23 [1, 2] : vector<1x16x16xf32> to vector<1xf32>
    %47 = vector.shape_cast %46 : vector<1xf32> to vector<1x1x1xf32>
    %48 = vector.extract %47[0, 0, 0] : f32 from vector<1x1x1xf32>
    %cst_24 = arith.constant 1.600000e+01 : f32
    %49 = arith.mulf %42, %cst_24 : f32
    %50 = arith.divf %48, %49 : f32
    %51 = vector.broadcast %50 : f32 to vector<16x1xf32>
    %52 = arith.mulf %37, %51 : vector<16x1xf32>
    %53 = arith.addf %36, %52 : vector<16x1xf32>
    %54 = vector.extract_strided_slice %35 {offsets = [0, 1], sizes = [16, 1], strides = [1, 1]} : vector<16x2xf32> to vector<16x1xf32>
    %55 = vector.shape_cast %54 : vector<16x1xf32> to vector<1x16x1xf32>
    %cst_25 = arith.constant dense<0.000000e+00> : vector<1xf32>
    %56 = vector.multi_reduction <add>, %55, %cst_25 [1, 2] : vector<1x16x1xf32> to vector<1xf32>
    %57 = vector.shape_cast %56 : vector<1xf32> to vector<1x1x1xf32>
    %58 = vector.extract %57[0, 0, 0] : f32 from vector<1x1x1xf32>
    %cst_26 = arith.constant 1.000000e+00 : f32
    %59 = arith.maximumf %58, %cst_26 : f32
    %60 = vector.broadcast %54 : vector<16x1xf32> to vector<16x16xf32>
    %61 = arith.mulf %34, %60 : vector<16x16xf32>
    %62 = vector.shape_cast %61 : vector<16x16xf32> to vector<1x16x16xf32>
    %cst_27 = arith.constant dense<0.000000e+00> : vector<1xf32>
    %63 = vector.multi_reduction <add>, %62, %cst_27 [1, 2] : vector<1x16x16xf32> to vector<1xf32>
    %64 = vector.shape_cast %63 : vector<1xf32> to vector<1x1x1xf32>
    %65 = vector.extract %64[0, 0, 0] : f32 from vector<1x1x1xf32>
    %cst_28 = arith.constant 1.600000e+01 : f32
    %66 = arith.mulf %59, %cst_28 : f32
    %67 = arith.divf %65, %66 : f32
    %68 = vector.broadcast %67 : f32 to vector<16x1xf32>
    %69 = arith.mulf %54, %68 : vector<16x1xf32>
    %70 = arith.addf %53, %69 : vector<16x1xf32>
    %71 = vector.broadcast %70 : vector<16x1xf32> to vector<16x16xf32>
    %72 = arith.subf %34, %71 : vector<16x16xf32>
    %cst_29 = arith.constant 0.000000e+00 : f32
    %73 = vector.broadcast %cst_29 : f32 to vector<16x1xf32>
    %74 = vector.extract_strided_slice %35 {offsets = [0, 0], sizes = [16, 1], strides = [1, 1]} : vector<16x2xf32> to vector<16x1xf32>
    %75 = vector.shape_cast %74 : vector<16x1xf32> to vector<1x16x1xf32>
    %cst_30 = arith.constant dense<0.000000e+00> : vector<1xf32>
    %76 = vector.multi_reduction <add>, %75, %cst_30 [1, 2] : vector<1x16x1xf32> to vector<1xf32>
    %77 = vector.shape_cast %76 : vector<1xf32> to vector<1x1x1xf32>
    %78 = vector.extract %77[0, 0, 0] : f32 from vector<1x1x1xf32>
    %cst_31 = arith.constant 1.000000e+00 : f32
    %79 = arith.maximumf %78, %cst_31 : f32
    %80 = arith.mulf %72, %72 : vector<16x16xf32>
    %81 = vector.broadcast %74 : vector<16x1xf32> to vector<16x16xf32>
    %82 = arith.mulf %80, %81 : vector<16x16xf32>
    %83 = vector.shape_cast %82 : vector<16x16xf32> to vector<1x16x16xf32>
    %cst_32 = arith.constant dense<0.000000e+00> : vector<1xf32>
    %84 = vector.multi_reduction <add>, %83, %cst_32 [1, 2] : vector<1x16x16xf32> to vector<1xf32>
    %85 = vector.shape_cast %84 : vector<1xf32> to vector<1x1x1xf32>
    %86 = vector.extract %85[0, 0, 0] : f32 from vector<1x1x1xf32>
    %cst_33 = arith.constant 1.600000e+01 : f32
    %87 = arith.mulf %79, %cst_33 : f32
    %88 = arith.divf %86, %87 : f32
    %cst_34 = arith.constant 9.99999974E-6 : f32
    %89 = arith.addf %88, %cst_34 : f32
    %90 = math.rsqrt %89 : f32
    %91 = vector.broadcast %90 : f32 to vector<16x1xf32>
    %92 = arith.mulf %74, %91 : vector<16x1xf32>
    %93 = arith.addf %73, %92 : vector<16x1xf32>
    %94 = vector.extract_strided_slice %35 {offsets = [0, 1], sizes = [16, 1], strides = [1, 1]} : vector<16x2xf32> to vector<16x1xf32>
    %95 = vector.shape_cast %94 : vector<16x1xf32> to vector<1x16x1xf32>
    %cst_35 = arith.constant dense<0.000000e+00> : vector<1xf32>
    %96 = vector.multi_reduction <add>, %95, %cst_35 [1, 2] : vector<1x16x1xf32> to vector<1xf32>
    %97 = vector.shape_cast %96 : vector<1xf32> to vector<1x1x1xf32>
    %98 = vector.extract %97[0, 0, 0] : f32 from vector<1x1x1xf32>
    %cst_36 = arith.constant 1.000000e+00 : f32
    %99 = arith.maximumf %98, %cst_36 : f32
    %100 = arith.mulf %72, %72 : vector<16x16xf32>
    %101 = vector.broadcast %94 : vector<16x1xf32> to vector<16x16xf32>
    %102 = arith.mulf %100, %101 : vector<16x16xf32>
    %103 = vector.shape_cast %102 : vector<16x16xf32> to vector<1x16x16xf32>
    %cst_37 = arith.constant dense<0.000000e+00> : vector<1xf32>
    %104 = vector.multi_reduction <add>, %103, %cst_37 [1, 2] : vector<1x16x16xf32> to vector<1xf32>
    %105 = vector.shape_cast %104 : vector<1xf32> to vector<1x1x1xf32>
    %106 = vector.extract %105[0, 0, 0] : f32 from vector<1x1x1xf32>
    %cst_38 = arith.constant 1.600000e+01 : f32
    %107 = arith.mulf %99, %cst_38 : f32
    %108 = arith.divf %106, %107 : f32
    %cst_39 = arith.constant 9.99999974E-6 : f32
    %109 = arith.addf %108, %cst_39 : f32
    %110 = math.rsqrt %109 : f32
    %111 = vector.broadcast %110 : f32 to vector<16x1xf32>
    %112 = arith.mulf %94, %111 : vector<16x1xf32>
    %113 = arith.addf %93, %112 : vector<16x1xf32>
    %114 = vector.broadcast %113 : vector<16x1xf32> to vector<16x16xf32>
    %115 = arith.mulf %72, %114 : vector<16x16xf32>
    %c0_40 = arith.constant 0 : index
    %c0_41 = arith.constant 0 : index
    %116 = vector.load %arg8[%c0_40, %c0_41] : memref<1x16xf32, #tpu.memory_space<vmem>>, vector<1x16xf32>
    %117 = vector.broadcast %116 : vector<1x16xf32> to vector<16x16xf32>
    %118 = arith.mulf %115, %117 : vector<16x16xf32>
    %c0_42 = arith.constant 0 : index
    %c0_43 = arith.constant 0 : index
    %119 = vector.load %arg9[%c0_42, %c0_43] : memref<1x16xf32, #tpu.memory_space<vmem>>, vector<1x16xf32>
    %120 = vector.broadcast %119 : vector<1x16xf32> to vector<16x16xf32>
    %121 = arith.addf %118, %120 : vector<16x16xf32>
    %cst_44 = arith.constant 0.000000e+00 : f32
    %122 = vector.broadcast %cst_44 : f32 to vector<16x16xf32>
    %123 = arith.maximumf %121, %122 : vector<16x16xf32>
    %c0_45 = arith.constant 0 : index
    %c0_46 = arith.constant 0 : index
    %124 = vector.load %arg10[%c0_45, %c0_46] : memref<16x16xf32, #tpu.memory_space<vmem>>, vector<16x16xf32>
    tpu.vector_store %arg10[%c0_45, %c0_46], %123 {strides = array<i32>} : memref<16x16xf32, #tpu.memory_space<vmem>>, vector<16x16xf32>,
    return
  }
  func.func @transform_0(%arg0: i32) -> (i32, i32) {
    %c0_i32 = arith.constant 0 : i32
    %c0_i32_0 = arith.constant 0 : i32
    %c0_i32_1 = arith.constant 0 : i32
    return %c0_i32, %c0_i32_0 : i32, i32
  }
  func.func @transform_1(%arg0: i32) -> (i32, i32) {
    %c0_i32 = arith.constant 0 : i32
    %c0_i32_0 = arith.constant 0 : i32
    %c0_i32_1 = arith.constant 0 : i32
    return %c0_i32, %c0_i32_0 : i32, i32
  }
  func.func @transform_2(%arg0: i32) -> (i32, i32) {
    %c0_i32 = arith.constant 0 : i32
    %c0_i32_0 = arith.constant 0 : i32
    %c0_i32_1 = arith.constant 0 : i32
    return %c0_i32, %c0_i32_0 : i32, i32
  }
  func.func @transform_3(%arg0: i32) -> (i32, i32) {
    %c0_i32 = arith.constant 0 : i32
    %c0_i32_0 = arith.constant 0 : i32
    %c0_i32_1 = arith.constant 0 : i32
    return %c0_i32, %c0_i32_0 : i32, i32
  }
  func.func @transform_4(%arg0: i32) -> (i32, i32) {
    %c0_i32 = arith.constant 0 : i32
    %c0_i32_0 = arith.constant 0 : i32
    %c0_i32_1 = arith.constant 0 : i32
    return %c0_i32, %c0_i32_0 : i32, i32
  }
  func.func @transform_5(%arg0: i32) -> (i32, i32) {
    %c0_i32 = arith.constant 0 : i32
    %c0_i32_0 = arith.constant 0 : i32
    %c0_i32_1 = arith.constant 0 : i32
    return %c0_i32, %c0_i32_0 : i32, i32
  }
  func.func @transform_6(%arg0: i32) -> (i32, i32) {
    %c0_i32 = arith.constant 0 : i32
    %c0_i32_0 = arith.constant 0 : i32
    %c0_i32_1 = arith.constant 0 : i32
    return %c0_i32, %c0_i32_0 : i32, i32
  }
  func.func @transform_7(%arg0: i32) -> (i32, i32) {
    %c0_i32 = arith.constant 0 : i32
    %c0_i32_0 = arith.constant 0 : i32
    %c0_i32_1 = arith.constant 0 : i32
    return %c0_i32, %c0_i32_0 : i32, i32
  }
  func.func @transform_8(%arg0: i32) -> (i32, i32) {
    %c0_i32 = arith.constant 0 : i32
    %c0_i32_0 = arith.constant 0 : i32
    %c0_i32_1 = arith.constant 0 : i32
    return %c0_i32, %c0_i32_0 : i32, i32
  }
  func.func @transform_9(%arg0: i32) -> (i32, i32) {
    %c0_i32 = arith.constant 0 : i32
    %c0_i32_0 = arith.constant 0 : i32
    %c0_i32_1 = arith.constant 0 : i32
    return %c0_i32, %c0_i32_0 : i32, i32
  }
}

module attributes {stable_mosaic.version = 11 : i64} {
  func.func @_gat_block_kernel(%arg0: i32, %arg1: memref<16x16xf32, #tpu.memory_space<vmem>>, %arg2: memref<16x16xf32, #tpu.memory_space<vmem>>, %arg3: memref<1x16xf32, #tpu.memory_space<vmem>>, %arg4: memref<1x16xf32, #tpu.memory_space<vmem>>, %arg5: memref<1x16xf32, #tpu.memory_space<vmem>>, %arg6: memref<16x16xbf16, #tpu.memory_space<vmem>>, %arg7: memref<16x2xf32, #tpu.memory_space<vmem>>, %arg8: memref<1x16xf32, #tpu.memory_space<vmem>>, %arg9: memref<1x16xf32, #tpu.memory_space<vmem>>, %arg10: memref<16x16xf32, #tpu.memory_space<vmem>>) attributes {dimension_semantics = [#tpu.dimension_semantics<arbitrary>], iteration_bounds = array<i64: 1>, scalar_prefetch = 0 : i64, scratch_operands = 0 : i64, tpu.core_type = #tpu.core_type<tc>, window_params = [{pipeline_mode = #tpu.pipeline_mode<synchronous>, transform_indices = @transform_0, window_bounds = array<i64: 16, 16>}, {pipeline_mode = #tpu.pipeline_mode<synchronous>, transform_indices = @transform_1, window_bounds = array<i64: 16, 16>}, {pipeline_mode = #tpu.pipeline_mode<synchronous>, transform_indices = @transform_2, window_bounds = array<i64: 1, 16>}, {pipeline_mode = #tpu.pipeline_mode<synchronous>, transform_indices = @transform_3, window_bounds = array<i64: 1, 16>}, {pipeline_mode = #tpu.pipeline_mode<synchronous>, transform_indices = @transform_4, window_bounds = array<i64: 1, 16>}, {pipeline_mode = #tpu.pipeline_mode<synchronous>, transform_indices = @transform_5, window_bounds = array<i64: 16, 16>}, {pipeline_mode = #tpu.pipeline_mode<synchronous>, transform_indices = @transform_6, window_bounds = array<i64: 16, 2>}, {pipeline_mode = #tpu.pipeline_mode<synchronous>, transform_indices = @transform_7, window_bounds = array<i64: 1, 16>}, {pipeline_mode = #tpu.pipeline_mode<synchronous>, transform_indices = @transform_8, window_bounds = array<i64: 1, 16>}, {pipeline_mode = #tpu.pipeline_mode<synchronous>, transform_indices = @transform_9, window_bounds = array<i64: 16, 16>}]} {
    %c0 = arith.constant 0 : index
    %c0_0 = arith.constant 0 : index
    %0 = vector.load %arg1[%c0, %c0_0] : memref<16x16xf32, #tpu.memory_space<vmem>>, vector<16x16xf32>
    %c0_1 = arith.constant 0 : index
    %c0_2 = arith.constant 0 : index
    %1 = vector.load %arg2[%c0_1, %c0_2] : memref<16x16xf32, #tpu.memory_space<vmem>>, vector<16x16xf32>
    %cst = arith.constant dense<0.000000e+00> : vector<16x16xf32>
    %2 = tpu.matmul %0, %1, %cst {dimension_numbers = #tpu.dot_dimension_numbers<[1], [0], [0], [1], [0, 0, 1, 1], [], []>} : vector<16x16xf32>, vector<16x16xf32>, vector<16x16xf32> -> vector<16x16xf32>
    %c0_3 = arith.constant 0 : index
    %c0_4 = arith.constant 0 : index
    %3 = vector.load %arg4[%c0_3, %c0_4] : memref<1x16xf32, #tpu.memory_space<vmem>>, vector<1x16xf32>
    %4 = vector.broadcast %3 : vector<1x16xf32> to vector<16x16xf32>
    %5 = arith.mulf %2, %4 : vector<16x16xf32>
    %cst_5 = arith.constant dense<0.000000e+00> : vector<16xf32>
    %6 = vector.multi_reduction <add>, %5, %cst_5 [1] : vector<16x16xf32> to vector<16xf32>
    %7 = vector.shape_cast %6 : vector<16xf32> to vector<16x1xf32>
    %c0_6 = arith.constant 0 : index
    %c0_7 = arith.constant 0 : index
    %8 = vector.load %arg3[%c0_6, %c0_7] : memref<1x16xf32, #tpu.memory_space<vmem>>, vector<1x16xf32>
    %cst_8 = arith.constant dense<0.000000e+00> : vector<1x16xf32>
    %9 = tpu.matmul %8, %2, %cst_8 {dimension_numbers = #tpu.dot_dimension_numbers<[1], [1], [0], [0], [0, 0, 1, 0], [], []>} : vector<1x16xf32>, vector<16x16xf32>, vector<1x16xf32> -> vector<1x16xf32>
    %10 = vector.broadcast %7 : vector<16x1xf32> to vector<16x16xf32>
    %11 = vector.broadcast %9 : vector<1x16xf32> to vector<16x16xf32>
    %12 = arith.addf %10, %11 : vector<16x16xf32>
    %cst_9 = arith.constant 0.000000e+00 : f32
    %13 = vector.broadcast %cst_9 : f32 to vector<16x16xf32>
    %14 = arith.cmpf ogt, %12, %13 : vector<16x16xf32>
    %cst_10 = arith.constant 2.000000e-01 : f32
    %15 = vector.broadcast %cst_10 : f32 to vector<16x16xf32>
    %16 = arith.mulf %15, %12 : vector<16x16xf32>
    %17 = arith.select %14, %12, %16 : vector<16x16xi1>, vector<16x16xf32>
    %c0_11 = arith.constant 0 : index
    %c0_12 = arith.constant 0 : index
    %18 = vector.load %arg6[%c0_11, %c0_12] : memref<16x16xbf16, #tpu.memory_space<vmem>>, vector<16x16xbf16>
    %19 = arith.extf %18 : vector<16x16xbf16> to vector<16x16xf32>
    %20 = arith.addf %17, %19 : vector<16x16xf32>
    %cst_13 = arith.constant dense<0xFF800000> : vector<16xf32>
    %21 = vector.multi_reduction <maximumf>, %20, %cst_13 [1] : vector<16x16xf32> to vector<16xf32>
    %22 = vector.shape_cast %21 : vector<16xf32> to vector<16x1xf32>
    %23 = vector.broadcast %22 : vector<16x1xf32> to vector<16x16xf32>
    %24 = arith.subf %20, %23 : vector<16x16xf32>
    %25 = math.exp %24 : vector<16x16xf32>
    %cst_14 = arith.constant dense<0.000000e+00> : vector<16xf32>
    %26 = vector.multi_reduction <add>, %25, %cst_14 [1] : vector<16x16xf32> to vector<16xf32>
    %27 = vector.shape_cast %26 : vector<16xf32> to vector<16x1xf32>
    %28 = tpu.reciprocal %27 {approx = true} : vector<16x1xf32> -> vector<16x1xf32>
    %29 = vector.broadcast %28 : vector<16x1xf32> to vector<16x16xf32>
    %30 = arith.mulf %25, %29 : vector<16x16xf32>
    %cst_15 = arith.constant dense<0.000000e+00> : vector<16x16xf32>
    %31 = tpu.matmul %30, %2, %cst_15 {dimension_numbers = #tpu.dot_dimension_numbers<[1], [0], [0], [1], [0, 0, 1, 1], [], []>} : vector<16x16xf32>, vector<16x16xf32>, vector<16x16xf32> -> vector<16x16xf32>
    %c0_16 = arith.constant 0 : index
    %c0_17 = arith.constant 0 : index
    %32 = vector.load %arg5[%c0_16, %c0_17] : memref<1x16xf32, #tpu.memory_space<vmem>>, vector<1x16xf32>
    %33 = vector.broadcast %32 : vector<1x16xf32> to vector<16x16xf32>
    %34 = arith.addf %31, %33 : vector<16x16xf32>
    %c0_18 = arith.constant 0 : index
    %c0_19 = arith.constant 0 : index
    %35 = vector.load %arg7[%c0_18, %c0_19] : memref<16x2xf32, #tpu.memory_space<vmem>>, vector<16x2xf32>
    %cst_20 = arith.constant 0.000000e+00 : f32
    %36 = vector.broadcast %cst_20 : f32 to vector<16x1xf32>
    %37 = vector.extract_strided_slice %35 {offsets = [0, 0], sizes = [16, 1], strides = [1, 1]} : vector<16x2xf32> to vector<16x1xf32>
    %38 = vector.shape_cast %37 : vector<16x1xf32> to vector<1x16x1xf32>
    %cst_21 = arith.constant dense<0.000000e+00> : vector<1xf32>
    %39 = vector.multi_reduction <add>, %38, %cst_21 [1, 2] : vector<1x16x1xf32> to vector<1xf32>
    %40 = vector.shape_cast %39 : vector<1xf32> to vector<1x1x1xf32>
    %41 = vector.extract %40[0, 0, 0] : f32 from vector<1x1x1xf32>
    %cst_22 = arith.constant 1.000000e+00 : f32
    %42 = arith.maximumf %41, %cst_22 : f32
    %43 = vector.broadcast %37 : vector<16x1xf32> to vector<16x16xf32>
    %44 = arith.mulf %34, %43 : vector<16x16xf32>
    %45 = vector.shape_cast %44 : vector<16x16xf32> to vector<1x16x16xf32>
    %cst_23 = arith.constant dense<0.000000e+00> : vector<1xf32>
    %46 = vector.multi_reduction <add>, %45, %cst_23 [1, 2] : vector<1x16x16xf32> to vector<1xf32>
    %47 = vector.shape_cast %46 : vector<1xf32> to vector<1x1x1xf32>
    %48 = vector.extract %47[0, 0, 0] : f32 from vector<1x1x1xf32>
    %cst_24 = arith.constant 1.600000e+01 : f32
    %49 = arith.mulf %42, %cst_24 : f32
    %50 = arith.divf %48, %49 : f32
    %51 = vector.broadcast %50 : f32 to vector<16x1xf32>
    %52 = arith.mulf %37, %51 : vector<16x1xf32>
    %53 = arith.addf %36, %52 : vector<16x1xf32>
    %54 = vector.extract_strided_slice %35 {offsets = [0, 1], sizes = [16, 1], strides = [1, 1]} : vector<16x2xf32> to vector<16x1xf32>
    %55 = vector.shape_cast %54 : vector<16x1xf32> to vector<1x16x1xf32>
    %cst_25 = arith.constant dense<0.000000e+00> : vector<1xf32>
    %56 = vector.multi_reduction <add>, %55, %cst_25 [1, 2] : vector<1x16x1xf32> to vector<1xf32>
    %57 = vector.shape_cast %56 : vector<1xf32> to vector<1x1x1xf32>
    %58 = vector.extract %57[0, 0, 0] : f32 from vector<1x1x1xf32>
    %cst_26 = arith.constant 1.000000e+00 : f32
    %59 = arith.maximumf %58, %cst_26 : f32
    %60 = vector.broadcast %54 : vector<16x1xf32> to vector<16x16xf32>
    %61 = arith.mulf %34, %60 : vector<16x16xf32>
    %62 = vector.shape_cast %61 : vector<16x16xf32> to vector<1x16x16xf32>
    %cst_27 = arith.constant dense<0.000000e+00> : vector<1xf32>
    %63 = vector.multi_reduction <add>, %62, %cst_27 [1, 2] : vector<1x16x16xf32> to vector<1xf32>
    %64 = vector.shape_cast %63 : vector<1xf32> to vector<1x1x1xf32>
    %65 = vector.extract %64[0, 0, 0] : f32 from vector<1x1x1xf32>
    %cst_28 = arith.constant 1.600000e+01 : f32
    %66 = arith.mulf %59, %cst_28 : f32
    %67 = arith.divf %65, %66 : f32
    %68 = vector.broadcast %67 : f32 to vector<16x1xf32>
    %69 = arith.mulf %54, %68 : vector<16x1xf32>
    %70 = arith.addf %53, %69 : vector<16x1xf32>
    %71 = vector.broadcast %70 : vector<16x1xf32> to vector<16x16xf32>
    %72 = arith.subf %34, %71 : vector<16x16xf32>
    %cst_29 = arith.constant 0.000000e+00 : f32
    %73 = vector.broadcast %cst_29 : f32 to vector<16x1xf32>
    %74 = vector.extract_strided_slice %35 {offsets = [0, 0], sizes = [16, 1], strides = [1, 1]} : vector<16x2xf32> to vector<16x1xf32>
    %75 = vector.shape_cast %74 : vector<16x1xf32> to vector<1x16x1xf32>
    %cst_30 = arith.constant dense<0.000000e+00> : vector<1xf32>
    %76 = vector.multi_reduction <add>, %75, %cst_30 [1, 2] : vector<1x16x1xf32> to vector<1xf32>
    %77 = vector.shape_cast %76 : vector<1xf32> to vector<1x1x1xf32>
    %78 = vector.extract %77[0, 0, 0] : f32 from vector<1x1x1xf32>
    %cst_31 = arith.constant 1.000000e+00 : f32
    %79 = arith.maximumf %78, %cst_31 : f32
    %80 = arith.mulf %72, %72 : vector<16x16xf32>
    %81 = vector.broadcast %74 : vector<16x1xf32> to vector<16x16xf32>
    %82 = arith.mulf %80, %81 : vector<16x16xf32>
    %83 = vector.shape_cast %82 : vector<16x16xf32> to vector<1x16x16xf32>
    %cst_32 = arith.constant dense<0.000000e+00> : vector<1xf32>
    %84 = vector.multi_reduction <add>, %83, %cst_32 [1, 2] : vector<1x16x16xf32> to vector<1xf32>
    %85 = vector.shape_cast %84 : vector<1xf32> to vector<1x1x1xf32>
    %86 = vector.extract %85[0, 0, 0] : f32 from vector<1x1x1xf32>
    %cst_33 = arith.constant 1.600000e+01 : f32
    %87 = arith.mulf %79, %cst_33 : f32
    %88 = arith.divf %86, %87 : f32
    %cst_34 = arith.constant 9.99999974E-6 : f32
    %89 = arith.addf %88, %cst_34 : f32
    %90 = math.rsqrt %89 : f32
    %91 = vector.broadcast %90 : f32 to vector<16x1xf32>
    %92 = arith.mulf %74, %91 : vector<16x1xf32>
    %93 = arith.addf %73, %92 : vector<16x1xf32>
    %94 = vector.extract_strided_slice %35 {offsets = [0, 1], sizes = [16, 1], strides = [1, 1]} : vector<16x2xf32> to vector<16x1xf32>
    %95 = vector.shape_cast %94 : vector<16x1xf32> to vector<1x16x1xf32>
    %cst_35 = arith.constant dense<0.000000e+00> : vector<1xf32>
    %96 = vector.multi_reduction <add>, %95, %cst_35 [1, 2] : vector<1x16x1xf32> to vector<1xf32>
    %97 = vector.shape_cast %96 : vector<1xf32> to vector<1x1x1xf32>
    %98 = vector.extract %97[0, 0, 0] : f32 from vector<1x1x1xf32>
    %cst_36 = arith.constant 1.000000e+00 : f32
    %99 = arith.maximumf %98, %cst_36 : f32
    %100 = arith.mulf %72, %72 : vector<16x16xf32>
    %101 = vector.broadcast %94 : vector<16x1xf32> to vector<16x16xf32>
    %102 = arith.mulf %100, %101 : vector<16x16xf32>
    %103 = vector.shape_cast %102 : vector<16x16xf32> to vector<1x16x16xf32>
    %cst_37 = arith.constant dense<0.000000e+00> : vector<1xf32>
    %104 = vector.multi_reduction <add>, %103, %cst_37 [1, 2] : vector<1x16x16xf32> to vector<1xf32>
    %105 = vector.shape_cast %104 : vector<1xf32> to vector<1x1x1xf32>
    %106 = vector.extract %105[0, 0, 0] : f32 from vector<1x1x1xf32>
    %cst_38 = arith.constant 1.600000e+01 : f32
    %107 = arith.mulf %99, %cst_38 : f32
    %108 = arith.divf %106, %107 : f32
    %cst_39 = arith.constant 9.99999974E-6 : f32
    %109 = arith.addf %108, %cst_39 : f32
    %110 = math.rsqrt %109 : f32
    %111 = vector.broadcast %110 : f32 to vector<16x1xf32>
    %112 = arith.mulf %94, %111 : vector<16x1xf32>
    %113 = arith.addf %93, %112 : vector<16x1xf32>
    %114 = vector.broadcast %113 : vector<16x1xf32> to vector<16x16xf32>
    %115 = arith.mulf %72, %114 : vector<16x16xf32>
    %c0_40 = arith.constant 0 : index
    %c0_41 = arith.constant 0 : index
    %116 = vector.load %arg8[%c0_40, %c0_41] : memref<1x16xf32, #tpu.memory_space<vmem>>, vector<1x16xf32>
    %117 = vector.broadcast %116 : vector<1x16xf32> to vector<16x16xf32>
    %118 = arith.mulf %115, %117 : vector<16x16xf32>
    %c0_42 = arith.constant 0 : index
    %c0_43 = arith.constant 0 : index
    %119 = vector.load %arg9[%c0_42, %c0_43] : memref<1x16xf32, #tpu.memory_space<vmem>>, vector<1x16xf32>
    %120 = vector.broadcast %119 : vector<1x16xf32> to vector<16x16xf32>
    %121 = arith.addf %118, %120 : vector<16x16xf32>
    %c0_44 = arith.constant 0 : index
    %c0_45 = arith.constant 0 : index
    %122 = vector.load %arg10[%c0_44, %c0_45] : memref<16x16xf32, #tpu.memory_space<vmem>>, vector<16x16xf32>
    tpu.vector_store %arg10[%c0_44, %c0_45], %121 {strides = array<i32>} : memref<16x16xf32, #tpu.memory_space<vmem>>, vector<16x16xf32>,
    return
  }
  func.func @transform_0(%arg0: i32) -> (i32, i32) {
    %c0_i32 = arith.constant 0 : i32
    %c0_i32_0 = arith.constant 0 : i32
    %c0_i32_1 = arith.constant 0 : i32
    return %c0_i32, %c0_i32_0 : i32, i32
  }
  func.func @transform_1(%arg0: i32) -> (i32, i32) {
    %c0_i32 = arith.constant 0 : i32
    %c0_i32_0 = arith.constant 0 : i32
    %c0_i32_1 = arith.constant 0 : i32
    return %c0_i32, %c0_i32_0 : i32, i32
  }
  func.func @transform_2(%arg0: i32) -> (i32, i32) {
    %c0_i32 = arith.constant 0 : i32
    %c0_i32_0 = arith.constant 0 : i32
    %c0_i32_1 = arith.constant 0 : i32
    return %c0_i32, %c0_i32_0 : i32, i32
  }
  func.func @transform_3(%arg0: i32) -> (i32, i32) {
    %c0_i32 = arith.constant 0 : i32
    %c0_i32_0 = arith.constant 0 : i32
    %c0_i32_1 = arith.constant 0 : i32
    return %c0_i32, %c0_i32_0 : i32, i32
  }
  func.func @transform_4(%arg0: i32) -> (i32, i32) {
    %c0_i32 = arith.constant 0 : i32
    %c0_i32_0 = arith.constant 0 : i32
    %c0_i32_1 = arith.constant 0 : i32
    return %c0_i32, %c0_i32_0 : i32, i32
  }
  func.func @transform_5(%arg0: i32) -> (i32, i32) {
    %c0_i32 = arith.constant 0 : i32
    %c0_i32_0 = arith.constant 0 : i32
    %c0_i32_1 = arith.constant 0 : i32
    return %c0_i32, %c0_i32_0 : i32, i32
  }
  func.func @transform_6(%arg0: i32) -> (i32, i32) {
    %c0_i32 = arith.constant 0 : i32
    %c0_i32_0 = arith.constant 0 : i32
    %c0_i32_1 = arith.constant 0 : i32
    return %c0_i32, %c0_i32_0 : i32, i32
  }
  func.func @transform_7(%arg0: i32) -> (i32, i32) {
    %c0_i32 = arith.constant 0 : i32
    %c0_i32_0 = arith.constant 0 : i32
    %c0_i32_1 = arith.constant 0 : i32
    return %c0_i32, %c0_i32_0 : i32, i32
  }
  func.func @transform_8(%arg0: i32) -> (i32, i32) {
    %c0_i32 = arith.constant 0 : i32
    %c0_i32_0 = arith.constant 0 : i32
    %c0_i32_1 = arith.constant 0 : i32
    return %c0_i32, %c0_i32_0 : i32, i32
  }
  func.func @transform_9(%arg0: i32) -> (i32, i32) {
    %c0_i32 = arith.constant 0 : i32
    %c0_i32_0 = arith.constant 0 : i32
    %c0_i32_1 = arith.constant 0 : i32
    return %c0_i32, %c0_i32_0 : i32, i32
  }
}

module attributes {stable_mosaic.version = 11 : i64} {
  func.func @_mlp_head_kernel(%arg0: i32, %arg1: memref<2x64xf32, #tpu.memory_space<vmem>>, %arg2: memref<64x16xf32, #tpu.memory_space<vmem>>, %arg3: memref<1x16xf32, #tpu.memory_space<vmem>>, %arg4: memref<16x16xf32, #tpu.memory_space<vmem>>, %arg5: memref<1x16xf32, #tpu.memory_space<vmem>>, %arg6: memref<16x4xf32, #tpu.memory_space<vmem>>, %arg7: memref<1x4xf32, #tpu.memory_space<vmem>>, %arg8: memref<2x16xf32, #tpu.memory_space<vmem>>, %arg9: memref<2x4xf32, #tpu.memory_space<vmem>>) attributes {dimension_semantics = [#tpu.dimension_semantics<arbitrary>], iteration_bounds = array<i64: 1>, scalar_prefetch = 0 : i64, scratch_operands = 0 : i64, tpu.core_type = #tpu.core_type<tc>, window_params = [{pipeline_mode = #tpu.pipeline_mode<synchronous>, transform_indices = @transform_0, window_bounds = array<i64: 2, 64>}, {pipeline_mode = #tpu.pipeline_mode<synchronous>, transform_indices = @transform_1, window_bounds = array<i64: 64, 16>}, {pipeline_mode = #tpu.pipeline_mode<synchronous>, transform_indices = @transform_2, window_bounds = array<i64: 1, 16>}, {pipeline_mode = #tpu.pipeline_mode<synchronous>, transform_indices = @transform_3, window_bounds = array<i64: 16, 16>}, {pipeline_mode = #tpu.pipeline_mode<synchronous>, transform_indices = @transform_4, window_bounds = array<i64: 1, 16>}, {pipeline_mode = #tpu.pipeline_mode<synchronous>, transform_indices = @transform_5, window_bounds = array<i64: 16, 4>}, {pipeline_mode = #tpu.pipeline_mode<synchronous>, transform_indices = @transform_6, window_bounds = array<i64: 1, 4>}, {pipeline_mode = #tpu.pipeline_mode<synchronous>, transform_indices = @transform_7, window_bounds = array<i64: 2, 16>}, {pipeline_mode = #tpu.pipeline_mode<synchronous>, transform_indices = @transform_8, window_bounds = array<i64: 2, 4>}]} {
    %c0 = arith.constant 0 : index
    %c0_0 = arith.constant 0 : index
    %0 = vector.load %arg1[%c0, %c0_0] : memref<2x64xf32, #tpu.memory_space<vmem>>, vector<2x64xf32>
    %c0_1 = arith.constant 0 : index
    %c0_2 = arith.constant 0 : index
    %1 = vector.load %arg2[%c0_1, %c0_2] : memref<64x16xf32, #tpu.memory_space<vmem>>, vector<64x16xf32>
    %cst = arith.constant dense<0.000000e+00> : vector<2x16xf32>
    %2 = tpu.matmul %0, %1, %cst {dimension_numbers = #tpu.dot_dimension_numbers<[1], [0], [0], [1], [0, 0, 1, 1], [], []>} : vector<2x64xf32>, vector<64x16xf32>, vector<2x16xf32> -> vector<2x16xf32>
    %c0_3 = arith.constant 0 : index
    %c0_4 = arith.constant 0 : index
    %3 = vector.load %arg3[%c0_3, %c0_4] : memref<1x16xf32, #tpu.memory_space<vmem>>, vector<1x16xf32>
    %4 = vector.broadcast %3 : vector<1x16xf32> to vector<2x16xf32>
    %5 = arith.addf %2, %4 : vector<2x16xf32>
    %cst_5 = arith.constant 0.000000e+00 : f32
    %6 = vector.broadcast %cst_5 : f32 to vector<2x16xf32>
    %7 = arith.maximumf %5, %6 : vector<2x16xf32>
    %c0_6 = arith.constant 0 : index
    %c0_7 = arith.constant 0 : index
    %8 = vector.load %arg4[%c0_6, %c0_7] : memref<16x16xf32, #tpu.memory_space<vmem>>, vector<16x16xf32>
    %cst_8 = arith.constant dense<0.000000e+00> : vector<2x16xf32>
    %9 = tpu.matmul %7, %8, %cst_8 {dimension_numbers = #tpu.dot_dimension_numbers<[1], [0], [0], [1], [0, 0, 1, 1], [], []>} : vector<2x16xf32>, vector<16x16xf32>, vector<2x16xf32> -> vector<2x16xf32>
    %c0_9 = arith.constant 0 : index
    %c0_10 = arith.constant 0 : index
    %10 = vector.load %arg5[%c0_9, %c0_10] : memref<1x16xf32, #tpu.memory_space<vmem>>, vector<1x16xf32>
    %11 = vector.broadcast %10 : vector<1x16xf32> to vector<2x16xf32>
    %12 = arith.addf %9, %11 : vector<2x16xf32>
    %cst_11 = arith.constant 0.000000e+00 : f32
    %13 = vector.broadcast %cst_11 : f32 to vector<2x16xf32>
    %14 = arith.maximumf %12, %13 : vector<2x16xf32>
    %c0_12 = arith.constant 0 : index
    %c0_13 = arith.constant 0 : index
    %15 = vector.load %arg6[%c0_12, %c0_13] : memref<16x4xf32, #tpu.memory_space<vmem>>, vector<16x4xf32>
    %cst_14 = arith.constant dense<0.000000e+00> : vector<2x4xf32>
    %16 = tpu.matmul %14, %15, %cst_14 {dimension_numbers = #tpu.dot_dimension_numbers<[1], [0], [0], [1], [0, 0, 1, 1], [], []>} : vector<2x16xf32>, vector<16x4xf32>, vector<2x4xf32> -> vector<2x4xf32>
    %c0_15 = arith.constant 0 : index
    %c0_16 = arith.constant 0 : index
    %17 = vector.load %arg7[%c0_15, %c0_16] : memref<1x4xf32, #tpu.memory_space<vmem>>, vector<1x4xf32>
    %18 = vector.broadcast %17 : vector<1x4xf32> to vector<2x4xf32>
    %19 = arith.addf %16, %18 : vector<2x4xf32>
    %cst_17 = arith.constant 0.000000e+00 : f32
    %20 = vector.broadcast %cst_17 : f32 to vector<2x4xf32>
    %21 = arith.subf %20, %19 : vector<2x4xf32>
    %22 = math.exp %21 : vector<2x4xf32>
    %cst_18 = arith.constant 1.000000e+00 : f32
    %23 = vector.broadcast %cst_18 : f32 to vector<2x4xf32>
    %24 = arith.addf %23, %22 : vector<2x4xf32>
    %cst_19 = arith.constant 1.000000e+00 : f32
    %25 = vector.broadcast %cst_19 : f32 to vector<2x4xf32>
    %26 = arith.divf %25, %24 : vector<2x4xf32>
    %c0_20 = arith.constant 0 : index
    %c0_21 = arith.constant 0 : index
    %27 = vector.load %arg8[%c0_20, %c0_21] : memref<2x16xf32, #tpu.memory_space<vmem>>, vector<2x16xf32>
    tpu.vector_store %arg8[%c0_20, %c0_21], %14 {strides = array<i32>} : memref<2x16xf32, #tpu.memory_space<vmem>>, vector<2x16xf32>,
    %c0_22 = arith.constant 0 : index
    %c0_23 = arith.constant 0 : index
    %28 = vector.load %arg9[%c0_22, %c0_23] : memref<2x4xf32, #tpu.memory_space<vmem>>, vector<2x4xf32>
    tpu.vector_store %arg9[%c0_22, %c0_23], %26 {strides = array<i32>} : memref<2x4xf32, #tpu.memory_space<vmem>>, vector<2x4xf32>,
    return
  }
  func.func @transform_0(%arg0: i32) -> (i32, i32) {
    %c0_i32 = arith.constant 0 : i32
    %c0_i32_0 = arith.constant 0 : i32
    %c0_i32_1 = arith.constant 0 : i32
    return %c0_i32, %c0_i32_0 : i32, i32
  }
  func.func @transform_1(%arg0: i32) -> (i32, i32) {
    %c0_i32 = arith.constant 0 : i32
    %c0_i32_0 = arith.constant 0 : i32
    %c0_i32_1 = arith.constant 0 : i32
    return %c0_i32, %c0_i32_0 : i32, i32
  }
  func.func @transform_2(%arg0: i32) -> (i32, i32) {
    %c0_i32 = arith.constant 0 : i32
    %c0_i32_0 = arith.constant 0 : i32
    %c0_i32_1 = arith.constant 0 : i32
    return %c0_i32, %c0_i32_0 : i32, i32
  }
  func.func @transform_3(%arg0: i32) -> (i32, i32) {
    %c0_i32 = arith.constant 0 : i32
    %c0_i32_0 = arith.constant 0 : i32
    %c0_i32_1 = arith.constant 0 : i32
    return %c0_i32, %c0_i32_0 : i32, i32
  }
  func.func @transform_4(%arg0: i32) -> (i32, i32) {
    %c0_i32 = arith.constant 0 : i32
    %c0_i32_0 = arith.constant 0 : i32
    %c0_i32_1 = arith.constant 0 : i32
    return %c0_i32, %c0_i32_0 : i32, i32
  }
  func.func @transform_5(%arg0: i32) -> (i32, i32) {
    %c0_i32 = arith.constant 0 : i32
    %c0_i32_0 = arith.constant 0 : i32
    %c0_i32_1 = arith.constant 0 : i32
    return %c0_i32, %c0_i32_0 : i32, i32
  }
  func.func @transform_6(%arg0: i32) -> (i32, i32) {
    %c0_i32 = arith.constant 0 : i32
    %c0_i32_0 = arith.constant 0 : i32
    %c0_i32_1 = arith.constant 0 : i32
    return %c0_i32, %c0_i32_0 : i32, i32
  }
  func.func @transform_7(%arg0: i32) -> (i32, i32) {
    %c0_i32 = arith.constant 0 : i32
    %c0_i32_0 = arith.constant 0 : i32
    %c0_i32_1 = arith.constant 0 : i32
    return %c0_i32, %c0_i32_0 : i32, i32
  }
  func.func @transform_8(%arg0: i32) -> (i32, i32) {
    %c0_i32 = arith.constant 0 : i32
    %c0_i32_0 = arith.constant 0 : i32
    %c0_i32_1 = arith.constant 0 : i32
    return %c0_i32, %c0_i32_0 : i32, i32
  }
}

</mosaic_0001>

<llo_original>
// kernel: gat_model_mll_forward.25
$region0: #{gat_model_mll_forward.25}
  #allocation0 [shape = 'u32[]', space=smem, size = 0x4, offset = 0x4, fixed_abs, tag = 'smem constant byte address 0x4 - core index']
  #allocation1 [shape = 'u32[144,128]{1,0:T(1,128)}', space=vmem, size = 0x12000, scoped, tag = 'internal scratch']
  %s0 = inlined_call_operand.vmem [shape: bf16[2,10,256], index: 0, kind: input, shape index: {}]
  %s1 = inlined_call_operand.vmem [shape: bf16[3,256,64], index: 1, kind: input, shape index: {}]
  %s2 = inlined_call_operand.vmem [shape: f32[1,64], index: 2, kind: input, shape index: {}]
  %s3 = inlined_call_operand.vmem [shape: f32[2,8,64], index: 3, kind: output, shape index: {}]
  %s4 = sld [smem:[#allocation0]]
  $region45: #{gat_model_mll_forward.25} parent=0
    _
  %s6 = ssub.s32 1, %s4
  %s7 = scalar_select 0, %s6, %s4
  loop: start=0, step=1, limit=4
  $region2: #{gat_model_mll_forward.25} parent=0 // loop_pre_header
    _
  $region3: #{gat_model_mll_forward.25} parent=0 // loop_header
    %s9 = sphi 0, %s13
    %p10 = scmp.ge.s32.totalorder %s9, 4
    %s16 = sphi 0, %s28
    %s17 = sphi 0, %s24
    %s18 = sphi 0, %s16
    %s19 = sphi 0, %s17
    %s20 = sphi 0, %s18
    %s21 = sphi 0, %s19
    %s31 = sphi 0, %s33
    %s34 = sphi 0, %s31
    %s35 = sphi 0, %s34
    %s51 = sphi 0, %s35
    %s57 = sphi 0, %s59
    %s60 = sphi 0, %s57
    %s61 = sphi 0, %s60
    %s77 = sphi 0, %s61
    %s83 = sphi 0, %s85
    %s86 = sphi 0, %s83
    %s87 = sphi 0, %s86
    %s103 = sphi 0, %s87
    %s111 = sphi 0, %s113
    %s114 = sphi 0, %s111
    %s115 = sphi 0, %s114
    %s131 = sphi 0, %s115
  $region4: #{gat_model_mll_forward.25} parent=0 // loop_header_branch
    %12 = sbr.rel (%p10) target = $region8
  $region5: #{gat_model_mll_forward.25} parent=0 // loop_body
    %s14 = ssub.s32 %s9, 1
    %s15 = ssub.s32 %s9, 2
    %s22 = sadd.s32 1, %s17
    %p23 = scmp.ge.s32.totalorder %s22, 1
    %s24 = scalar_select %p23, 0, %s22
    %s25 = sadd.s32 1, %s16
    %s26 = scalar_select %p23, %s25, %s16
    %p27 = scmp.ge.s32.totalorder %s26, 2
    %s28 = scalar_select %p27, 0, %s26
    %s29 = ssub.s32 %s16, %s28
    %p30 = scmp.eq.s32.totalorder %s29, 0
    %s32 = sadd.s32 %s31, 1
    %s33 = scalar_select %p30, %s31, %s32
    %p36 = pneg %p30
    %p37 = scmp.eq.s32.totalorder %s9, 1
    %p38 = por %p36, %p37
    %p39 = scmp.ne.s32.totalorder %s31, %s34
    %p40 = scmp.eq.s32.totalorder %s9, 0
    %p41 = por %p39, %p40
    %p42 = scmp.ne.s32.totalorder %s31, %s34
    %p43 = scmp.eq.s32.totalorder %s14, 1
    %p44 = por %p42, %p43
    %p45 = scmp.ne.s32.totalorder %s34, %s35
    %p46 = scmp.eq.s32.totalorder %s14, 0
    %p47 = por %p45, %p46
    %p48 = scmp.ne.s32.totalorder %s34, %s35
    %p49 = scmp.eq.s32.totalorder %s15, 1
    %p50 = por %p48, %p49
    %p52 = scmp.ne.s32.totalorder %s35, %s51
    %p53 = scmp.eq.s32.totalorder %s15, 0
    %p54 = por %p52, %p53
    %s55 = ssub.s32 %s17, %s24
    %p56 = scmp.eq.s32.totalorder %s55, 0
    %s58 = sadd.s32 %s57, 1
    %s59 = scalar_select %p56, %s57, %s58
    %p62 = pneg %p56
    %p63 = scmp.eq.s32.totalorder %s9, 1
    %p64 = por %p62, %p63
    %p65 = scmp.ne.s32.totalorder %s57, %s60
    %p66 = scmp.eq.s32.totalorder %s9, 0
    %p67 = por %p65, %p66
    %p68 = scmp.ne.s32.totalorder %s57, %s60
    %p69 = scmp.eq.s32.totalorder %s14, 1
    %p70 = por %p68, %p69
    %p71 = scmp.ne.s32.totalorder %s60, %s61
    %p72 = scmp.eq.s32.totalorder %s14, 0
    %p73 = por %p71, %p72
    %p74 = scmp.ne.s32.totalorder %s60, %s61
    %p75 = scmp.eq.s32.totalorder %s15, 1
    %p76 = por %p74, %p75
    %p78 = scmp.ne.s32.totalorder %s61, %s77
    %p79 = scmp.eq.s32.totalorder %s15, 0
    %p80 = por %p78, %p79
    %s81 = ssub.s32 %s17, %s24
    %p82 = scmp.eq.s32.totalorder %s81, 0
    %s84 = sadd.s32 %s83, 1
    %s85 = scalar_select %p82, %s83, %s84
    %p88 = pneg %p82
    %p89 = scmp.eq.s32.totalorder %s9, 1
    %p90 = por %p88, %p89
    %p91 = scmp.ne.s32.totalorder %s83, %s86
    %p92 = scmp.eq.s32.totalorder %s9, 0
    %p93 = por %p91, %p92
    %p94 = scmp.ne.s32.totalorder %s83, %s86
    %p95 = scmp.eq.s32.totalorder %s14, 1
    %p96 = por %p94, %p95
    %p97 = scmp.ne.s32.totalorder %s86, %s87
    %p98 = scmp.eq.s32.totalorder %s14, 0
    %p99 = por %p97, %p98
    %p100 = scmp.ne.s32.totalorder %s86, %s87
    %p101 = scmp.eq.s32.totalorder %s15, 1
    %p102 = por %p100, %p101
    %p104 = scmp.ne.s32.totalorder %s87, %s103
    %p105 = scmp.eq.s32.totalorder %s15, 0
    %p106 = por %p104, %p105
    %s107 = ssub.s32 %s16, %s28
    %s108 = ssub.s32 %s17, %s24
    %s109 = sor.u32 %s107, %s108
    %p110 = scmp.eq.s32.totalorder %s109, 0
    %s112 = sadd.s32 %s111, 1
    %s113 = scalar_select %p110, %s111, %s112
    %p116 = pneg %p110
    %p117 = scmp.eq.s32.totalorder %s9, 1
    %p118 = por %p116, %p117
    %p119 = scmp.ne.s32.totalorder %s111, %s114
    %p120 = scmp.eq.s32.totalorder %s9, 0
    %p121 = por %p119, %p120
    %p122 = scmp.ne.s32.totalorder %s111, %s114
    %p123 = scmp.eq.s32.totalorder %s14, 1
    %p124 = por %p122, %p123
    %p125 = scmp.ne.s32.totalorder %s114, %s115
    %p126 = scmp.eq.s32.totalorder %s14, 0
    %p127 = por %p125, %p126
    %p128 = scmp.ne.s32.totalorder %s114, %s115
    %p129 = scmp.eq.s32.totalorder %s15, 1
    %p130 = por %p128, %p129
    %p132 = scmp.ne.s32.totalorder %s115, %s131
    %p133 = scmp.eq.s32.totalorder %s15, 0
    %p134 = por %p132, %p133
    %p135 = scmp.le.s32.totalorder 1, %s9
    %p136 = scmp.lt.s32.totalorder %s9, 3
    %p137 = pnand %p135, %p136
    %p138 = pneg %p137
    // Predicated region
    $region9: #{gat_model_mll_forward.25} parent=5 // pred_check
      _
    $region10: #{gat_model_mll_forward.25} parent=5 // pred_check_branch
      %140 = sbr.rel (%p137) target = $region12
    $region11: #{gat_model_mll_forward.25} parent=5 // pred_region
      %s141 = ssub.s32 %s9, 1
      // Predicated region
      $region13: #{gat_model_mll_forward.25} parent=11 // pred_check
        %p142 = pneg %p73
      $region14: #{gat_model_mll_forward.25} parent=11 // pred_check_branch
        %144 = sbr.rel (%p142) target = $region16
      $region15: #{gat_model_mll_forward.25} parent=11 // pred_region
        %p145 = scmp.lt.s32.totalorder %s19, 0
        %s146 = scalar_select %p145, %s19, 0
        %s147 = smul.addr %s146, 4
        %s148 = scalar_lea.vmem %s1, %s147
      $region16: #{gat_model_mll_forward.25} parent=11 // pred_fallthru
        _
      // Predicated region
      $region17: #{gat_model_mll_forward.25} parent=11 // pred_check
        %p149 = pneg %p99
      $region18: #{gat_model_mll_forward.25} parent=11 // pred_check_branch
        %151 = sbr.rel (%p149) target = $region20
      $region19: #{gat_model_mll_forward.25} parent=11 // pred_region
        %p152 = scmp.lt.s32.totalorder %s19, 0
        %s153 = scalar_select %p152, %s19, 0
        %s154 = scalar_lea.vmem %s2, %s153
      $region20: #{gat_model_mll_forward.25} parent=11 // pred_fallthru
        _
    $region12: #{gat_model_mll_forward.25} parent=5 // pred_fallthru
      _
    %p155 = scmp.lt.s32.totalorder %s9, 2
    // Predicated region
    $region21: #{gat_model_mll_forward.25} parent=5 // pred_check
      %p156 = pneg %p155
    $region22: #{gat_model_mll_forward.25} parent=5 // pred_check_branch
      %158 = sbr.rel (%p156) target = $region24
    $region23: #{gat_model_mll_forward.25} parent=5 // pred_region
      // Predicated region
      $region25: #{gat_model_mll_forward.25} parent=23 // pred_check
        %p159 = pneg %p41
      $region26: #{gat_model_mll_forward.25} parent=23 // pred_check_branch
        %161 = sbr.rel (%p159) target = $region28
      $region27: #{gat_model_mll_forward.25} parent=23 // pred_region
        %p162 = scmp.lt.s32.totalorder %s16, 1
        %s163 = scalar_select %p162, %s16, 1
        %s164 = smul.addr %s163, 4
        %s165 = smul.addr %s164, 4
        %s166 = scalar_lea.vmem %s0, %s165
      $region28: #{gat_model_mll_forward.25} parent=23 // pred_fallthru
        _
    $region24: #{gat_model_mll_forward.25} parent=5 // pred_fallthru
      _
    %p167 = scmp.le.s32.totalorder 1, %s9
    %p168 = scmp.lt.s32.totalorder %s9, 3
    %p169 = pnand %p167, %p168
    %p170 = pneg %p169
    // Predicated region
    $region29: #{gat_model_mll_forward.25} parent=5 // pred_check
      _
    $region30: #{gat_model_mll_forward.25} parent=5 // pred_check_branch
      %172 = sbr.rel (%p169) target = $region32
    $region31: #{gat_model_mll_forward.25} parent=5 // pred_region
      %s173 = ssub.s32 %s9, 1
      %p174 = scmp.lt.s32.totalorder %s18, 1
      %s175 = scalar_select %p174, %s18, 1
      %s176 = smul.addr %s175, 4
      %s177 = smul.addr %s176, 4
      %s178 = scalar_lea.vmem %s0, %s177
      %p179 = pneg %p47
      %p180 = pneg %p44
      %p181 = scmp.lt.s32.totalorder %s19, 0
      %s182 = scalar_select %p181, %s19, 0
      %s183 = smul.addr %s182, 4
      %s184 = scalar_lea.vmem %s1, %s183
      %p185 = pneg %p73
      %p186 = pneg %p70
      %p187 = scmp.lt.s32.totalorder %s19, 0
      %s188 = scalar_select %p187, %s19, 0
      %s189 = scalar_lea.vmem %s2, %s188
      %p190 = pneg %p99
      %p191 = pneg %p96
      %p192 = pneg %p127
      %p193 = pneg %p124
      %p194 = scmp.lt.s32.totalorder %s18, 1
      %s195 = scalar_select %p194, %s18, 1
      %p196 = scmp.lt.s32.totalorder %s19, 0
      %s197 = scalar_select %p196, %s19, 0
      %s198 = sadd.s32 %s197, %s195
      %s199 = smul.addr %s198, 8
      %s200 = scalar_lea.vmem %s3, %s199
      %p201 = scmp.lt.s32.totalorder %s18, 1
      %s202 = scalar_select %p201, %s18, 1
      %s203 = smul.addr %s202, 4
      %s204 = smul.addr %s203, 4
      %s205 = scalar_lea.vmem %s0, %s204
      %p206 = scmp.lt.s32.totalorder %s19, 0
      %s207 = scalar_select %p206, %s19, 0
      %s208 = smul.addr %s207, 4
      %s209 = scalar_lea.vmem %s1, %s208
      %p210 = scmp.lt.s32.totalorder %s19, 0
      %s211 = scalar_select %p210, %s19, 0
      %s212 = scalar_lea.vmem %s2, %s211
      %p213 = scmp.lt.s32.totalorder %s18, 1
      %s214 = scalar_select %p213, %s18, 1
      %p215 = scmp.lt.s32.totalorder %s19, 0
      %s216 = scalar_select %p215, %s19, 0
      %s217 = sadd.s32 %s216, %s214
      %s218 = smul.addr %s217, 8
      %s219 = scalar_lea.vmem %s3, %s218
      %v221 = vld [vmem:[%s205] sm:$0xff]
      %v222 = vld [vmem:[%s209] sm:$0xf]
      %v223 = vld [vmem:[%s209 + $0x4] sm:$0xf]
      %v224 = vld [vmem:[%s209 + $0x8] sm:$0xf]
      %v225 = vld [vmem:[%s209 + $0xc] sm:$0xf]
      %v226 = vld [vmem:[%s209 + $0x10] sm:$0xf]
      %v227 = vld [vmem:[%s209 + $0x14] sm:$0xf]
      %v228 = vld [vmem:[%s209 + $0x18] sm:$0xf]
      %v229 = vld [vmem:[%s209 + $0x1c] sm:$0xf]
      %v230 = vld [vmem:[%s209 + $0x20] sm:$0xf]
      %v231 = vld [vmem:[%s209 + $0x24] sm:$0xf]
      %v232 = vld [vmem:[%s209 + $0x28] sm:$0xf]
      %v233 = vld [vmem:[%s209 + $0x2c] sm:$0xf]
      %v234 = vld [vmem:[%s209 + $0x30] sm:$0xf]
      %v235 = vld [vmem:[%s209 + $0x34] sm:$0xf]
      %v236 = vld [vmem:[%s209 + $0x38] sm:$0xf]
      %v237 = vld [vmem:[%s209 + $0x3c] sm:$0xf]
      %v238 = vld [vmem:[%s209 + $0x40] sm:$0xf]
      %v239 = vld [vmem:[%s209 + $0x44] sm:$0xf]
      %v240 = vld [vmem:[%s209 + $0x48] sm:$0xf]
      %v241 = vld [vmem:[%s209 + $0x4c] sm:$0xf]
      %v242 = vld [vmem:[%s209 + $0x50] sm:$0xf]
      %v243 = vld [vmem:[%s209 + $0x54] sm:$0xf]
      %v244 = vld [vmem:[%s209 + $0x58] sm:$0xf]
      %v245 = vld [vmem:[%s209 + $0x5c] sm:$0xf]
      %v246 = vld [vmem:[%s209 + $0x60] sm:$0xf]
      %v247 = vld [vmem:[%s209 + $0x64] sm:$0xf]
      %v248 = vld [vmem:[%s209 + $0x68] sm:$0xf]
      %v249 = vld [vmem:[%s209 + $0x6c] sm:$0xf]
      %v250 = vld [vmem:[%s209 + $0x70] sm:$0xf]
      %v251 = vld [vmem:[%s209 + $0x74] sm:$0xf]
      %v252 = vld [vmem:[%s209 + $0x78] sm:$0xf]
      %v253 = vld [vmem:[%s209 + $0x7c] sm:$0xf]
      %v254 = vld [vmem:[%s205 + $0x8] sm:$0x11]
      %s255 = scalar_lea.vmem %s209, 128
      %v256 = vld [vmem:[%s255] sm:$0xf]
      %v257 = vld [vmem:[%s255 + $0x4] sm:$0xf]
      %v258 = vld [vmem:[%s255 + $0x8] sm:$0xf]
      %v259 = vld [vmem:[%s255 + $0xc] sm:$0xf]
      %v260 = vld [vmem:[%s255 + $0x10] sm:$0xf]
      %v261 = vld [vmem:[%s255 + $0x14] sm:$0xf]
      %v262 = vld [vmem:[%s255 + $0x18] sm:$0xf]
      %v263 = vld [vmem:[%s255 + $0x1c] sm:$0xf]
      %v264 = vld [vmem:[%s255 + $0x20] sm:$0xf]
      %v265 = vld [vmem:[%s255 + $0x24] sm:$0xf]
      %v266 = vld [vmem:[%s255 + $0x28] sm:$0xf]
      %v267 = vld [vmem:[%s255 + $0x2c] sm:$0xf]
      %v268 = vld [vmem:[%s255 + $0x30] sm:$0xf]
      %v269 = vld [vmem:[%s255 + $0x34] sm:$0xf]
      %v270 = vld [vmem:[%s255 + $0x38] sm:$0xf]
      %v271 = vld [vmem:[%s255 + $0x3c] sm:$0xf]
      %v272 = vld [vmem:[%s255 + $0x40] sm:$0xf]
      %v273 = vld [vmem:[%s255 + $0x44] sm:$0xf]
      %v274 = vld [vmem:[%s255 + $0x48] sm:$0xf]
      %v275 = vld [vmem:[%s255 + $0x4c] sm:$0xf]
      %v276 = vld [vmem:[%s255 + $0x50] sm:$0xf]
      %v277 = vld [vmem:[%s255 + $0x54] sm:$0xf]
      %v278 = vld [vmem:[%s255 + $0x58] sm:$0xf]
      %v279 = vld [vmem:[%s255 + $0x5c] sm:$0xf]
      %v280 = vld [vmem:[%s255 + $0x60] sm:$0xf]
      %v281 = vld [vmem:[%s255 + $0x64] sm:$0xf]
      %v282 = vld [vmem:[%s255 + $0x68] sm:$0xf]
      %v283 = vld [vmem:[%s255 + $0x6c] sm:$0xf]
      %v284 = vld [vmem:[%s255 + $0x70] sm:$0xf]
      %v285 = vld [vmem:[%s255 + $0x74] sm:$0xf]
      %v286 = vld [vmem:[%s255 + $0x78] sm:$0xf]
      %v287 = vld [vmem:[%s255 + $0x7c] sm:$0xf]
      %v290 = vunpack.c.l.b16 %v221
      %v291 = vunpack.c.h.b16 %v221
      %v292 = vunpack.c.l.b16 %v254
      %v293 = vunpack.c.h.b16 %v254
      %v294 = vpack.c.b16 %v292, %v290
      %v295 = vpack.c.b16 %v293, %v291
      %v297 = vshrl.u32 %v294, 16
      %v299 = vshll.u32 %v294, 16
      %v301 = vrot.slane %v299, 1
      %v302 = vor.u32 %v297, %v301
      %v304 = vshrl.u32 %v295, 16
      %v306 = vshll.u32 %v295, 16
      %v308 = vrot.slane %v306, 1
      %v309 = vor.u32 %v304, %v308
      %v344 = vunpack.c.l.b16 %v256
      %v345 = vunpack.c.l.b16 %v257
      %v346 = vunpack.c.l.b16 %v258
      %v347 = vunpack.c.l.b16 %v259
      %v348 = vunpack.c.l.b16 %v260
      %v349 = vunpack.c.l.b16 %v261
      %v350 = vunpack.c.l.b16 %v262
      %v351 = vunpack.c.l.b16 %v263
      %v352 = vunpack.c.l.b16 %v264
      %v353 = vunpack.c.l.b16 %v265
      %v354 = vunpack.c.l.b16 %v266
      %v355 = vunpack.c.l.b16 %v267
      %v356 = vunpack.c.l.b16 %v268
      %v357 = vunpack.c.l.b16 %v269
      %v358 = vunpack.c.l.b16 %v270
      %v359 = vunpack.c.l.b16 %v271
      %v360 = vunpack.c.l.b16 %v272
      %v361 = vunpack.c.l.b16 %v273
      %v362 = vunpack.c.l.b16 %v274
      %v363 = vunpack.c.l.b16 %v275
      %v364 = vunpack.c.l.b16 %v276
      %v365 = vunpack.c.l.b16 %v277
      %v366 = vunpack.c.l.b16 %v278
      %v367 = vunpack.c.l.b16 %v279
      %v368 = vunpack.c.l.b16 %v280
      %v369 = vunpack.c.l.b16 %v281
      %v370 = vunpack.c.l.b16 %v282
      %v371 = vunpack.c.l.b16 %v283
      %v372 = vunpack.c.l.b16 %v284
      %v373 = vunpack.c.l.b16 %v285
      %v374 = vunpack.c.l.b16 %v286
      %v375 = vunpack.c.l.b16 %v287
      %v376 = vpack.c.b16 %v345, %v344
      %v377 = vpack.c.b16 %v347, %v346
      %v378 = vpack.c.b16 %v349, %v348
      %v379 = vpack.c.b16 %v351, %v350
      %v380 = vpack.c.b16 %v353, %v352
      %v381 = vpack.c.b16 %v355, %v354
      %v382 = vpack.c.b16 %v357, %v356
      %v383 = vpack.c.b16 %v359, %v358
      %v384 = vpack.c.b16 %v361, %v360
      %v385 = vpack.c.b16 %v363, %v362
      %v386 = vpack.c.b16 %v365, %v364
      %v387 = vpack.c.b16 %v367, %v366
      %v388 = vpack.c.b16 %v369, %v368
      %v389 = vpack.c.b16 %v371, %v370
      %v390 = vpack.c.b16 %v373, %v372
      %v391 = vpack.c.b16 %v375, %v374
      %408 = vmatprep.subr.bf16.mxu0 0
      %409 = vmatpush1.bf16.msra.mxu0 %v376
      %410 = vmatprep.subr.bf16.mxu0 0
      %411 = vmatpush1.bf16.msra.mxu0 %v377
      %412 = vmatprep.subr.bf16.mxu0 0
      %413 = vmatpush1.bf16.msra.mxu0 %v378
      %414 = vmatprep.subr.bf16.mxu0 0
      %415 = vmatpush1.bf16.msra.mxu0 %v379
      %416 = vmatprep.subr.bf16.mxu0 0
      %417 = vmatpush1.bf16.msra.mxu0 %v380
      %418 = vmatprep.subr.bf16.mxu0 0
      %419 = vmatpush1.bf16.msra.mxu0 %v381
      %420 = vmatprep.subr.bf16.mxu0 0
      %421 = vmatpush1.bf16.msra.mxu0 %v382
      %422 = vmatprep.subr.bf16.mxu0 0
      %423 = vmatpush1.bf16.msra.mxu0 %v383
      %424 = vmatprep.subr.bf16.mxu0 0
      %425 = vmatpush1.bf16.msra.mxu0 %v384
      %426 = vmatprep.subr.bf16.mxu0 0
      %427 = vmatpush1.bf16.msra.mxu0 %v385
      %428 = vmatprep.subr.bf16.mxu0 0
      %429 = vmatpush1.bf16.msra.mxu0 %v386
      %430 = vmatprep.subr.bf16.mxu0 0
      %431 = vmatpush1.bf16.msra.mxu0 %v387
      %432 = vmatprep.subr.bf16.mxu0 0
      %433 = vmatpush1.bf16.msra.mxu0 %v388
      %434 = vmatprep.subr.bf16.mxu0 0
      %435 = vmatpush1.bf16.msra.mxu0 %v389
      %436 = vmatprep.subr.bf16.mxu0 0
      %437 = vmatpush1.bf16.msra.mxu0 %v390
      %438 = vmatprep.subr.bf16.mxu0 0
      %439 = vmatpush1.bf16.msra.mxu0 %v391
      %440 = vmatprep.mubr.bf16.mxu0 %v309
      %441 = vmatmul.mubr.bf16.gmra.mrb[0].mxu0 %v302
      %v442 = vpop.f32.mrb[0].mxu0
      %v443 = vadd.f32 0.0, %v442
      %v444 = vpop.f32.mrb[0].mxu0
      %v445 = vpop.f32.mrb[0].mxu0
      %v446 = vpop.f32.mrb[0].mxu0
      %447 = vdwg.mxu0
      %v448 = vpack.c.b16 %v290, %v290
      %v449 = vpack.c.b16 %v291, %v291
      %v484 = vunpack.c.l.b16 %v222
      %v485 = vunpack.c.l.b16 %v223
      %v486 = vunpack.c.l.b16 %v224
      %v487 = vunpack.c.l.b16 %v225
      %v488 = vunpack.c.l.b16 %v226
      %v489 = vunpack.c.l.b16 %v227
      %v490 = vunpack.c.l.b16 %v228
      %v491 = vunpack.c.l.b16 %v229
      %v492 = vunpack.c.l.b16 %v230
      %v493 = vunpack.c.l.b16 %v231
      %v494 = vunpack.c.l.b16 %v232
      %v495 = vunpack.c.l.b16 %v233
      %v496 = vunpack.c.l.b16 %v234
      %v497 = vunpack.c.l.b16 %v235
      %v498 = vunpack.c.l.b16 %v236
      %v499 = vunpack.c.l.b16 %v237
      %v500 = vunpack.c.l.b16 %v238
      %v501 = vunpack.c.l.b16 %v239
      %v502 = vunpack.c.l.b16 %v240
      %v503 = vunpack.c.l.b16 %v241
      %v504 = vunpack.c.l.b16 %v242
      %v505 = vunpack.c.l.b16 %v243
      %v506 = vunpack.c.l.b16 %v244
      %v507 = vunpack.c.l.b16 %v245
      %v508 = vunpack.c.l.b16 %v246
      %v509 = vunpack.c.l.b16 %v247
      %v510 = vunpack.c.l.b16 %v248
      %v511 = vunpack.c.l.b16 %v249
      %v512 = vunpack.c.l.b16 %v250
      %v513 = vunpack.c.l.b16 %v251
      %v514 = vunpack.c.l.b16 %v252
      %v515 = vunpack.c.l.b16 %v253
      %v516 = vpack.c.b16 %v485, %v484
      %v517 = vpack.c.b16 %v487, %v486
      %v518 = vpack.c.b16 %v489, %v488
      %v519 = vpack.c.b16 %v491, %v490
      %v520 = vpack.c.b16 %v493, %v492
      %v521 = vpack.c.b16 %v495, %v494
      %v522 = vpack.c.b16 %v497, %v496
      %v523 = vpack.c.b16 %v499, %v498
      %v524 = vpack.c.b16 %v501, %v500
      %v525 = vpack.c.b16 %v503, %v502
      %v526 = vpack.c.b16 %v505, %v504
      %v527 = vpack.c.b16 %v507, %v506
      %v528 = vpack.c.b16 %v509, %v508
      %v529 = vpack.c.b16 %v511, %v510
      %v530 = vpack.c.b16 %v513, %v512
      %v531 = vpack.c.b16 %v515, %v514
      %548 = vmatprep.subr.bf16.mxu0 0
      %549 = vmatpush1.bf16.msra.mxu0 %v516
      %550 = vmatprep.subr.bf16.mxu0 0
      %551 = vmatpush1.bf16.msra.mxu0 %v517
      %552 = vmatprep.subr.bf16.mxu0 0
      %553 = vmatpush1.bf16.msra.mxu0 %v518
      %554 = vmatprep.subr.bf16.mxu0 0
      %555 = vmatpush1.bf16.msra.mxu0 %v519
      %556 = vmatprep.subr.bf16.mxu0 0
      %557 = vmatpush1.bf16.msra.mxu0 %v520
      %558 = vmatprep.subr.bf16.mxu0 0
      %559 = vmatpush1.bf16.msra.mxu0 %v521
      %560 = vmatprep.subr.bf16.mxu0 0
      %561 = vmatpush1.bf16.msra.mxu0 %v522
      %562 = vmatprep.subr.bf16.mxu0 0
      %563 = vmatpush1.bf16.msra.mxu0 %v523
      %564 = vmatprep.subr.bf16.mxu0 0
      %565 = vmatpush1.bf16.msra.mxu0 %v524
      %566 = vmatprep.subr.bf16.mxu0 0
      %567 = vmatpush1.bf16.msra.mxu0 %v525
      %568 = vmatprep.subr.bf16.mxu0 0
      %569 = vmatpush1.bf16.msra.mxu0 %v526
      %570 = vmatprep.subr.bf16.mxu0 0
      %571 = vmatpush1.bf16.msra.mxu0 %v527
      %572 = vmatprep.subr.bf16.mxu0 0
      %573 = vmatpush1.bf16.msra.mxu0 %v528
      %574 = vmatprep.subr.bf16.mxu0 0
      %575 = vmatpush1.bf16.msra.mxu0 %v529
      %576 = vmatprep.subr.bf16.mxu0 0
      %577 = vmatpush1.bf16.msra.mxu0 %v530
      %578 = vmatprep.subr.bf16.mxu0 0
      %579 = vmatpush1.bf16.msra.mxu0 %v531
      %580 = vmatprep.mubr.bf16.mxu0 %v449
      %581 = vmatmul.mubr.bf16.gmra.mrb[0].mxu0 %v448
      %v582 = vpop.f32.mrb[0].mxu0
      %v583 = vadd.f32 %v443, %v582
      %v584 = vpop.f32.mrb[0].mxu0
      %v585 = vpop.f32.mrb[0].mxu0
      %v586 = vpop.f32.mrb[0].mxu0
      %587 = vdwg.mxu0
      %v588 = vld [vmem:[%s205] sm:$0xee]
      %s589 = scalar_lea.vmem %s209, 256
      %v590 = vld [vmem:[%s589] sm:$0xf]
      %v591 = vld [vmem:[%s589 + $0x4] sm:$0xf]
      %v592 = vld [vmem:[%s589 + $0x8] sm:$0xf]
      %v593 = vld [vmem:[%s589 + $0xc] sm:$0xf]
      %v594 = vld [vmem:[%s589 + $0x10] sm:$0xf]
      %v595 = vld [vmem:[%s589 + $0x14] sm:$0xf]
      %v596 = vld [vmem:[%s589 + $0x18] sm:$0xf]
      %v597 = vld [vmem:[%s589 + $0x1c] sm:$0xf]
      %v598 = vld [vmem:[%s589 + $0x20] sm:$0xf]
      %v599 = vld [vmem:[%s589 + $0x24] sm:$0xf]
      %v600 = vld [vmem:[%s589 + $0x28] sm:$0xf]
      %v601 = vld [vmem:[%s589 + $0x2c] sm:$0xf]
      %v602 = vld [vmem:[%s589 + $0x30] sm:$0xf]
      %v603 = vld [vmem:[%s589 + $0x34] sm:$0xf]
      %v604 = vld [vmem:[%s589 + $0x38] sm:$0xf]
      %v605 = vld [vmem:[%s589 + $0x3c] sm:$0xf]
      %v606 = vld [vmem:[%s589 + $0x40] sm:$0xf]
      %v607 = vld [vmem:[%s589 + $0x44] sm:$0xf]
      %v608 = vld [vmem:[%s589 + $0x48] sm:$0xf]
      %v609 = vld [vmem:[%s589 + $0x4c] sm:$0xf]
      %v610 = vld [vmem:[%s589 + $0x50] sm:$0xf]
      %v611 = vld [vmem:[%s589 + $0x54] sm:$0xf]
      %v612 = vld [vmem:[%s589 + $0x58] sm:$0xf]
      %v613 = vld [vmem:[%s589 + $0x5c] sm:$0xf]
      %v614 = vld [vmem:[%s589 + $0x60] sm:$0xf]
      %v615 = vld [vmem:[%s589 + $0x64] sm:$0xf]
      %v616 = vld [vmem:[%s589 + $0x68] sm:$0xf]
      %v617 = vld [vmem:[%s589 + $0x6c] sm:$0xf]
      %v618 = vld [vmem:[%s589 + $0x70] sm:$0xf]
      %v619 = vld [vmem:[%s589 + $0x74] sm:$0xf]
      %v620 = vld [vmem:[%s589 + $0x78] sm:$0xf]
      %v621 = vld [vmem:[%s589 + $0x7c] sm:$0xf]
      %v623 = vunpack.c.l.b16 %v588
      %v624 = vunpack.c.h.b16 %v588
      %v625 = vpack.c.b16 %v292, %v623
      %v626 = vpack.c.b16 %v293, %v624
      %v627 = vrot.slane %v625, 1
      %v628 = vrot.slane %v626, 1
      %v663 = vunpack.c.l.b16 %v590
      %v664 = vunpack.c.l.b16 %v591
      %v665 = vunpack.c.l.b16 %v592
      %v666 = vunpack.c.l.b16 %v593
      %v667 = vunpack.c.l.b16 %v594
      %v668 = vunpack.c.l.b16 %v595
      %v669 = vunpack.c.l.b16 %v596
      %v670 = vunpack.c.l.b16 %v597
      %v671 = vunpack.c.l.b16 %v598
      %v672 = vunpack.c.l.b16 %v599
      %v673 = vunpack.c.l.b16 %v600
      %v674 = vunpack.c.l.b16 %v601
      %v675 = vunpack.c.l.b16 %v602
      %v676 = vunpack.c.l.b16 %v603
      %v677 = vunpack.c.l.b16 %v604
      %v678 = vunpack.c.l.b16 %v605
      %v679 = vunpack.c.l.b16 %v606
      %v680 = vunpack.c.l.b16 %v607
      %v681 = vunpack.c.l.b16 %v608
      %v682 = vunpack.c.l.b16 %v609
      %v683 = vunpack.c.l.b16 %v610
      %v684 = vunpack.c.l.b16 %v611
      %v685 = vunpack.c.l.b16 %v612
      %v686 = vunpack.c.l.b16 %v613
      %v687 = vunpack.c.l.b16 %v614
      %v688 = vunpack.c.l.b16 %v615
      %v689 = vunpack.c.l.b16 %v616
      %v690 = vunpack.c.l.b16 %v617
      %v691 = vunpack.c.l.b16 %v618
      %v692 = vunpack.c.l.b16 %v619
      %v693 = vunpack.c.l.b16 %v620
      %v694 = vunpack.c.l.b16 %v621
      %v695 = vpack.c.b16 %v664, %v663
      %v696 = vpack.c.b16 %v666, %v665
      %v697 = vpack.c.b16 %v668, %v667
      %v698 = vpack.c.b16 %v670, %v669
      %v699 = vpack.c.b16 %v672, %v671
      %v700 = vpack.c.b16 %v674, %v673
      %v701 = vpack.c.b16 %v676, %v675
      %v702 = vpack.c.b16 %v678, %v677
      %v703 = vpack.c.b16 %v680, %v679
      %v704 = vpack.c.b16 %v682, %v681
      %v705 = vpack.c.b16 %v684, %v683
      %v706 = vpack.c.b16 %v686, %v685
      %v707 = vpack.c.b16 %v688, %v687
      %v708 = vpack.c.b16 %v690, %v689
      %v709 = vpack.c.b16 %v692, %v691
      %v710 = vpack.c.b16 %v694, %v693
      %727 = vmatprep.subr.bf16.mxu0 0
      %728 = vmatpush1.bf16.msra.mxu0 %v695
      %729 = vmatprep.subr.bf16.mxu0 0
      %730 = vmatpush1.bf16.msra.mxu0 %v696
      %731 = vmatprep.subr.bf16.mxu0 0
      %732 = vmatpush1.bf16.msra.mxu0 %v697
      %733 = vmatprep.subr.bf16.mxu0 0
      %734 = vmatpush1.bf16.msra.mxu0 %v698
      %735 = vmatprep.subr.bf16.mxu0 0
      %736 = vmatpush1.bf16.msra.mxu0 %v699
      %737 = vmatprep.subr.bf16.mxu0 0
      %738 = vmatpush1.bf16.msra.mxu0 %v700
      %739 = vmatprep.subr.bf16.mxu0 0
      %740 = vmatpush1.bf16.msra.mxu0 %v701
      %741 = vmatprep.subr.bf16.mxu0 0
      %742 = vmatpush1.bf16.msra.mxu0 %v702
      %743 = vmatprep.subr.bf16.mxu0 0
      %744 = vmatpush1.bf16.msra.mxu0 %v703
      %745 = vmatprep.subr.bf16.mxu0 0
      %746 = vmatpush1.bf16.msra.mxu0 %v704
      %747 = vmatprep.subr.bf16.mxu0 0
      %748 = vmatpush1.bf16.msra.mxu0 %v705
      %749 = vmatprep.subr.bf16.mxu0 0
      %750 = vmatpush1.bf16.msra.mxu0 %v706
      %751 = vmatprep.subr.bf16.mxu0 0
      %752 = vmatpush1.bf16.msra.mxu0 %v707
      %753 = vmatprep.subr.bf16.mxu0 0
      %754 = vmatpush1.bf16.msra.mxu0 %v708
      %755 = vmatprep.subr.bf16.mxu0 0
      %756 = vmatpush1.bf16.msra.mxu0 %v709
      %757 = vmatprep.subr.bf16.mxu0 0
      %758 = vmatpush1.bf16.msra.mxu0 %v710
      %759 = vmatprep.mubr.bf16.mxu0 %v628
      %760 = vmatmul.mubr.bf16.gmra.mrb[0].mxu0 %v627
      %v761 = vpop.f32.mrb[0].mxu0
      %v762 = vadd.f32 0.0, %v761
      %v763 = vpop.f32.mrb[0].mxu0
      %v764 = vpop.f32.mrb[0].mxu0
      %v765 = vpop.f32.mrb[0].mxu0
      %766 = vdwg.mxu0
      %v767 = vadd.f32 %v583, %v762
      %v768 = vld [vmem:[%s212] sm:$0x1]
      %v770 = vlaneseq
      %v771 = vshrl.u32 %v770, 7
      %v772 = vsub.s32 0, %v771
      %v773 = vrot.slane %v768, %v772
      %v775 = vadd.f32 %v767, %v773
      %v776 = vmax.f32 %v775, 0.0
      %vm777 = vcmask 523264
      %778 = vst.msk [vmem:[%s219] sm:$0xff] %vm777, %v776
      %p779 = scmp.lt.s32.totalorder %s18, 1
      %s780 = scalar_select %p779, %s18, 1
      %p781 = scmp.lt.s32.totalorder %s19, 0
      %s782 = scalar_select %p781, %s19, 0
      %s783 = sadd.s32 %s782, %s780
      %s784 = smul.addr %s783, 8
      %s785 = scalar_lea.vmem %s3, %s784
      // Predicated region
      $region33: #{gat_model_mll_forward.25} parent=31 // pred_check
        %p786 = pneg %p124
      $region34: #{gat_model_mll_forward.25} parent=31 // pred_check_branch
        %788 = sbr.rel (%p786) target = $region36
      $region35: #{gat_model_mll_forward.25} parent=31 // pred_region
        _
      $region36: #{gat_model_mll_forward.25} parent=31 // pred_fallthru
        _
    $region32: #{gat_model_mll_forward.25} parent=5 // pred_fallthru
      _
    %p789 = scmp.le.s32.totalorder 2, %s9
    // Predicated region
    $region37: #{gat_model_mll_forward.25} parent=5 // pred_check
      %p790 = pneg %p789
    $region38: #{gat_model_mll_forward.25} parent=5 // pred_check_branch
      %792 = sbr.rel (%p790) target = $region40
    $region39: #{gat_model_mll_forward.25} parent=5 // pred_region
      %s793 = ssub.s32 %s9, 2
      // Predicated region
      $region41: #{gat_model_mll_forward.25} parent=39 // pred_check
        %p794 = pneg %p130
      $region42: #{gat_model_mll_forward.25} parent=39 // pred_check_branch
        %796 = sbr.rel (%p794) target = $region44
      $region43: #{gat_model_mll_forward.25} parent=39 // pred_region
        %p797 = scmp.lt.s32.totalorder %s20, 1
        %s798 = scalar_select %p797, %s20, 1
        %p799 = scmp.lt.s32.totalorder %s21, 0
        %s800 = scalar_select %p799, %s21, 0
        %s801 = sadd.s32 %s800, %s798
        %s802 = smul.addr %s801, 8
        %s803 = scalar_lea.vmem %s3, %s802
      $region44: #{gat_model_mll_forward.25} parent=39 // pred_fallthru
        _
    $region40: #{gat_model_mll_forward.25} parent=5 // pred_fallthru
      _
  $region6: #{gat_model_mll_forward.25} parent=0 // loop_footer
    %s13 = sadd.s32 1, %s9
  $region7: #{gat_model_mll_forward.25} parent=0 // loop_footer_branch
    %8 = sbr.rel target = $region3
  $region8: #{gat_model_mll_forward.25} parent=0 // loop_exit
    _

// kernel: gat_model_mll_forward.33
$region0: #{gat_model_mll_forward.33}
  #allocation0 [shape = 'u32[]', space=smem, size = 0x4, offset = 0x4, fixed_abs, tag = 'smem constant byte address 0x4 - core index']
  #allocation1 [shape = 'u32[144,128]{1,0:T(1,128)}', space=vmem, size = 0x12000, scoped, tag = 'internal scratch']
  %s0 = inlined_call_operand.vmem [shape: bf16[2,8,64], index: 0, kind: input, shape index: {}]
  %s1 = inlined_call_operand.vmem [shape: bf16[1,64,64], index: 1, kind: input, shape index: {}]
  %s2 = inlined_call_operand.vmem [shape: f32[1,64], index: 2, kind: input, shape index: {}]
  %s3 = inlined_call_operand.vmem [shape: f32[2,8,64], index: 3, kind: output, shape index: {}]
  %s4 = sld [smem:[#allocation0]]
  $region45: #{gat_model_mll_forward.33} parent=0
    _
  %s6 = ssub.s32 1, %s4
  %s7 = scalar_select 0, %s6, %s4
  loop: start=0, step=1, limit=4
  $region2: #{gat_model_mll_forward.33} parent=0 // loop_pre_header
    _
  $region3: #{gat_model_mll_forward.33} parent=0 // loop_header
    %s9 = sphi 0, %s13
    %p10 = scmp.ge.s32.totalorder %s9, 4
    %s16 = sphi 0, %s28
    %s17 = sphi 0, %s24
    %s18 = sphi 0, %s16
    %s19 = sphi 0, %s17
    %s20 = sphi 0, %s18
    %s21 = sphi 0, %s19
    %s31 = sphi 0, %s33
    %s34 = sphi 0, %s31
    %s35 = sphi 0, %s34
    %s51 = sphi 0, %s35
    %s57 = sphi 0, %s59
    %s60 = sphi 0, %s57
    %s61 = sphi 0, %s60
    %s77 = sphi 0, %s61
    %s83 = sphi 0, %s85
    %s86 = sphi 0, %s83
    %s87 = sphi 0, %s86
    %s103 = sphi 0, %s87
    %s111 = sphi 0, %s113
    %s114 = sphi 0, %s111
    %s115 = sphi 0, %s114
    %s131 = sphi 0, %s115
  $region4: #{gat_model_mll_forward.33} parent=0 // loop_header_branch
    %12 = sbr.rel (%p10) target = $region8
  $region5: #{gat_model_mll_forward.33} parent=0 // loop_body
    %s14 = ssub.s32 %s9, 1
    %s15 = ssub.s32 %s9, 2
    %s22 = sadd.s32 1, %s17
    %p23 = scmp.ge.s32.totalorder %s22, 1
    %s24 = scalar_select %p23, 0, %s22
    %s25 = sadd.s32 1, %s16
    %s26 = scalar_select %p23, %s25, %s16
    %p27 = scmp.ge.s32.totalorder %s26, 2
    %s28 = scalar_select %p27, 0, %s26
    %s29 = ssub.s32 %s16, %s28
    %p30 = scmp.eq.s32.totalorder %s29, 0
    %s32 = sadd.s32 %s31, 1
    %s33 = scalar_select %p30, %s31, %s32
    %p36 = pneg %p30
    %p37 = scmp.eq.s32.totalorder %s9, 1
    %p38 = por %p36, %p37
    %p39 = scmp.ne.s32.totalorder %s31, %s34
    %p40 = scmp.eq.s32.totalorder %s9, 0
    %p41 = por %p39, %p40
    %p42 = scmp.ne.s32.totalorder %s31, %s34
    %p43 = scmp.eq.s32.totalorder %s14, 1
    %p44 = por %p42, %p43
    %p45 = scmp.ne.s32.totalorder %s34, %s35
    %p46 = scmp.eq.s32.totalorder %s14, 0
    %p47 = por %p45, %p46
    %p48 = scmp.ne.s32.totalorder %s34, %s35
    %p49 = scmp.eq.s32.totalorder %s15, 1
    %p50 = por %p48, %p49
    %p52 = scmp.ne.s32.totalorder %s35, %s51
    %p53 = scmp.eq.s32.totalorder %s15, 0
    %p54 = por %p52, %p53
    %s55 = ssub.s32 %s17, %s24
    %p56 = scmp.eq.s32.totalorder %s55, 0
    %s58 = sadd.s32 %s57, 1
    %s59 = scalar_select %p56, %s57, %s58
    %p62 = pneg %p56
    %p63 = scmp.eq.s32.totalorder %s9, 1
    %p64 = por %p62, %p63
    %p65 = scmp.ne.s32.totalorder %s57, %s60
    %p66 = scmp.eq.s32.totalorder %s9, 0
    %p67 = por %p65, %p66
    %p68 = scmp.ne.s32.totalorder %s57, %s60
    %p69 = scmp.eq.s32.totalorder %s14, 1
    %p70 = por %p68, %p69
    %p71 = scmp.ne.s32.totalorder %s60, %s61
    %p72 = scmp.eq.s32.totalorder %s14, 0
    %p73 = por %p71, %p72
    %p74 = scmp.ne.s32.totalorder %s60, %s61
    %p75 = scmp.eq.s32.totalorder %s15, 1
    %p76 = por %p74, %p75
    %p78 = scmp.ne.s32.totalorder %s61, %s77
    %p79 = scmp.eq.s32.totalorder %s15, 0
    %p80 = por %p78, %p79
    %s81 = ssub.s32 %s17, %s24
    %p82 = scmp.eq.s32.totalorder %s81, 0
    %s84 = sadd.s32 %s83, 1
    %s85 = scalar_select %p82, %s83, %s84
    %p88 = pneg %p82
    %p89 = scmp.eq.s32.totalorder %s9, 1
    %p90 = por %p88, %p89
    %p91 = scmp.ne.s32.totalorder %s83, %s86
    %p92 = scmp.eq.s32.totalorder %s9, 0
    %p93 = por %p91, %p92
    %p94 = scmp.ne.s32.totalorder %s83, %s86
    %p95 = scmp.eq.s32.totalorder %s14, 1
    %p96 = por %p94, %p95
    %p97 = scmp.ne.s32.totalorder %s86, %s87
    %p98 = scmp.eq.s32.totalorder %s14, 0
    %p99 = por %p97, %p98
    %p100 = scmp.ne.s32.totalorder %s86, %s87
    %p101 = scmp.eq.s32.totalorder %s15, 1
    %p102 = por %p100, %p101
    %p104 = scmp.ne.s32.totalorder %s87, %s103
    %p105 = scmp.eq.s32.totalorder %s15, 0
    %p106 = por %p104, %p105
    %s107 = ssub.s32 %s16, %s28
    %s108 = ssub.s32 %s17, %s24
    %s109 = sor.u32 %s107, %s108
    %p110 = scmp.eq.s32.totalorder %s109, 0
    %s112 = sadd.s32 %s111, 1
    %s113 = scalar_select %p110, %s111, %s112
    %p116 = pneg %p110
    %p117 = scmp.eq.s32.totalorder %s9, 1
    %p118 = por %p116, %p117
    %p119 = scmp.ne.s32.totalorder %s111, %s114
    %p120 = scmp.eq.s32.totalorder %s9, 0
    %p121 = por %p119, %p120
    %p122 = scmp.ne.s32.totalorder %s111, %s114
    %p123 = scmp.eq.s32.totalorder %s14, 1
    %p124 = por %p122, %p123
    %p125 = scmp.ne.s32.totalorder %s114, %s115
    %p126 = scmp.eq.s32.totalorder %s14, 0
    %p127 = por %p125, %p126
    %p128 = scmp.ne.s32.totalorder %s114, %s115
    %p129 = scmp.eq.s32.totalorder %s15, 1
    %p130 = por %p128, %p129
    %p132 = scmp.ne.s32.totalorder %s115, %s131
    %p133 = scmp.eq.s32.totalorder %s15, 0
    %p134 = por %p132, %p133
    %p135 = scmp.le.s32.totalorder 1, %s9
    %p136 = scmp.lt.s32.totalorder %s9, 3
    %p137 = pnand %p135, %p136
    %p138 = pneg %p137
    // Predicated region
    $region9: #{gat_model_mll_forward.33} parent=5 // pred_check
      _
    $region10: #{gat_model_mll_forward.33} parent=5 // pred_check_branch
      %140 = sbr.rel (%p137) target = $region12
    $region11: #{gat_model_mll_forward.33} parent=5 // pred_region
      %s141 = ssub.s32 %s9, 1
      // Predicated region
      $region13: #{gat_model_mll_forward.33} parent=11 // pred_check
        %p142 = pneg %p73
      $region14: #{gat_model_mll_forward.33} parent=11 // pred_check_branch
        %144 = sbr.rel (%p142) target = $region16
      $region15: #{gat_model_mll_forward.33} parent=11 // pred_region
        %p145 = scmp.lt.s32.totalorder %s19, 0
        %s146 = scalar_select %p145, %s19, 0
        %s147 = smul.addr %s146, 4
        %s148 = scalar_lea.vmem %s1, %s147
      $region16: #{gat_model_mll_forward.33} parent=11 // pred_fallthru
        _
      // Predicated region
      $region17: #{gat_model_mll_forward.33} parent=11 // pred_check
        %p149 = pneg %p99
      $region18: #{gat_model_mll_forward.33} parent=11 // pred_check_branch
        %151 = sbr.rel (%p149) target = $region20
      $region19: #{gat_model_mll_forward.33} parent=11 // pred_region
        %p152 = scmp.lt.s32.totalorder %s19, 0
        %s153 = scalar_select %p152, %s19, 0
        %s154 = scalar_lea.vmem %s2, %s153
      $region20: #{gat_model_mll_forward.33} parent=11 // pred_fallthru
        _
    $region12: #{gat_model_mll_forward.33} parent=5 // pred_fallthru
      _
    %p155 = scmp.lt.s32.totalorder %s9, 2
    // Predicated region
    $region21: #{gat_model_mll_forward.33} parent=5 // pred_check
      %p156 = pneg %p155
    $region22: #{gat_model_mll_forward.33} parent=5 // pred_check_branch
      %158 = sbr.rel (%p156) target = $region24
    $region23: #{gat_model_mll_forward.33} parent=5 // pred_region
      // Predicated region
      $region25: #{gat_model_mll_forward.33} parent=23 // pred_check
        %p159 = pneg %p41
      $region26: #{gat_model_mll_forward.33} parent=23 // pred_check_branch
        %161 = sbr.rel (%p159) target = $region28
      $region27: #{gat_model_mll_forward.33} parent=23 // pred_region
        %p162 = scmp.lt.s32.totalorder %s16, 1
        %s163 = scalar_select %p162, %s16, 1
        %s164 = smul.addr %s163, 4
        %s165 = scalar_lea.vmem %s0, %s164
      $region28: #{gat_model_mll_forward.33} parent=23 // pred_fallthru
        _
    $region24: #{gat_model_mll_forward.33} parent=5 // pred_fallthru
      _
    %p166 = scmp.le.s32.totalorder 1, %s9
    %p167 = scmp.lt.s32.totalorder %s9, 3
    %p168 = pnand %p166, %p167
    %p169 = pneg %p168
    // Predicated region
    $region29: #{gat_model_mll_forward.33} parent=5 // pred_check
      _
    $region30: #{gat_model_mll_forward.33} parent=5 // pred_check_branch
      %171 = sbr.rel (%p168) target = $region32
    $region31: #{gat_model_mll_forward.33} parent=5 // pred_region
      %s172 = ssub.s32 %s9, 1
      %p173 = scmp.lt.s32.totalorder %s18, 1
      %s174 = scalar_select %p173, %s18, 1
      %s175 = smul.addr %s174, 4
      %s176 = scalar_lea.vmem %s0, %s175
      %p177 = pneg %p47
      %p178 = pneg %p44
      %p179 = scmp.lt.s32.totalorder %s19, 0
      %s180 = scalar_select %p179, %s19, 0
      %s181 = smul.addr %s180, 4
      %s182 = scalar_lea.vmem %s1, %s181
      %p183 = pneg %p73
      %p184 = pneg %p70
      %p185 = scmp.lt.s32.totalorder %s19, 0
      %s186 = scalar_select %p185, %s19, 0
      %s187 = scalar_lea.vmem %s2, %s186
      %p188 = pneg %p99
      %p189 = pneg %p96
      %p190 = pneg %p127
      %p191 = pneg %p124
      %p192 = scmp.lt.s32.totalorder %s18, 1
      %s193 = scalar_select %p192, %s18, 1
      %p194 = scmp.lt.s32.totalorder %s19, 0
      %s195 = scalar_select %p194, %s19, 0
      %s196 = sadd.s32 %s195, %s193
      %s197 = smul.addr %s196, 8
      %s198 = scalar_lea.vmem %s3, %s197
      %p199 = scmp.lt.s32.totalorder %s18, 1
      %s200 = scalar_select %p199, %s18, 1
      %s201 = smul.addr %s200, 4
      %s202 = scalar_lea.vmem %s0, %s201
      %p203 = scmp.lt.s32.totalorder %s19, 0
      %s204 = scalar_select %p203, %s19, 0
      %s205 = smul.addr %s204, 4
      %s206 = scalar_lea.vmem %s1, %s205
      %p207 = scmp.lt.s32.totalorder %s19, 0
      %s208 = scalar_select %p207, %s19, 0
      %s209 = scalar_lea.vmem %s2, %s208
      %p210 = scmp.lt.s32.totalorder %s18, 1
      %s211 = scalar_select %p210, %s18, 1
      %p212 = scmp.lt.s32.totalorder %s19, 0
      %s213 = scalar_select %p212, %s19, 0
      %s214 = sadd.s32 %s213, %s211
      %s215 = smul.addr %s214, 8
      %s216 = scalar_lea.vmem %s3, %s215
      %v218 = vld [vmem:[%s202] sm:$0xf]
      %v219 = vld [vmem:[%s206] sm:$0xf]
      %v220 = vld [vmem:[%s206 + $0x4] sm:$0xf]
      %v221 = vld [vmem:[%s206 + $0x8] sm:$0xf]
      %v222 = vld [vmem:[%s206 + $0xc] sm:$0xf]
      %v223 = vld [vmem:[%s206 + $0x10] sm:$0xf]
      %v224 = vld [vmem:[%s206 + $0x14] sm:$0xf]
      %v225 = vld [vmem:[%s206 + $0x18] sm:$0xf]
      %v226 = vld [vmem:[%s206 + $0x1c] sm:$0xf]
      %v227 = vld [vmem:[%s209] sm:$0x1]
      %v229 = vlaneseq
      %v230 = vshrl.u32 %v229, 7
      %v231 = vsub.s32 0, %v230
      %v232 = vrot.slane %v227, %v231
      %v242 = vunpack.c.l.b16 %v219
      %v243 = vunpack.c.l.b16 %v220
      %v244 = vunpack.c.l.b16 %v221
      %v245 = vunpack.c.l.b16 %v222
      %v246 = vunpack.c.l.b16 %v223
      %v247 = vunpack.c.l.b16 %v224
      %v248 = vunpack.c.l.b16 %v225
      %v249 = vunpack.c.l.b16 %v226
      %v250 = vpack.c.b16 %v243, %v242
      %v251 = vpack.c.b16 %v245, %v244
      %v252 = vpack.c.b16 %v247, %v246
      %v253 = vpack.c.b16 %v249, %v248
      %vm258 = vcmask 523264
      %v260 = vsel %vm258, %v218, 0
      %262 = vmatprep.subr.bf16.mxu0 0
      %263 = vmatpush1.bf16.msra.mxu0 %v250
      %264 = vmatprep.subr.bf16.mxu0 0
      %265 = vmatpush1.bf16.msra.mxu0 %v251
      %266 = vmatprep.subr.bf16.mxu0 0
      %267 = vmatpush1.bf16.msra.mxu0 %v252
      %268 = vmatprep.subr.bf16.mxu0 0
      %269 = vmatpush1.bf16.msra.mxu0 %v253
      %270 = vmatprep.subr.bf16.mxu0 0
      %271 = vmatpush1.bf16.msra.mxu0 0
      %272 = vmatprep.subr.bf16.mxu0 0
      %273 = vmatpush1.bf16.msra.mxu0 0
      %274 = vmatprep.subr.bf16.mxu0 0
      %275 = vmatpush1.bf16.msra.mxu0 0
      %276 = vmatprep.subr.bf16.mxu0 0
      %277 = vmatpush1.bf16.msra.mxu0 0
      %278 = vmatprep.subr.bf16.mxu0 0
      %279 = vmatpush1.bf16.msra.mxu0 0
      %280 = vmatprep.subr.bf16.mxu0 0
      %281 = vmatpush1.bf16.msra.mxu0 0
      %282 = vmatprep.subr.bf16.mxu0 0
      %283 = vmatpush1.bf16.msra.mxu0 0
      %284 = vmatprep.subr.bf16.mxu0 0
      %285 = vmatpush1.bf16.msra.mxu0 0
      %286 = vmatprep.subr.bf16.mxu0 0
      %287 = vmatpush1.bf16.msra.mxu0 0
      %288 = vmatprep.subr.bf16.mxu0 0
      %289 = vmatpush1.bf16.msra.mxu0 0
      %290 = vmatprep.subr.bf16.mxu0 0
      %291 = vmatpush1.bf16.msra.mxu0 0
      %292 = vmatprep.subr.bf16.mxu0 0
      %293 = vmatpush1.bf16.msra.mxu0 0
      %294 = vmatprep.mubr.bf16.mxu0 0
      %295 = vmatmul.mubr.bf16.gmra.mrb[0].mxu0 %v260
      %v296 = vpop.f32.mrb[0].mxu0
      %v297 = vadd.f32 %v232, %v296
      %v298 = vpop.f32.mrb[0].mxu0
      %v299 = vpop.f32.mrb[0].mxu0
      %v300 = vpop.f32.mrb[0].mxu0
      %301 = vdwg.mxu0
      %v302 = vmax.f32 %v297, 0.0
      %303 = vst.msk [vmem:[%s216] sm:$0xff] %vm258, %v302
      %p304 = scmp.lt.s32.totalorder %s18, 1
      %s305 = scalar_select %p304, %s18, 1
      %p306 = scmp.lt.s32.totalorder %s19, 0
      %s307 = scalar_select %p306, %s19, 0
      %s308 = sadd.s32 %s307, %s305
      %s309 = smul.addr %s308, 8
      %s310 = scalar_lea.vmem %s3, %s309
      // Predicated region
      $region33: #{gat_model_mll_forward.33} parent=31 // pred_check
        %p311 = pneg %p124
      $region34: #{gat_model_mll_forward.33} parent=31 // pred_check_branch
        %313 = sbr.rel (%p311) target = $region36
      $region35: #{gat_model_mll_forward.33} parent=31 // pred_region
        _
      $region36: #{gat_model_mll_forward.33} parent=31 // pred_fallthru
        _
    $region32: #{gat_model_mll_forward.33} parent=5 // pred_fallthru
      _
    %p314 = scmp.le.s32.totalorder 2, %s9
    // Predicated region
    $region37: #{gat_model_mll_forward.33} parent=5 // pred_check
      %p315 = pneg %p314
    $region38: #{gat_model_mll_forward.33} parent=5 // pred_check_branch
      %317 = sbr.rel (%p315) target = $region40
    $region39: #{gat_model_mll_forward.33} parent=5 // pred_region
      %s318 = ssub.s32 %s9, 2
      // Predicated region
      $region41: #{gat_model_mll_forward.33} parent=39 // pred_check
        %p319 = pneg %p130
      $region42: #{gat_model_mll_forward.33} parent=39 // pred_check_branch
        %321 = sbr.rel (%p319) target = $region44
      $region43: #{gat_model_mll_forward.33} parent=39 // pred_region
        %p322 = scmp.lt.s32.totalorder %s20, 1
        %s323 = scalar_select %p322, %s20, 1
        %p324 = scmp.lt.s32.totalorder %s21, 0
        %s325 = scalar_select %p324, %s21, 0
        %s326 = sadd.s32 %s325, %s323
        %s327 = smul.addr %s326, 8
        %s328 = scalar_lea.vmem %s3, %s327
      $region44: #{gat_model_mll_forward.33} parent=39 // pred_fallthru
        _
    $region40: #{gat_model_mll_forward.33} parent=5 // pred_fallthru
      _
  $region6: #{gat_model_mll_forward.33} parent=0 // loop_footer
    %s13 = sadd.s32 1, %s9
  $region7: #{gat_model_mll_forward.33} parent=0 // loop_footer_branch
    %8 = sbr.rel target = $region3
  $region8: #{gat_model_mll_forward.33} parent=0 // loop_exit
    _

// kernel: gat_model_mll_forward.24
$region0: #{gat_model_mll_forward.24}
  #allocation0 [shape = 'u32[]', space=smem, size = 0x4, offset = 0x4, fixed_abs, tag = 'smem constant byte address 0x4 - core index']
  #allocation1 [shape = 'u32[144,128]{1,0:T(1,128)}', space=vmem, size = 0x12000, scoped, tag = 'internal scratch']
  %s0 = inlined_call_operand.vmem [shape: bf16[2,10,1024], index: 0, kind: input, shape index: {}]
  %s1 = inlined_call_operand.vmem [shape: bf16[3,1024,256], index: 1, kind: input, shape index: {}]
  %s2 = inlined_call_operand.vmem [shape: f32[1,256], index: 2, kind: input, shape index: {}]
  %s3 = inlined_call_operand.vmem [shape: f32[2,8,256], index: 3, kind: output, shape index: {}]
  %s4 = sld [smem:[#allocation0]]
  $region45: #{gat_model_mll_forward.24} parent=0
    _
  %s6 = ssub.s32 1, %s4
  %s7 = scalar_select 0, %s6, %s4
  loop: start=0, step=1, limit=4
  $region2: #{gat_model_mll_forward.24} parent=0 // loop_pre_header
    _
  $region3: #{gat_model_mll_forward.24} parent=0 // loop_header
    %s9 = sphi 0, %s13
    %p10 = scmp.ge.s32.totalorder %s9, 4
    %s16 = sphi 0, %s28
    %s17 = sphi 0, %s24
    %s18 = sphi 0, %s16
    %s19 = sphi 0, %s17
    %s20 = sphi 0, %s18
    %s21 = sphi 0, %s19
    %s31 = sphi 0, %s33
    %s34 = sphi 0, %s31
    %s35 = sphi 0, %s34
    %s51 = sphi 0, %s35
    %s57 = sphi 0, %s59
    %s60 = sphi 0, %s57
    %s61 = sphi 0, %s60
    %s77 = sphi 0, %s61
    %s83 = sphi 0, %s85
    %s86 = sphi 0, %s83
    %s87 = sphi 0, %s86
    %s103 = sphi 0, %s87
    %s111 = sphi 0, %s113
    %s114 = sphi 0, %s111
    %s115 = sphi 0, %s114
    %s131 = sphi 0, %s115
  $region4: #{gat_model_mll_forward.24} parent=0 // loop_header_branch
    %12 = sbr.rel (%p10) target = $region8
  $region5: #{gat_model_mll_forward.24} parent=0 // loop_body
    %s14 = ssub.s32 %s9, 1
    %s15 = ssub.s32 %s9, 2
    %s22 = sadd.s32 1, %s17
    %p23 = scmp.ge.s32.totalorder %s22, 1
    %s24 = scalar_select %p23, 0, %s22
    %s25 = sadd.s32 1, %s16
    %s26 = scalar_select %p23, %s25, %s16
    %p27 = scmp.ge.s32.totalorder %s26, 2
    %s28 = scalar_select %p27, 0, %s26
    %s29 = ssub.s32 %s16, %s28
    %p30 = scmp.eq.s32.totalorder %s29, 0
    %s32 = sadd.s32 %s31, 1
    %s33 = scalar_select %p30, %s31, %s32
    %p36 = pneg %p30
    %p37 = scmp.eq.s32.totalorder %s9, 1
    %p38 = por %p36, %p37
    %p39 = scmp.ne.s32.totalorder %s31, %s34
    %p40 = scmp.eq.s32.totalorder %s9, 0
    %p41 = por %p39, %p40
    %p42 = scmp.ne.s32.totalorder %s31, %s34
    %p43 = scmp.eq.s32.totalorder %s14, 1
    %p44 = por %p42, %p43
    %p45 = scmp.ne.s32.totalorder %s34, %s35
    %p46 = scmp.eq.s32.totalorder %s14, 0
    %p47 = por %p45, %p46
    %p48 = scmp.ne.s32.totalorder %s34, %s35
    %p49 = scmp.eq.s32.totalorder %s15, 1
    %p50 = por %p48, %p49
    %p52 = scmp.ne.s32.totalorder %s35, %s51
    %p53 = scmp.eq.s32.totalorder %s15, 0
    %p54 = por %p52, %p53
    %s55 = ssub.s32 %s17, %s24
    %p56 = scmp.eq.s32.totalorder %s55, 0
    %s58 = sadd.s32 %s57, 1
    %s59 = scalar_select %p56, %s57, %s58
    %p62 = pneg %p56
    %p63 = scmp.eq.s32.totalorder %s9, 1
    %p64 = por %p62, %p63
    %p65 = scmp.ne.s32.totalorder %s57, %s60
    %p66 = scmp.eq.s32.totalorder %s9, 0
    %p67 = por %p65, %p66
    %p68 = scmp.ne.s32.totalorder %s57, %s60
    %p69 = scmp.eq.s32.totalorder %s14, 1
    %p70 = por %p68, %p69
    %p71 = scmp.ne.s32.totalorder %s60, %s61
    %p72 = scmp.eq.s32.totalorder %s14, 0
    %p73 = por %p71, %p72
    %p74 = scmp.ne.s32.totalorder %s60, %s61
    %p75 = scmp.eq.s32.totalorder %s15, 1
    %p76 = por %p74, %p75
    %p78 = scmp.ne.s32.totalorder %s61, %s77
    %p79 = scmp.eq.s32.totalorder %s15, 0
    %p80 = por %p78, %p79
    %s81 = ssub.s32 %s17, %s24
    %p82 = scmp.eq.s32.totalorder %s81, 0
    %s84 = sadd.s32 %s83, 1
    %s85 = scalar_select %p82, %s83, %s84
    %p88 = pneg %p82
    %p89 = scmp.eq.s32.totalorder %s9, 1
    %p90 = por %p88, %p89
    %p91 = scmp.ne.s32.totalorder %s83, %s86
    %p92 = scmp.eq.s32.totalorder %s9, 0
    %p93 = por %p91, %p92
    %p94 = scmp.ne.s32.totalorder %s83, %s86
    %p95 = scmp.eq.s32.totalorder %s14, 1
    %p96 = por %p94, %p95
    %p97 = scmp.ne.s32.totalorder %s86, %s87
    %p98 = scmp.eq.s32.totalorder %s14, 0
    %p99 = por %p97, %p98
    %p100 = scmp.ne.s32.totalorder %s86, %s87
    %p101 = scmp.eq.s32.totalorder %s15, 1
    %p102 = por %p100, %p101
    %p104 = scmp.ne.s32.totalorder %s87, %s103
    %p105 = scmp.eq.s32.totalorder %s15, 0
    %p106 = por %p104, %p105
    %s107 = ssub.s32 %s16, %s28
    %s108 = ssub.s32 %s17, %s24
    %s109 = sor.u32 %s107, %s108
    %p110 = scmp.eq.s32.totalorder %s109, 0
    %s112 = sadd.s32 %s111, 1
    %s113 = scalar_select %p110, %s111, %s112
    %p116 = pneg %p110
    %p117 = scmp.eq.s32.totalorder %s9, 1
    %p118 = por %p116, %p117
    %p119 = scmp.ne.s32.totalorder %s111, %s114
    %p120 = scmp.eq.s32.totalorder %s9, 0
    %p121 = por %p119, %p120
    %p122 = scmp.ne.s32.totalorder %s111, %s114
    %p123 = scmp.eq.s32.totalorder %s14, 1
    %p124 = por %p122, %p123
    %p125 = scmp.ne.s32.totalorder %s114, %s115
    %p126 = scmp.eq.s32.totalorder %s14, 0
    %p127 = por %p125, %p126
    %p128 = scmp.ne.s32.totalorder %s114, %s115
    %p129 = scmp.eq.s32.totalorder %s15, 1
    %p130 = por %p128, %p129
    %p132 = scmp.ne.s32.totalorder %s115, %s131
    %p133 = scmp.eq.s32.totalorder %s15, 0
    %p134 = por %p132, %p133
    %p135 = scmp.le.s32.totalorder 1, %s9
    %p136 = scmp.lt.s32.totalorder %s9, 3
    %p137 = pnand %p135, %p136
    %p138 = pneg %p137
    // Predicated region
    $region9: #{gat_model_mll_forward.24} parent=5 // pred_check
      _
    $region10: #{gat_model_mll_forward.24} parent=5 // pred_check_branch
      %140 = sbr.rel (%p137) target = $region12
    $region11: #{gat_model_mll_forward.24} parent=5 // pred_region
      %s141 = ssub.s32 %s9, 1
      // Predicated region
      $region13: #{gat_model_mll_forward.24} parent=11 // pred_check
        %p142 = pneg %p73
      $region14: #{gat_model_mll_forward.24} parent=11 // pred_check_branch
        %144 = sbr.rel (%p142) target = $region16
      $region15: #{gat_model_mll_forward.24} parent=11 // pred_region
        %s145 = smul.u32 2, %s19
        %p146 = scmp.lt.s32.totalorder %s145, 1
        %s147 = scalar_select %p146, %s145, 1
        %s148 = smul.addr %s147, 4
        %s149 = scalar_lea.vmem %s1, %s148
        %s150 = smul.u32 2, %s19
      $region16: #{gat_model_mll_forward.24} parent=11 // pred_fallthru
        _
      // Predicated region
      $region17: #{gat_model_mll_forward.24} parent=11 // pred_check
        %p151 = pneg %p99
      $region18: #{gat_model_mll_forward.24} parent=11 // pred_check_branch
        %153 = sbr.rel (%p151) target = $region20
      $region19: #{gat_model_mll_forward.24} parent=11 // pred_region
        %s154 = smul.u32 2, %s19
        %p155 = scmp.lt.s32.totalorder %s154, 1
        %s156 = scalar_select %p155, %s154, 1
        %s157 = scalar_lea.vmem %s2, %s156
        %s158 = smul.u32 2, %s19
      $region20: #{gat_model_mll_forward.24} parent=11 // pred_fallthru
        _
    $region12: #{gat_model_mll_forward.24} parent=5 // pred_fallthru
      _
    %p159 = scmp.lt.s32.totalorder %s9, 2
    // Predicated region
    $region21: #{gat_model_mll_forward.24} parent=5 // pred_check
      %p160 = pneg %p159
    $region22: #{gat_model_mll_forward.24} parent=5 // pred_check_branch
      %162 = sbr.rel (%p160) target = $region24
    $region23: #{gat_model_mll_forward.24} parent=5 // pred_region
      // Predicated region
      $region25: #{gat_model_mll_forward.24} parent=23 // pred_check
        %p163 = pneg %p41
      $region26: #{gat_model_mll_forward.24} parent=23 // pred_check_branch
        %165 = sbr.rel (%p163) target = $region28
      $region27: #{gat_model_mll_forward.24} parent=23 // pred_region
        %p166 = scmp.lt.s32.totalorder %s16, 1
        %s167 = scalar_select %p166, %s16, 1
        %s168 = smul.addr %s167, 16
        %s169 = smul.addr %s168, 4
        %s170 = scalar_lea.vmem %s0, %s169
      $region28: #{gat_model_mll_forward.24} parent=23 // pred_fallthru
        _
    $region24: #{gat_model_mll_forward.24} parent=5 // pred_fallthru
      _
    %p171 = scmp.le.s32.totalorder 1, %s9
    %p172 = scmp.lt.s32.totalorder %s9, 3
    %p173 = pnand %p171, %p172
    %p174 = pneg %p173
    // Predicated region
    $region29: #{gat_model_mll_forward.24} parent=5 // pred_check
      _
    $region30: #{gat_model_mll_forward.24} parent=5 // pred_check_branch
      %176 = sbr.rel (%p173) target = $region32
    $region31: #{gat_model_mll_forward.24} parent=5 // pred_region
      %s177 = ssub.s32 %s9, 1
      %p178 = scmp.lt.s32.totalorder %s18, 1
      %s179 = scalar_select %p178, %s18, 1
      %s180 = smul.addr %s179, 16
      %s181 = smul.addr %s180, 4
      %s182 = scalar_lea.vmem %s0, %s181
      %p183 = pneg %p47
      %p184 = pneg %p44
      %s185 = smul.u32 2, %s19
      %p186 = scmp.lt.s32.totalorder %s185, 1
      %s187 = scalar_select %p186, %s185, 1
      %s188 = smul.addr %s187, 4
      %s189 = scalar_lea.vmem %s1, %s188
      %p190 = pneg %p73
      %p191 = pneg %p70
      %s192 = smul.u32 2, %s19
      %p193 = scmp.lt.s32.totalorder %s192, 1
      %s194 = scalar_select %p193, %s192, 1
      %s195 = scalar_lea.vmem %s2, %s194
      %p196 = pneg %p99
      %p197 = pneg %p96
      %p198 = pneg %p127
      %p199 = pneg %p124
      %s200 = smul.u32 2, %s19
      %p201 = scmp.lt.s32.totalorder %s18, 1
      %s202 = scalar_select %p201, %s18, 1
      %p203 = scmp.lt.s32.totalorder %s200, 1
      %s204 = scalar_select %p203, %s200, 1
      %s205 = smul.addr %s202, 2
      %s206 = sadd.s32 %s204, %s205
      %s207 = smul.addr %s206, 8
      %s208 = scalar_lea.vmem %s3, %s207
      %p209 = scmp.lt.s32.totalorder %s18, 1
      %s210 = scalar_select %p209, %s18, 1
      %s211 = smul.addr %s210, 16
      %s212 = smul.addr %s211, 4
      %s213 = scalar_lea.vmem %s0, %s212
      %s214 = smul.u32 2, %s19
      %p215 = scmp.lt.s32.totalorder %s214, 1
      %s216 = scalar_select %p215, %s214, 1
      %s217 = smul.addr %s216, 4
      %s218 = scalar_lea.vmem %s1, %s217
      %s219 = smul.u32 2, %s19
      %s220 = smul.u32 2, %s19
      %p221 = scmp.lt.s32.totalorder %s220, 1
      %s222 = scalar_select %p221, %s220, 1
      %s223 = scalar_lea.vmem %s2, %s222
      %s224 = smul.u32 2, %s19
      %s225 = smul.u32 2, %s19
      %p226 = scmp.lt.s32.totalorder %s18, 1
      %s227 = scalar_select %p226, %s18, 1
      %p228 = scmp.lt.s32.totalorder %s225, 1
      %s229 = scalar_select %p228, %s225, 1
      %s230 = smul.addr %s227, 2
      %s231 = sadd.s32 %s229, %s230
      %s232 = smul.addr %s231, 8
      %s233 = scalar_lea.vmem %s3, %s232
      %s234 = smul.u32 2, %s19
      %v235 = vld [vmem:[%s213] sm:$0xff]
      %v236 = vld [vmem:[%s213 + $0x8] sm:$0xff]
      %v237 = vld [vmem:[%s213 + $0x10] sm:$0xff]
      %v238 = vld [vmem:[%s213 + $0x18] sm:$0xff]
      %v239 = vld [vmem:[%s218] sm:$0xff]
      %v240 = vld [vmem:[%s218 + $0x8] sm:$0xff]
      %v241 = vld [vmem:[%s218 + $0x10] sm:$0xff]
      %v242 = vld [vmem:[%s218 + $0x18] sm:$0xff]
      %v243 = vld [vmem:[%s218 + $0x20] sm:$0xff]
      %v244 = vld [vmem:[%s218 + $0x28] sm:$0xff]
      %v245 = vld [vmem:[%s218 + $0x30] sm:$0xff]
      %v246 = vld [vmem:[%s218 + $0x38] sm:$0xff]
      %v247 = vld [vmem:[%s218 + $0x40] sm:$0xff]
      %v248 = vld [vmem:[%s218 + $0x48] sm:$0xff]
      %v249 = vld [vmem:[%s218 + $0x50] sm:$0xff]
      %v250 = vld [vmem:[%s218 + $0x58] sm:$0xff]
      %v251 = vld [vmem:[%s218 + $0x60] sm:$0xff]
      %v252 = vld [vmem:[%s218 + $0x68] sm:$0xff]
      %v253 = vld [vmem:[%s218 + $0x70] sm:$0xff]
      %v254 = vld [vmem:[%s218 + $0x78] sm:$0xff]
      %v255 = vld [vmem:[%s218 + $0x80] sm:$0xff]
      %v256 = vld [vmem:[%s218 + $0x88] sm:$0xff]
      %v257 = vld [vmem:[%s218 + $0x90] sm:$0xff]
      %v258 = vld [vmem:[%s218 + $0x98] sm:$0xff]
      %v259 = vld [vmem:[%s218 + $0xa0] sm:$0xff]
      %v260 = vld [vmem:[%s218 + $0xa8] sm:$0xff]
      %v261 = vld [vmem:[%s218 + $0xb0] sm:$0xff]
      %v262 = vld [vmem:[%s218 + $0xb8] sm:$0xff]
      %v263 = vld [vmem:[%s218 + $0xc0] sm:$0xff]
      %v264 = vld [vmem:[%s218 + $0xc8] sm:$0xff]
      %v265 = vld [vmem:[%s218 + $0xd0] sm:$0xff]
      %v266 = vld [vmem:[%s218 + $0xd8] sm:$0xff]
      %v267 = vld [vmem:[%s218 + $0xe0] sm:$0xff]
      %v268 = vld [vmem:[%s218 + $0xe8] sm:$0xff]
      %v269 = vld [vmem:[%s218 + $0xf0] sm:$0xff]
      %v270 = vld [vmem:[%s218 + $0xf8] sm:$0xff]
      %v271 = vld [vmem:[%s218 + $0x100] sm:$0xff]
      %v272 = vld [vmem:[%s218 + $0x108] sm:$0xff]
      %v273 = vld [vmem:[%s218 + $0x110] sm:$0xff]
      %v274 = vld [vmem:[%s218 + $0x118] sm:$0xff]
      %v275 = vld [vmem:[%s218 + $0x120] sm:$0xff]
      %v276 = vld [vmem:[%s218 + $0x128] sm:$0xff]
      %v277 = vld [vmem:[%s218 + $0x130] sm:$0xff]
      %v278 = vld [vmem:[%s218 + $0x138] sm:$0xff]
      %v279 = vld [vmem:[%s218 + $0x140] sm:$0xff]
      %v280 = vld [vmem:[%s218 + $0x148] sm:$0xff]
      %v281 = vld [vmem:[%s218 + $0x150] sm:$0xff]
      %v282 = vld [vmem:[%s218 + $0x158] sm:$0xff]
      %v283 = vld [vmem:[%s218 + $0x160] sm:$0xff]
      %v284 = vld [vmem:[%s218 + $0x168] sm:$0xff]
      %v285 = vld [vmem:[%s218 + $0x170] sm:$0xff]
      %v286 = vld [vmem:[%s218 + $0x178] sm:$0xff]
      %v287 = vld [vmem:[%s218 + $0x180] sm:$0xff]
      %v288 = vld [vmem:[%s218 + $0x188] sm:$0xff]
      %v289 = vld [vmem:[%s218 + $0x190] sm:$0xff]
      %v290 = vld [vmem:[%s218 + $0x198] sm:$0xff]
      %v291 = vld [vmem:[%s218 + $0x1a0] sm:$0xff]
      %v292 = vld [vmem:[%s218 + $0x1a8] sm:$0xff]
      %v293 = vld [vmem:[%s218 + $0x1b0] sm:$0xff]
      %v294 = vld [vmem:[%s218 + $0x1b8] sm:$0xff]
      %v295 = vld [vmem:[%s218 + $0x1c0] sm:$0xff]
      %v296 = vld [vmem:[%s218 + $0x1c8] sm:$0xff]
      %v297 = vld [vmem:[%s218 + $0x1d0] sm:$0xff]
      %v298 = vld [vmem:[%s218 + $0x1d8] sm:$0xff]
      %v299 = vld [vmem:[%s218 + $0x1e0] sm:$0xff]
      %v300 = vld [vmem:[%s218 + $0x1e8] sm:$0xff]
      %v301 = vld [vmem:[%s218 + $0x1f0] sm:$0xff]
      %v302 = vld [vmem:[%s218 + $0x1f8] sm:$0xff]
      %v303 = vld [vmem:[%s218 + $0x200] sm:$0xff]
      %v304 = vld [vmem:[%s218 + $0x208] sm:$0xff]
      %v305 = vld [vmem:[%s218 + $0x210] sm:$0xff]
      %v306 = vld [vmem:[%s218 + $0x218] sm:$0xff]
      %v307 = vld [vmem:[%s218 + $0x220] sm:$0xff]
      %v308 = vld [vmem:[%s218 + $0x228] sm:$0xff]
      %v309 = vld [vmem:[%s218 + $0x230] sm:$0xff]
      %v310 = vld [vmem:[%s218 + $0x238] sm:$0xff]
      %v311 = vld [vmem:[%s218 + $0x240] sm:$0xff]
      %v312 = vld [vmem:[%s218 + $0x248] sm:$0xff]
      %v313 = vld [vmem:[%s218 + $0x250] sm:$0xff]
      %v314 = vld [vmem:[%s218 + $0x258] sm:$0xff]
      %v315 = vld [vmem:[%s218 + $0x260] sm:$0xff]
      %v316 = vld [vmem:[%s218 + $0x268] sm:$0xff]
      %v317 = vld [vmem:[%s218 + $0x270] sm:$0xff]
      %v318 = vld [vmem:[%s218 + $0x278] sm:$0xff]
      %v319 = vld [vmem:[%s218 + $0x280] sm:$0xff]
      %v320 = vld [vmem:[%s218 + $0x288] sm:$0xff]
      %v321 = vld [vmem:[%s218 + $0x290] sm:$0xff]
      %v322 = vld [vmem:[%s218 + $0x298] sm:$0xff]
      %v323 = vld [vmem:[%s218 + $0x2a0] sm:$0xff]
      %v324 = vld [vmem:[%s218 + $0x2a8] sm:$0xff]
      %v325 = vld [vmem:[%s218 + $0x2b0] sm:$0xff]
      %v326 = vld [vmem:[%s218 + $0x2b8] sm:$0xff]
      %v327 = vld [vmem:[%s218 + $0x2c0] sm:$0xff]
      %v328 = vld [vmem:[%s218 + $0x2c8] sm:$0xff]
      %v329 = vld [vmem:[%s218 + $0x2d0] sm:$0xff]
      %v330 = vld [vmem:[%s218 + $0x2d8] sm:$0xff]
      %v331 = vld [vmem:[%s218 + $0x2e0] sm:$0xff]
      %v332 = vld [vmem:[%s218 + $0x2e8] sm:$0xff]
      %v333 = vld [vmem:[%s218 + $0x2f0] sm:$0xff]
      %v334 = vld [vmem:[%s218 + $0x2f8] sm:$0xff]
      %v335 = vld [vmem:[%s218 + $0x300] sm:$0xff]
      %v336 = vld [vmem:[%s218 + $0x308] sm:$0xff]
      %v337 = vld [vmem:[%s218 + $0x310] sm:$0xff]
      %v338 = vld [vmem:[%s218 + $0x318] sm:$0xff]
      %v339 = vld [vmem:[%s218 + $0x320] sm:$0xff]
      %v340 = vld [vmem:[%s218 + $0x328] sm:$0xff]
      %v341 = vld [vmem:[%s218 + $0x330] sm:$0xff]
      %v342 = vld [vmem:[%s218 + $0x338] sm:$0xff]
      %v343 = vld [vmem:[%s218 + $0x340] sm:$0xff]
      %v344 = vld [vmem:[%s218 + $0x348] sm:$0xff]
      %v345 = vld [vmem:[%s218 + $0x350] sm:$0xff]
      %v346 = vld [vmem:[%s218 + $0x358] sm:$0xff]
      %v347 = vld [vmem:[%s218 + $0x360] sm:$0xff]
      %v348 = vld [vmem:[%s218 + $0x368] sm:$0xff]
      %v349 = vld [vmem:[%s218 + $0x370] sm:$0xff]
      %v350 = vld [vmem:[%s218 + $0x378] sm:$0xff]
      %v351 = vld [vmem:[%s218 + $0x380] sm:$0xff]
      %v352 = vld [vmem:[%s218 + $0x388] sm:$0xff]
      %v353 = vld [vmem:[%s218 + $0x390] sm:$0xff]
      %v354 = vld [vmem:[%s218 + $0x398] sm:$0xff]
      %v355 = vld [vmem:[%s218 + $0x3a0] sm:$0xff]
      %v356 = vld [vmem:[%s218 + $0x3a8] sm:$0xff]
      %v357 = vld [vmem:[%s218 + $0x3b0] sm:$0xff]
      %v358 = vld [vmem:[%s218 + $0x3b8] sm:$0xff]
      %v359 = vld [vmem:[%s218 + $0x3c0] sm:$0xff]
      %v360 = vld [vmem:[%s218 + $0x3c8] sm:$0xff]
      %v361 = vld [vmem:[%s218 + $0x3d0] sm:$0xff]
      %v362 = vld [vmem:[%s218 + $0x3d8] sm:$0xff]
      %v363 = vld [vmem:[%s218 + $0x3e0] sm:$0xff]
      %v364 = vld [vmem:[%s218 + $0x3e8] sm:$0xff]
      %v365 = vld [vmem:[%s218 + $0x3f0] sm:$0xff]
      %v366 = vld [vmem:[%s218 + $0x3f8] sm:$0xff]
      %v367 = vld [vmem:[%s213 + $0x20] sm:$0x11]
      %v368 = vld [vmem:[%s213 + $0x28] sm:$0x11]
      %v369 = vld [vmem:[%s213 + $0x30] sm:$0x11]
      %v370 = vld [vmem:[%s213 + $0x38] sm:$0x11]
      %s371 = scalar_lea.vmem %s218, 1024
      %v372 = vld [vmem:[%s371] sm:$0xff]
      %v373 = vld [vmem:[%s371 + $0x8] sm:$0xff]
      %v374 = vld [vmem:[%s371 + $0x10] sm:$0xff]
      %v375 = vld [vmem:[%s371 + $0x18] sm:$0xff]
      %v376 = vld [vmem:[%s371 + $0x20] sm:$0xff]
      %v377 = vld [vmem:[%s371 + $0x28] sm:$0xff]
      %v378 = vld [vmem:[%s371 + $0x30] sm:$0xff]
      %v379 = vld [vmem:[%s371 + $0x38] sm:$0xff]
      %v380 = vld [vmem:[%s371 + $0x40] sm:$0xff]
      %v381 = vld [vmem:[%s371 + $0x48] sm:$0xff]
      %v382 = vld [vmem:[%s371 + $0x50] sm:$0xff]
      %v383 = vld [vmem:[%s371 + $0x58] sm:$0xff]
      %v384 = vld [vmem:[%s371 + $0x60] sm:$0xff]
      %v385 = vld [vmem:[%s371 + $0x68] sm:$0xff]
      %v386 = vld [vmem:[%s371 + $0x70] sm:$0xff]
      %v387 = vld [vmem:[%s371 + $0x78] sm:$0xff]
      %v388 = vld [vmem:[%s371 + $0x80] sm:$0xff]
      %v389 = vld [vmem:[%s371 + $0x88] sm:$0xff]
      %v390 = vld [vmem:[%s371 + $0x90] sm:$0xff]
      %v391 = vld [vmem:[%s371 + $0x98] sm:$0xff]
      %v392 = vld [vmem:[%s371 + $0xa0] sm:$0xff]
      %v393 = vld [vmem:[%s371 + $0xa8] sm:$0xff]
      %v394 = vld [vmem:[%s371 + $0xb0] sm:$0xff]
      %v395 = vld [vmem:[%s371 + $0xb8] sm:$0xff]
      %v396 = vld [vmem:[%s371 + $0xc0] sm:$0xff]
      %v397 = vld [vmem:[%s371 + $0xc8] sm:$0xff]
      %v398 = vld [vmem:[%s371 + $0xd0] sm:$0xff]
      %v399 = vld [vmem:[%s371 + $0xd8] sm:$0xff]
      %v400 = vld [vmem:[%s371 + $0xe0] sm:$0xff]
      %v401 = vld [vmem:[%s371 + $0xe8] sm:$0xff]
      %v402 = vld [vmem:[%s371 + $0xf0] sm:$0xff]
      %v403 = vld [vmem:[%s371 + $0xf8] sm:$0xff]
      %v404 = vld [vmem:[%s371 + $0x100] sm:$0xff]
      %v405 = vld [vmem:[%s371 + $0x108] sm:$0xff]
      %v406 = vld [vmem:[%s371 + $0x110] sm:$0xff]
      %v407 = vld [vmem:[%s371 + $0x118] sm:$0xff]
      %v408 = vld [vmem:[%s371 + $0x120] sm:$0xff]
      %v409 = vld [vmem:[%s371 + $0x128] sm:$0xff]
      %v410 = vld [vmem:[%s371 + $0x130] sm:$0xff]
      %v411 = vld [vmem:[%s371 + $0x138] sm:$0xff]
      %v412 = vld [vmem:[%s371 + $0x140] sm:$0xff]
      %v413 = vld [vmem:[%s371 + $0x148] sm:$0xff]
      %v414 = vld [vmem:[%s371 + $0x150] sm:$0xff]
      %v415 = vld [vmem:[%s371 + $0x158] sm:$0xff]
      %v416 = vld [vmem:[%s371 + $0x160] sm:$0xff]
      %v417 = vld [vmem:[%s371 + $0x168] sm:$0xff]
      %v418 = vld [vmem:[%s371 + $0x170] sm:$0xff]
      %v419 = vld [vmem:[%s371 + $0x178] sm:$0xff]
      %v420 = vld [vmem:[%s371 + $0x180] sm:$0xff]
      %v421 = vld [vmem:[%s371 + $0x188] sm:$0xff]
      %v422 = vld [vmem:[%s371 + $0x190] sm:$0xff]
      %v423 = vld [vmem:[%s371 + $0x198] sm:$0xff]
      %v424 = vld [vmem:[%s371 + $0x1a0] sm:$0xff]
      %v425 = vld [vmem:[%s371 + $0x1a8] sm:$0xff]
      %v426 = vld [vmem:[%s371 + $0x1b0] sm:$0xff]
      %v427 = vld [vmem:[%s371 + $0x1b8] sm:$0xff]
      %v428 = vld [vmem:[%s371 + $0x1c0] sm:$0xff]
      %v429 = vld [vmem:[%s371 + $0x1c8] sm:$0xff]
      %v430 = vld [vmem:[%s371 + $0x1d0] sm:$0xff]
      %v431 = vld [vmem:[%s371 + $0x1d8] sm:$0xff]
      %v432 = vld [vmem:[%s371 + $0x1e0] sm:$0xff]
      %v433 = vld [vmem:[%s371 + $0x1e8] sm:$0xff]
      %v434 = vld [vmem:[%s371 + $0x1f0] sm:$0xff]
      %v435 = vld [vmem:[%s371 + $0x1f8] sm:$0xff]
      %v436 = vld [vmem:[%s371 + $0x200] sm:$0xff]
      %v437 = vld [vmem:[%s371 + $0x208] sm:$0xff]
      %v438 = vld [vmem:[%s371 + $0x210] sm:$0xff]
      %v439 = vld [vmem:[%s371 + $0x218] sm:$0xff]
      %v440 = vld [vmem:[%s371 + $0x220] sm:$0xff]
      %v441 = vld [vmem:[%s371 + $0x228] sm:$0xff]
      %v442 = vld [vmem:[%s371 + $0x230] sm:$0xff]
      %v443 = vld [vmem:[%s371 + $0x238] sm:$0xff]
      %v444 = vld [vmem:[%s371 + $0x240] sm:$0xff]
      %v445 = vld [vmem:[%s371 + $0x248] sm:$0xff]
      %v446 = vld [vmem:[%s371 + $0x250] sm:$0xff]
      %v447 = vld [vmem:[%s371 + $0x258] sm:$0xff]
      %v448 = vld [vmem:[%s371 + $0x260] sm:$0xff]
      %v449 = vld [vmem:[%s371 + $0x268] sm:$0xff]
      %v450 = vld [vmem:[%s371 + $0x270] sm:$0xff]
      %v451 = vld [vmem:[%s371 + $0x278] sm:$0xff]
      %v452 = vld [vmem:[%s371 + $0x280] sm:$0xff]
      %v453 = vld [vmem:[%s371 + $0x288] sm:$0xff]
      %v454 = vld [vmem:[%s371 + $0x290] sm:$0xff]
      %v455 = vld [vmem:[%s371 + $0x298] sm:$0xff]
      %v456 = vld [vmem:[%s371 + $0x2a0] sm:$0xff]
      %v457 = vld [vmem:[%s371 + $0x2a8] sm:$0xff]
      %v458 = vld [vmem:[%s371 + $0x2b0] sm:$0xff]
      %v459 = vld [vmem:[%s371 + $0x2b8] sm:$0xff]
      %v460 = vld [vmem:[%s371 + $0x2c0] sm:$0xff]
      %v461 = vld [vmem:[%s371 + $0x2c8] sm:$0xff]
      %v462 = vld [vmem:[%s371 + $0x2d0] sm:$0xff]
      %v463 = vld [vmem:[%s371 + $0x2d8] sm:$0xff]
      %v464 = vld [vmem:[%s371 + $0x2e0] sm:$0xff]
      %v465 = vld [vmem:[%s371 + $0x2e8] sm:$0xff]
      %v466 = vld [vmem:[%s371 + $0x2f0] sm:$0xff]
      %v467 = vld [vmem:[%s371 + $0x2f8] sm:$0xff]
      %v468 = vld [vmem:[%s371 + $0x300] sm:$0xff]
      %v469 = vld [vmem:[%s371 + $0x308] sm:$0xff]
      %v470 = vld [vmem:[%s371 + $0x310] sm:$0xff]
      %v471 = vld [vmem:[%s371 + $0x318] sm:$0xff]
      %v472 = vld [vmem:[%s371 + $0x320] sm:$0xff]
      %v473 = vld [vmem:[%s371 + $0x328] sm:$0xff]
      %v474 = vld [vmem:[%s371 + $0x330] sm:$0xff]
      %v475 = vld [vmem:[%s371 + $0x338] sm:$0xff]
      %v476 = vld [vmem:[%s371 + $0x340] sm:$0xff]
      %v477 = vld [vmem:[%s371 + $0x348] sm:$0xff]
      %v478 = vld [vmem:[%s371 + $0x350] sm:$0xff]
      %v479 = vld [vmem:[%s371 + $0x358] sm:$0xff]
      %v480 = vld [vmem:[%s371 + $0x360] sm:$0xff]
      %v481 = vld [vmem:[%s371 + $0x368] sm:$0xff]
      %v482 = vld [vmem:[%s371 + $0x370] sm:$0xff]
      %v483 = vld [vmem:[%s371 + $0x378] sm:$0xff]
      %v484 = vld [vmem:[%s371 + $0x380] sm:$0xff]
      %v485 = vld [vmem:[%s371 + $0x388] sm:$0xff]
      %v486 = vld [vmem:[%s371 + $0x390] sm:$0xff]
      %v487 = vld [vmem:[%s371 + $0x398] sm:$0xff]
      %v488 = vld [vmem:[%s371 + $0x3a0] sm:$0xff]
      %v489 = vld [vmem:[%s371 + $0x3a8] sm:$0xff]
      %v490 = vld [vmem:[%s371 + $0x3b0] sm:$0xff]
      %v491 = vld [vmem:[%s371 + $0x3b8] sm:$0xff]
      %v492 = vld [vmem:[%s371 + $0x3c0] sm:$0xff]
      %v493 = vld [vmem:[%s371 + $0x3c8] sm:$0xff]
      %v494 = vld [vmem:[%s371 + $0x3d0] sm:$0xff]
      %v495 = vld [vmem:[%s371 + $0x3d8] sm:$0xff]
      %v496 = vld [vmem:[%s371 + $0x3e0] sm:$0xff]
      %v497 = vld [vmem:[%s371 + $0x3e8] sm:$0xff]
      %v498 = vld [vmem:[%s371 + $0x3f0] sm:$0xff]
      %v499 = vld [vmem:[%s371 + $0x3f8] sm:$0xff]
      %v508 = vunpack.c.l.b16 %v235
      %v509 = vunpack.c.h.b16 %v235
      %v510 = vunpack.c.l.b16 %v236
      %v511 = vunpack.c.h.b16 %v236
      %v512 = vunpack.c.l.b16 %v237
      %v513 = vunpack.c.h.b16 %v237
      %v514 = vunpack.c.l.b16 %v238
      %v515 = vunpack.c.h.b16 %v238
      %v516 = vunpack.c.l.b16 %v367
      %v517 = vunpack.c.h.b16 %v367
      %v518 = vunpack.c.l.b16 %v368
      %v519 = vunpack.c.h.b16 %v368
      %v520 = vunpack.c.l.b16 %v369
      %v521 = vunpack.c.h.b16 %v369
      %v522 = vunpack.c.l.b16 %v370
      %v523 = vunpack.c.h.b16 %v370
      %v524 = vpack.c.b16 %v516, %v508
      %v525 = vpack.c.b16 %v517, %v509
      %v526 = vpack.c.b16 %v518, %v510
      %v527 = vpack.c.b16 %v519, %v511
      %v528 = vpack.c.b16 %v520, %v512
      %v529 = vpack.c.b16 %v521, %v513
      %v530 = vpack.c.b16 %v522, %v514
      %v531 = vpack.c.b16 %v523, %v515
      %v533 = vshrl.u32 %v524, 16
      %v535 = vshll.u32 %v524, 16
      %v537 = vrot.slane %v535, 1
      %v538 = vor.u32 %v533, %v537
      %v540 = vshrl.u32 %v525, 16
      %v542 = vshll.u32 %v525, 16
      %v544 = vrot.slane %v542, 1
      %v545 = vor.u32 %v540, %v544
      %v547 = vshrl.u32 %v526, 16
      %v549 = vshll.u32 %v526, 16
      %v551 = vrot.slane %v549, 1
      %v552 = vor.u32 %v547, %v551
      %v554 = vshrl.u32 %v527, 16
      %v556 = vshll.u32 %v527, 16
      %v558 = vrot.slane %v556, 1
      %v559 = vor.u32 %v554, %v558
      %v561 = vshrl.u32 %v528, 16
      %v563 = vshll.u32 %v528, 16
      %v565 = vrot.slane %v563, 1
      %v566 = vor.u32 %v561, %v565
      %v568 = vshrl.u32 %v529, 16
      %v570 = vshll.u32 %v529, 16
      %v572 = vrot.slane %v570, 1
      %v573 = vor.u32 %v568, %v572
      %v575 = vshrl.u32 %v530, 16
      %v577 = vshll.u32 %v530, 16
      %v579 = vrot.slane %v577, 1
      %v580 = vor.u32 %v575, %v579
      %v582 = vshrl.u32 %v531, 16
      %v584 = vshll.u32 %v531, 16
      %v586 = vrot.slane %v584, 1
      %v587 = vor.u32 %v582, %v586
      %v724 = vunpack.c.l.b16 %v372
      %v725 = vunpack.c.h.b16 %v372
      %v726 = vunpack.c.l.b16 %v373
      %v727 = vunpack.c.h.b16 %v373
      %v728 = vunpack.c.l.b16 %v374
      %v729 = vunpack.c.h.b16 %v374
      %v730 = vunpack.c.l.b16 %v375
      %v731 = vunpack.c.h.b16 %v375
      %v732 = vunpack.c.l.b16 %v376
      %v733 = vunpack.c.h.b16 %v376
      %v734 = vunpack.c.l.b16 %v377
      %v735 = vunpack.c.h.b16 %v377
      %v736 = vunpack.c.l.b16 %v378
      %v737 = vunpack.c.h.b16 %v378
      %v738 = vunpack.c.l.b16 %v379
      %v739 = vunpack.c.h.b16 %v379
      %v740 = vunpack.c.l.b16 %v380
      %v741 = vunpack.c.h.b16 %v380
      %v742 = vunpack.c.l.b16 %v381
      %v743 = vunpack.c.h.b16 %v381
      %v744 = vunpack.c.l.b16 %v382
      %v745 = vunpack.c.h.b16 %v382
      %v746 = vunpack.c.l.b16 %v383
      %v747 = vunpack.c.h.b16 %v383
      %v748 = vunpack.c.l.b16 %v384
      %v749 = vunpack.c.h.b16 %v384
      %v750 = vunpack.c.l.b16 %v385
      %v751 = vunpack.c.h.b16 %v385
      %v752 = vunpack.c.l.b16 %v386
      %v753 = vunpack.c.h.b16 %v386
      %v754 = vunpack.c.l.b16 %v387
      %v755 = vunpack.c.h.b16 %v387
      %v756 = vunpack.c.l.b16 %v388
      %v757 = vunpack.c.h.b16 %v388
      %v758 = vunpack.c.l.b16 %v389
      %v759 = vunpack.c.h.b16 %v389
      %v760 = vunpack.c.l.b16 %v390
      %v761 = vunpack.c.h.b16 %v390
      %v762 = vunpack.c.l.b16 %v391
      %v763 = vunpack.c.h.b16 %v391
      %v764 = vunpack.c.l.b16 %v392
      %v765 = vunpack.c.h.b16 %v392
      %v766 = vunpack.c.l.b16 %v393
      %v767 = vunpack.c.h.b16 %v393
      %v768 = vunpack.c.l.b16 %v394
      %v769 = vunpack.c.h.b16 %v394
      %v770 = vunpack.c.l.b16 %v395
      %v771 = vunpack.c.h.b16 %v395
      %v772 = vunpack.c.l.b16 %v396
      %v773 = vunpack.c.h.b16 %v396
      %v774 = vunpack.c.l.b16 %v397
      %v775 = vunpack.c.h.b16 %v397
      %v776 = vunpack.c.l.b16 %v398
      %v777 = vunpack.c.h.b16 %v398
      %v778 = vunpack.c.l.b16 %v399
      %v779 = vunpack.c.h.b16 %v399
      %v780 = vunpack.c.l.b16 %v400
      %v781 = vunpack.c.h.b16 %v400
      %v782 = vunpack.c.l.b16 %v401
      %v783 = vunpack.c.h.b16 %v401
      %v784 = vunpack.c.l.b16 %v402
      %v785 = vunpack.c.h.b16 %v402
      %v786 = vunpack.c.l.b16 %v403
      %v787 = vunpack.c.h.b16 %v403
      %v788 = vunpack.c.l.b16 %v404
      %v789 = vunpack.c.h.b16 %v404
      %v790 = vunpack.c.l.b16 %v405
      %v791 = vunpack.c.h.b16 %v405
      %v792 = vunpack.c.l.b16 %v406
      %v793 = vunpack.c.h.b16 %v406
      %v794 = vunpack.c.l.b16 %v407
      %v795 = vunpack.c.h.b16 %v407
      %v796 = vunpack.c.l.b16 %v408
      %v797 = vunpack.c.h.b16 %v408
      %v798 = vunpack.c.l.b16 %v409
      %v799 = vunpack.c.h.b16 %v409
      %v800 = vunpack.c.l.b16 %v410
      %v801 = vunpack.c.h.b16 %v410
      %v802 = vunpack.c.l.b16 %v411
      %v803 = vunpack.c.h.b16 %v411
      %v804 = vunpack.c.l.b16 %v412
      %v805 = vunpack.c.h.b16 %v412
      %v806 = vunpack.c.l.b16 %v413
      %v807 = vunpack.c.h.b16 %v413
      %v808 = vunpack.c.l.b16 %v414
      %v809 = vunpack.c.h.b16 %v414
      %v810 = vunpack.c.l.b16 %v415
      %v811 = vunpack.c.h.b16 %v415
      %v812 = vunpack.c.l.b16 %v416
      %v813 = vunpack.c.h.b16 %v416
      %v814 = vunpack.c.l.b16 %v417
      %v815 = vunpack.c.h.b16 %v417
      %v816 = vunpack.c.l.b16 %v418
      %v817 = vunpack.c.h.b16 %v418
      %v818 = vunpack.c.l.b16 %v419
      %v819 = vunpack.c.h.b16 %v419
      %v820 = vunpack.c.l.b16 %v420
      %v821 = vunpack.c.h.b16 %v420
      %v822 = vunpack.c.l.b16 %v421
      %v823 = vunpack.c.h.b16 %v421
      %v824 = vunpack.c.l.b16 %v422
      %v825 = vunpack.c.h.b16 %v422
      %v826 = vunpack.c.l.b16 %v423
      %v827 = vunpack.c.h.b16 %v423
      %v828 = vunpack.c.l.b16 %v424
      %v829 = vunpack.c.h.b16 %v424
      %v830 = vunpack.c.l.b16 %v425
      %v831 = vunpack.c.h.b16 %v425
      %v832 = vunpack.c.l.b16 %v426
      %v833 = vunpack.c.h.b16 %v426
      %v834 = vunpack.c.l.b16 %v427
      %v835 = vunpack.c.h.b16 %v427
      %v836 = vunpack.c.l.b16 %v428
      %v837 = vunpack.c.h.b16 %v428
      %v838 = vunpack.c.l.b16 %v429
      %v839 = vunpack.c.h.b16 %v429
      %v840 = vunpack.c.l.b16 %v430
      %v841 = vunpack.c.h.b16 %v430
      %v842 = vunpack.c.l.b16 %v431
      %v843 = vunpack.c.h.b16 %v431
      %v844 = vunpack.c.l.b16 %v432
      %v845 = vunpack.c.h.b16 %v432
      %v846 = vunpack.c.l.b16 %v433
      %v847 = vunpack.c.h.b16 %v433
      %v848 = vunpack.c.l.b16 %v434
      %v849 = vunpack.c.h.b16 %v434
      %v850 = vunpack.c.l.b16 %v435
      %v851 = vunpack.c.h.b16 %v435
      %v852 = vunpack.c.l.b16 %v436
      %v853 = vunpack.c.h.b16 %v436
      %v854 = vunpack.c.l.b16 %v437
      %v855 = vunpack.c.h.b16 %v437
      %v856 = vunpack.c.l.b16 %v438
      %v857 = vunpack.c.h.b16 %v438
      %v858 = vunpack.c.l.b16 %v439
      %v859 = vunpack.c.h.b16 %v439
      %v860 = vunpack.c.l.b16 %v440
      %v861 = vunpack.c.h.b16 %v440
      %v862 = vunpack.c.l.b16 %v441
      %v863 = vunpack.c.h.b16 %v441
      %v864 = vunpack.c.l.b16 %v442
      %v865 = vunpack.c.h.b16 %v442
      %v866 = vunpack.c.l.b16 %v443
      %v867 = vunpack.c.h.b16 %v443
      %v868 = vunpack.c.l.b16 %v444
      %v869 = vunpack.c.h.b16 %v444
      %v870 = vunpack.c.l.b16 %v445
      %v871 = vunpack.c.h.b16 %v445
      %v872 = vunpack.c.l.b16 %v446
      %v873 = vunpack.c.h.b16 %v446
      %v874 = vunpack.c.l.b16 %v447
      %v875 = vunpack.c.h.b16 %v447
      %v876 = vunpack.c.l.b16 %v448
      %v877 = vunpack.c.h.b16 %v448
      %v878 = vunpack.c.l.b16 %v449
      %v879 = vunpack.c.h.b16 %v449
      %v880 = vunpack.c.l.b16 %v450
      %v881 = vunpack.c.h.b16 %v450
      %v882 = vunpack.c.l.b16 %v451
      %v883 = vunpack.c.h.b16 %v451
      %v884 = vunpack.c.l.b16 %v452
      %v885 = vunpack.c.h.b16 %v452
      %v886 = vunpack.c.l.b16 %v453
      %v887 = vunpack.c.h.b16 %v453
      %v888 = vunpack.c.l.b16 %v454
      %v889 = vunpack.c.h.b16 %v454
      %v890 = vunpack.c.l.b16 %v455
      %v891 = vunpack.c.h.b16 %v455
      %v892 = vunpack.c.l.b16 %v456
      %v893 = vunpack.c.h.b16 %v456
      %v894 = vunpack.c.l.b16 %v457
      %v895 = vunpack.c.h.b16 %v457
      %v896 = vunpack.c.l.b16 %v458
      %v897 = vunpack.c.h.b16 %v458
      %v898 = vunpack.c.l.b16 %v459
      %v899 = vunpack.c.h.b16 %v459
      %v900 = vunpack.c.l.b16 %v460
      %v901 = vunpack.c.h.b16 %v460
      %v902 = vunpack.c.l.b16 %v461
      %v903 = vunpack.c.h.b16 %v461
      %v904 = vunpack.c.l.b16 %v462
      %v905 = vunpack.c.h.b16 %v462
      %v906 = vunpack.c.l.b16 %v463
      %v907 = vunpack.c.h.b16 %v463
      %v908 = vunpack.c.l.b16 %v464
      %v909 = vunpack.c.h.b16 %v464
      %v910 = vunpack.c.l.b16 %v465
      %v911 = vunpack.c.h.b16 %v465
      %v912 = vunpack.c.l.b16 %v466
      %v913 = vunpack.c.h.b16 %v466
      %v914 = vunpack.c.l.b16 %v467
      %v915 = vunpack.c.h.b16 %v467
      %v916 = vunpack.c.l.b16 %v468
      %v917 = vunpack.c.h.b16 %v468
      %v918 = vunpack.c.l.b16 %v469
      %v919 = vunpack.c.h.b16 %v469
      %v920 = vunpack.c.l.b16 %v470
      %v921 = vunpack.c.h.b16 %v470
      %v922 = vunpack.c.l.b16 %v471
      %v923 = vunpack.c.h.b16 %v471
      %v924 = vunpack.c.l.b16 %v472
      %v925 = vunpack.c.h.b16 %v472
      %v926 = vunpack.c.l.b16 %v473
      %v927 = vunpack.c.h.b16 %v473
      %v928 = vunpack.c.l.b16 %v474
      %v929 = vunpack.c.h.b16 %v474
      %v930 = vunpack.c.l.b16 %v475
      %v931 = vunpack.c.h.b16 %v475
      %v932 = vunpack.c.l.b16 %v476
      %v933 = vunpack.c.h.b16 %v476
      %v934 = vunpack.c.l.b16 %v477
      %v935 = vunpack.c.h.b16 %v477
      %v936 = vunpack.c.l.b16 %v478
      %v937 = vunpack.c.h.b16 %v478
      %v938 = vunpack.c.l.b16 %v479
      %v939 = vunpack.c.h.b16 %v479
      %v940 = vunpack.c.l.b16 %v480
      %v941 = vunpack.c.h.b16 %v480
      %v942 = vunpack.c.l.b16 %v481
      %v943 = vunpack.c.h.b16 %v481
      %v944 = vunpack.c.l.b16 %v482
      %v945 = vunpack.c.h.b16 %v482
      %v946 = vunpack.c.l.b16 %v483
      %v947 = vunpack.c.h.b16 %v483
      %v948 = vunpack.c.l.b16 %v484
      %v949 = vunpack.c.h.b16 %v484
      %v950 = vunpack.c.l.b16 %v485
      %v951 = vunpack.c.h.b16 %v485
      %v952 = vunpack.c.l.b16 %v486
      %v953 = vunpack.c.h.b16 %v486
      %v954 = vunpack.c.l.b16 %v487
      %v955 = vunpack.c.h.b16 %v487
      %v956 = vunpack.c.l.b16 %v488
      %v957 = vunpack.c.h.b16 %v488
      %v958 = vunpack.c.l.b16 %v489
      %v959 = vunpack.c.h.b16 %v489
      %v960 = vunpack.c.l.b16 %v490
      %v961 = vunpack.c.h.b16 %v490
      %v962 = vunpack.c.l.b16 %v491
      %v963 = vunpack.c.h.b16 %v491
      %v964 = vunpack.c.l.b16 %v492
      %v965 = vunpack.c.h.b16 %v492
      %v966 = vunpack.c.l.b16 %v493
      %v967 = vunpack.c.h.b16 %v493
      %v968 = vunpack.c.l.b16 %v494
      %v969 = vunpack.c.h.b16 %v494
      %v970 = vunpack.c.l.b16 %v495
      %v971 = vunpack.c.h.b16 %v495
      %v972 = vunpack.c.l.b16 %v496
      %v973 = vunpack.c.h.b16 %v496
      %v974 = vunpack.c.l.b16 %v497
      %v975 = vunpack.c.h.b16 %v497
      %v976 = vunpack.c.l.b16 %v498
      %v977 = vunpack.c.h.b16 %v498
      %v978 = vunpack.c.l.b16 %v499
      %v979 = vunpack.c.h.b16 %v499
      %v980 = vpack.c.b16 %v726, %v724
      %v981 = vpack.c.b16 %v727, %v725
      %v982 = vpack.c.b16 %v730, %v728
      %v983 = vpack.c.b16 %v731, %v729
      %v984 = vpack.c.b16 %v734, %v732
      %v985 = vpack.c.b16 %v735, %v733
      %v986 = vpack.c.b16 %v738, %v736
      %v987 = vpack.c.b16 %v739, %v737
      %v988 = vpack.c.b16 %v742, %v740
      %v989 = vpack.c.b16 %v743, %v741
      %v990 = vpack.c.b16 %v746, %v744
      %v991 = vpack.c.b16 %v747, %v745
      %v992 = vpack.c.b16 %v750, %v748
      %v993 = vpack.c.b16 %v751, %v749
      %v994 = vpack.c.b16 %v754, %v752
      %v995 = vpack.c.b16 %v755, %v753
      %v996 = vpack.c.b16 %v758, %v756
      %v997 = vpack.c.b16 %v759, %v757
      %v998 = vpack.c.b16 %v762, %v760
      %v999 = vpack.c.b16 %v763, %v761
      %v1000 = vpack.c.b16 %v766, %v764
      %v1001 = vpack.c.b16 %v767, %v765
      %v1002 = vpack.c.b16 %v770, %v768
      %v1003 = vpack.c.b16 %v771, %v769
      %v1004 = vpack.c.b16 %v774, %v772
      %v1005 = vpack.c.b16 %v775, %v773
      %v1006 = vpack.c.b16 %v778, %v776
      %v1007 = vpack.c.b16 %v779, %v777
      %v1008 = vpack.c.b16 %v782, %v780
      %v1009 = vpack.c.b16 %v783, %v781
      %v1010 = vpack.c.b16 %v786, %v784
      %v1011 = vpack.c.b16 %v787, %v785
      %v1012 = vpack.c.b16 %v790, %v788
      %v1013 = vpack.c.b16 %v791, %v789
      %v1014 = vpack.c.b16 %v794, %v792
      %v1015 = vpack.c.b16 %v795, %v793
      %v1016 = vpack.c.b16 %v798, %v796
      %v1017 = vpack.c.b16 %v799, %v797
      %v1018 = vpack.c.b16 %v802, %v800
      %v1019 = vpack.c.b16 %v803, %v801
      %v1020 = vpack.c.b16 %v806, %v804
      %v1021 = vpack.c.b16 %v807, %v805
      %v1022 = vpack.c.b16 %v810, %v808
      %v1023 = vpack.c.b16 %v811, %v809
      %v1024 = vpack.c.b16 %v814, %v812
      %v1025 = vpack.c.b16 %v815, %v813
      %v1026 = vpack.c.b16 %v818, %v816
      %v1027 = vpack.c.b16 %v819, %v817
      %v1028 = vpack.c.b16 %v822, %v820
      %v1029 = vpack.c.b16 %v823, %v821
      %v1030 = vpack.c.b16 %v826, %v824
      %v1031 = vpack.c.b16 %v827, %v825
      %v1032 = vpack.c.b16 %v830, %v828
      %v1033 = vpack.c.b16 %v831, %v829
      %v1034 = vpack.c.b16 %v834, %v832
      %v1035 = vpack.c.b16 %v835, %v833
      %v1036 = vpack.c.b16 %v838, %v836
      %v1037 = vpack.c.b16 %v839, %v837
      %v1038 = vpack.c.b16 %v842, %v840
      %v1039 = vpack.c.b16 %v843, %v841
      %v1040 = vpack.c.b16 %v846, %v844
      %v1041 = vpack.c.b16 %v847, %v845
      %v1042 = vpack.c.b16 %v850, %v848
      %v1043 = vpack.c.b16 %v851, %v849
      %v1044 = vpack.c.b16 %v854, %v852
      %v1045 = vpack.c.b16 %v855, %v853
      %v1046 = vpack.c.b16 %v858, %v856
      %v1047 = vpack.c.b16 %v859, %v857
      %v1048 = vpack.c.b16 %v862, %v860
      %v1049 = vpack.c.b16 %v863, %v861
      %v1050 = vpack.c.b16 %v866, %v864
      %v1051 = vpack.c.b16 %v867, %v865
      %v1052 = vpack.c.b16 %v870, %v868
      %v1053 = vpack.c.b16 %v871, %v869
      %v1054 = vpack.c.b16 %v874, %v872
      %v1055 = vpack.c.b16 %v875, %v873
      %v1056 = vpack.c.b16 %v878, %v876
      %v1057 = vpack.c.b16 %v879, %v877
      %v1058 = vpack.c.b16 %v882, %v880
      %v1059 = vpack.c.b16 %v883, %v881
      %v1060 = vpack.c.b16 %v886, %v884
      %v1061 = vpack.c.b16 %v887, %v885
      %v1062 = vpack.c.b16 %v890, %v888
      %v1063 = vpack.c.b16 %v891, %v889
      %v1064 = vpack.c.b16 %v894, %v892
      %v1065 = vpack.c.b16 %v895, %v893
      %v1066 = vpack.c.b16 %v898, %v896
      %v1067 = vpack.c.b16 %v899, %v897
      %v1068 = vpack.c.b16 %v902, %v900
      %v1069 = vpack.c.b16 %v903, %v901
      %v1070 = vpack.c.b16 %v906, %v904
      %v1071 = vpack.c.b16 %v907, %v905
      %v1072 = vpack.c.b16 %v910, %v908
      %v1073 = vpack.c.b16 %v911, %v909
      %v1074 = vpack.c.b16 %v914, %v912
      %v1075 = vpack.c.b16 %v915, %v913
      %v1076 = vpack.c.b16 %v918, %v916
      %v1077 = vpack.c.b16 %v919, %v917
      %v1078 = vpack.c.b16 %v922, %v920
      %v1079 = vpack.c.b16 %v923, %v921
      %v1080 = vpack.c.b16 %v926, %v924
      %v1081 = vpack.c.b16 %v927, %v925
      %v1082 = vpack.c.b16 %v930, %v928
      %v1083 = vpack.c.b16 %v931, %v929
      %v1084 = vpack.c.b16 %v934, %v932
      %v1085 = vpack.c.b16 %v935, %v933
      %v1086 = vpack.c.b16 %v938, %v936
      %v1087 = vpack.c.b16 %v939, %v937
      %v1088 = vpack.c.b16 %v942, %v940
      %v1089 = vpack.c.b16 %v943, %v941
      %v1090 = vpack.c.b16 %v946, %v944
      %v1091 = vpack.c.b16 %v947, %v945
      %v1092 = vpack.c.b16 %v950, %v948
      %v1093 = vpack.c.b16 %v951, %v949
      %v1094 = vpack.c.b16 %v954, %v952
      %v1095 = vpack.c.b16 %v955, %v953
      %v1096 = vpack.c.b16 %v958, %v956
      %v1097 = vpack.c.b16 %v959, %v957
      %v1098 = vpack.c.b16 %v962, %v960
      %v1099 = vpack.c.b16 %v963, %v961
      %v1100 = vpack.c.b16 %v966, %v964
      %v1101 = vpack.c.b16 %v967, %v965
      %v1102 = vpack.c.b16 %v970, %v968
      %v1103 = vpack.c.b16 %v971, %v969
      %v1104 = vpack.c.b16 %v974, %v972
      %v1105 = vpack.c.b16 %v975, %v973
      %v1106 = vpack.c.b16 %v978, %v976
      %v1107 = vpack.c.b16 %v979, %v977
      %1236 = vmatprep.subr.bf16.mxu0 %v981
      %1237 = vmatpush1.bf16.msra.mxu0 %v980
      %1238 = vmatprep.subr.bf16.mxu0 %v983
      %1239 = vmatpush1.bf16.msra.mxu0 %v982
      %1240 = vmatprep.subr.bf16.mxu0 %v985
      %1241 = vmatpush1.bf16.msra.mxu0 %v984
      %1242 = vmatprep.subr.bf16.mxu0 %v987
      %1243 = vmatpush1.bf16.msra.mxu0 %v986
      %1244 = vmatprep.subr.bf16.mxu0 %v989
      %1245 = vmatpush1.bf16.msra.mxu0 %v988
      %1246 = vmatprep.subr.bf16.mxu0 %v991
      %1247 = vmatpush1.bf16.msra.mxu0 %v990
      %1248 = vmatprep.subr.bf16.mxu0 %v993
      %1249 = vmatpush1.bf16.msra.mxu0 %v992
      %1250 = vmatprep.subr.bf16.mxu0 %v995
      %1251 = vmatpush1.bf16.msra.mxu0 %v994
      %1252 = vmatprep.subr.bf16.mxu0 %v997
      %1253 = vmatpush1.bf16.msra.mxu0 %v996
      %1254 = vmatprep.subr.bf16.mxu0 %v999
      %1255 = vmatpush1.bf16.msra.mxu0 %v998
      %1256 = vmatprep.subr.bf16.mxu0 %v1001
      %1257 = vmatpush1.bf16.msra.mxu0 %v1000
      %1258 = vmatprep.subr.bf16.mxu0 %v1003
      %1259 = vmatpush1.bf16.msra.mxu0 %v1002
      %1260 = vmatprep.subr.bf16.mxu0 %v1005
      %1261 = vmatpush1.bf16.msra.mxu0 %v1004
      %1262 = vmatprep.subr.bf16.mxu0 %v1007
      %1263 = vmatpush1.bf16.msra.mxu0 %v1006
      %1264 = vmatprep.subr.bf16.mxu0 %v1009
      %1265 = vmatpush1.bf16.msra.mxu0 %v1008
      %1266 = vmatprep.subr.bf16.mxu0 %v1011
      %1267 = vmatpush1.bf16.msra.mxu0 %v1010
      %1268 = vmatprep.mubr.bf16.mxu0 %v545
      %1269 = vmatmul.mubr.bf16.gmra.mrb[0].mxu0 %v538
      %v1270 = vpop.f32.mrb[0].mxu0
      %v1271 = vadd.f32 0.0, %v1270
      %v1272 = vpop.f32.mrb[0].mxu0
      %v1273 = vadd.f32 0.0, %v1272
      %v1274 = vpop.f32.mrb[0].mxu0
      %v1275 = vpop.f32.mrb[0].mxu0
      %1276 = vdwg.mxu0
      %1277 = vmatprep.subr.bf16.mxu0 %v1013
      %1278 = vmatpush1.bf16.msra.mxu0 %v1012
      %1279 = vmatprep.subr.bf16.mxu0 %v1015
      %1280 = vmatpush1.bf16.msra.mxu0 %v1014
      %1281 = vmatprep.subr.bf16.mxu0 %v1017
      %1282 = vmatpush1.bf16.msra.mxu0 %v1016
      %1283 = vmatprep.subr.bf16.mxu0 %v1019
      %1284 = vmatpush1.bf16.msra.mxu0 %v1018
      %1285 = vmatprep.subr.bf16.mxu0 %v1021
      %1286 = vmatpush1.bf16.msra.mxu0 %v1020
      %1287 = vmatprep.subr.bf16.mxu0 %v1023
      %1288 = vmatpush1.bf16.msra.mxu0 %v1022
      %1289 = vmatprep.subr.bf16.mxu0 %v1025
      %1290 = vmatpush1.bf16.msra.mxu0 %v1024
      %1291 = vmatprep.subr.bf16.mxu0 %v1027
      %1292 = vmatpush1.bf16.msra.mxu0 %v1026
      %1293 = vmatprep.subr.bf16.mxu0 %v1029
      %1294 = vmatpush1.bf16.msra.mxu0 %v1028
      %1295 = vmatprep.subr.bf16.mxu0 %v1031
      %1296 = vmatpush1.bf16.msra.mxu0 %v1030
      %1297 = vmatprep.subr.bf16.mxu0 %v1033
      %1298 = vmatpush1.bf16.msra.mxu0 %v1032
      %1299 = vmatprep.subr.bf16.mxu0 %v1035
      %1300 = vmatpush1.bf16.msra.mxu0 %v1034
      %1301 = vmatprep.subr.bf16.mxu0 %v1037
      %1302 = vmatpush1.bf16.msra.mxu0 %v1036
      %1303 = vmatprep.subr.bf16.mxu0 %v1039
      %1304 = vmatpush1.bf16.msra.mxu0 %v1038
      %1305 = vmatprep.subr.bf16.mxu0 %v1041
      %1306 = vmatpush1.bf16.msra.mxu0 %v1040
      %1307 = vmatprep.subr.bf16.mxu0 %v1043
      %1308 = vmatpush1.bf16.msra.mxu0 %v1042
      %1309 = vmatprep.mubr.bf16.mxu0 %v559
      %1310 = vmatmul.mubr.bf16.gmra.mrb[0].mxu0 %v552
      %v1311 = vpop.f32.mrb[0].mxu0
      %v1312 = vadd.f32 %v1271, %v1311
      %v1313 = vpop.f32.mrb[0].mxu0
      %v1314 = vadd.f32 %v1273, %v1313
      %v1315 = vpop.f32.mrb[0].mxu0
      %v1316 = vpop.f32.mrb[0].mxu0
      %1317 = vdwg.mxu0
      %1318 = vmatprep.subr.bf16.mxu0 %v1045
      %1319 = vmatpush1.bf16.msra.mxu0 %v1044
      %1320 = vmatprep.subr.bf16.mxu0 %v1047
      %1321 = vmatpush1.bf16.msra.mxu0 %v1046
      %1322 = vmatprep.subr.bf16.mxu0 %v1049
      %1323 = vmatpush1.bf16.msra.mxu0 %v1048
      %1324 = vmatprep.subr.bf16.mxu0 %v1051
      %1325 = vmatpush1.bf16.msra.mxu0 %v1050
      %1326 = vmatprep.subr.bf16.mxu0 %v1053
      %1327 = vmatpush1.bf16.msra.mxu0 %v1052
      %1328 = vmatprep.subr.bf16.mxu0 %v1055
      %1329 = vmatpush1.bf16.msra.mxu0 %v1054
      %1330 = vmatprep.subr.bf16.mxu0 %v1057
      %1331 = vmatpush1.bf16.msra.mxu0 %v1056
      %1332 = vmatprep.subr.bf16.mxu0 %v1059
      %1333 = vmatpush1.bf16.msra.mxu0 %v1058
      %1334 = vmatprep.subr.bf16.mxu0 %v1061
      %1335 = vmatpush1.bf16.msra.mxu0 %v1060
      %1336 = vmatprep.subr.bf16.mxu0 %v1063
      %1337 = vmatpush1.bf16.msra.mxu0 %v1062
      %1338 = vmatprep.subr.bf16.mxu0 %v1065
      %1339 = vmatpush1.bf16.msra.mxu0 %v1064
      %1340 = vmatprep.subr.bf16.mxu0 %v1067
      %1341 = vmatpush1.bf16.msra.mxu0 %v1066
      %1342 = vmatprep.subr.bf16.mxu0 %v1069
      %1343 = vmatpush1.bf16.msra.mxu0 %v1068
      %1344 = vmatprep.subr.bf16.mxu0 %v1071
      %1345 = vmatpush1.bf16.msra.mxu0 %v1070
      %1346 = vmatprep.subr.bf16.mxu0 %v1073
      %1347 = vmatpush1.bf16.msra.mxu0 %v1072
      %1348 = vmatprep.subr.bf16.mxu0 %v1075
      %1349 = vmatpush1.bf16.msra.mxu0 %v1074
      %1350 = vmatprep.mubr.bf16.mxu0 %v573
      %1351 = vmatmul.mubr.bf16.gmra.mrb[0].mxu0 %v566
      %v1352 = vpop.f32.mrb[0].mxu0
      %v1353 = vadd.f32 %v1312, %v1352
      %v1354 = vpop.f32.mrb[0].mxu0
      %v1355 = vadd.f32 %v1314, %v1354
      %v1356 = vpop.f32.mrb[0].mxu0
      %v1357 = vpop.f32.mrb[0].mxu0
      %1358 = vdwg.mxu0
      %1359 = vmatprep.subr.bf16.mxu0 %v1077
      %1360 = vmatpush1.bf16.msra.mxu0 %v1076
      %1361 = vmatprep.subr.bf16.mxu0 %v1079
      %1362 = vmatpush1.bf16.msra.mxu0 %v1078
      %1363 = vmatprep.subr.bf16.mxu0 %v1081
      %1364 = vmatpush1.bf16.msra.mxu0 %v1080
      %1365 = vmatprep.subr.bf16.mxu0 %v1083
      %1366 = vmatpush1.bf16.msra.mxu0 %v1082
      %1367 = vmatprep.subr.bf16.mxu0 %v1085
      %1368 = vmatpush1.bf16.msra.mxu0 %v1084
      %1369 = vmatprep.subr.bf16.mxu0 %v1087
      %1370 = vmatpush1.bf16.msra.mxu0 %v1086
      %1371 = vmatprep.subr.bf16.mxu0 %v1089
      %1372 = vmatpush1.bf16.msra.mxu0 %v1088
      %1373 = vmatprep.subr.bf16.mxu0 %v1091
      %1374 = vmatpush1.bf16.msra.mxu0 %v1090
      %1375 = vmatprep.subr.bf16.mxu0 %v1093
      %1376 = vmatpush1.bf16.msra.mxu0 %v1092
      %1377 = vmatprep.subr.bf16.mxu0 %v1095
      %1378 = vmatpush1.bf16.msra.mxu0 %v1094
      %1379 = vmatprep.subr.bf16.mxu0 %v1097
      %1380 = vmatpush1.bf16.msra.mxu0 %v1096
      %1381 = vmatprep.subr.bf16.mxu0 %v1099
      %1382 = vmatpush1.bf16.msra.mxu0 %v1098
      %1383 = vmatprep.subr.bf16.mxu0 %v1101
      %1384 = vmatpush1.bf16.msra.mxu0 %v1100
      %1385 = vmatprep.subr.bf16.mxu0 %v1103
      %1386 = vmatpush1.bf16.msra.mxu0 %v1102
      %1387 = vmatprep.subr.bf16.mxu0 %v1105
      %1388 = vmatpush1.bf16.msra.mxu0 %v1104
      %1389 = vmatprep.subr.bf16.mxu0 %v1107
      %1390 = vmatpush1.bf16.msra.mxu0 %v1106
      %1391 = vmatprep.mubr.bf16.mxu0 %v587
      %1392 = vmatmul.mubr.bf16.gmra.mrb[0].mxu0 %v580
      %v1393 = vpop.f32.mrb[0].mxu0
      %v1394 = vadd.f32 %v1353, %v1393
      %v1395 = vpop.f32.mrb[0].mxu0
      %v1396 = vadd.f32 %v1355, %v1395
      %v1397 = vpop.f32.mrb[0].mxu0
      %v1398 = vpop.f32.mrb[0].mxu0
      %1399 = vdwg.mxu0
      %v1400 = vpack.c.b16 %v508, %v508
      %v1401 = vpack.c.b16 %v509, %v509
      %v1402 = vpack.c.b16 %v510, %v510
      %v1403 = vpack.c.b16 %v511, %v511
      %v1404 = vpack.c.b16 %v512, %v512
      %v1405 = vpack.c.b16 %v513, %v513
      %v1406 = vpack.c.b16 %v514, %v514
      %v1407 = vpack.c.b16 %v515, %v515
      %v1544 = vunpack.c.l.b16 %v239
      %v1545 = vunpack.c.h.b16 %v239
      %v1546 = vunpack.c.l.b16 %v240
      %v1547 = vunpack.c.h.b16 %v240
      %v1548 = vunpack.c.l.b16 %v241
      %v1549 = vunpack.c.h.b16 %v241
      %v1550 = vunpack.c.l.b16 %v242
      %v1551 = vunpack.c.h.b16 %v242
      %v1552 = vunpack.c.l.b16 %v243
      %v1553 = vunpack.c.h.b16 %v243
      %v1554 = vunpack.c.l.b16 %v244
      %v1555 = vunpack.c.h.b16 %v244
      %v1556 = vunpack.c.l.b16 %v245
      %v1557 = vunpack.c.h.b16 %v245
      %v1558 = vunpack.c.l.b16 %v246
      %v1559 = vunpack.c.h.b16 %v246
      %v1560 = vunpack.c.l.b16 %v247
      %v1561 = vunpack.c.h.b16 %v247
      %v1562 = vunpack.c.l.b16 %v248
      %v1563 = vunpack.c.h.b16 %v248
      %v1564 = vunpack.c.l.b16 %v249
      %v1565 = vunpack.c.h.b16 %v249
      %v1566 = vunpack.c.l.b16 %v250
      %v1567 = vunpack.c.h.b16 %v250
      %v1568 = vunpack.c.l.b16 %v251
      %v1569 = vunpack.c.h.b16 %v251
      %v1570 = vunpack.c.l.b16 %v252
      %v1571 = vunpack.c.h.b16 %v252
      %v1572 = vunpack.c.l.b16 %v253
      %v1573 = vunpack.c.h.b16 %v253
      %v1574 = vunpack.c.l.b16 %v254
      %v1575 = vunpack.c.h.b16 %v254
      %v1576 = vunpack.c.l.b16 %v255
      %v1577 = vunpack.c.h.b16 %v255
      %v1578 = vunpack.c.l.b16 %v256
      %v1579 = vunpack.c.h.b16 %v256
      %v1580 = vunpack.c.l.b16 %v257
      %v1581 = vunpack.c.h.b16 %v257
      %v1582 = vunpack.c.l.b16 %v258
      %v1583 = vunpack.c.h.b16 %v258
      %v1584 = vunpack.c.l.b16 %v259
      %v1585 = vunpack.c.h.b16 %v259
      %v1586 = vunpack.c.l.b16 %v260
      %v1587 = vunpack.c.h.b16 %v260
      %v1588 = vunpack.c.l.b16 %v261
      %v1589 = vunpack.c.h.b16 %v261
      %v1590 = vunpack.c.l.b16 %v262
      %v1591 = vunpack.c.h.b16 %v262
      %v1592 = vunpack.c.l.b16 %v263
      %v1593 = vunpack.c.h.b16 %v263
      %v1594 = vunpack.c.l.b16 %v264
      %v1595 = vunpack.c.h.b16 %v264
      %v1596 = vunpack.c.l.b16 %v265
      %v1597 = vunpack.c.h.b16 %v265
      %v1598 = vunpack.c.l.b16 %v266
      %v1599 = vunpack.c.h.b16 %v266
      %v1600 = vunpack.c.l.b16 %v267
      %v1601 = vunpack.c.h.b16 %v267
      %v1602 = vunpack.c.l.b16 %v268
      %v1603 = vunpack.c.h.b16 %v268
      %v1604 = vunpack.c.l.b16 %v269
      %v1605 = vunpack.c.h.b16 %v269
      %v1606 = vunpack.c.l.b16 %v270
      %v1607 = vunpack.c.h.b16 %v270
      %v1608 = vunpack.c.l.b16 %v271
      %v1609 = vunpack.c.h.b16 %v271
      %v1610 = vunpack.c.l.b16 %v272
      %v1611 = vunpack.c.h.b16 %v272
      %v1612 = vunpack.c.l.b16 %v273
      %v1613 = vunpack.c.h.b16 %v273
      %v1614 = vunpack.c.l.b16 %v274
      %v1615 = vunpack.c.h.b16 %v274
      %v1616 = vunpack.c.l.b16 %v275
      %v1617 = vunpack.c.h.b16 %v275
      %v1618 = vunpack.c.l.b16 %v276
      %v1619 = vunpack.c.h.b16 %v276
      %v1620 = vunpack.c.l.b16 %v277
      %v1621 = vunpack.c.h.b16 %v277
      %v1622 = vunpack.c.l.b16 %v278
      %v1623 = vunpack.c.h.b16 %v278
      %v1624 = vunpack.c.l.b16 %v279
      %v1625 = vunpack.c.h.b16 %v279
      %v1626 = vunpack.c.l.b16 %v280
      %v1627 = vunpack.c.h.b16 %v280
      %v1628 = vunpack.c.l.b16 %v281
      %v1629 = vunpack.c.h.b16 %v281
      %v1630 = vunpack.c.l.b16 %v282
      %v1631 = vunpack.c.h.b16 %v282
      %v1632 = vunpack.c.l.b16 %v283
      %v1633 = vunpack.c.h.b16 %v283
      %v1634 = vunpack.c.l.b16 %v284
      %v1635 = vunpack.c.h.b16 %v284
      %v1636 = vunpack.c.l.b16 %v285
      %v1637 = vunpack.c.h.b16 %v285
      %v1638 = vunpack.c.l.b16 %v286
      %v1639 = vunpack.c.h.b16 %v286
      %v1640 = vunpack.c.l.b16 %v287
      %v1641 = vunpack.c.h.b16 %v287
      %v1642 = vunpack.c.l.b16 %v288
      %v1643 = vunpack.c.h.b16 %v288
      %v1644 = vunpack.c.l.b16 %v289
      %v1645 = vunpack.c.h.b16 %v289
      %v1646 = vunpack.c.l.b16 %v290
      %v1647 = vunpack.c.h.b16 %v290
      %v1648 = vunpack.c.l.b16 %v291
      %v1649 = vunpack.c.h.b16 %v291
      %v1650 = vunpack.c.l.b16 %v292
      %v1651 = vunpack.c.h.b16 %v292
      %v1652 = vunpack.c.l.b16 %v293
      %v1653 = vunpack.c.h.b16 %v293
      %v1654 = vunpack.c.l.b16 %v294
      %v1655 = vunpack.c.h.b16 %v294
      %v1656 = vunpack.c.l.b16 %v295
      %v1657 = vunpack.c.h.b16 %v295
      %v1658 = vunpack.c.l.b16 %v296
      %v1659 = vunpack.c.h.b16 %v296
      %v1660 = vunpack.c.l.b16 %v297
      %v1661 = vunpack.c.h.b16 %v297
      %v1662 = vunpack.c.l.b16 %v298
      %v1663 = vunpack.c.h.b16 %v298
      %v1664 = vunpack.c.l.b16 %v299
      %v1665 = vunpack.c.h.b16 %v299
      %v1666 = vunpack.c.l.b16 %v300
      %v1667 = vunpack.c.h.b16 %v300
      %v1668 = vunpack.c.l.b16 %v301
      %v1669 = vunpack.c.h.b16 %v301
      %v1670 = vunpack.c.l.b16 %v302
      %v1671 = vunpack.c.h.b16 %v302
      %v1672 = vunpack.c.l.b16 %v303
      %v1673 = vunpack.c.h.b16 %v303
      %v1674 = vunpack.c.l.b16 %v304
      %v1675 = vunpack.c.h.b16 %v304
      %v1676 = vunpack.c.l.b16 %v305
      %v1677 = vunpack.c.h.b16 %v305
      %v1678 = vunpack.c.l.b16 %v306
      %v1679 = vunpack.c.h.b16 %v306
      %v1680 = vunpack.c.l.b16 %v307
      %v1681 = vunpack.c.h.b16 %v307
      %v1682 = vunpack.c.l.b16 %v308
      %v1683 = vunpack.c.h.b16 %v308
      %v1684 = vunpack.c.l.b16 %v309
      %v1685 = vunpack.c.h.b16 %v309
      %v1686 = vunpack.c.l.b16 %v310
      %v1687 = vunpack.c.h.b16 %v310
      %v1688 = vunpack.c.l.b16 %v311
      %v1689 = vunpack.c.h.b16 %v311
      %v1690 = vunpack.c.l.b16 %v312
      %v1691 = vunpack.c.h.b16 %v312
      %v1692 = vunpack.c.l.b16 %v313
      %v1693 = vunpack.c.h.b16 %v313
      %v1694 = vunpack.c.l.b16 %v314
      %v1695 = vunpack.c.h.b16 %v314
      %v1696 = vunpack.c.l.b16 %v315
      %v1697 = vunpack.c.h.b16 %v315
      %v1698 = vunpack.c.l.b16 %v316
      %v1699 = vunpack.c.h.b16 %v316
      %v1700 = vunpack.c.l.b16 %v317
      %v1701 = vunpack.c.h.b16 %v317
      %v1702 = vunpack.c.l.b16 %v318
      %v1703 = vunpack.c.h.b16 %v318
      %v1704 = vunpack.c.l.b16 %v319
      %v1705 = vunpack.c.h.b16 %v319
      %v1706 = vunpack.c.l.b16 %v320
      %v1707 = vunpack.c.h.b16 %v320
      %v1708 = vunpack.c.l.b16 %v321
      %v1709 = vunpack.c.h.b16 %v321
      %v1710 = vunpack.c.l.b16 %v322
      %v1711 = vunpack.c.h.b16 %v322
      %v1712 = vunpack.c.l.b16 %v323
      %v1713 = vunpack.c.h.b16 %v323
      %v1714 = vunpack.c.l.b16 %v324
      %v1715 = vunpack.c.h.b16 %v324
      %v1716 = vunpack.c.l.b16 %v325
      %v1717 = vunpack.c.h.b16 %v325
      %v1718 = vunpack.c.l.b16 %v326
      %v1719 = vunpack.c.h.b16 %v326
      %v1720 = vunpack.c.l.b16 %v327
      %v1721 = vunpack.c.h.b16 %v327
      %v1722 = vunpack.c.l.b16 %v328
      %v1723 = vunpack.c.h.b16 %v328
      %v1724 = vunpack.c.l.b16 %v329
      %v1725 = vunpack.c.h.b16 %v329
      %v1726 = vunpack.c.l.b16 %v330
      %v1727 = vunpack.c.h.b16 %v330
      %v1728 = vunpack.c.l.b16 %v331
      %v1729 = vunpack.c.h.b16 %v331
      %v1730 = vunpack.c.l.b16 %v332
      %v1731 = vunpack.c.h.b16 %v332
      %v1732 = vunpack.c.l.b16 %v333
      %v1733 = vunpack.c.h.b16 %v333
      %v1734 = vunpack.c.l.b16 %v334
      %v1735 = vunpack.c.h.b16 %v334
      %v1736 = vunpack.c.l.b16 %v335
      %v1737 = vunpack.c.h.b16 %v335
      %v1738 = vunpack.c.l.b16 %v336
      %v1739 = vunpack.c.h.b16 %v336
      %v1740 = vunpack.c.l.b16 %v337
      %v1741 = vunpack.c.h.b16 %v337
      %v1742 = vunpack.c.l.b16 %v338
      %v1743 = vunpack.c.h.b16 %v338
      %v1744 = vunpack.c.l.b16 %v339
      %v1745 = vunpack.c.h.b16 %v339
      %v1746 = vunpack.c.l.b16 %v340
      %v1747 = vunpack.c.h.b16 %v340
      %v1748 = vunpack.c.l.b16 %v341
      %v1749 = vunpack.c.h.b16 %v341
      %v1750 = vunpack.c.l.b16 %v342
      %v1751 = vunpack.c.h.b16 %v342
      %v1752 = vunpack.c.l.b16 %v343
      %v1753 = vunpack.c.h.b16 %v343
      %v1754 = vunpack.c.l.b16 %v344
      %v1755 = vunpack.c.h.b16 %v344
      %v1756 = vunpack.c.l.b16 %v345
      %v1757 = vunpack.c.h.b16 %v345
      %v1758 = vunpack.c.l.b16 %v346
      %v1759 = vunpack.c.h.b16 %v346
      %v1760 = vunpack.c.l.b16 %v347
      %v1761 = vunpack.c.h.b16 %v347
      %v1762 = vunpack.c.l.b16 %v348
      %v1763 = vunpack.c.h.b16 %v348
      %v1764 = vunpack.c.l.b16 %v349
      %v1765 = vunpack.c.h.b16 %v349
      %v1766 = vunpack.c.l.b16 %v350
      %v1767 = vunpack.c.h.b16 %v350
      %v1768 = vunpack.c.l.b16 %v351
      %v1769 = vunpack.c.h.b16 %v351
      %v1770 = vunpack.c.l.b16 %v352
      %v1771 = vunpack.c.h.b16 %v352
      %v1772 = vunpack.c.l.b16 %v353
      %v1773 = vunpack.c.h.b16 %v353
      %v1774 = vunpack.c.l.b16 %v354
      %v1775 = vunpack.c.h.b16 %v354
      %v1776 = vunpack.c.l.b16 %v355
      %v1777 = vunpack.c.h.b16 %v355
      %v1778 = vunpack.c.l.b16 %v356
      %v1779 = vunpack.c.h.b16 %v356
      %v1780 = vunpack.c.l.b16 %v357
      %v1781 = vunpack.c.h.b16 %v357
      %v1782 = vunpack.c.l.b16 %v358
      %v1783 = vunpack.c.h.b16 %v358
      %v1784 = vunpack.c.l.b16 %v359
      %v1785 = vunpack.c.h.b16 %v359
      %v1786 = vunpack.c.l.b16 %v360
      %v1787 = vunpack.c.h.b16 %v360
      %v1788 = vunpack.c.l.b16 %v361
      %v1789 = vunpack.c.h.b16 %v361
      %v1790 = vunpack.c.l.b16 %v362
      %v1791 = vunpack.c.h.b16 %v362
      %v1792 = vunpack.c.l.b16 %v363
      %v1793 = vunpack.c.h.b16 %v363
      %v1794 = vunpack.c.l.b16 %v364
      %v1795 = vunpack.c.h.b16 %v364
      %v1796 = vunpack.c.l.b16 %v365
      %v1797 = vunpack.c.h.b16 %v365
      %v1798 = vunpack.c.l.b16 %v366
      %v1799 = vunpack.c.h.b16 %v366
      %v1800 = vpack.c.b16 %v1546, %v1544
      %v1801 = vpack.c.b16 %v1547, %v1545
      %v1802 = vpack.c.b16 %v1550, %v1548
      %v1803 = vpack.c.b16 %v1551, %v1549
      %v1804 = vpack.c.b16 %v1554, %v1552
      %v1805 = vpack.c.b16 %v1555, %v1553
      %v1806 = vpack.c.b16 %v1558, %v1556
      %v1807 = vpack.c.b16 %v1559, %v1557
      %v1808 = vpack.c.b16 %v1562, %v1560
      %v1809 = vpack.c.b16 %v1563, %v1561
      %v1810 = vpack.c.b16 %v1566, %v1564
      %v1811 = vpack.c.b16 %v1567, %v1565
      %v1812 = vpack.c.b16 %v1570, %v1568
      %v1813 = vpack.c.b16 %v1571, %v1569
      %v1814 = vpack.c.b16 %v1574, %v1572
      %v1815 = vpack.c.b16 %v1575, %v1573
      %v1816 = vpack.c.b16 %v1578, %v1576
      %v1817 = vpack.c.b16 %v1579, %v1577
      %v1818 = vpack.c.b16 %v1582, %v1580
      %v1819 = vpack.c.b16 %v1583, %v1581
      %v1820 = vpack.c.b16 %v1586, %v1584
      %v1821 = vpack.c.b16 %v1587, %v1585
      %v1822 = vpack.c.b16 %v1590, %v1588
      %v1823 = vpack.c.b16 %v1591, %v1589
      %v1824 = vpack.c.b16 %v1594, %v1592
      %v1825 = vpack.c.b16 %v1595, %v1593
      %v1826 = vpack.c.b16 %v1598, %v1596
      %v1827 = vpack.c.b16 %v1599, %v1597
      %v1828 = vpack.c.b16 %v1602, %v1600
      %v1829 = vpack.c.b16 %v1603, %v1601
      %v1830 = vpack.c.b16 %v1606, %v1604
      %v1831 = vpack.c.b16 %v1607, %v1605
      %v1832 = vpack.c.b16 %v1610, %v1608
      %v1833 = vpack.c.b16 %v1611, %v1609
      %v1834 = vpack.c.b16 %v1614, %v1612
      %v1835 = vpack.c.b16 %v1615, %v1613
      %v1836 = vpack.c.b16 %v1618, %v1616
      %v1837 = vpack.c.b16 %v1619, %v1617
      %v1838 = vpack.c.b16 %v1622, %v1620
      %v1839 = vpack.c.b16 %v1623, %v1621
      %v1840 = vpack.c.b16 %v1626, %v1624
      %v1841 = vpack.c.b16 %v1627, %v1625
      %v1842 = vpack.c.b16 %v1630, %v1628
      %v1843 = vpack.c.b16 %v1631, %v1629
      %v1844 = vpack.c.b16 %v1634, %v1632
      %v1845 = vpack.c.b16 %v1635, %v1633
      %v1846 = vpack.c.b16 %v1638, %v1636
      %v1847 = vpack.c.b16 %v1639, %v1637
      %v1848 = vpack.c.b16 %v1642, %v1640
      %v1849 = vpack.c.b16 %v1643, %v1641
      %v1850 = vpack.c.b16 %v1646, %v1644
      %v1851 = vpack.c.b16 %v1647, %v1645
      %v1852 = vpack.c.b16 %v1650, %v1648
      %v1853 = vpack.c.b16 %v1651, %v1649
      %v1854 = vpack.c.b16 %v1654, %v1652
      %v1855 = vpack.c.b16 %v1655, %v1653
      %v1856 = vpack.c.b16 %v1658, %v1656
      %v1857 = vpack.c.b16 %v1659, %v1657
      %v1858 = vpack.c.b16 %v1662, %v1660
      %v1859 = vpack.c.b16 %v1663, %v1661
      %v1860 = vpack.c.b16 %v1666, %v1664
      %v1861 = vpack.c.b16 %v1667, %v1665
      %v1862 = vpack.c.b16 %v1670, %v1668
      %v1863 = vpack.c.b16 %v1671, %v1669
      %v1864 = vpack.c.b16 %v1674, %v1672
      %v1865 = vpack.c.b16 %v1675, %v1673
      %v1866 = vpack.c.b16 %v1678, %v1676
      %v1867 = vpack.c.b16 %v1679, %v1677
      %v1868 = vpack.c.b16 %v1682, %v1680
      %v1869 = vpack.c.b16 %v1683, %v1681
      %v1870 = vpack.c.b16 %v1686, %v1684
      %v1871 = vpack.c.b16 %v1687, %v1685
      %v1872 = vpack.c.b16 %v1690, %v1688
      %v1873 = vpack.c.b16 %v1691, %v1689
      %v1874 = vpack.c.b16 %v1694, %v1692
      %v1875 = vpack.c.b16 %v1695, %v1693
      %v1876 = vpack.c.b16 %v1698, %v1696
      %v1877 = vpack.c.b16 %v1699, %v1697
      %v1878 = vpack.c.b16 %v1702, %v1700
      %v1879 = vpack.c.b16 %v1703, %v1701
      %v1880 = vpack.c.b16 %v1706, %v1704
      %v1881 = vpack.c.b16 %v1707, %v1705
      %v1882 = vpack.c.b16 %v1710, %v1708
      %v1883 = vpack.c.b16 %v1711, %v1709
      %v1884 = vpack.c.b16 %v1714, %v1712
      %v1885 = vpack.c.b16 %v1715, %v1713
      %v1886 = vpack.c.b16 %v1718, %v1716
      %v1887 = vpack.c.b16 %v1719, %v1717
      %v1888 = vpack.c.b16 %v1722, %v1720
      %v1889 = vpack.c.b16 %v1723, %v1721
      %v1890 = vpack.c.b16 %v1726, %v1724
      %v1891 = vpack.c.b16 %v1727, %v1725
      %v1892 = vpack.c.b16 %v1730, %v1728
      %v1893 = vpack.c.b16 %v1731, %v1729
      %v1894 = vpack.c.b16 %v1734, %v1732
      %v1895 = vpack.c.b16 %v1735, %v1733
      %v1896 = vpack.c.b16 %v1738, %v1736
      %v1897 = vpack.c.b16 %v1739, %v1737
      %v1898 = vpack.c.b16 %v1742, %v1740
      %v1899 = vpack.c.b16 %v1743, %v1741
      %v1900 = vpack.c.b16 %v1746, %v1744
      %v1901 = vpack.c.b16 %v1747, %v1745
      %v1902 = vpack.c.b16 %v1750, %v1748
      %v1903 = vpack.c.b16 %v1751, %v1749
      %v1904 = vpack.c.b16 %v1754, %v1752
      %v1905 = vpack.c.b16 %v1755, %v1753
      %v1906 = vpack.c.b16 %v1758, %v1756
      %v1907 = vpack.c.b16 %v1759, %v1757
      %v1908 = vpack.c.b16 %v1762, %v1760
      %v1909 = vpack.c.b16 %v1763, %v1761
      %v1910 = vpack.c.b16 %v1766, %v1764
      %v1911 = vpack.c.b16 %v1767, %v1765
      %v1912 = vpack.c.b16 %v1770, %v1768
      %v1913 = vpack.c.b16 %v1771, %v1769
      %v1914 = vpack.c.b16 %v1774, %v1772
      %v1915 = vpack.c.b16 %v1775, %v1773
      %v1916 = vpack.c.b16 %v1778, %v1776
      %v1917 = vpack.c.b16 %v1779, %v1777
      %v1918 = vpack.c.b16 %v1782, %v1780
      %v1919 = vpack.c.b16 %v1783, %v1781
      %v1920 = vpack.c.b16 %v1786, %v1784
      %v1921 = vpack.c.b16 %v1787, %v1785
      %v1922 = vpack.c.b16 %v1790, %v1788
      %v1923 = vpack.c.b16 %v1791, %v1789
      %v1924 = vpack.c.b16 %v1794, %v1792
      %v1925 = vpack.c.b16 %v1795, %v1793
      %v1926 = vpack.c.b16 %v1798, %v1796
      %v1927 = vpack.c.b16 %v1799, %v1797
      %2056 = vmatprep.subr.bf16.mxu0 %v1801
      %2057 = vmatpush1.bf16.msra.mxu0 %v1800
      %2058 = vmatprep.subr.bf16.mxu0 %v1803
      %2059 = vmatpush1.bf16.msra.mxu0 %v1802
      %2060 = vmatprep.subr.bf16.mxu0 %v1805
      %2061 = vmatpush1.bf16.msra.mxu0 %v1804
      %2062 = vmatprep.subr.bf16.mxu0 %v1807
      %2063 = vmatpush1.bf16.msra.mxu0 %v1806
      %2064 = vmatprep.subr.bf16.mxu0 %v1809
      %2065 = vmatpush1.bf16.msra.mxu0 %v1808
      %2066 = vmatprep.subr.bf16.mxu0 %v1811
      %2067 = vmatpush1.bf16.msra.mxu0 %v1810
      %2068 = vmatprep.subr.bf16.mxu0 %v1813
      %2069 = vmatpush1.bf16.msra.mxu0 %v1812
      %2070 = vmatprep.subr.bf16.mxu0 %v1815
      %2071 = vmatpush1.bf16.msra.mxu0 %v1814
      %2072 = vmatprep.subr.bf16.mxu0 %v1817
      %2073 = vmatpush1.bf16.msra.mxu0 %v1816
      %2074 = vmatprep.subr.bf16.mxu0 %v1819
      %2075 = vmatpush1.bf16.msra.mxu0 %v1818
      %2076 = vmatprep.subr.bf16.mxu0 %v1821
      %2077 = vmatpush1.bf16.msra.mxu0 %v1820
      %2078 = vmatprep.subr.bf16.mxu0 %v1823
      %2079 = vmatpush1.bf16.msra.mxu0 %v1822
      %2080 = vmatprep.subr.bf16.mxu0 %v1825
      %2081 = vmatpush1.bf16.msra.mxu0 %v1824
      %2082 = vmatprep.subr.bf16.mxu0 %v1827
      %2083 = vmatpush1.bf16.msra.mxu0 %v1826
      %2084 = vmatprep.subr.bf16.mxu0 %v1829
      %2085 = vmatpush1.bf16.msra.mxu0 %v1828
      %2086 = vmatprep.subr.bf16.mxu0 %v1831
      %2087 = vmatpush1.bf16.msra.mxu0 %v1830
      %2088 = vmatprep.mubr.bf16.mxu0 %v1401
      %2089 = vmatmul.mubr.bf16.gmra.mrb[0].mxu0 %v1400
      %v2090 = vpop.f32.mrb[0].mxu0
      %v2091 = vadd.f32 %v1394, %v2090
      %v2092 = vpop.f32.mrb[0].mxu0
      %v2093 = vadd.f32 %v1396, %v2092
      %v2094 = vpop.f32.mrb[0].mxu0
      %v2095 = vpop.f32.mrb[0].mxu0
      %2096 = vdwg.mxu0
      %2097 = vmatprep.subr.bf16.mxu0 %v1833
      %2098 = vmatpush1.bf16.msra.mxu0 %v1832
      %2099 = vmatprep.subr.bf16.mxu0 %v1835
      %2100 = vmatpush1.bf16.msra.mxu0 %v1834
      %2101 = vmatprep.subr.bf16.mxu0 %v1837
      %2102 = vmatpush1.bf16.msra.mxu0 %v1836
      %2103 = vmatprep.subr.bf16.mxu0 %v1839
      %2104 = vmatpush1.bf16.msra.mxu0 %v1838
      %2105 = vmatprep.subr.bf16.mxu0 %v1841
      %2106 = vmatpush1.bf16.msra.mxu0 %v1840
      %2107 = vmatprep.subr.bf16.mxu0 %v1843
      %2108 = vmatpush1.bf16.msra.mxu0 %v1842
      %2109 = vmatprep.subr.bf16.mxu0 %v1845
      %2110 = vmatpush1.bf16.msra.mxu0 %v1844
      %2111 = vmatprep.subr.bf16.mxu0 %v1847
      %2112 = vmatpush1.bf16.msra.mxu0 %v1846
      %2113 = vmatprep.subr.bf16.mxu0 %v1849
      %2114 = vmatpush1.bf16.msra.mxu0 %v1848
      %2115 = vmatprep.subr.bf16.mxu0 %v1851
      %2116 = vmatpush1.bf16.msra.mxu0 %v1850
      %2117 = vmatprep.subr.bf16.mxu0 %v1853
      %2118 = vmatpush1.bf16.msra.mxu0 %v1852
      %2119 = vmatprep.subr.bf16.mxu0 %v1855
      %2120 = vmatpush1.bf16.msra.mxu0 %v1854
      %2121 = vmatprep.subr.bf16.mxu0 %v1857
      %2122 = vmatpush1.bf16.msra.mxu0 %v1856
      %2123 = vmatprep.subr.bf16.mxu0 %v1859
      %2124 = vmatpush1.bf16.msra.mxu0 %v1858
      %2125 = vmatprep.subr.bf16.mxu0 %v1861
      %2126 = vmatpush1.bf16.msra.mxu0 %v1860
      %2127 = vmatprep.subr.bf16.mxu0 %v1863
      %2128 = vmatpush1.bf16.msra.mxu0 %v1862
      %2129 = vmatprep.mubr.bf16.mxu0 %v1403
      %2130 = vmatmul.mubr.bf16.gmra.mrb[0].mxu0 %v1402
      %v2131 = vpop.f32.mrb[0].mxu0
      %v2132 = vadd.f32 %v2091, %v2131
      %v2133 = vpop.f32.mrb[0].mxu0
      %v2134 = vadd.f32 %v2093, %v2133
      %v2135 = vpop.f32.mrb[0].mxu0
      %v2136 = vpop.f32.mrb[0].mxu0
      %2137 = vdwg.mxu0
      %2138 = vmatprep.subr.bf16.mxu0 %v1865
      %2139 = vmatpush1.bf16.msra.mxu0 %v1864
      %2140 = vmatprep.subr.bf16.mxu0 %v1867
      %2141 = vmatpush1.bf16.msra.mxu0 %v1866
      %2142 = vmatprep.subr.bf16.mxu0 %v1869
      %2143 = vmatpush1.bf16.msra.mxu0 %v1868
      %2144 = vmatprep.subr.bf16.mxu0 %v1871
      %2145 = vmatpush1.bf16.msra.mxu0 %v1870
      %2146 = vmatprep.subr.bf16.mxu0 %v1873
      %2147 = vmatpush1.bf16.msra.mxu0 %v1872
      %2148 = vmatprep.subr.bf16.mxu0 %v1875
      %2149 = vmatpush1.bf16.msra.mxu0 %v1874
      %2150 = vmatprep.subr.bf16.mxu0 %v1877
      %2151 = vmatpush1.bf16.msra.mxu0 %v1876
      %2152 = vmatprep.subr.bf16.mxu0 %v1879
      %2153 = vmatpush1.bf16.msra.mxu0 %v1878
      %2154 = vmatprep.subr.bf16.mxu0 %v1881
      %2155 = vmatpush1.bf16.msra.mxu0 %v1880
      %2156 = vmatprep.subr.bf16.mxu0 %v1883
      %2157 = vmatpush1.bf16.msra.mxu0 %v1882
      %2158 = vmatprep.subr.bf16.mxu0 %v1885
      %2159 = vmatpush1.bf16.msra.mxu0 %v1884
      %2160 = vmatprep.subr.bf16.mxu0 %v1887
      %2161 = vmatpush1.bf16.msra.mxu0 %v1886
      %2162 = vmatprep.subr.bf16.mxu0 %v1889
      %2163 = vmatpush1.bf16.msra.mxu0 %v1888
      %2164 = vmatprep.subr.bf16.mxu0 %v1891
      %2165 = vmatpush1.bf16.msra.mxu0 %v1890
      %2166 = vmatprep.subr.bf16.mxu0 %v1893
      %2167 = vmatpush1.bf16.msra.mxu0 %v1892
      %2168 = vmatprep.subr.bf16.mxu0 %v1895
      %2169 = vmatpush1.bf16.msra.mxu0 %v1894
      %2170 = vmatprep.mubr.bf16.mxu0 %v1405
      %2171 = vmatmul.mubr.bf16.gmra.mrb[0].mxu0 %v1404
      %v2172 = vpop.f32.mrb[0].mxu0
      %v2173 = vadd.f32 %v2132, %v2172
      %v2174 = vpop.f32.mrb[0].mxu0
      %v2175 = vadd.f32 %v2134, %v2174
      %v2176 = vpop.f32.mrb[0].mxu0
      %v2177 = vpop.f32.mrb[0].mxu0
      %2178 = vdwg.mxu0
      %2179 = vmatprep.subr.bf16.mxu0 %v1897
      %2180 = vmatpush1.bf16.msra.mxu0 %v1896
      %2181 = vmatprep.subr.bf16.mxu0 %v1899
      %2182 = vmatpush1.bf16.msra.mxu0 %v1898
      %2183 = vmatprep.subr.bf16.mxu0 %v1901
      %2184 = vmatpush1.bf16.msra.mxu0 %v1900
      %2185 = vmatprep.subr.bf16.mxu0 %v1903
      %2186 = vmatpush1.bf16.msra.mxu0 %v1902
      %2187 = vmatprep.subr.bf16.mxu0 %v1905
      %2188 = vmatpush1.bf16.msra.mxu0 %v1904
      %2189 = vmatprep.subr.bf16.mxu0 %v1907
      %2190 = vmatpush1.bf16.msra.mxu0 %v1906
      %2191 = vmatprep.subr.bf16.mxu0 %v1909
      %2192 = vmatpush1.bf16.msra.mxu0 %v1908
      %2193 = vmatprep.subr.bf16.mxu0 %v1911
      %2194 = vmatpush1.bf16.msra.mxu0 %v1910
      %2195 = vmatprep.subr.bf16.mxu0 %v1913
      %2196 = vmatpush1.bf16.msra.mxu0 %v1912
      %2197 = vmatprep.subr.bf16.mxu0 %v1915
      %2198 = vmatpush1.bf16.msra.mxu0 %v1914
      %2199 = vmatprep.subr.bf16.mxu0 %v1917
      %2200 = vmatpush1.bf16.msra.mxu0 %v1916
      %2201 = vmatprep.subr.bf16.mxu0 %v1919
      %2202 = vmatpush1.bf16.msra.mxu0 %v1918
      %2203 = vmatprep.subr.bf16.mxu0 %v1921
      %2204 = vmatpush1.bf16.msra.mxu0 %v1920
      %2205 = vmatprep.subr.bf16.mxu0 %v1923
      %2206 = vmatpush1.bf16.msra.mxu0 %v1922
      %2207 = vmatprep.subr.bf16.mxu0 %v1925
      %2208 = vmatpush1.bf16.msra.mxu0 %v1924
      %2209 = vmatprep.subr.bf16.mxu0 %v1927
      %2210 = vmatpush1.bf16.msra.mxu0 %v1926
      %2211 = vmatprep.mubr.bf16.mxu0 %v1407
      %2212 = vmatmul.mubr.bf16.gmra.mrb[0].mxu0 %v1406
      %v2213 = vpop.f32.mrb[0].mxu0
      %v2214 = vadd.f32 %v2173, %v2213
      %v2215 = vpop.f32.mrb[0].mxu0
      %v2216 = vadd.f32 %v2175, %v2215
      %v2217 = vpop.f32.mrb[0].mxu0
      %v2218 = vpop.f32.mrb[0].mxu0
      %2219 = vdwg.mxu0
      %v2220 = vld [vmem:[%s213] sm:$0xee]
      %v2221 = vld [vmem:[%s213 + $0x8] sm:$0xee]
      %v2222 = vld [vmem:[%s213 + $0x10] sm:$0xee]
      %v2223 = vld [vmem:[%s213 + $0x18] sm:$0xee]
      %s2224 = scalar_lea.vmem %s218, 2048
      %v2225 = vld [vmem:[%s2224] sm:$0xff]
      %v2226 = vld [vmem:[%s2224 + $0x8] sm:$0xff]
      %v2227 = vld [vmem:[%s2224 + $0x10] sm:$0xff]
      %v2228 = vld [vmem:[%s2224 + $0x18] sm:$0xff]
      %v2229 = vld [vmem:[%s2224 + $0x20] sm:$0xff]
      %v2230 = vld [vmem:[%s2224 + $0x28] sm:$0xff]
      %v2231 = vld [vmem:[%s2224 + $0x30] sm:$0xff]
      %v2232 = vld [vmem:[%s2224 + $0x38] sm:$0xff]
      %v2233 = vld [vmem:[%s2224 + $0x40] sm:$0xff]
      %v2234 = vld [vmem:[%s2224 + $0x48] sm:$0xff]
      %v2235 = vld [vmem:[%s2224 + $0x50] sm:$0xff]
      %v2236 = vld [vmem:[%s2224 + $0x58] sm:$0xff]
      %v2237 = vld [vmem:[%s2224 + $0x60] sm:$0xff]
      %v2238 = vld [vmem:[%s2224 + $0x68] sm:$0xff]
      %v2239 = vld [vmem:[%s2224 + $0x70] sm:$0xff]
      %v2240 = vld [vmem:[%s2224 + $0x78] sm:$0xff]
      %v2241 = vld [vmem:[%s2224 + $0x80] sm:$0xff]
      %v2242 = vld [vmem:[%s2224 + $0x88] sm:$0xff]
      %v2243 = vld [vmem:[%s2224 + $0x90] sm:$0xff]
      %v2244 = vld [vmem:[%s2224 + $0x98] sm:$0xff]
      %v2245 = vld [vmem:[%s2224 + $0xa0] sm:$0xff]
      %v2246 = vld [vmem:[%s2224 + $0xa8] sm:$0xff]
      %v2247 = vld [vmem:[%s2224 + $0xb0] sm:$0xff]
      %v2248 = vld [vmem:[%s2224 + $0xb8] sm:$0xff]
      %v2249 = vld [vmem:[%s2224 + $0xc0] sm:$0xff]
      %v2250 = vld [vmem:[%s2224 + $0xc8] sm:$0xff]
      %v2251 = vld [vmem:[%s2224 + $0xd0] sm:$0xff]
      %v2252 = vld [vmem:[%s2224 + $0xd8] sm:$0xff]
      %v2253 = vld [vmem:[%s2224 + $0xe0] sm:$0xff]
      %v2254 = vld [vmem:[%s2224 + $0xe8] sm:$0xff]
      %v2255 = vld [vmem:[%s2224 + $0xf0] sm:$0xff]
      %v2256 = vld [vmem:[%s2224 + $0xf8] sm:$0xff]
      %v2257 = vld [vmem:[%s2224 + $0x100] sm:$0xff]
      %v2258 = vld [vmem:[%s2224 + $0x108] sm:$0xff]
      %v2259 = vld [vmem:[%s2224 + $0x110] sm:$0xff]
      %v2260 = vld [vmem:[%s2224 + $0x118] sm:$0xff]
      %v2261 = vld [vmem:[%s2224 + $0x120] sm:$0xff]
      %v2262 = vld [vmem:[%s2224 + $0x128] sm:$0xff]
      %v2263 = vld [vmem:[%s2224 + $0x130] sm:$0xff]
      %v2264 = vld [vmem:[%s2224 + $0x138] sm:$0xff]
      %v2265 = vld [vmem:[%s2224 + $0x140] sm:$0xff]
      %v2266 = vld [vmem:[%s2224 + $0x148] sm:$0xff]
      %v2267 = vld [vmem:[%s2224 + $0x150] sm:$0xff]
      %v2268 = vld [vmem:[%s2224 + $0x158] sm:$0xff]
      %v2269 = vld [vmem:[%s2224 + $0x160] sm:$0xff]
      %v2270 = vld [vmem:[%s2224 + $0x168] sm:$0xff]
      %v2271 = vld [vmem:[%s2224 + $0x170] sm:$0xff]
      %v2272 = vld [vmem:[%s2224 + $0x178] sm:$0xff]
      %v2273 = vld [vmem:[%s2224 + $0x180] sm:$0xff]
      %v2274 = vld [vmem:[%s2224 + $0x188] sm:$0xff]
      %v2275 = vld [vmem:[%s2224 + $0x190] sm:$0xff]
      %v2276 = vld [vmem:[%s2224 + $0x198] sm:$0xff]
      %v2277 = vld [vmem:[%s2224 + $0x1a0] sm:$0xff]
      %v2278 = vld [vmem:[%s2224 + $0x1a8] sm:$0xff]
      %v2279 = vld [vmem:[%s2224 + $0x1b0] sm:$0xff]
      %v2280 = vld [vmem:[%s2224 + $0x1b8] sm:$0xff]
      %v2281 = vld [vmem:[%s2224 + $0x1c0] sm:$0xff]
      %v2282 = vld [vmem:[%s2224 + $0x1c8] sm:$0xff]
      %v2283 = vld [vmem:[%s2224 + $0x1d0] sm:$0xff]
      %v2284 = vld [vmem:[%s2224 + $0x1d8] sm:$0xff]
      %v2285 = vld [vmem:[%s2224 + $0x1e0] sm:$0xff]
      %v2286 = vld [vmem:[%s2224 + $0x1e8] sm:$0xff]
      %v2287 = vld [vmem:[%s2224 + $0x1f0] sm:$0xff]
      %v2288 = vld [vmem:[%s2224 + $0x1f8] sm:$0xff]
      %v2289 = vld [vmem:[%s2224 + $0x200] sm:$0xff]
      %v2290 = vld [vmem:[%s2224 + $0x208] sm:$0xff]
      %v2291 = vld [vmem:[%s2224 + $0x210] sm:$0xff]
      %v2292 = vld [vmem:[%s2224 + $0x218] sm:$0xff]
      %v2293 = vld [vmem:[%s2224 + $0x220] sm:$0xff]
      %v2294 = vld [vmem:[%s2224 + $0x228] sm:$0xff]
      %v2295 = vld [vmem:[%s2224 + $0x230] sm:$0xff]
      %v2296 = vld [vmem:[%s2224 + $0x238] sm:$0xff]
      %v2297 = vld [vmem:[%s2224 + $0x240] sm:$0xff]
      %v2298 = vld [vmem:[%s2224 + $0x248] sm:$0xff]
      %v2299 = vld [vmem:[%s2224 + $0x250] sm:$0xff]
      %v2300 = vld [vmem:[%s2224 + $0x258] sm:$0xff]
      %v2301 = vld [vmem:[%s2224 + $0x260] sm:$0xff]
      %v2302 = vld [vmem:[%s2224 + $0x268] sm:$0xff]
      %v2303 = vld [vmem:[%s2224 + $0x270] sm:$0xff]
      %v2304 = vld [vmem:[%s2224 + $0x278] sm:$0xff]
      %v2305 = vld [vmem:[%s2224 + $0x280] sm:$0xff]
      %v2306 = vld [vmem:[%s2224 + $0x288] sm:$0xff]
      %v2307 = vld [vmem:[%s2224 + $0x290] sm:$0xff]
      %v2308 = vld [vmem:[%s2224 + $0x298] sm:$0xff]
      %v2309 = vld [vmem:[%s2224 + $0x2a0] sm:$0xff]
      %v2310 = vld [vmem:[%s2224 + $0x2a8] sm:$0xff]
      %v2311 = vld [vmem:[%s2224 + $0x2b0] sm:$0xff]
      %v2312 = vld [vmem:[%s2224 + $0x2b8] sm:$0xff]
      %v2313 = vld [vmem:[%s2224 + $0x2c0] sm:$0xff]
      %v2314 = vld [vmem:[%s2224 + $0x2c8] sm:$0xff]
      %v2315 = vld [vmem:[%s2224 + $0x2d0] sm:$0xff]
      %v2316 = vld [vmem:[%s2224 + $0x2d8] sm:$0xff]
      %v2317 = vld [vmem:[%s2224 + $0x2e0] sm:$0xff]
      %v2318 = vld [vmem:[%s2224 + $0x2e8] sm:$0xff]
      %v2319 = vld [vmem:[%s2224 + $0x2f0] sm:$0xff]
      %v2320 = vld [vmem:[%s2224 + $0x2f8] sm:$0xff]
      %v2321 = vld [vmem:[%s2224 + $0x300] sm:$0xff]
      %v2322 = vld [vmem:[%s2224 + $0x308] sm:$0xff]
      %v2323 = vld [vmem:[%s2224 + $0x310] sm:$0xff]
      %v2324 = vld [vmem:[%s2224 + $0x318] sm:$0xff]
      %v2325 = vld [vmem:[%s2224 + $0x320] sm:$0xff]
      %v2326 = vld [vmem:[%s2224 + $0x328] sm:$0xff]
      %v2327 = vld [vmem:[%s2224 + $0x330] sm:$0xff]
      %v2328 = vld [vmem:[%s2224 + $0x338] sm:$0xff]
      %v2329 = vld [vmem:[%s2224 + $0x340] sm:$0xff]
      %v2330 = vld [vmem:[%s2224 + $0x348] sm:$0xff]
      %v2331 = vld [vmem:[%s2224 + $0x350] sm:$0xff]
      %v2332 = vld [vmem:[%s2224 + $0x358] sm:$0xff]
      %v2333 = vld [vmem:[%s2224 + $0x360] sm:$0xff]
      %v2334 = vld [vmem:[%s2224 + $0x368] sm:$0xff]
      %v2335 = vld [vmem:[%s2224 + $0x370] sm:$0xff]
      %v2336 = vld [vmem:[%s2224 + $0x378] sm:$0xff]
      %v2337 = vld [vmem:[%s2224 + $0x380] sm:$0xff]
      %v2338 = vld [vmem:[%s2224 + $0x388] sm:$0xff]
      %v2339 = vld [vmem:[%s2224 + $0x390] sm:$0xff]
      %v2340 = vld [vmem:[%s2224 + $0x398] sm:$0xff]
      %v2341 = vld [vmem:[%s2224 + $0x3a0] sm:$0xff]
      %v2342 = vld [vmem:[%s2224 + $0x3a8] sm:$0xff]
      %v2343 = vld [vmem:[%s2224 + $0x3b0] sm:$0xff]
      %v2344 = vld [vmem:[%s2224 + $0x3b8] sm:$0xff]
      %v2345 = vld [vmem:[%s2224 + $0x3c0] sm:$0xff]
      %v2346 = vld [vmem:[%s2224 + $0x3c8] sm:$0xff]
      %v2347 = vld [vmem:[%s2224 + $0x3d0] sm:$0xff]
      %v2348 = vld [vmem:[%s2224 + $0x3d8] sm:$0xff]
      %v2349 = vld [vmem:[%s2224 + $0x3e0] sm:$0xff]
      %v2350 = vld [vmem:[%s2224 + $0x3e8] sm:$0xff]
      %v2351 = vld [vmem:[%s2224 + $0x3f0] sm:$0xff]
      %v2352 = vld [vmem:[%s2224 + $0x3f8] sm:$0xff]
      %v2357 = vunpack.c.l.b16 %v2220
      %v2358 = vunpack.c.h.b16 %v2220
      %v2359 = vunpack.c.l.b16 %v2221
      %v2360 = vunpack.c.h.b16 %v2221
      %v2361 = vunpack.c.l.b16 %v2222
      %v2362 = vunpack.c.h.b16 %v2222
      %v2363 = vunpack.c.l.b16 %v2223
      %v2364 = vunpack.c.h.b16 %v2223
      %v2365 = vpack.c.b16 %v516, %v2357
      %v2366 = vpack.c.b16 %v517, %v2358
      %v2367 = vpack.c.b16 %v518, %v2359
      %v2368 = vpack.c.b16 %v519, %v2360
      %v2369 = vpack.c.b16 %v520, %v2361
      %v2370 = vpack.c.b16 %v521, %v2362
      %v2371 = vpack.c.b16 %v522, %v2363
      %v2372 = vpack.c.b16 %v523, %v2364
      %v2373 = vrot.slane %v2365, 1
      %v2374 = vrot.slane %v2366, 1
      %v2375 = vrot.slane %v2367, 1
      %v2376 = vrot.slane %v2368, 1
      %v2377 = vrot.slane %v2369, 1
      %v2378 = vrot.slane %v2370, 1
      %v2379 = vrot.slane %v2371, 1
      %v2380 = vrot.slane %v2372, 1
      %v2517 = vunpack.c.l.b16 %v2225
      %v2518 = vunpack.c.h.b16 %v2225
      %v2519 = vunpack.c.l.b16 %v2226
      %v2520 = vunpack.c.h.b16 %v2226
      %v2521 = vunpack.c.l.b16 %v2227
      %v2522 = vunpack.c.h.b16 %v2227
      %v2523 = vunpack.c.l.b16 %v2228
      %v2524 = vunpack.c.h.b16 %v2228
      %v2525 = vunpack.c.l.b16 %v2229
      %v2526 = vunpack.c.h.b16 %v2229
      %v2527 = vunpack.c.l.b16 %v2230
      %v2528 = vunpack.c.h.b16 %v2230
      %v2529 = vunpack.c.l.b16 %v2231
      %v2530 = vunpack.c.h.b16 %v2231
      %v2531 = vunpack.c.l.b16 %v2232
      %v2532 = vunpack.c.h.b16 %v2232
      %v2533 = vunpack.c.l.b16 %v2233
      %v2534 = vunpack.c.h.b16 %v2233
      %v2535 = vunpack.c.l.b16 %v2234
      %v2536 = vunpack.c.h.b16 %v2234
      %v2537 = vunpack.c.l.b16 %v2235
      %v2538 = vunpack.c.h.b16 %v2235
      %v2539 = vunpack.c.l.b16 %v2236
      %v2540 = vunpack.c.h.b16 %v2236
      %v2541 = vunpack.c.l.b16 %v2237
      %v2542 = vunpack.c.h.b16 %v2237
      %v2543 = vunpack.c.l.b16 %v2238
      %v2544 = vunpack.c.h.b16 %v2238
      %v2545 = vunpack.c.l.b16 %v2239
      %v2546 = vunpack.c.h.b16 %v2239
      %v2547 = vunpack.c.l.b16 %v2240
      %v2548 = vunpack.c.h.b16 %v2240
      %v2549 = vunpack.c.l.b16 %v2241
      %v2550 = vunpack.c.h.b16 %v2241
      %v2551 = vunpack.c.l.b16 %v2242
      %v2552 = vunpack.c.h.b16 %v2242
      %v2553 = vunpack.c.l.b16 %v2243
      %v2554 = vunpack.c.h.b16 %v2243
      %v2555 = vunpack.c.l.b16 %v2244
      %v2556 = vunpack.c.h.b16 %v2244
      %v2557 = vunpack.c.l.b16 %v2245
      %v2558 = vunpack.c.h.b16 %v2245
      %v2559 = vunpack.c.l.b16 %v2246
      %v2560 = vunpack.c.h.b16 %v2246
      %v2561 = vunpack.c.l.b16 %v2247
      %v2562 = vunpack.c.h.b16 %v2247
      %v2563 = vunpack.c.l.b16 %v2248
      %v2564 = vunpack.c.h.b16 %v2248
      %v2565 = vunpack.c.l.b16 %v2249
      %v2566 = vunpack.c.h.b16 %v2249
      %v2567 = vunpack.c.l.b16 %v2250
      %v2568 = vunpack.c.h.b16 %v2250
      %v2569 = vunpack.c.l.b16 %v2251
      %v2570 = vunpack.c.h.b16 %v2251
      %v2571 = vunpack.c.l.b16 %v2252
      %v2572 = vunpack.c.h.b16 %v2252
      %v2573 = vunpack.c.l.b16 %v2253
      %v2574 = vunpack.c.h.b16 %v2253
      %v2575 = vunpack.c.l.b16 %v2254
      %v2576 = vunpack.c.h.b16 %v2254
      %v2577 = vunpack.c.l.b16 %v2255
      %v2578 = vunpack.c.h.b16 %v2255
      %v2579 = vunpack.c.l.b16 %v2256
      %v2580 = vunpack.c.h.b16 %v2256
      %v2581 = vunpack.c.l.b16 %v2257
      %v2582 = vunpack.c.h.b16 %v2257
      %v2583 = vunpack.c.l.b16 %v2258
      %v2584 = vunpack.c.h.b16 %v2258
      %v2585 = vunpack.c.l.b16 %v2259
      %v2586 = vunpack.c.h.b16 %v2259
      %v2587 = vunpack.c.l.b16 %v2260
      %v2588 = vunpack.c.h.b16 %v2260
      %v2589 = vunpack.c.l.b16 %v2261
      %v2590 = vunpack.c.h.b16 %v2261
      %v2591 = vunpack.c.l.b16 %v2262
      %v2592 = vunpack.c.h.b16 %v2262
      %v2593 = vunpack.c.l.b16 %v2263
      %v2594 = vunpack.c.h.b16 %v2263
      %v2595 = vunpack.c.l.b16 %v2264
      %v2596 = vunpack.c.h.b16 %v2264
      %v2597 = vunpack.c.l.b16 %v2265
      %v2598 = vunpack.c.h.b16 %v2265
      %v2599 = vunpack.c.l.b16 %v2266
      %v2600 = vunpack.c.h.b16 %v2266
      %v2601 = vunpack.c.l.b16 %v2267
      %v2602 = vunpack.c.h.b16 %v2267
      %v2603 = vunpack.c.l.b16 %v2268
      %v2604 = vunpack.c.h.b16 %v2268
      %v2605 = vunpack.c.l.b16 %v2269
      %v2606 = vunpack.c.h.b16 %v2269
      %v2607 = vunpack.c.l.b16 %v2270
      %v2608 = vunpack.c.h.b16 %v2270
      %v2609 = vunpack.c.l.b16 %v2271
      %v2610 = vunpack.c.h.b16 %v2271
      %v2611 = vunpack.c.l.b16 %v2272
      %v2612 = vunpack.c.h.b16 %v2272
      %v2613 = vunpack.c.l.b16 %v2273
      %v2614 = vunpack.c.h.b16 %v2273
      %v2615 = vunpack.c.l.b16 %v2274
      %v2616 = vunpack.c.h.b16 %v2274
      %v2617 = vunpack.c.l.b16 %v2275
      %v2618 = vunpack.c.h.b16 %v2275
      %v2619 = vunpack.c.l.b16 %v2276
      %v2620 = vunpack.c.h.b16 %v2276
      %v2621 = vunpack.c.l.b16 %v2277
      %v2622 = vunpack.c.h.b16 %v2277
      %v2623 = vunpack.c.l.b16 %v2278
      %v2624 = vunpack.c.h.b16 %v2278
      %v2625 = vunpack.c.l.b16 %v2279
      %v2626 = vunpack.c.h.b16 %v2279
      %v2627 = vunpack.c.l.b16 %v2280
      %v2628 = vunpack.c.h.b16 %v2280
      %v2629 = vunpack.c.l.b16 %v2281
      %v2630 = vunpack.c.h.b16 %v2281
      %v2631 = vunpack.c.l.b16 %v2282
      %v2632 = vunpack.c.h.b16 %v2282
      %v2633 = vunpack.c.l.b16 %v2283
      %v2634 = vunpack.c.h.b16 %v2283
      %v2635 = vunpack.c.l.b16 %v2284
      %v2636 = vunpack.c.h.b16 %v2284
      %v2637 = vunpack.c.l.b16 %v2285
      %v2638 = vunpack.c.h.b16 %v2285
      %v2639 = vunpack.c.l.b16 %v2286
      %v2640 = vunpack.c.h.b16 %v2286
      %v2641 = vunpack.c.l.b16 %v2287
      %v2642 = vunpack.c.h.b16 %v2287
      %v2643 = vunpack.c.l.b16 %v2288
      %v2644 = vunpack.c.h.b16 %v2288
      %v2645 = vunpack.c.l.b16 %v2289
      %v2646 = vunpack.c.h.b16 %v2289
      %v2647 = vunpack.c.l.b16 %v2290
      %v2648 = vunpack.c.h.b16 %v2290
      %v2649 = vunpack.c.l.b16 %v2291
      %v2650 = vunpack.c.h.b16 %v2291
      %v2651 = vunpack.c.l.b16 %v2292
      %v2652 = vunpack.c.h.b16 %v2292
      %v2653 = vunpack.c.l.b16 %v2293
      %v2654 = vunpack.c.h.b16 %v2293
      %v2655 = vunpack.c.l.b16 %v2294
      %v2656 = vunpack.c.h.b16 %v2294
      %v2657 = vunpack.c.l.b16 %v2295
      %v2658 = vunpack.c.h.b16 %v2295
      %v2659 = vunpack.c.l.b16 %v2296
      %v2660 = vunpack.c.h.b16 %v2296
      %v2661 = vunpack.c.l.b16 %v2297
      %v2662 = vunpack.c.h.b16 %v2297
      %v2663 = vunpack.c.l.b16 %v2298
      %v2664 = vunpack.c.h.b16 %v2298
      %v2665 = vunpack.c.l.b16 %v2299
      %v2666 = vunpack.c.h.b16 %v2299
      %v2667 = vunpack.c.l.b16 %v2300
      %v2668 = vunpack.c.h.b16 %v2300
      %v2669 = vunpack.c.l.b16 %v2301
      %v2670 = vunpack.c.h.b16 %v2301
      %v2671 = vunpack.c.l.b16 %v2302
      %v2672 = vunpack.c.h.b16 %v2302
      %v2673 = vunpack.c.l.b16 %v2303
      %v2674 = vunpack.c.h.b16 %v2303
      %v2675 = vunpack.c.l.b16 %v2304
      %v2676 = vunpack.c.h.b16 %v2304
      %v2677 = vunpack.c.l.b16 %v2305
      %v2678 = vunpack.c.h.b16 %v2305
      %v2679 = vunpack.c.l.b16 %v2306
      %v2680 = vunpack.c.h.b16 %v2306
      %v2681 = vunpack.c.l.b16 %v2307
      %v2682 = vunpack.c.h.b16 %v2307
      %v2683 = vunpack.c.l.b16 %v2308
      %v2684 = vunpack.c.h.b16 %v2308
      %v2685 = vunpack.c.l.b16 %v2309
      %v2686 = vunpack.c.h.b16 %v2309
      %v2687 = vunpack.c.l.b16 %v2310
      %v2688 = vunpack.c.h.b16 %v2310
      %v2689 = vunpack.c.l.b16 %v2311
      %v2690 = vunpack.c.h.b16 %v2311
      %v2691 = vunpack.c.l.b16 %v2312
      %v2692 = vunpack.c.h.b16 %v2312
      %v2693 = vunpack.c.l.b16 %v2313
      %v2694 = vunpack.c.h.b16 %v2313
      %v2695 = vunpack.c.l.b16 %v2314
      %v2696 = vunpack.c.h.b16 %v2314
      %v2697 = vunpack.c.l.b16 %v2315
      %v2698 = vunpack.c.h.b16 %v2315
      %v2699 = vunpack.c.l.b16 %v2316
      %v2700 = vunpack.c.h.b16 %v2316
      %v2701 = vunpack.c.l.b16 %v2317
      %v2702 = vunpack.c.h.b16 %v2317
      %v2703 = vunpack.c.l.b16 %v2318
      %v2704 = vunpack.c.h.b16 %v2318
      %v2705 = vunpack.c.l.b16 %v2319
      %v2706 = vunpack.c.h.b16 %v2319
      %v2707 = vunpack.c.l.b16 %v2320
      %v2708 = vunpack.c.h.b16 %v2320
      %v2709 = vunpack.c.l.b16 %v2321
      %v2710 = vunpack.c.h.b16 %v2321
      %v2711 = vunpack.c.l.b16 %v2322
      %v2712 = vunpack.c.h.b16 %v2322
      %v2713 = vunpack.c.l.b16 %v2323
      %v2714 = vunpack.c.h.b16 %v2323
      %v2715 = vunpack.c.l.b16 %v2324
      %v2716 = vunpack.c.h.b16 %v2324
      %v2717 = vunpack.c.l.b16 %v2325
      %v2718 = vunpack.c.h.b16 %v2325
      %v2719 = vunpack.c.l.b16 %v2326
      %v2720 = vunpack.c.h.b16 %v2326
      %v2721 = vunpack.c.l.b16 %v2327
      %v2722 = vunpack.c.h.b16 %v2327
      %v2723 = vunpack.c.l.b16 %v2328
      %v2724 = vunpack.c.h.b16 %v2328
      %v2725 = vunpack.c.l.b16 %v2329
      %v2726 = vunpack.c.h.b16 %v2329
      %v2727 = vunpack.c.l.b16 %v2330
      %v2728 = vunpack.c.h.b16 %v2330
      %v2729 = vunpack.c.l.b16 %v2331
      %v2730 = vunpack.c.h.b16 %v2331
      %v2731 = vunpack.c.l.b16 %v2332
      %v2732 = vunpack.c.h.b16 %v2332
      %v2733 = vunpack.c.l.b16 %v2333
      %v2734 = vunpack.c.h.b16 %v2333
      %v2735 = vunpack.c.l.b16 %v2334
      %v2736 = vunpack.c.h.b16 %v2334
      %v2737 = vunpack.c.l.b16 %v2335
      %v2738 = vunpack.c.h.b16 %v2335
      %v2739 = vunpack.c.l.b16 %v2336
      %v2740 = vunpack.c.h.b16 %v2336
      %v2741 = vunpack.c.l.b16 %v2337
      %v2742 = vunpack.c.h.b16 %v2337
      %v2743 = vunpack.c.l.b16 %v2338
      %v2744 = vunpack.c.h.b16 %v2338
      %v2745 = vunpack.c.l.b16 %v2339
      %v2746 = vunpack.c.h.b16 %v2339
      %v2747 = vunpack.c.l.b16 %v2340
      %v2748 = vunpack.c.h.b16 %v2340
      %v2749 = vunpack.c.l.b16 %v2341
      %v2750 = vunpack.c.h.b16 %v2341
      %v2751 = vunpack.c.l.b16 %v2342
      %v2752 = vunpack.c.h.b16 %v2342
      %v2753 = vunpack.c.l.b16 %v2343
      %v2754 = vunpack.c.h.b16 %v2343
      %v2755 = vunpack.c.l.b16 %v2344
      %v2756 = vunpack.c.h.b16 %v2344
      %v2757 = vunpack.c.l.b16 %v2345
      %v2758 = vunpack.c.h.b16 %v2345
      %v2759 = vunpack.c.l.b16 %v2346
      %v2760 = vunpack.c.h.b16 %v2346
      %v2761 = vunpack.c.l.b16 %v2347
      %v2762 = vunpack.c.h.b16 %v2347
      %v2763 = vunpack.c.l.b16 %v2348
      %v2764 = vunpack.c.h.b16 %v2348
      %v2765 = vunpack.c.l.b16 %v2349
      %v2766 = vunpack.c.h.b16 %v2349
      %v2767 = vunpack.c.l.b16 %v2350
      %v2768 = vunpack.c.h.b16 %v2350
      %v2769 = vunpack.c.l.b16 %v2351
      %v2770 = vunpack.c.h.b16 %v2351
      %v2771 = vunpack.c.l.b16 %v2352
      %v2772 = vunpack.c.h.b16 %v2352
      %v2773 = vpack.c.b16 %v2519, %v2517
      %v2774 = vpack.c.b16 %v2520, %v2518
      %v2775 = vpack.c.b16 %v2523, %v2521
      %v2776 = vpack.c.b16 %v2524, %v2522
      %v2777 = vpack.c.b16 %v2527, %v2525
      %v2778 = vpack.c.b16 %v2528, %v2526
      %v2779 = vpack.c.b16 %v2531, %v2529
      %v2780 = vpack.c.b16 %v2532, %v2530
      %v2781 = vpack.c.b16 %v2535, %v2533
      %v2782 = vpack.c.b16 %v2536, %v2534
      %v2783 = vpack.c.b16 %v2539, %v2537
      %v2784 = vpack.c.b16 %v2540, %v2538
      %v2785 = vpack.c.b16 %v2543, %v2541
      %v2786 = vpack.c.b16 %v2544, %v2542
      %v2787 = vpack.c.b16 %v2547, %v2545
      %v2788 = vpack.c.b16 %v2548, %v2546
      %v2789 = vpack.c.b16 %v2551, %v2549
      %v2790 = vpack.c.b16 %v2552, %v2550
      %v2791 = vpack.c.b16 %v2555, %v2553
      %v2792 = vpack.c.b16 %v2556, %v2554
      %v2793 = vpack.c.b16 %v2559, %v2557
      %v2794 = vpack.c.b16 %v2560, %v2558
      %v2795 = vpack.c.b16 %v2563, %v2561
      %v2796 = vpack.c.b16 %v2564, %v2562
      %v2797 = vpack.c.b16 %v2567, %v2565
      %v2798 = vpack.c.b16 %v2568, %v2566
      %v2799 = vpack.c.b16 %v2571, %v2569
      %v2800 = vpack.c.b16 %v2572, %v2570
      %v2801 = vpack.c.b16 %v2575, %v2573
      %v2802 = vpack.c.b16 %v2576, %v2574
      %v2803 = vpack.c.b16 %v2579, %v2577
      %v2804 = vpack.c.b16 %v2580, %v2578
      %v2805 = vpack.c.b16 %v2583, %v2581
      %v2806 = vpack.c.b16 %v2584, %v2582
      %v2807 = vpack.c.b16 %v2587, %v2585
      %v2808 = vpack.c.b16 %v2588, %v2586
      %v2809 = vpack.c.b16 %v2591, %v2589
      %v2810 = vpack.c.b16 %v2592, %v2590
      %v2811 = vpack.c.b16 %v2595, %v2593
      %v2812 = vpack.c.b16 %v2596, %v2594
      %v2813 = vpack.c.b16 %v2599, %v2597
      %v2814 = vpack.c.b16 %v2600, %v2598
      %v2815 = vpack.c.b16 %v2603, %v2601
      %v2816 = vpack.c.b16 %v2604, %v2602
      %v2817 = vpack.c.b16 %v2607, %v2605
      %v2818 = vpack.c.b16 %v2608, %v2606
      %v2819 = vpack.c.b16 %v2611, %v2609
      %v2820 = vpack.c.b16 %v2612, %v2610
      %v2821 = vpack.c.b16 %v2615, %v2613
      %v2822 = vpack.c.b16 %v2616, %v2614
      %v2823 = vpack.c.b16 %v2619, %v2617
      %v2824 = vpack.c.b16 %v2620, %v2618
      %v2825 = vpack.c.b16 %v2623, %v2621
      %v2826 = vpack.c.b16 %v2624, %v2622
      %v2827 = vpack.c.b16 %v2627, %v2625
      %v2828 = vpack.c.b16 %v2628, %v2626
      %v2829 = vpack.c.b16 %v2631, %v2629
      %v2830 = vpack.c.b16 %v2632, %v2630
      %v2831 = vpack.c.b16 %v2635, %v2633
      %v2832 = vpack.c.b16 %v2636, %v2634
      %v2833 = vpack.c.b16 %v2639, %v2637
      %v2834 = vpack.c.b16 %v2640, %v2638
      %v2835 = vpack.c.b16 %v2643, %v2641
      %v2836 = vpack.c.b16 %v2644, %v2642
      %v2837 = vpack.c.b16 %v2647, %v2645
      %v2838 = vpack.c.b16 %v2648, %v2646
      %v2839 = vpack.c.b16 %v2651, %v2649
      %v2840 = vpack.c.b16 %v2652, %v2650
      %v2841 = vpack.c.b16 %v2655, %v2653
      %v2842 = vpack.c.b16 %v2656, %v2654
      %v2843 = vpack.c.b16 %v2659, %v2657
      %v2844 = vpack.c.b16 %v2660, %v2658
      %v2845 = vpack.c.b16 %v2663, %v2661
      %v2846 = vpack.c.b16 %v2664, %v2662
      %v2847 = vpack.c.b16 %v2667, %v2665
      %v2848 = vpack.c.b16 %v2668, %v2666
      %v2849 = vpack.c.b16 %v2671, %v2669
      %v2850 = vpack.c.b16 %v2672, %v2670
      %v2851 = vpack.c.b16 %v2675, %v2673
      %v2852 = vpack.c.b16 %v2676, %v2674
      %v2853 = vpack.c.b16 %v2679, %v2677
      %v2854 = vpack.c.b16 %v2680, %v2678
      %v2855 = vpack.c.b16 %v2683, %v2681
      %v2856 = vpack.c.b16 %v2684, %v2682
      %v2857 = vpack.c.b16 %v2687, %v2685
      %v2858 = vpack.c.b16 %v2688, %v2686
      %v2859 = vpack.c.b16 %v2691, %v2689
      %v2860 = vpack.c.b16 %v2692, %v2690
      %v2861 = vpack.c.b16 %v2695, %v2693
      %v2862 = vpack.c.b16 %v2696, %v2694
      %v2863 = vpack.c.b16 %v2699, %v2697
      %v2864 = vpack.c.b16 %v2700, %v2698
      %v2865 = vpack.c.b16 %v2703, %v2701
      %v2866 = vpack.c.b16 %v2704, %v2702
      %v2867 = vpack.c.b16 %v2707, %v2705
      %v2868 = vpack.c.b16 %v2708, %v2706
      %v2869 = vpack.c.b16 %v2711, %v2709
      %v2870 = vpack.c.b16 %v2712, %v2710
      %v2871 = vpack.c.b16 %v2715, %v2713
      %v2872 = vpack.c.b16 %v2716, %v2714
      %v2873 = vpack.c.b16 %v2719, %v2717
      %v2874 = vpack.c.b16 %v2720, %v2718
      %v2875 = vpack.c.b16 %v2723, %v2721
      %v2876 = vpack.c.b16 %v2724, %v2722
      %v2877 = vpack.c.b16 %v2727, %v2725
      %v2878 = vpack.c.b16 %v2728, %v2726
      %v2879 = vpack.c.b16 %v2731, %v2729
      %v2880 = vpack.c.b16 %v2732, %v2730
      %v2881 = vpack.c.b16 %v2735, %v2733
      %v2882 = vpack.c.b16 %v2736, %v2734
      %v2883 = vpack.c.b16 %v2739, %v2737
      %v2884 = vpack.c.b16 %v2740, %v2738
      %v2885 = vpack.c.b16 %v2743, %v2741
      %v2886 = vpack.c.b16 %v2744, %v2742
      %v2887 = vpack.c.b16 %v2747, %v2745
      %v2888 = vpack.c.b16 %v2748, %v2746
      %v2889 = vpack.c.b16 %v2751, %v2749
      %v2890 = vpack.c.b16 %v2752, %v2750
      %v2891 = vpack.c.b16 %v2755, %v2753
      %v2892 = vpack.c.b16 %v2756, %v2754
      %v2893 = vpack.c.b16 %v2759, %v2757
      %v2894 = vpack.c.b16 %v2760, %v2758
      %v2895 = vpack.c.b16 %v2763, %v2761
      %v2896 = vpack.c.b16 %v2764, %v2762
      %v2897 = vpack.c.b16 %v2767, %v2765
      %v2898 = vpack.c.b16 %v2768, %v2766
      %v2899 = vpack.c.b16 %v2771, %v2769
      %v2900 = vpack.c.b16 %v2772, %v2770
      %3029 = vmatprep.subr.bf16.mxu0 %v2774
      %3030 = vmatpush1.bf16.msra.mxu0 %v2773
      %3031 = vmatprep.subr.bf16.mxu0 %v2776
      %3032 = vmatpush1.bf16.msra.mxu0 %v2775
      %3033 = vmatprep.subr.bf16.mxu0 %v2778
      %3034 = vmatpush1.bf16.msra.mxu0 %v2777
      %3035 = vmatprep.subr.bf16.mxu0 %v2780
      %3036 = vmatpush1.bf16.msra.mxu0 %v2779
      %3037 = vmatprep.subr.bf16.mxu0 %v2782
      %3038 = vmatpush1.bf16.msra.mxu0 %v2781
      %3039 = vmatprep.subr.bf16.mxu0 %v2784
      %3040 = vmatpush1.bf16.msra.mxu0 %v2783
      %3041 = vmatprep.subr.bf16.mxu0 %v2786
      %3042 = vmatpush1.bf16.msra.mxu0 %v2785
      %3043 = vmatprep.subr.bf16.mxu0 %v2788
      %3044 = vmatpush1.bf16.msra.mxu0 %v2787
      %3045 = vmatprep.subr.bf16.mxu0 %v2790
      %3046 = vmatpush1.bf16.msra.mxu0 %v2789
      %3047 = vmatprep.subr.bf16.mxu0 %v2792
      %3048 = vmatpush1.bf16.msra.mxu0 %v2791
      %3049 = vmatprep.subr.bf16.mxu0 %v2794
      %3050 = vmatpush1.bf16.msra.mxu0 %v2793
      %3051 = vmatprep.subr.bf16.mxu0 %v2796
      %3052 = vmatpush1.bf16.msra.mxu0 %v2795
      %3053 = vmatprep.subr.bf16.mxu0 %v2798
      %3054 = vmatpush1.bf16.msra.mxu0 %v2797
      %3055 = vmatprep.subr.bf16.mxu0 %v2800
      %3056 = vmatpush1.bf16.msra.mxu0 %v2799
      %3057 = vmatprep.subr.bf16.mxu0 %v2802
      %3058 = vmatpush1.bf16.msra.mxu0 %v2801
      %3059 = vmatprep.subr.bf16.mxu0 %v2804
      %3060 = vmatpush1.bf16.msra.mxu0 %v2803
      %3061 = vmatprep.mubr.bf16.mxu0 %v2374
      %3062 = vmatmul.mubr.bf16.gmra.mrb[0].mxu0 %v2373
      %v3063 = vpop.f32.mrb[0].mxu0
      %v3064 = vadd.f32 0.0, %v3063
      %v3065 = vpop.f32.mrb[0].mxu0
      %v3066 = vadd.f32 0.0, %v3065
      %v3067 = vpop.f32.mrb[0].mxu0
      %v3068 = vpop.f32.mrb[0].mxu0
      %3069 = vdwg.mxu0
      %3070 = vmatprep.subr.bf16.mxu0 %v2806
      %3071 = vmatpush1.bf16.msra.mxu0 %v2805
      %3072 = vmatprep.subr.bf16.mxu0 %v2808
      %3073 = vmatpush1.bf16.msra.mxu0 %v2807
      %3074 = vmatprep.subr.bf16.mxu0 %v2810
      %3075 = vmatpush1.bf16.msra.mxu0 %v2809
      %3076 = vmatprep.subr.bf16.mxu0 %v2812
      %3077 = vmatpush1.bf16.msra.mxu0 %v2811
      %3078 = vmatprep.subr.bf16.mxu0 %v2814
      %3079 = vmatpush1.bf16.msra.mxu0 %v2813
      %3080 = vmatprep.subr.bf16.mxu0 %v2816
      %3081 = vmatpush1.bf16.msra.mxu0 %v2815
      %3082 = vmatprep.subr.bf16.mxu0 %v2818
      %3083 = vmatpush1.bf16.msra.mxu0 %v2817
      %3084 = vmatprep.subr.bf16.mxu0 %v2820
      %3085 = vmatpush1.bf16.msra.mxu0 %v2819
      %3086 = vmatprep.subr.bf16.mxu0 %v2822
      %3087 = vmatpush1.bf16.msra.mxu0 %v2821
      %3088 = vmatprep.subr.bf16.mxu0 %v2824
      %3089 = vmatpush1.bf16.msra.mxu0 %v2823
      %3090 = vmatprep.subr.bf16.mxu0 %v2826
      %3091 = vmatpush1.bf16.msra.mxu0 %v2825
      %3092 = vmatprep.subr.bf16.mxu0 %v2828
      %3093 = vmatpush1.bf16.msra.mxu0 %v2827
      %3094 = vmatprep.subr.bf16.mxu0 %v2830
      %3095 = vmatpush1.bf16.msra.mxu0 %v2829
      %3096 = vmatprep.subr.bf16.mxu0 %v2832
      %3097 = vmatpush1.bf16.msra.mxu0 %v2831
      %3098 = vmatprep.subr.bf16.mxu0 %v2834
      %3099 = vmatpush1.bf16.msra.mxu0 %v2833
      %3100 = vmatprep.subr.bf16.mxu0 %v2836
      %3101 = vmatpush1.bf16.msra.mxu0 %v2835
      %3102 = vmatprep.mubr.bf16.mxu0 %v2376
      %3103 = vmatmul.mubr.bf16.gmra.mrb[0].mxu0 %v2375
      %v3104 = vpop.f32.mrb[0].mxu0
      %v3105 = vadd.f32 %v3064, %v3104
      %v3106 = vpop.f32.mrb[0].mxu0
      %v3107 = vadd.f32 %v3066, %v3106
      %v3108 = vpop.f32.mrb[0].mxu0
      %v3109 = vpop.f32.mrb[0].mxu0
      %3110 = vdwg.mxu0
      %3111 = vmatprep.subr.bf16.mxu0 %v2838
      %3112 = vmatpush1.bf16.msra.mxu0 %v2837
      %3113 = vmatprep.subr.bf16.mxu0 %v2840
      %3114 = vmatpush1.bf16.msra.mxu0 %v2839
      %3115 = vmatprep.subr.bf16.mxu0 %v2842
      %3116 = vmatpush1.bf16.msra.mxu0 %v2841
      %3117 = vmatprep.subr.bf16.mxu0 %v2844
      %3118 = vmatpush1.bf16.msra.mxu0 %v2843
      %3119 = vmatprep.subr.bf16.mxu0 %v2846
      %3120 = vmatpush1.bf16.msra.mxu0 %v2845
      %3121 = vmatprep.subr.bf16.mxu0 %v2848
      %3122 = vmatpush1.bf16.msra.mxu0 %v2847
      %3123 = vmatprep.subr.bf16.mxu0 %v2850
      %3124 = vmatpush1.bf16.msra.mxu0 %v2849
      %3125 = vmatprep.subr.bf16.mxu0 %v2852
      %3126 = vmatpush1.bf16.msra.mxu0 %v2851
      %3127 = vmatprep.subr.bf16.mxu0 %v2854
      %3128 = vmatpush1.bf16.msra.mxu0 %v2853
      %3129 = vmatprep.subr.bf16.mxu0 %v2856
      %3130 = vmatpush1.bf16.msra.mxu0 %v2855
      %3131 = vmatprep.subr.bf16.mxu0 %v2858
      %3132 = vmatpush1.bf16.msra.mxu0 %v2857
      %3133 = vmatprep.subr.bf16.mxu0 %v2860
      %3134 = vmatpush1.bf16.msra.mxu0 %v2859
      %3135 = vmatprep.subr.bf16.mxu0 %v2862
      %3136 = vmatpush1.bf16.msra.mxu0 %v2861
      %3137 = vmatprep.subr.bf16.mxu0 %v2864
      %3138 = vmatpush1.bf16.msra.mxu0 %v2863
      %3139 = vmatprep.subr.bf16.mxu0 %v2866
      %3140 = vmatpush1.bf16.msra.mxu0 %v2865
      %3141 = vmatprep.subr.bf16.mxu0 %v2868
      %3142 = vmatpush1.bf16.msra.mxu0 %v2867
      %3143 = vmatprep.mubr.bf16.mxu0 %v2378
      %3144 = vmatmul.mubr.bf16.gmra.mrb[0].mxu0 %v2377
      %v3145 = vpop.f32.mrb[0].mxu0
      %v3146 = vadd.f32 %v3105, %v3145
      %v3147 = vpop.f32.mrb[0].mxu0
      %v3148 = vadd.f32 %v3107, %v3147
      %v3149 = vpop.f32.mrb[0].mxu0
      %v3150 = vpop.f32.mrb[0].mxu0
      %3151 = vdwg.mxu0
      %3152 = vmatprep.subr.bf16.mxu0 %v2870
      %3153 = vmatpush1.bf16.msra.mxu0 %v2869
      %3154 = vmatprep.subr.bf16.mxu0 %v2872
      %3155 = vmatpush1.bf16.msra.mxu0 %v2871
      %3156 = vmatprep.subr.bf16.mxu0 %v2874
      %3157 = vmatpush1.bf16.msra.mxu0 %v2873
      %3158 = vmatprep.subr.bf16.mxu0 %v2876
      %3159 = vmatpush1.bf16.msra.mxu0 %v2875
      %3160 = vmatprep.subr.bf16.mxu0 %v2878
      %3161 = vmatpush1.bf16.msra.mxu0 %v2877
      %3162 = vmatprep.subr.bf16.mxu0 %v2880
      %3163 = vmatpush1.bf16.msra.mxu0 %v2879
      %3164 = vmatprep.subr.bf16.mxu0 %v2882
      %3165 = vmatpush1.bf16.msra.mxu0 %v2881
      %3166 = vmatprep.subr.bf16.mxu0 %v2884
      %3167 = vmatpush1.bf16.msra.mxu0 %v2883
      %3168 = vmatprep.subr.bf16.mxu0 %v2886
      %3169 = vmatpush1.bf16.msra.mxu0 %v2885
      %3170 = vmatprep.subr.bf16.mxu0 %v2888
      %3171 = vmatpush1.bf16.msra.mxu0 %v2887
      %3172 = vmatprep.subr.bf16.mxu0 %v2890
      %3173 = vmatpush1.bf16.msra.mxu0 %v2889
      %3174 = vmatprep.subr.bf16.mxu0 %v2892
      %3175 = vmatpush1.bf16.msra.mxu0 %v2891
      %3176 = vmatprep.subr.bf16.mxu0 %v2894
      %3177 = vmatpush1.bf16.msra.mxu0 %v2893
      %3178 = vmatprep.subr.bf16.mxu0 %v2896
      %3179 = vmatpush1.bf16.msra.mxu0 %v2895
      %3180 = vmatprep.subr.bf16.mxu0 %v2898
      %3181 = vmatpush1.bf16.msra.mxu0 %v2897
      %3182 = vmatprep.subr.bf16.mxu0 %v2900
      %3183 = vmatpush1.bf16.msra.mxu0 %v2899
      %3184 = vmatprep.mubr.bf16.mxu0 %v2380
      %3185 = vmatmul.mubr.bf16.gmra.mrb[0].mxu0 %v2379
      %v3186 = vpop.f32.mrb[0].mxu0
      %v3187 = vadd.f32 %v3146, %v3186
      %v3188 = vpop.f32.mrb[0].mxu0
      %v3189 = vadd.f32 %v3148, %v3188
      %v3190 = vpop.f32.mrb[0].mxu0
      %v3191 = vpop.f32.mrb[0].mxu0
      %3192 = vdwg.mxu0
      %v3193 = vadd.f32 %v2214, %v3187
      %v3194 = vadd.f32 %v2216, %v3189
      %v3195 = vld [vmem:[%s223] sm:$0x3]
      %v3197 = vlaneseq
      %v3198 = vshrl.u32 %v3197, 7
      %v3199 = vsub.s32 0, %v3198
      %v3200 = vrot.slane %v3195, %v3199
      %v3201 = vlaneseq
      %v3202 = vshrl.u32 %v3201, 7
      %v3203 = vsub.s32 1, %v3202
      %v3204 = vrot.slane %v3195, %v3203
      %v3207 = vadd.f32 %v3193, %v3200
      %v3208 = vadd.f32 %v3194, %v3204
      %v3209 = vmax.f32 %v3207, 0.0
      %v3210 = vmax.f32 %v3208, 0.0
      %3211 = vst [vmem:[%s233] sm:$0xff] %v3209
      %3212 = vst [vmem:[%s233 + $0x8] sm:$0xff] %v3210
      %s3213 = smul.u32 2, %s19
      %p3214 = scmp.lt.s32.totalorder %s18, 1
      %s3215 = scalar_select %p3214, %s18, 1
      %p3216 = scmp.lt.s32.totalorder %s3213, 1
      %s3217 = scalar_select %p3216, %s3213, 1
      %s3218 = smul.addr %s3215, 2
      %s3219 = sadd.s32 %s3217, %s3218
      %s3220 = smul.addr %s3219, 8
      %s3221 = scalar_lea.vmem %s3, %s3220
      // Predicated region
      $region33: #{gat_model_mll_forward.24} parent=31 // pred_check
        %p3222 = pneg %p124
      $region34: #{gat_model_mll_forward.24} parent=31 // pred_check_branch
        %3224 = sbr.rel (%p3222) target = $region36
      $region35: #{gat_model_mll_forward.24} parent=31 // pred_region
        %s3225 = smul.u32 2, %s19
      $region36: #{gat_model_mll_forward.24} parent=31 // pred_fallthru
        _
    $region32: #{gat_model_mll_forward.24} parent=5 // pred_fallthru
      _
    %p3226 = scmp.le.s32.totalorder 2, %s9
    // Predicated region
    $region37: #{gat_model_mll_forward.24} parent=5 // pred_check
      %p3227 = pneg %p3226
    $region38: #{gat_model_mll_forward.24} parent=5 // pred_check_branch
      %3229 = sbr.rel (%p3227) target = $region40
    $region39: #{gat_model_mll_forward.24} parent=5 // pred_region
      %s3230 = ssub.s32 %s9, 2
      // Predicated region
      $region41: #{gat_model_mll_forward.24} parent=39 // pred_check
        %p3231 = pneg %p130
      $region42: #{gat_model_mll_forward.24} parent=39 // pred_check_branch
        %3233 = sbr.rel (%p3231) target = $region44
      $region43: #{gat_model_mll_forward.24} parent=39 // pred_region
        %s3234 = smul.u32 2, %s21
        %p3235 = scmp.lt.s32.totalorder %s20, 1
        %s3236 = scalar_select %p3235, %s20, 1
        %p3237 = scmp.lt.s32.totalorder %s3234, 1
        %s3238 = scalar_select %p3237, %s3234, 1
        %s3239 = smul.addr %s3236, 2
        %s3240 = sadd.s32 %s3238, %s3239
        %s3241 = smul.addr %s3240, 8
        %s3242 = scalar_lea.vmem %s3, %s3241
      $region44: #{gat_model_mll_forward.24} parent=39 // pred_fallthru
        _
    $region40: #{gat_model_mll_forward.24} parent=5 // pred_fallthru
      _
  $region6: #{gat_model_mll_forward.24} parent=0 // loop_footer
    %s13 = sadd.s32 1, %s9
  $region7: #{gat_model_mll_forward.24} parent=0 // loop_footer_branch
    %8 = sbr.rel target = $region3
  $region8: #{gat_model_mll_forward.24} parent=0 // loop_exit
    _

// kernel: gat_model_mll_forward.37
$region0: #{gat_model_mll_forward.37}
  #allocation0 [shape = 'u32[]', space=smem, size = 0x4, offset = 0x4, fixed_abs, tag = 'smem constant byte address 0x4 - core index']
  #allocation1 [shape = 'u32[144,128]{1,0:T(1,128)}', space=vmem, size = 0x12000, scoped, tag = 'internal scratch']
  %s0 = inlined_call_operand.vmem [shape: bf16[2,14,16], index: 0, kind: input, shape index: {}]
  %s1 = inlined_call_operand.vmem [shape: bf16[7,16,16], index: 1, kind: input, shape index: {}]
  %s2 = inlined_call_operand.vmem [shape: f32[1,16], index: 2, kind: input, shape index: {}]
  %s3 = inlined_call_operand.vmem [shape: f32[2,8,16], index: 3, kind: output, shape index: {}]
  %s4 = sld [smem:[#allocation0]]
  $region45: #{gat_model_mll_forward.37} parent=0
    _
  %s6 = ssub.s32 1, %s4
  %s7 = scalar_select 0, %s6, %s4
  loop: start=0, step=1, limit=4
  $region2: #{gat_model_mll_forward.37} parent=0 // loop_pre_header
    _
  $region3: #{gat_model_mll_forward.37} parent=0 // loop_header
    %s9 = sphi 0, %s13
    %p10 = scmp.ge.s32.totalorder %s9, 4
    %s16 = sphi 0, %s28
    %s17 = sphi 0, %s24
    %s18 = sphi 0, %s16
    %s19 = sphi 0, %s17
    %s20 = sphi 0, %s18
    %s21 = sphi 0, %s19
    %s31 = sphi 0, %s33
    %s34 = sphi 0, %s31
    %s35 = sphi 0, %s34
    %s51 = sphi 0, %s35
    %s57 = sphi 0, %s59
    %s60 = sphi 0, %s57
    %s61 = sphi 0, %s60
    %s77 = sphi 0, %s61
    %s83 = sphi 0, %s85
    %s86 = sphi 0, %s83
    %s87 = sphi 0, %s86
    %s103 = sphi 0, %s87
    %s111 = sphi 0, %s113
    %s114 = sphi 0, %s111
    %s115 = sphi 0, %s114
    %s131 = sphi 0, %s115
  $region4: #{gat_model_mll_forward.37} parent=0 // loop_header_branch
    %12 = sbr.rel (%p10) target = $region8
  $region5: #{gat_model_mll_forward.37} parent=0 // loop_body
    %s14 = ssub.s32 %s9, 1
    %s15 = ssub.s32 %s9, 2
    %s22 = sadd.s32 1, %s17
    %p23 = scmp.ge.s32.totalorder %s22, 1
    %s24 = scalar_select %p23, 0, %s22
    %s25 = sadd.s32 1, %s16
    %s26 = scalar_select %p23, %s25, %s16
    %p27 = scmp.ge.s32.totalorder %s26, 2
    %s28 = scalar_select %p27, 0, %s26
    %s29 = ssub.s32 %s16, %s28
    %p30 = scmp.eq.s32.totalorder %s29, 0
    %s32 = sadd.s32 %s31, 1
    %s33 = scalar_select %p30, %s31, %s32
    %p36 = pneg %p30
    %p37 = scmp.eq.s32.totalorder %s9, 1
    %p38 = por %p36, %p37
    %p39 = scmp.ne.s32.totalorder %s31, %s34
    %p40 = scmp.eq.s32.totalorder %s9, 0
    %p41 = por %p39, %p40
    %p42 = scmp.ne.s32.totalorder %s31, %s34
    %p43 = scmp.eq.s32.totalorder %s14, 1
    %p44 = por %p42, %p43
    %p45 = scmp.ne.s32.totalorder %s34, %s35
    %p46 = scmp.eq.s32.totalorder %s14, 0
    %p47 = por %p45, %p46
    %p48 = scmp.ne.s32.totalorder %s34, %s35
    %p49 = scmp.eq.s32.totalorder %s15, 1
    %p50 = por %p48, %p49
    %p52 = scmp.ne.s32.totalorder %s35, %s51
    %p53 = scmp.eq.s32.totalorder %s15, 0
    %p54 = por %p52, %p53
    %s55 = ssub.s32 %s17, %s24
    %p56 = scmp.eq.s32.totalorder %s55, 0
    %s58 = sadd.s32 %s57, 1
    %s59 = scalar_select %p56, %s57, %s58
    %p62 = pneg %p56
    %p63 = scmp.eq.s32.totalorder %s9, 1
    %p64 = por %p62, %p63
    %p65 = scmp.ne.s32.totalorder %s57, %s60
    %p66 = scmp.eq.s32.totalorder %s9, 0
    %p67 = por %p65, %p66
    %p68 = scmp.ne.s32.totalorder %s57, %s60
    %p69 = scmp.eq.s32.totalorder %s14, 1
    %p70 = por %p68, %p69
    %p71 = scmp.ne.s32.totalorder %s60, %s61
    %p72 = scmp.eq.s32.totalorder %s14, 0
    %p73 = por %p71, %p72
    %p74 = scmp.ne.s32.totalorder %s60, %s61
    %p75 = scmp.eq.s32.totalorder %s15, 1
    %p76 = por %p74, %p75
    %p78 = scmp.ne.s32.totalorder %s61, %s77
    %p79 = scmp.eq.s32.totalorder %s15, 0
    %p80 = por %p78, %p79
    %s81 = ssub.s32 %s17, %s24
    %p82 = scmp.eq.s32.totalorder %s81, 0
    %s84 = sadd.s32 %s83, 1
    %s85 = scalar_select %p82, %s83, %s84
    %p88 = pneg %p82
    %p89 = scmp.eq.s32.totalorder %s9, 1
    %p90 = por %p88, %p89
    %p91 = scmp.ne.s32.totalorder %s83, %s86
    %p92 = scmp.eq.s32.totalorder %s9, 0
    %p93 = por %p91, %p92
    %p94 = scmp.ne.s32.totalorder %s83, %s86
    %p95 = scmp.eq.s32.totalorder %s14, 1
    %p96 = por %p94, %p95
    %p97 = scmp.ne.s32.totalorder %s86, %s87
    %p98 = scmp.eq.s32.totalorder %s14, 0
    %p99 = por %p97, %p98
    %p100 = scmp.ne.s32.totalorder %s86, %s87
    %p101 = scmp.eq.s32.totalorder %s15, 1
    %p102 = por %p100, %p101
    %p104 = scmp.ne.s32.totalorder %s87, %s103
    %p105 = scmp.eq.s32.totalorder %s15, 0
    %p106 = por %p104, %p105
    %s107 = ssub.s32 %s16, %s28
    %s108 = ssub.s32 %s17, %s24
    %s109 = sor.u32 %s107, %s108
    %p110 = scmp.eq.s32.totalorder %s109, 0
    %s112 = sadd.s32 %s111, 1
    %s113 = scalar_select %p110, %s111, %s112
    %p116 = pneg %p110
    %p117 = scmp.eq.s32.totalorder %s9, 1
    %p118 = por %p116, %p117
    %p119 = scmp.ne.s32.totalorder %s111, %s114
    %p120 = scmp.eq.s32.totalorder %s9, 0
    %p121 = por %p119, %p120
    %p122 = scmp.ne.s32.totalorder %s111, %s114
    %p123 = scmp.eq.s32.totalorder %s14, 1
    %p124 = por %p122, %p123
    %p125 = scmp.ne.s32.totalorder %s114, %s115
    %p126 = scmp.eq.s32.totalorder %s14, 0
    %p127 = por %p125, %p126
    %p128 = scmp.ne.s32.totalorder %s114, %s115
    %p129 = scmp.eq.s32.totalorder %s15, 1
    %p130 = por %p128, %p129
    %p132 = scmp.ne.s32.totalorder %s115, %s131
    %p133 = scmp.eq.s32.totalorder %s15, 0
    %p134 = por %p132, %p133
    %p135 = scmp.le.s32.totalorder 1, %s9
    %p136 = scmp.lt.s32.totalorder %s9, 3
    %p137 = pnand %p135, %p136
    %p138 = pneg %p137
    // Predicated region
    $region9: #{gat_model_mll_forward.37} parent=5 // pred_check
      _
    $region10: #{gat_model_mll_forward.37} parent=5 // pred_check_branch
      %140 = sbr.rel (%p137) target = $region12
    $region11: #{gat_model_mll_forward.37} parent=5 // pred_region
      %s141 = ssub.s32 %s9, 1
      // Predicated region
      $region13: #{gat_model_mll_forward.37} parent=11 // pred_check
        %p142 = pneg %p73
      $region14: #{gat_model_mll_forward.37} parent=11 // pred_check_branch
        %144 = sbr.rel (%p142) target = $region16
      $region15: #{gat_model_mll_forward.37} parent=11 // pred_region
        %p145 = scmp.lt.s32.totalorder %s19, 0
        %s146 = scalar_select %p145, %s19, 0
        %s147 = smul.addr %s146, 4
        %s148 = scalar_lea.vmem %s1, %s147
      $region16: #{gat_model_mll_forward.37} parent=11 // pred_fallthru
        _
      // Predicated region
      $region17: #{gat_model_mll_forward.37} parent=11 // pred_check
        %p149 = pneg %p99
      $region18: #{gat_model_mll_forward.37} parent=11 // pred_check_branch
        %151 = sbr.rel (%p149) target = $region20
      $region19: #{gat_model_mll_forward.37} parent=11 // pred_region
        %p152 = scmp.lt.s32.totalorder %s19, 0
        %s153 = scalar_select %p152, %s19, 0
        %s154 = scalar_lea.vmem %s2, %s153
      $region20: #{gat_model_mll_forward.37} parent=11 // pred_fallthru
        _
    $region12: #{gat_model_mll_forward.37} parent=5 // pred_fallthru
      _
    %p155 = scmp.lt.s32.totalorder %s9, 2
    // Predicated region
    $region21: #{gat_model_mll_forward.37} parent=5 // pred_check
      %p156 = pneg %p155
    $region22: #{gat_model_mll_forward.37} parent=5 // pred_check_branch
      %158 = sbr.rel (%p156) target = $region24
    $region23: #{gat_model_mll_forward.37} parent=5 // pred_region
      // Predicated region
      $region25: #{gat_model_mll_forward.37} parent=23 // pred_check
        %p159 = pneg %p41
      $region26: #{gat_model_mll_forward.37} parent=23 // pred_check_branch
        %161 = sbr.rel (%p159) target = $region28
      $region27: #{gat_model_mll_forward.37} parent=23 // pred_region
        %p162 = scmp.lt.s32.totalorder %s16, 1
        %s163 = scalar_select %p162, %s16, 1
        %s164 = smul.addr %s163, 2
        %s165 = smul.addr %s164, 4
        %s166 = scalar_lea.vmem %s0, %s165
      $region28: #{gat_model_mll_forward.37} parent=23 // pred_fallthru
        _
    $region24: #{gat_model_mll_forward.37} parent=5 // pred_fallthru
      _
    %p167 = scmp.le.s32.totalorder 1, %s9
    %p168 = scmp.lt.s32.totalorder %s9, 3
    %p169 = pnand %p167, %p168
    %p170 = pneg %p169
    // Predicated region
    $region29: #{gat_model_mll_forward.37} parent=5 // pred_check
      _
    $region30: #{gat_model_mll_forward.37} parent=5 // pred_check_branch
      %172 = sbr.rel (%p169) target = $region32
    $region31: #{gat_model_mll_forward.37} parent=5 // pred_region
      %s173 = ssub.s32 %s9, 1
      %p174 = scmp.lt.s32.totalorder %s18, 1
      %s175 = scalar_select %p174, %s18, 1
      %s176 = smul.addr %s175, 2
      %s177 = smul.addr %s176, 4
      %s178 = scalar_lea.vmem %s0, %s177
      %p179 = pneg %p47
      %p180 = pneg %p44
      %p181 = scmp.lt.s32.totalorder %s19, 0
      %s182 = scalar_select %p181, %s19, 0
      %s183 = smul.addr %s182, 4
      %s184 = scalar_lea.vmem %s1, %s183
      %p185 = pneg %p73
      %p186 = pneg %p70
      %p187 = scmp.lt.s32.totalorder %s19, 0
      %s188 = scalar_select %p187, %s19, 0
      %s189 = scalar_lea.vmem %s2, %s188
      %p190 = pneg %p99
      %p191 = pneg %p96
      %p192 = pneg %p127
      %p193 = pneg %p124
      %p194 = scmp.lt.s32.totalorder %s18, 1
      %s195 = scalar_select %p194, %s18, 1
      %p196 = scmp.lt.s32.totalorder %s19, 0
      %s197 = scalar_select %p196, %s19, 0
      %s198 = sadd.s32 %s197, %s195
      %s199 = smul.addr %s198, 8
      %s200 = scalar_lea.vmem %s3, %s199
      %p201 = scmp.lt.s32.totalorder %s18, 1
      %s202 = scalar_select %p201, %s18, 1
      %s203 = smul.addr %s202, 2
      %s204 = smul.addr %s203, 4
      %s205 = scalar_lea.vmem %s0, %s204
      %p206 = scmp.lt.s32.totalorder %s19, 0
      %s207 = scalar_select %p206, %s19, 0
      %s208 = smul.addr %s207, 4
      %s209 = scalar_lea.vmem %s1, %s208
      %p210 = scmp.lt.s32.totalorder %s19, 0
      %s211 = scalar_select %p210, %s19, 0
      %s212 = scalar_lea.vmem %s2, %s211
      %p213 = scmp.lt.s32.totalorder %s18, 1
      %s214 = scalar_select %p213, %s18, 1
      %p215 = scmp.lt.s32.totalorder %s19, 0
      %s216 = scalar_select %p215, %s19, 0
      %s217 = sadd.s32 %s216, %s214
      %s218 = smul.addr %s217, 8
      %s219 = scalar_lea.vmem %s3, %s218
      %v221 = vld [vmem:[%s205] sm:$0xf]
      %v222 = vld [vmem:[%s209] sm:$0xf]
      %v223 = vld [vmem:[%s209 + $0x4] sm:$0xf]
      %v224 = vld [vmem:[%s205 + $0x4] sm:$0x1]
      %s225 = scalar_lea.vmem %s209, 8
      %v226 = vld [vmem:[%s225] sm:$0xf]
      %v227 = vld [vmem:[%s225 + $0x4] sm:$0xf]
      %v230 = vunpack.c.l.b16 %v221
      %v231 = vunpack.c.l.b16 %v224
      %v232 = vpack.c.b16 %v231, %v230
      %v234 = vshrl.u32 %v232, 16
      %v236 = vshll.u32 %v232, 16
      %v238 = vrot.slane %v236, 1
      %v239 = vor.u32 %v234, %v238
      %v242 = vunpack.c.l.b16 %v226
      %v243 = vunpack.c.l.b16 %v227
      %v244 = vpack.c.b16 %v243, %v242
      %vm246 = vcmask 130048
      %v248 = vsel %vm246, %v239, 0
      %250 = vmatprep.subr.bf16.mxu0 0
      %251 = vmatpush1.bf16.msra.mxu0 %v244
      %252 = vmatprep.subr.bf16.mxu0 0
      %253 = vmatpush1.bf16.msra.mxu0 0
      %254 = vmatprep.subr.bf16.mxu0 0
      %255 = vmatpush1.bf16.msra.mxu0 0
      %256 = vmatprep.subr.bf16.mxu0 0
      %257 = vmatpush1.bf16.msra.mxu0 0
      %258 = vmatprep.subr.bf16.mxu0 0
      %259 = vmatpush1.bf16.msra.mxu0 0
      %260 = vmatprep.subr.bf16.mxu0 0
      %261 = vmatpush1.bf16.msra.mxu0 0
      %262 = vmatprep.subr.bf16.mxu0 0
      %263 = vmatpush1.bf16.msra.mxu0 0
      %264 = vmatprep.subr.bf16.mxu0 0
      %265 = vmatpush1.bf16.msra.mxu0 0
      %266 = vmatprep.subr.bf16.mxu0 0
      %267 = vmatpush1.bf16.msra.mxu0 0
      %268 = vmatprep.subr.bf16.mxu0 0
      %269 = vmatpush1.bf16.msra.mxu0 0
      %270 = vmatprep.subr.bf16.mxu0 0
      %271 = vmatpush1.bf16.msra.mxu0 0
      %272 = vmatprep.subr.bf16.mxu0 0
      %273 = vmatpush1.bf16.msra.mxu0 0
      %274 = vmatprep.subr.bf16.mxu0 0
      %275 = vmatpush1.bf16.msra.mxu0 0
      %276 = vmatprep.subr.bf16.mxu0 0
      %277 = vmatpush1.bf16.msra.mxu0 0
      %278 = vmatprep.subr.bf16.mxu0 0
      %279 = vmatpush1.bf16.msra.mxu0 0
      %280 = vmatprep.subr.bf16.mxu0 0
      %281 = vmatpush1.bf16.msra.mxu0 0
      %282 = vmatprep.mubr.bf16.mxu0 0
      %283 = vmatmul.mubr.bf16.gmra.mrb[0].mxu0 %v248
      %v284 = vpop.f32.mrb[0].mxu0
      %v285 = vadd.f32 0.0, %v284
      %v286 = vpop.f32.mrb[0].mxu0
      %v287 = vpop.f32.mrb[0].mxu0
      %v288 = vpop.f32.mrb[0].mxu0
      %289 = vdwg.mxu0
      %v292 = vunpack.c.l.b16 %v222
      %v293 = vunpack.c.l.b16 %v223
      %v294 = vpack.c.b16 %v293, %v292
      %v297 = vsel %vm246, %v221, 0
      %299 = vmatprep.subr.bf16.mxu0 0
      %300 = vmatpush1.bf16.msra.mxu0 %v294
      %301 = vmatprep.subr.bf16.mxu0 0
      %302 = vmatpush1.bf16.msra.mxu0 0
      %303 = vmatprep.subr.bf16.mxu0 0
      %304 = vmatpush1.bf16.msra.mxu0 0
      %305 = vmatprep.subr.bf16.mxu0 0
      %306 = vmatpush1.bf16.msra.mxu0 0
      %307 = vmatprep.subr.bf16.mxu0 0
      %308 = vmatpush1.bf16.msra.mxu0 0
      %309 = vmatprep.subr.bf16.mxu0 0
      %310 = vmatpush1.bf16.msra.mxu0 0
      %311 = vmatprep.subr.bf16.mxu0 0
      %312 = vmatpush1.bf16.msra.mxu0 0
      %313 = vmatprep.subr.bf16.mxu0 0
      %314 = vmatpush1.bf16.msra.mxu0 0
      %315 = vmatprep.subr.bf16.mxu0 0
      %316 = vmatpush1.bf16.msra.mxu0 0
      %317 = vmatprep.subr.bf16.mxu0 0
      %318 = vmatpush1.bf16.msra.mxu0 0
      %319 = vmatprep.subr.bf16.mxu0 0
      %320 = vmatpush1.bf16.msra.mxu0 0
      %321 = vmatprep.subr.bf16.mxu0 0
      %322 = vmatpush1.bf16.msra.mxu0 0
      %323 = vmatprep.subr.bf16.mxu0 0
      %324 = vmatpush1.bf16.msra.mxu0 0
      %325 = vmatprep.subr.bf16.mxu0 0
      %326 = vmatpush1.bf16.msra.mxu0 0
      %327 = vmatprep.subr.bf16.mxu0 0
      %328 = vmatpush1.bf16.msra.mxu0 0
      %329 = vmatprep.subr.bf16.mxu0 0
      %330 = vmatpush1.bf16.msra.mxu0 0
      %331 = vmatprep.mubr.bf16.mxu0 0
      %332 = vmatmul.mubr.bf16.gmra.mrb[0].mxu0 %v297
      %v333 = vpop.f32.mrb[0].mxu0
      %v334 = vadd.f32 %v285, %v333
      %v335 = vpop.f32.mrb[0].mxu0
      %v336 = vpop.f32.mrb[0].mxu0
      %v337 = vpop.f32.mrb[0].mxu0
      %338 = vdwg.mxu0
      %v339 = vld [vmem:[%s205] sm:$0xe]
      %s340 = scalar_lea.vmem %s209, 16
      %v341 = vld [vmem:[%s340] sm:$0xf]
      %v342 = vld [vmem:[%s340 + $0x4] sm:$0xf]
      %v344 = vunpack.c.l.b16 %v339
      %v345 = vpack.c.b16 %v231, %v344
      %v346 = vrot.slane %v345, 1
      %v349 = vunpack.c.l.b16 %v341
      %v350 = vunpack.c.l.b16 %v342
      %v351 = vpack.c.b16 %v350, %v349
      %v354 = vsel %vm246, %v346, 0
      %356 = vmatprep.subr.bf16.mxu0 0
      %357 = vmatpush1.bf16.msra.mxu0 %v351
      %358 = vmatprep.subr.bf16.mxu0 0
      %359 = vmatpush1.bf16.msra.mxu0 0
      %360 = vmatprep.subr.bf16.mxu0 0
      %361 = vmatpush1.bf16.msra.mxu0 0
      %362 = vmatprep.subr.bf16.mxu0 0
      %363 = vmatpush1.bf16.msra.mxu0 0
      %364 = vmatprep.subr.bf16.mxu0 0
      %365 = vmatpush1.bf16.msra.mxu0 0
      %366 = vmatprep.subr.bf16.mxu0 0
      %367 = vmatpush1.bf16.msra.mxu0 0
      %368 = vmatprep.subr.bf16.mxu0 0
      %369 = vmatpush1.bf16.msra.mxu0 0
      %370 = vmatprep.subr.bf16.mxu0 0
      %371 = vmatpush1.bf16.msra.mxu0 0
      %372 = vmatprep.subr.bf16.mxu0 0
      %373 = vmatpush1.bf16.msra.mxu0 0
      %374 = vmatprep.subr.bf16.mxu0 0
      %375 = vmatpush1.bf16.msra.mxu0 0
      %376 = vmatprep.subr.bf16.mxu0 0
      %377 = vmatpush1.bf16.msra.mxu0 0
      %378 = vmatprep.subr.bf16.mxu0 0
      %379 = vmatpush1.bf16.msra.mxu0 0
      %380 = vmatprep.subr.bf16.mxu0 0
      %381 = vmatpush1.bf16.msra.mxu0 0
      %382 = vmatprep.subr.bf16.mxu0 0
      %383 = vmatpush1.bf16.msra.mxu0 0
      %384 = vmatprep.subr.bf16.mxu0 0
      %385 = vmatpush1.bf16.msra.mxu0 0
      %386 = vmatprep.subr.bf16.mxu0 0
      %387 = vmatpush1.bf16.msra.mxu0 0
      %388 = vmatprep.mubr.bf16.mxu0 0
      %389 = vmatmul.mubr.bf16.gmra.mrb[0].mxu0 %v354
      %v390 = vpop.f32.mrb[0].mxu0
      %v391 = vadd.f32 0.0, %v390
      %v392 = vpop.f32.mrb[0].mxu0
      %v393 = vpop.f32.mrb[0].mxu0
      %v394 = vpop.f32.mrb[0].mxu0
      %395 = vdwg.mxu0
      %v396 = vadd.f32 %v334, %v391
      %v397 = vld [vmem:[%s205 + $0x4] sm:$0x3]
      %s398 = scalar_lea.vmem %s209, 24
      %v399 = vld [vmem:[%s398] sm:$0xf]
      %v400 = vld [vmem:[%s398 + $0x4] sm:$0xf]
      %v402 = vunpack.c.l.b16 %v397
      %v403 = vpack.c.b16 %v402, %v344
      %v405 = vshrl.u32 %v403, 16
      %v407 = vrot.slane %v405, 1
      %v408 = vshll.u32 %v403, 16
      %v410 = vrot.slane %v408, 2
      %v411 = vor.u32 %v407, %v410
      %v414 = vunpack.c.l.b16 %v399
      %v415 = vunpack.c.l.b16 %v400
      %v416 = vpack.c.b16 %v415, %v414
      %v419 = vsel %vm246, %v411, 0
      %421 = vmatprep.subr.bf16.mxu0 0
      %422 = vmatpush1.bf16.msra.mxu0 %v416
      %423 = vmatprep.subr.bf16.mxu0 0
      %424 = vmatpush1.bf16.msra.mxu0 0
      %425 = vmatprep.subr.bf16.mxu0 0
      %426 = vmatpush1.bf16.msra.mxu0 0
      %427 = vmatprep.subr.bf16.mxu0 0
      %428 = vmatpush1.bf16.msra.mxu0 0
      %429 = vmatprep.subr.bf16.mxu0 0
      %430 = vmatpush1.bf16.msra.mxu0 0
      %431 = vmatprep.subr.bf16.mxu0 0
      %432 = vmatpush1.bf16.msra.mxu0 0
      %433 = vmatprep.subr.bf16.mxu0 0
      %434 = vmatpush1.bf16.msra.mxu0 0
      %435 = vmatprep.subr.bf16.mxu0 0
      %436 = vmatpush1.bf16.msra.mxu0 0
      %437 = vmatprep.subr.bf16.mxu0 0
      %438 = vmatpush1.bf16.msra.mxu0 0
      %439 = vmatprep.subr.bf16.mxu0 0
      %440 = vmatpush1.bf16.msra.mxu0 0
      %441 = vmatprep.subr.bf16.mxu0 0
      %442 = vmatpush1.bf16.msra.mxu0 0
      %443 = vmatprep.subr.bf16.mxu0 0
      %444 = vmatpush1.bf16.msra.mxu0 0
      %445 = vmatprep.subr.bf16.mxu0 0
      %446 = vmatpush1.bf16.msra.mxu0 0
      %447 = vmatprep.subr.bf16.mxu0 0
      %448 = vmatpush1.bf16.msra.mxu0 0
      %449 = vmatprep.subr.bf16.mxu0 0
      %450 = vmatpush1.bf16.msra.mxu0 0
      %451 = vmatprep.subr.bf16.mxu0 0
      %452 = vmatpush1.bf16.msra.mxu0 0
      %453 = vmatprep.mubr.bf16.mxu0 0
      %454 = vmatmul.mubr.bf16.gmra.mrb[0].mxu0 %v419
      %v455 = vpop.f32.mrb[0].mxu0
      %v456 = vadd.f32 0.0, %v455
      %v457 = vpop.f32.mrb[0].mxu0
      %v458 = vpop.f32.mrb[0].mxu0
      %v459 = vpop.f32.mrb[0].mxu0
      %460 = vdwg.mxu0
      %v461 = vadd.f32 %v396, %v456
      %v462 = vld [vmem:[%s205] sm:$0xc]
      %s463 = scalar_lea.vmem %s209, 32
      %v464 = vld [vmem:[%s463] sm:$0xf]
      %v465 = vld [vmem:[%s463 + $0x4] sm:$0xf]
      %v467 = vunpack.c.l.b16 %v462
      %v468 = vpack.c.b16 %v402, %v467
      %v469 = vrot.slane %v468, 2
      %v472 = vunpack.c.l.b16 %v464
      %v473 = vunpack.c.l.b16 %v465
      %v474 = vpack.c.b16 %v473, %v472
      %v477 = vsel %vm246, %v469, 0
      %479 = vmatprep.subr.bf16.mxu0 0
      %480 = vmatpush1.bf16.msra.mxu0 %v474
      %481 = vmatprep.subr.bf16.mxu0 0
      %482 = vmatpush1.bf16.msra.mxu0 0
      %483 = vmatprep.subr.bf16.mxu0 0
      %484 = vmatpush1.bf16.msra.mxu0 0
      %485 = vmatprep.subr.bf16.mxu0 0
      %486 = vmatpush1.bf16.msra.mxu0 0
      %487 = vmatprep.subr.bf16.mxu0 0
      %488 = vmatpush1.bf16.msra.mxu0 0
      %489 = vmatprep.subr.bf16.mxu0 0
      %490 = vmatpush1.bf16.msra.mxu0 0
      %491 = vmatprep.subr.bf16.mxu0 0
      %492 = vmatpush1.bf16.msra.mxu0 0
      %493 = vmatprep.subr.bf16.mxu0 0
      %494 = vmatpush1.bf16.msra.mxu0 0
      %495 = vmatprep.subr.bf16.mxu0 0
      %496 = vmatpush1.bf16.msra.mxu0 0
      %497 = vmatprep.subr.bf16.mxu0 0
      %498 = vmatpush1.bf16.msra.mxu0 0
      %499 = vmatprep.subr.bf16.mxu0 0
      %500 = vmatpush1.bf16.msra.mxu0 0
      %501 = vmatprep.subr.bf16.mxu0 0
      %502 = vmatpush1.bf16.msra.mxu0 0
      %503 = vmatprep.subr.bf16.mxu0 0
      %504 = vmatpush1.bf16.msra.mxu0 0
      %505 = vmatprep.subr.bf16.mxu0 0
      %506 = vmatpush1.bf16.msra.mxu0 0
      %507 = vmatprep.subr.bf16.mxu0 0
      %508 = vmatpush1.bf16.msra.mxu0 0
      %509 = vmatprep.subr.bf16.mxu0 0
      %510 = vmatpush1.bf16.msra.mxu0 0
      %511 = vmatprep.mubr.bf16.mxu0 0
      %512 = vmatmul.mubr.bf16.gmra.mrb[0].mxu0 %v477
      %v513 = vpop.f32.mrb[0].mxu0
      %v514 = vadd.f32 0.0, %v513
      %v515 = vpop.f32.mrb[0].mxu0
      %v516 = vpop.f32.mrb[0].mxu0
      %v517 = vpop.f32.mrb[0].mxu0
      %518 = vdwg.mxu0
      %v519 = vadd.f32 %v461, %v514
      %v520 = vld [vmem:[%s205 + $0x4] sm:$0x7]
      %s521 = scalar_lea.vmem %s209, 40
      %v522 = vld [vmem:[%s521] sm:$0xf]
      %v523 = vld [vmem:[%s521 + $0x4] sm:$0xf]
      %v525 = vunpack.c.l.b16 %v520
      %v526 = vpack.c.b16 %v525, %v467
      %v528 = vshrl.u32 %v526, 16
      %v530 = vrot.slane %v528, 2
      %v531 = vshll.u32 %v526, 16
      %v533 = vrot.slane %v531, 3
      %v534 = vor.u32 %v530, %v533
      %v537 = vunpack.c.l.b16 %v522
      %v538 = vunpack.c.l.b16 %v523
      %v539 = vpack.c.b16 %v538, %v537
      %v542 = vsel %vm246, %v534, 0
      %544 = vmatprep.subr.bf16.mxu0 0
      %545 = vmatpush1.bf16.msra.mxu0 %v539
      %546 = vmatprep.subr.bf16.mxu0 0
      %547 = vmatpush1.bf16.msra.mxu0 0
      %548 = vmatprep.subr.bf16.mxu0 0
      %549 = vmatpush1.bf16.msra.mxu0 0
      %550 = vmatprep.subr.bf16.mxu0 0
      %551 = vmatpush1.bf16.msra.mxu0 0
      %552 = vmatprep.subr.bf16.mxu0 0
      %553 = vmatpush1.bf16.msra.mxu0 0
      %554 = vmatprep.subr.bf16.mxu0 0
      %555 = vmatpush1.bf16.msra.mxu0 0
      %556 = vmatprep.subr.bf16.mxu0 0
      %557 = vmatpush1.bf16.msra.mxu0 0
      %558 = vmatprep.subr.bf16.mxu0 0
      %559 = vmatpush1.bf16.msra.mxu0 0
      %560 = vmatprep.subr.bf16.mxu0 0
      %561 = vmatpush1.bf16.msra.mxu0 0
      %562 = vmatprep.subr.bf16.mxu0 0
      %563 = vmatpush1.bf16.msra.mxu0 0
      %564 = vmatprep.subr.bf16.mxu0 0
      %565 = vmatpush1.bf16.msra.mxu0 0
      %566 = vmatprep.subr.bf16.mxu0 0
      %567 = vmatpush1.bf16.msra.mxu0 0
      %568 = vmatprep.subr.bf16.mxu0 0
      %569 = vmatpush1.bf16.msra.mxu0 0
      %570 = vmatprep.subr.bf16.mxu0 0
      %571 = vmatpush1.bf16.msra.mxu0 0
      %572 = vmatprep.subr.bf16.mxu0 0
      %573 = vmatpush1.bf16.msra.mxu0 0
      %574 = vmatprep.subr.bf16.mxu0 0
      %575 = vmatpush1.bf16.msra.mxu0 0
      %576 = vmatprep.mubr.bf16.mxu0 0
      %577 = vmatmul.mubr.bf16.gmra.mrb[0].mxu0 %v542
      %v578 = vpop.f32.mrb[0].mxu0
      %v579 = vadd.f32 0.0, %v578
      %v580 = vpop.f32.mrb[0].mxu0
      %v581 = vpop.f32.mrb[0].mxu0
      %v582 = vpop.f32.mrb[0].mxu0
      %583 = vdwg.mxu0
      %v584 = vadd.f32 %v519, %v579
      %v585 = vld [vmem:[%s205] sm:$0x8]
      %s586 = scalar_lea.vmem %s209, 48
      %v587 = vld [vmem:[%s586] sm:$0xf]
      %v588 = vld [vmem:[%s586 + $0x4] sm:$0xf]
      %v590 = vunpack.c.l.b16 %v585
      %v591 = vpack.c.b16 %v525, %v590
      %v592 = vrot.slane %v591, 3
      %v595 = vunpack.c.l.b16 %v587
      %v596 = vunpack.c.l.b16 %v588
      %v597 = vpack.c.b16 %v596, %v595
      %v600 = vsel %vm246, %v592, 0
      %602 = vmatprep.subr.bf16.mxu0 0
      %603 = vmatpush1.bf16.msra.mxu0 %v597
      %604 = vmatprep.subr.bf16.mxu0 0
      %605 = vmatpush1.bf16.msra.mxu0 0
      %606 = vmatprep.subr.bf16.mxu0 0
      %607 = vmatpush1.bf16.msra.mxu0 0
      %608 = vmatprep.subr.bf16.mxu0 0
      %609 = vmatpush1.bf16.msra.mxu0 0
      %610 = vmatprep.subr.bf16.mxu0 0
      %611 = vmatpush1.bf16.msra.mxu0 0
      %612 = vmatprep.subr.bf16.mxu0 0
      %613 = vmatpush1.bf16.msra.mxu0 0
      %614 = vmatprep.subr.bf16.mxu0 0
      %615 = vmatpush1.bf16.msra.mxu0 0
      %616 = vmatprep.subr.bf16.mxu0 0
      %617 = vmatpush1.bf16.msra.mxu0 0
      %618 = vmatprep.subr.bf16.mxu0 0
      %619 = vmatpush1.bf16.msra.mxu0 0
      %620 = vmatprep.subr.bf16.mxu0 0
      %621 = vmatpush1.bf16.msra.mxu0 0
      %622 = vmatprep.subr.bf16.mxu0 0
      %623 = vmatpush1.bf16.msra.mxu0 0
      %624 = vmatprep.subr.bf16.mxu0 0
      %625 = vmatpush1.bf16.msra.mxu0 0
      %626 = vmatprep.subr.bf16.mxu0 0
      %627 = vmatpush1.bf16.msra.mxu0 0
      %628 = vmatprep.subr.bf16.mxu0 0
      %629 = vmatpush1.bf16.msra.mxu0 0
      %630 = vmatprep.subr.bf16.mxu0 0
      %631 = vmatpush1.bf16.msra.mxu0 0
      %632 = vmatprep.subr.bf16.mxu0 0
      %633 = vmatpush1.bf16.msra.mxu0 0
      %634 = vmatprep.mubr.bf16.mxu0 0
      %635 = vmatmul.mubr.bf16.gmra.mrb[0].mxu0 %v600
      %v636 = vpop.f32.mrb[0].mxu0
      %v637 = vadd.f32 0.0, %v636
      %v638 = vpop.f32.mrb[0].mxu0
      %v639 = vpop.f32.mrb[0].mxu0
      %v640 = vpop.f32.mrb[0].mxu0
      %641 = vdwg.mxu0
      %v642 = vadd.f32 %v584, %v637
      %v643 = vld [vmem:[%s212] sm:$0x1]
      %v645 = vlaneseq
      %v646 = vshrl.u32 %v645, 7
      %v647 = vsub.s32 0, %v646
      %v648 = vrot.slane %v643, %v647
      %v650 = vadd.f32 %v642, %v648
      %v651 = vmax.f32 %v650, 0.0
      %652 = vst.msk [vmem:[%s219] sm:$0xff] %vm246, %v651
      %p653 = scmp.lt.s32.totalorder %s18, 1
      %s654 = scalar_select %p653, %s18, 1
      %p655 = scmp.lt.s32.totalorder %s19, 0
      %s656 = scalar_select %p655, %s19, 0
      %s657 = sadd.s32 %s656, %s654
      %s658 = smul.addr %s657, 8
      %s659 = scalar_lea.vmem %s3, %s658
      // Predicated region
      $region33: #{gat_model_mll_forward.37} parent=31 // pred_check
        %p660 = pneg %p124
      $region34: #{gat_model_mll_forward.37} parent=31 // pred_check_branch
        %662 = sbr.rel (%p660) target = $region36
      $region35: #{gat_model_mll_forward.37} parent=31 // pred_region
        _
      $region36: #{gat_model_mll_forward.37} parent=31 // pred_fallthru
        _
    $region32: #{gat_model_mll_forward.37} parent=5 // pred_fallthru
      _
    %p663 = scmp.le.s32.totalorder 2, %s9
    // Predicated region
    $region37: #{gat_model_mll_forward.37} parent=5 // pred_check
      %p664 = pneg %p663
    $region38: #{gat_model_mll_forward.37} parent=5 // pred_check_branch
      %666 = sbr.rel (%p664) target = $region40
    $region39: #{gat_model_mll_forward.37} parent=5 // pred_region
      %s667 = ssub.s32 %s9, 2
      // Predicated region
      $region41: #{gat_model_mll_forward.37} parent=39 // pred_check
        %p668 = pneg %p130
      $region42: #{gat_model_mll_forward.37} parent=39 // pred_check_branch
        %670 = sbr.rel (%p668) target = $region44
      $region43: #{gat_model_mll_forward.37} parent=39 // pred_region
        %p671 = scmp.lt.s32.totalorder %s20, 1
        %s672 = scalar_select %p671, %s20, 1
        %p673 = scmp.lt.s32.totalorder %s21, 0
        %s674 = scalar_select %p673, %s21, 0
        %s675 = sadd.s32 %s674, %s672
        %s676 = smul.addr %s675, 8
        %s677 = scalar_lea.vmem %s3, %s676
      $region44: #{gat_model_mll_forward.37} parent=39 // pred_fallthru
        _
    $region40: #{gat_model_mll_forward.37} parent=5 // pred_fallthru
      _
  $region6: #{gat_model_mll_forward.37} parent=0 // loop_footer
    %s13 = sadd.s32 1, %s9
  $region7: #{gat_model_mll_forward.37} parent=0 // loop_footer_branch
    %8 = sbr.rel target = $region3
  $region8: #{gat_model_mll_forward.37} parent=0 // loop_exit
    _

// kernel: gat_model_mll_forward.35
$region0: #{gat_model_mll_forward.35}
  #allocation0 [shape = 'u32[]', space=smem, size = 0x4, offset = 0x4, fixed_abs, tag = 'smem constant byte address 0x4 - core index']
  #allocation1 [shape = 'u32[144,128]{1,0:T(1,128)}', space=vmem, size = 0x12000, scoped, tag = 'internal scratch']
  %s0 = inlined_call_operand.vmem [shape: bf16[2,12,16], index: 0, kind: input, shape index: {}]
  %s1 = inlined_call_operand.vmem [shape: bf16[5,16,16], index: 1, kind: input, shape index: {}]
  %s2 = inlined_call_operand.vmem [shape: f32[1,16], index: 2, kind: input, shape index: {}]
  %s3 = inlined_call_operand.vmem [shape: f32[2,8,16], index: 3, kind: output, shape index: {}]
  %s4 = sld [smem:[#allocation0]]
  $region45: #{gat_model_mll_forward.35} parent=0
    _
  %s6 = ssub.s32 1, %s4
  %s7 = scalar_select 0, %s6, %s4
  loop: start=0, step=1, limit=4
  $region2: #{gat_model_mll_forward.35} parent=0 // loop_pre_header
    _
  $region3: #{gat_model_mll_forward.35} parent=0 // loop_header
    %s9 = sphi 0, %s13
    %p10 = scmp.ge.s32.totalorder %s9, 4
    %s16 = sphi 0, %s28
    %s17 = sphi 0, %s24
    %s18 = sphi 0, %s16
    %s19 = sphi 0, %s17
    %s20 = sphi 0, %s18
    %s21 = sphi 0, %s19
    %s31 = sphi 0, %s33
    %s34 = sphi 0, %s31
    %s35 = sphi 0, %s34
    %s51 = sphi 0, %s35
    %s57 = sphi 0, %s59
    %s60 = sphi 0, %s57
    %s61 = sphi 0, %s60
    %s77 = sphi 0, %s61
    %s83 = sphi 0, %s85
    %s86 = sphi 0, %s83
    %s87 = sphi 0, %s86
    %s103 = sphi 0, %s87
    %s111 = sphi 0, %s113
    %s114 = sphi 0, %s111
    %s115 = sphi 0, %s114
    %s131 = sphi 0, %s115
  $region4: #{gat_model_mll_forward.35} parent=0 // loop_header_branch
    %12 = sbr.rel (%p10) target = $region8
  $region5: #{gat_model_mll_forward.35} parent=0 // loop_body
    %s14 = ssub.s32 %s9, 1
    %s15 = ssub.s32 %s9, 2
    %s22 = sadd.s32 1, %s17
    %p23 = scmp.ge.s32.totalorder %s22, 1
    %s24 = scalar_select %p23, 0, %s22
    %s25 = sadd.s32 1, %s16
    %s26 = scalar_select %p23, %s25, %s16
    %p27 = scmp.ge.s32.totalorder %s26, 2
    %s28 = scalar_select %p27, 0, %s26
    %s29 = ssub.s32 %s16, %s28
    %p30 = scmp.eq.s32.totalorder %s29, 0
    %s32 = sadd.s32 %s31, 1
    %s33 = scalar_select %p30, %s31, %s32
    %p36 = pneg %p30
    %p37 = scmp.eq.s32.totalorder %s9, 1
    %p38 = por %p36, %p37
    %p39 = scmp.ne.s32.totalorder %s31, %s34
    %p40 = scmp.eq.s32.totalorder %s9, 0
    %p41 = por %p39, %p40
    %p42 = scmp.ne.s32.totalorder %s31, %s34
    %p43 = scmp.eq.s32.totalorder %s14, 1
    %p44 = por %p42, %p43
    %p45 = scmp.ne.s32.totalorder %s34, %s35
    %p46 = scmp.eq.s32.totalorder %s14, 0
    %p47 = por %p45, %p46
    %p48 = scmp.ne.s32.totalorder %s34, %s35
    %p49 = scmp.eq.s32.totalorder %s15, 1
    %p50 = por %p48, %p49
    %p52 = scmp.ne.s32.totalorder %s35, %s51
    %p53 = scmp.eq.s32.totalorder %s15, 0
    %p54 = por %p52, %p53
    %s55 = ssub.s32 %s17, %s24
    %p56 = scmp.eq.s32.totalorder %s55, 0
    %s58 = sadd.s32 %s57, 1
    %s59 = scalar_select %p56, %s57, %s58
    %p62 = pneg %p56
    %p63 = scmp.eq.s32.totalorder %s9, 1
    %p64 = por %p62, %p63
    %p65 = scmp.ne.s32.totalorder %s57, %s60
    %p66 = scmp.eq.s32.totalorder %s9, 0
    %p67 = por %p65, %p66
    %p68 = scmp.ne.s32.totalorder %s57, %s60
    %p69 = scmp.eq.s32.totalorder %s14, 1
    %p70 = por %p68, %p69
    %p71 = scmp.ne.s32.totalorder %s60, %s61
    %p72 = scmp.eq.s32.totalorder %s14, 0
    %p73 = por %p71, %p72
    %p74 = scmp.ne.s32.totalorder %s60, %s61
    %p75 = scmp.eq.s32.totalorder %s15, 1
    %p76 = por %p74, %p75
    %p78 = scmp.ne.s32.totalorder %s61, %s77
    %p79 = scmp.eq.s32.totalorder %s15, 0
    %p80 = por %p78, %p79
    %s81 = ssub.s32 %s17, %s24
    %p82 = scmp.eq.s32.totalorder %s81, 0
    %s84 = sadd.s32 %s83, 1
    %s85 = scalar_select %p82, %s83, %s84
    %p88 = pneg %p82
    %p89 = scmp.eq.s32.totalorder %s9, 1
    %p90 = por %p88, %p89
    %p91 = scmp.ne.s32.totalorder %s83, %s86
    %p92 = scmp.eq.s32.totalorder %s9, 0
    %p93 = por %p91, %p92
    %p94 = scmp.ne.s32.totalorder %s83, %s86
    %p95 = scmp.eq.s32.totalorder %s14, 1
    %p96 = por %p94, %p95
    %p97 = scmp.ne.s32.totalorder %s86, %s87
    %p98 = scmp.eq.s32.totalorder %s14, 0
    %p99 = por %p97, %p98
    %p100 = scmp.ne.s32.totalorder %s86, %s87
    %p101 = scmp.eq.s32.totalorder %s15, 1
    %p102 = por %p100, %p101
    %p104 = scmp.ne.s32.totalorder %s87, %s103
    %p105 = scmp.eq.s32.totalorder %s15, 0
    %p106 = por %p104, %p105
    %s107 = ssub.s32 %s16, %s28
    %s108 = ssub.s32 %s17, %s24
    %s109 = sor.u32 %s107, %s108
    %p110 = scmp.eq.s32.totalorder %s109, 0
    %s112 = sadd.s32 %s111, 1
    %s113 = scalar_select %p110, %s111, %s112
    %p116 = pneg %p110
    %p117 = scmp.eq.s32.totalorder %s9, 1
    %p118 = por %p116, %p117
    %p119 = scmp.ne.s32.totalorder %s111, %s114
    %p120 = scmp.eq.s32.totalorder %s9, 0
    %p121 = por %p119, %p120
    %p122 = scmp.ne.s32.totalorder %s111, %s114
    %p123 = scmp.eq.s32.totalorder %s14, 1
    %p124 = por %p122, %p123
    %p125 = scmp.ne.s32.totalorder %s114, %s115
    %p126 = scmp.eq.s32.totalorder %s14, 0
    %p127 = por %p125, %p126
    %p128 = scmp.ne.s32.totalorder %s114, %s115
    %p129 = scmp.eq.s32.totalorder %s15, 1
    %p130 = por %p128, %p129
    %p132 = scmp.ne.s32.totalorder %s115, %s131
    %p133 = scmp.eq.s32.totalorder %s15, 0
    %p134 = por %p132, %p133
    %p135 = scmp.le.s32.totalorder 1, %s9
    %p136 = scmp.lt.s32.totalorder %s9, 3
    %p137 = pnand %p135, %p136
    %p138 = pneg %p137
    // Predicated region
    $region9: #{gat_model_mll_forward.35} parent=5 // pred_check
      _
    $region10: #{gat_model_mll_forward.35} parent=5 // pred_check_branch
      %140 = sbr.rel (%p137) target = $region12
    $region11: #{gat_model_mll_forward.35} parent=5 // pred_region
      %s141 = ssub.s32 %s9, 1
      // Predicated region
      $region13: #{gat_model_mll_forward.35} parent=11 // pred_check
        %p142 = pneg %p73
      $region14: #{gat_model_mll_forward.35} parent=11 // pred_check_branch
        %144 = sbr.rel (%p142) target = $region16
      $region15: #{gat_model_mll_forward.35} parent=11 // pred_region
        %p145 = scmp.lt.s32.totalorder %s19, 0
        %s146 = scalar_select %p145, %s19, 0
        %s147 = smul.addr %s146, 4
        %s148 = scalar_lea.vmem %s1, %s147
      $region16: #{gat_model_mll_forward.35} parent=11 // pred_fallthru
        _
      // Predicated region
      $region17: #{gat_model_mll_forward.35} parent=11 // pred_check
        %p149 = pneg %p99
      $region18: #{gat_model_mll_forward.35} parent=11 // pred_check_branch
        %151 = sbr.rel (%p149) target = $region20
      $region19: #{gat_model_mll_forward.35} parent=11 // pred_region
        %p152 = scmp.lt.s32.totalorder %s19, 0
        %s153 = scalar_select %p152, %s19, 0
        %s154 = scalar_lea.vmem %s2, %s153
      $region20: #{gat_model_mll_forward.35} parent=11 // pred_fallthru
        _
    $region12: #{gat_model_mll_forward.35} parent=5 // pred_fallthru
      _
    %p155 = scmp.lt.s32.totalorder %s9, 2
    // Predicated region
    $region21: #{gat_model_mll_forward.35} parent=5 // pred_check
      %p156 = pneg %p155
    $region22: #{gat_model_mll_forward.35} parent=5 // pred_check_branch
      %158 = sbr.rel (%p156) target = $region24
    $region23: #{gat_model_mll_forward.35} parent=5 // pred_region
      // Predicated region
      $region25: #{gat_model_mll_forward.35} parent=23 // pred_check
        %p159 = pneg %p41
      $region26: #{gat_model_mll_forward.35} parent=23 // pred_check_branch
        %161 = sbr.rel (%p159) target = $region28
      $region27: #{gat_model_mll_forward.35} parent=23 // pred_region
        %p162 = scmp.lt.s32.totalorder %s16, 1
        %s163 = scalar_select %p162, %s16, 1
        %s164 = smul.addr %s163, 2
        %s165 = smul.addr %s164, 4
        %s166 = scalar_lea.vmem %s0, %s165
      $region28: #{gat_model_mll_forward.35} parent=23 // pred_fallthru
        _
    $region24: #{gat_model_mll_forward.35} parent=5 // pred_fallthru
      _
    %p167 = scmp.le.s32.totalorder 1, %s9
    %p168 = scmp.lt.s32.totalorder %s9, 3
    %p169 = pnand %p167, %p168
    %p170 = pneg %p169
    // Predicated region
    $region29: #{gat_model_mll_forward.35} parent=5 // pred_check
      _
    $region30: #{gat_model_mll_forward.35} parent=5 // pred_check_branch
      %172 = sbr.rel (%p169) target = $region32
    $region31: #{gat_model_mll_forward.35} parent=5 // pred_region
      %s173 = ssub.s32 %s9, 1
      %p174 = scmp.lt.s32.totalorder %s18, 1
      %s175 = scalar_select %p174, %s18, 1
      %s176 = smul.addr %s175, 2
      %s177 = smul.addr %s176, 4
      %s178 = scalar_lea.vmem %s0, %s177
      %p179 = pneg %p47
      %p180 = pneg %p44
      %p181 = scmp.lt.s32.totalorder %s19, 0
      %s182 = scalar_select %p181, %s19, 0
      %s183 = smul.addr %s182, 4
      %s184 = scalar_lea.vmem %s1, %s183
      %p185 = pneg %p73
      %p186 = pneg %p70
      %p187 = scmp.lt.s32.totalorder %s19, 0
      %s188 = scalar_select %p187, %s19, 0
      %s189 = scalar_lea.vmem %s2, %s188
      %p190 = pneg %p99
      %p191 = pneg %p96
      %p192 = pneg %p127
      %p193 = pneg %p124
      %p194 = scmp.lt.s32.totalorder %s18, 1
      %s195 = scalar_select %p194, %s18, 1
      %p196 = scmp.lt.s32.totalorder %s19, 0
      %s197 = scalar_select %p196, %s19, 0
      %s198 = sadd.s32 %s197, %s195
      %s199 = smul.addr %s198, 8
      %s200 = scalar_lea.vmem %s3, %s199
      %p201 = scmp.lt.s32.totalorder %s18, 1
      %s202 = scalar_select %p201, %s18, 1
      %s203 = smul.addr %s202, 2
      %s204 = smul.addr %s203, 4
      %s205 = scalar_lea.vmem %s0, %s204
      %p206 = scmp.lt.s32.totalorder %s19, 0
      %s207 = scalar_select %p206, %s19, 0
      %s208 = smul.addr %s207, 4
      %s209 = scalar_lea.vmem %s1, %s208
      %p210 = scmp.lt.s32.totalorder %s19, 0
      %s211 = scalar_select %p210, %s19, 0
      %s212 = scalar_lea.vmem %s2, %s211
      %p213 = scmp.lt.s32.totalorder %s18, 1
      %s214 = scalar_select %p213, %s18, 1
      %p215 = scmp.lt.s32.totalorder %s19, 0
      %s216 = scalar_select %p215, %s19, 0
      %s217 = sadd.s32 %s216, %s214
      %s218 = smul.addr %s217, 8
      %s219 = scalar_lea.vmem %s3, %s218
      %v221 = vld [vmem:[%s205] sm:$0xf]
      %v222 = vld [vmem:[%s209] sm:$0xf]
      %v223 = vld [vmem:[%s209 + $0x4] sm:$0xf]
      %v224 = vld [vmem:[%s205 + $0x4] sm:$0x1]
      %s225 = scalar_lea.vmem %s209, 8
      %v226 = vld [vmem:[%s225] sm:$0xf]
      %v227 = vld [vmem:[%s225 + $0x4] sm:$0xf]
      %v230 = vunpack.c.l.b16 %v221
      %v231 = vunpack.c.l.b16 %v224
      %v232 = vpack.c.b16 %v231, %v230
      %v234 = vshrl.u32 %v232, 16
      %v236 = vshll.u32 %v232, 16
      %v238 = vrot.slane %v236, 1
      %v239 = vor.u32 %v234, %v238
      %v242 = vunpack.c.l.b16 %v226
      %v243 = vunpack.c.l.b16 %v227
      %v244 = vpack.c.b16 %v243, %v242
      %vm246 = vcmask 130048
      %v248 = vsel %vm246, %v239, 0
      %250 = vmatprep.subr.bf16.mxu0 0
      %251 = vmatpush1.bf16.msra.mxu0 %v244
      %252 = vmatprep.subr.bf16.mxu0 0
      %253 = vmatpush1.bf16.msra.mxu0 0
      %254 = vmatprep.subr.bf16.mxu0 0
      %255 = vmatpush1.bf16.msra.mxu0 0
      %256 = vmatprep.subr.bf16.mxu0 0
      %257 = vmatpush1.bf16.msra.mxu0 0
      %258 = vmatprep.subr.bf16.mxu0 0
      %259 = vmatpush1.bf16.msra.mxu0 0
      %260 = vmatprep.subr.bf16.mxu0 0
      %261 = vmatpush1.bf16.msra.mxu0 0
      %262 = vmatprep.subr.bf16.mxu0 0
      %263 = vmatpush1.bf16.msra.mxu0 0
      %264 = vmatprep.subr.bf16.mxu0 0
      %265 = vmatpush1.bf16.msra.mxu0 0
      %266 = vmatprep.subr.bf16.mxu0 0
      %267 = vmatpush1.bf16.msra.mxu0 0
      %268 = vmatprep.subr.bf16.mxu0 0
      %269 = vmatpush1.bf16.msra.mxu0 0
      %270 = vmatprep.subr.bf16.mxu0 0
      %271 = vmatpush1.bf16.msra.mxu0 0
      %272 = vmatprep.subr.bf16.mxu0 0
      %273 = vmatpush1.bf16.msra.mxu0 0
      %274 = vmatprep.subr.bf16.mxu0 0
      %275 = vmatpush1.bf16.msra.mxu0 0
      %276 = vmatprep.subr.bf16.mxu0 0
      %277 = vmatpush1.bf16.msra.mxu0 0
      %278 = vmatprep.subr.bf16.mxu0 0
      %279 = vmatpush1.bf16.msra.mxu0 0
      %280 = vmatprep.subr.bf16.mxu0 0
      %281 = vmatpush1.bf16.msra.mxu0 0
      %282 = vmatprep.mubr.bf16.mxu0 0
      %283 = vmatmul.mubr.bf16.gmra.mrb[0].mxu0 %v248
      %v284 = vpop.f32.mrb[0].mxu0
      %v285 = vadd.f32 0.0, %v284
      %v286 = vpop.f32.mrb[0].mxu0
      %v287 = vpop.f32.mrb[0].mxu0
      %v288 = vpop.f32.mrb[0].mxu0
      %289 = vdwg.mxu0
      %v292 = vunpack.c.l.b16 %v222
      %v293 = vunpack.c.l.b16 %v223
      %v294 = vpack.c.b16 %v293, %v292
      %v297 = vsel %vm246, %v221, 0
      %299 = vmatprep.subr.bf16.mxu0 0
      %300 = vmatpush1.bf16.msra.mxu0 %v294
      %301 = vmatprep.subr.bf16.mxu0 0
      %302 = vmatpush1.bf16.msra.mxu0 0
      %303 = vmatprep.subr.bf16.mxu0 0
      %304 = vmatpush1.bf16.msra.mxu0 0
      %305 = vmatprep.subr.bf16.mxu0 0
      %306 = vmatpush1.bf16.msra.mxu0 0
      %307 = vmatprep.subr.bf16.mxu0 0
      %308 = vmatpush1.bf16.msra.mxu0 0
      %309 = vmatprep.subr.bf16.mxu0 0
      %310 = vmatpush1.bf16.msra.mxu0 0
      %311 = vmatprep.subr.bf16.mxu0 0
      %312 = vmatpush1.bf16.msra.mxu0 0
      %313 = vmatprep.subr.bf16.mxu0 0
      %314 = vmatpush1.bf16.msra.mxu0 0
      %315 = vmatprep.subr.bf16.mxu0 0
      %316 = vmatpush1.bf16.msra.mxu0 0
      %317 = vmatprep.subr.bf16.mxu0 0
      %318 = vmatpush1.bf16.msra.mxu0 0
      %319 = vmatprep.subr.bf16.mxu0 0
      %320 = vmatpush1.bf16.msra.mxu0 0
      %321 = vmatprep.subr.bf16.mxu0 0
      %322 = vmatpush1.bf16.msra.mxu0 0
      %323 = vmatprep.subr.bf16.mxu0 0
      %324 = vmatpush1.bf16.msra.mxu0 0
      %325 = vmatprep.subr.bf16.mxu0 0
      %326 = vmatpush1.bf16.msra.mxu0 0
      %327 = vmatprep.subr.bf16.mxu0 0
      %328 = vmatpush1.bf16.msra.mxu0 0
      %329 = vmatprep.subr.bf16.mxu0 0
      %330 = vmatpush1.bf16.msra.mxu0 0
      %331 = vmatprep.mubr.bf16.mxu0 0
      %332 = vmatmul.mubr.bf16.gmra.mrb[0].mxu0 %v297
      %v333 = vpop.f32.mrb[0].mxu0
      %v334 = vadd.f32 %v285, %v333
      %v335 = vpop.f32.mrb[0].mxu0
      %v336 = vpop.f32.mrb[0].mxu0
      %v337 = vpop.f32.mrb[0].mxu0
      %338 = vdwg.mxu0
      %v339 = vld [vmem:[%s205] sm:$0xe]
      %s340 = scalar_lea.vmem %s209, 16
      %v341 = vld [vmem:[%s340] sm:$0xf]
      %v342 = vld [vmem:[%s340 + $0x4] sm:$0xf]
      %v344 = vunpack.c.l.b16 %v339
      %v345 = vpack.c.b16 %v231, %v344
      %v346 = vrot.slane %v345, 1
      %v349 = vunpack.c.l.b16 %v341
      %v350 = vunpack.c.l.b16 %v342
      %v351 = vpack.c.b16 %v350, %v349
      %v354 = vsel %vm246, %v346, 0
      %356 = vmatprep.subr.bf16.mxu0 0
      %357 = vmatpush1.bf16.msra.mxu0 %v351
      %358 = vmatprep.subr.bf16.mxu0 0
      %359 = vmatpush1.bf16.msra.mxu0 0
      %360 = vmatprep.subr.bf16.mxu0 0
      %361 = vmatpush1.bf16.msra.mxu0 0
      %362 = vmatprep.subr.bf16.mxu0 0
      %363 = vmatpush1.bf16.msra.mxu0 0
      %364 = vmatprep.subr.bf16.mxu0 0
      %365 = vmatpush1.bf16.msra.mxu0 0
      %366 = vmatprep.subr.bf16.mxu0 0
      %367 = vmatpush1.bf16.msra.mxu0 0
      %368 = vmatprep.subr.bf16.mxu0 0
      %369 = vmatpush1.bf16.msra.mxu0 0
      %370 = vmatprep.subr.bf16.mxu0 0
      %371 = vmatpush1.bf16.msra.mxu0 0
      %372 = vmatprep.subr.bf16.mxu0 0
      %373 = vmatpush1.bf16.msra.mxu0 0
      %374 = vmatprep.subr.bf16.mxu0 0
      %375 = vmatpush1.bf16.msra.mxu0 0
      %376 = vmatprep.subr.bf16.mxu0 0
      %377 = vmatpush1.bf16.msra.mxu0 0
      %378 = vmatprep.subr.bf16.mxu0 0
      %379 = vmatpush1.bf16.msra.mxu0 0
      %380 = vmatprep.subr.bf16.mxu0 0
      %381 = vmatpush1.bf16.msra.mxu0 0
      %382 = vmatprep.subr.bf16.mxu0 0
      %383 = vmatpush1.bf16.msra.mxu0 0
      %384 = vmatprep.subr.bf16.mxu0 0
      %385 = vmatpush1.bf16.msra.mxu0 0
      %386 = vmatprep.subr.bf16.mxu0 0
      %387 = vmatpush1.bf16.msra.mxu0 0
      %388 = vmatprep.mubr.bf16.mxu0 0
      %389 = vmatmul.mubr.bf16.gmra.mrb[0].mxu0 %v354
      %v390 = vpop.f32.mrb[0].mxu0
      %v391 = vadd.f32 0.0, %v390
      %v392 = vpop.f32.mrb[0].mxu0
      %v393 = vpop.f32.mrb[0].mxu0
      %v394 = vpop.f32.mrb[0].mxu0
      %395 = vdwg.mxu0
      %v396 = vadd.f32 %v334, %v391
      %v397 = vld [vmem:[%s205 + $0x4] sm:$0x3]
      %s398 = scalar_lea.vmem %s209, 24
      %v399 = vld [vmem:[%s398] sm:$0xf]
      %v400 = vld [vmem:[%s398 + $0x4] sm:$0xf]
      %v402 = vunpack.c.l.b16 %v397
      %v403 = vpack.c.b16 %v402, %v344
      %v405 = vshrl.u32 %v403, 16
      %v407 = vrot.slane %v405, 1
      %v408 = vshll.u32 %v403, 16
      %v410 = vrot.slane %v408, 2
      %v411 = vor.u32 %v407, %v410
      %v414 = vunpack.c.l.b16 %v399
      %v415 = vunpack.c.l.b16 %v400
      %v416 = vpack.c.b16 %v415, %v414
      %v419 = vsel %vm246, %v411, 0
      %421 = vmatprep.subr.bf16.mxu0 0
      %422 = vmatpush1.bf16.msra.mxu0 %v416
      %423 = vmatprep.subr.bf16.mxu0 0
      %424 = vmatpush1.bf16.msra.mxu0 0
      %425 = vmatprep.subr.bf16.mxu0 0
      %426 = vmatpush1.bf16.msra.mxu0 0
      %427 = vmatprep.subr.bf16.mxu0 0
      %428 = vmatpush1.bf16.msra.mxu0 0
      %429 = vmatprep.subr.bf16.mxu0 0
      %430 = vmatpush1.bf16.msra.mxu0 0
      %431 = vmatprep.subr.bf16.mxu0 0
      %432 = vmatpush1.bf16.msra.mxu0 0
      %433 = vmatprep.subr.bf16.mxu0 0
      %434 = vmatpush1.bf16.msra.mxu0 0
      %435 = vmatprep.subr.bf16.mxu0 0
      %436 = vmatpush1.bf16.msra.mxu0 0
      %437 = vmatprep.subr.bf16.mxu0 0
      %438 = vmatpush1.bf16.msra.mxu0 0
      %439 = vmatprep.subr.bf16.mxu0 0
      %440 = vmatpush1.bf16.msra.mxu0 0
      %441 = vmatprep.subr.bf16.mxu0 0
      %442 = vmatpush1.bf16.msra.mxu0 0
      %443 = vmatprep.subr.bf16.mxu0 0
      %444 = vmatpush1.bf16.msra.mxu0 0
      %445 = vmatprep.subr.bf16.mxu0 0
      %446 = vmatpush1.bf16.msra.mxu0 0
      %447 = vmatprep.subr.bf16.mxu0 0
      %448 = vmatpush1.bf16.msra.mxu0 0
      %449 = vmatprep.subr.bf16.mxu0 0
      %450 = vmatpush1.bf16.msra.mxu0 0
      %451 = vmatprep.subr.bf16.mxu0 0
      %452 = vmatpush1.bf16.msra.mxu0 0
      %453 = vmatprep.mubr.bf16.mxu0 0
      %454 = vmatmul.mubr.bf16.gmra.mrb[0].mxu0 %v419
      %v455 = vpop.f32.mrb[0].mxu0
      %v456 = vadd.f32 0.0, %v455
      %v457 = vpop.f32.mrb[0].mxu0
      %v458 = vpop.f32.mrb[0].mxu0
      %v459 = vpop.f32.mrb[0].mxu0
      %460 = vdwg.mxu0
      %v461 = vadd.f32 %v396, %v456
      %v462 = vld [vmem:[%s205] sm:$0xc]
      %s463 = scalar_lea.vmem %s209, 32
      %v464 = vld [vmem:[%s463] sm:$0xf]
      %v465 = vld [vmem:[%s463 + $0x4] sm:$0xf]
      %v467 = vunpack.c.l.b16 %v462
      %v468 = vpack.c.b16 %v402, %v467
      %v469 = vrot.slane %v468, 2
      %v472 = vunpack.c.l.b16 %v464
      %v473 = vunpack.c.l.b16 %v465
      %v474 = vpack.c.b16 %v473, %v472
      %v477 = vsel %vm246, %v469, 0
      %479 = vmatprep.subr.bf16.mxu0 0
      %480 = vmatpush1.bf16.msra.mxu0 %v474
      %481 = vmatprep.subr.bf16.mxu0 0
      %482 = vmatpush1.bf16.msra.mxu0 0
      %483 = vmatprep.subr.bf16.mxu0 0
      %484 = vmatpush1.bf16.msra.mxu0 0
      %485 = vmatprep.subr.bf16.mxu0 0
      %486 = vmatpush1.bf16.msra.mxu0 0
      %487 = vmatprep.subr.bf16.mxu0 0
      %488 = vmatpush1.bf16.msra.mxu0 0
      %489 = vmatprep.subr.bf16.mxu0 0
      %490 = vmatpush1.bf16.msra.mxu0 0
      %491 = vmatprep.subr.bf16.mxu0 0
      %492 = vmatpush1.bf16.msra.mxu0 0
      %493 = vmatprep.subr.bf16.mxu0 0
      %494 = vmatpush1.bf16.msra.mxu0 0
      %495 = vmatprep.subr.bf16.mxu0 0
      %496 = vmatpush1.bf16.msra.mxu0 0
      %497 = vmatprep.subr.bf16.mxu0 0
      %498 = vmatpush1.bf16.msra.mxu0 0
      %499 = vmatprep.subr.bf16.mxu0 0
      %500 = vmatpush1.bf16.msra.mxu0 0
      %501 = vmatprep.subr.bf16.mxu0 0
      %502 = vmatpush1.bf16.msra.mxu0 0
      %503 = vmatprep.subr.bf16.mxu0 0
      %504 = vmatpush1.bf16.msra.mxu0 0
      %505 = vmatprep.subr.bf16.mxu0 0
      %506 = vmatpush1.bf16.msra.mxu0 0
      %507 = vmatprep.subr.bf16.mxu0 0
      %508 = vmatpush1.bf16.msra.mxu0 0
      %509 = vmatprep.subr.bf16.mxu0 0
      %510 = vmatpush1.bf16.msra.mxu0 0
      %511 = vmatprep.mubr.bf16.mxu0 0
      %512 = vmatmul.mubr.bf16.gmra.mrb[0].mxu0 %v477
      %v513 = vpop.f32.mrb[0].mxu0
      %v514 = vadd.f32 0.0, %v513
      %v515 = vpop.f32.mrb[0].mxu0
      %v516 = vpop.f32.mrb[0].mxu0
      %v517 = vpop.f32.mrb[0].mxu0
      %518 = vdwg.mxu0
      %v519 = vadd.f32 %v461, %v514
      %v520 = vld [vmem:[%s212] sm:$0x1]
      %v522 = vlaneseq
      %v523 = vshrl.u32 %v522, 7
      %v524 = vsub.s32 0, %v523
      %v525 = vrot.slane %v520, %v524
      %v527 = vadd.f32 %v519, %v525
      %v528 = vmax.f32 %v527, 0.0
      %529 = vst.msk [vmem:[%s219] sm:$0xff] %vm246, %v528
      %p530 = scmp.lt.s32.totalorder %s18, 1
      %s531 = scalar_select %p530, %s18, 1
      %p532 = scmp.lt.s32.totalorder %s19, 0
      %s533 = scalar_select %p532, %s19, 0
      %s534 = sadd.s32 %s533, %s531
      %s535 = smul.addr %s534, 8
      %s536 = scalar_lea.vmem %s3, %s535
      // Predicated region
      $region33: #{gat_model_mll_forward.35} parent=31 // pred_check
        %p537 = pneg %p124
      $region34: #{gat_model_mll_forward.35} parent=31 // pred_check_branch
        %539 = sbr.rel (%p537) target = $region36
      $region35: #{gat_model_mll_forward.35} parent=31 // pred_region
        _
      $region36: #{gat_model_mll_forward.35} parent=31 // pred_fallthru
        _
    $region32: #{gat_model_mll_forward.35} parent=5 // pred_fallthru
      _
    %p540 = scmp.le.s32.totalorder 2, %s9
    // Predicated region
    $region37: #{gat_model_mll_forward.35} parent=5 // pred_check
      %p541 = pneg %p540
    $region38: #{gat_model_mll_forward.35} parent=5 // pred_check_branch
      %543 = sbr.rel (%p541) target = $region40
    $region39: #{gat_model_mll_forward.35} parent=5 // pred_region
      %s544 = ssub.s32 %s9, 2
      // Predicated region
      $region41: #{gat_model_mll_forward.35} parent=39 // pred_check
        %p545 = pneg %p130
      $region42: #{gat_model_mll_forward.35} parent=39 // pred_check_branch
        %547 = sbr.rel (%p545) target = $region44
      $region43: #{gat_model_mll_forward.35} parent=39 // pred_region
        %p548 = scmp.lt.s32.totalorder %s20, 1
        %s549 = scalar_select %p548, %s20, 1
        %p550 = scmp.lt.s32.totalorder %s21, 0
        %s551 = scalar_select %p550, %s21, 0
        %s552 = sadd.s32 %s551, %s549
        %s553 = smul.addr %s552, 8
        %s554 = scalar_lea.vmem %s3, %s553
      $region44: #{gat_model_mll_forward.35} parent=39 // pred_fallthru
        _
    $region40: #{gat_model_mll_forward.35} parent=5 // pred_fallthru
      _
  $region6: #{gat_model_mll_forward.35} parent=0 // loop_footer
    %s13 = sadd.s32 1, %s9
  $region7: #{gat_model_mll_forward.35} parent=0 // loop_footer_branch
    %8 = sbr.rel target = $region3
  $region8: #{gat_model_mll_forward.35} parent=0 // loop_exit
    _

// kernel: gat_model_mll_forward.34
$region0: #{gat_model_mll_forward.34}
  #allocation0 [shape = 'u32[]', space=smem, size = 0x4, offset = 0x4, fixed_abs, tag = 'smem constant byte address 0x4 - core index']
  #allocation1 [shape = 'u32[144,128]{1,0:T(1,128)}', space=vmem, size = 0x12000, scoped, tag = 'internal scratch']
  %s0 = inlined_call_operand.vmem [shape: bf16[2,10,16], index: 0, kind: input, shape index: {}]
  %s1 = inlined_call_operand.vmem [shape: bf16[3,16,16], index: 1, kind: input, shape index: {}]
  %s2 = inlined_call_operand.vmem [shape: f32[1,16], index: 2, kind: input, shape index: {}]
  %s3 = inlined_call_operand.vmem [shape: f32[2,8,16], index: 3, kind: output, shape index: {}]
  %s4 = sld [smem:[#allocation0]]
  $region45: #{gat_model_mll_forward.34} parent=0
    _
  %s6 = ssub.s32 1, %s4
  %s7 = scalar_select 0, %s6, %s4
  loop: start=0, step=1, limit=4
  $region2: #{gat_model_mll_forward.34} parent=0 // loop_pre_header
    _
  $region3: #{gat_model_mll_forward.34} parent=0 // loop_header
    %s9 = sphi 0, %s13
    %p10 = scmp.ge.s32.totalorder %s9, 4
    %s16 = sphi 0, %s28
    %s17 = sphi 0, %s24
    %s18 = sphi 0, %s16
    %s19 = sphi 0, %s17
    %s20 = sphi 0, %s18
    %s21 = sphi 0, %s19
    %s31 = sphi 0, %s33
    %s34 = sphi 0, %s31
    %s35 = sphi 0, %s34
    %s51 = sphi 0, %s35
    %s57 = sphi 0, %s59
    %s60 = sphi 0, %s57
    %s61 = sphi 0, %s60
    %s77 = sphi 0, %s61
    %s83 = sphi 0, %s85
    %s86 = sphi 0, %s83
    %s87 = sphi 0, %s86
    %s103 = sphi 0, %s87
    %s111 = sphi 0, %s113
    %s114 = sphi 0, %s111
    %s115 = sphi 0, %s114
    %s131 = sphi 0, %s115
  $region4: #{gat_model_mll_forward.34} parent=0 // loop_header_branch
    %12 = sbr.rel (%p10) target = $region8
  $region5: #{gat_model_mll_forward.34} parent=0 // loop_body
    %s14 = ssub.s32 %s9, 1
    %s15 = ssub.s32 %s9, 2
    %s22 = sadd.s32 1, %s17
    %p23 = scmp.ge.s32.totalorder %s22, 1
    %s24 = scalar_select %p23, 0, %s22
    %s25 = sadd.s32 1, %s16
    %s26 = scalar_select %p23, %s25, %s16
    %p27 = scmp.ge.s32.totalorder %s26, 2
    %s28 = scalar_select %p27, 0, %s26
    %s29 = ssub.s32 %s16, %s28
    %p30 = scmp.eq.s32.totalorder %s29, 0
    %s32 = sadd.s32 %s31, 1
    %s33 = scalar_select %p30, %s31, %s32
    %p36 = pneg %p30
    %p37 = scmp.eq.s32.totalorder %s9, 1
    %p38 = por %p36, %p37
    %p39 = scmp.ne.s32.totalorder %s31, %s34
    %p40 = scmp.eq.s32.totalorder %s9, 0
    %p41 = por %p39, %p40
    %p42 = scmp.ne.s32.totalorder %s31, %s34
    %p43 = scmp.eq.s32.totalorder %s14, 1
    %p44 = por %p42, %p43
    %p45 = scmp.ne.s32.totalorder %s34, %s35
    %p46 = scmp.eq.s32.totalorder %s14, 0
    %p47 = por %p45, %p46
    %p48 = scmp.ne.s32.totalorder %s34, %s35
    %p49 = scmp.eq.s32.totalorder %s15, 1
    %p50 = por %p48, %p49
    %p52 = scmp.ne.s32.totalorder %s35, %s51
    %p53 = scmp.eq.s32.totalorder %s15, 0
    %p54 = por %p52, %p53
    %s55 = ssub.s32 %s17, %s24
    %p56 = scmp.eq.s32.totalorder %s55, 0
    %s58 = sadd.s32 %s57, 1
    %s59 = scalar_select %p56, %s57, %s58
    %p62 = pneg %p56
    %p63 = scmp.eq.s32.totalorder %s9, 1
    %p64 = por %p62, %p63
    %p65 = scmp.ne.s32.totalorder %s57, %s60
    %p66 = scmp.eq.s32.totalorder %s9, 0
    %p67 = por %p65, %p66
    %p68 = scmp.ne.s32.totalorder %s57, %s60
    %p69 = scmp.eq.s32.totalorder %s14, 1
    %p70 = por %p68, %p69
    %p71 = scmp.ne.s32.totalorder %s60, %s61
    %p72 = scmp.eq.s32.totalorder %s14, 0
    %p73 = por %p71, %p72
    %p74 = scmp.ne.s32.totalorder %s60, %s61
    %p75 = scmp.eq.s32.totalorder %s15, 1
    %p76 = por %p74, %p75
    %p78 = scmp.ne.s32.totalorder %s61, %s77
    %p79 = scmp.eq.s32.totalorder %s15, 0
    %p80 = por %p78, %p79
    %s81 = ssub.s32 %s17, %s24
    %p82 = scmp.eq.s32.totalorder %s81, 0
    %s84 = sadd.s32 %s83, 1
    %s85 = scalar_select %p82, %s83, %s84
    %p88 = pneg %p82
    %p89 = scmp.eq.s32.totalorder %s9, 1
    %p90 = por %p88, %p89
    %p91 = scmp.ne.s32.totalorder %s83, %s86
    %p92 = scmp.eq.s32.totalorder %s9, 0
    %p93 = por %p91, %p92
    %p94 = scmp.ne.s32.totalorder %s83, %s86
    %p95 = scmp.eq.s32.totalorder %s14, 1
    %p96 = por %p94, %p95
    %p97 = scmp.ne.s32.totalorder %s86, %s87
    %p98 = scmp.eq.s32.totalorder %s14, 0
    %p99 = por %p97, %p98
    %p100 = scmp.ne.s32.totalorder %s86, %s87
    %p101 = scmp.eq.s32.totalorder %s15, 1
    %p102 = por %p100, %p101
    %p104 = scmp.ne.s32.totalorder %s87, %s103
    %p105 = scmp.eq.s32.totalorder %s15, 0
    %p106 = por %p104, %p105
    %s107 = ssub.s32 %s16, %s28
    %s108 = ssub.s32 %s17, %s24
    %s109 = sor.u32 %s107, %s108
    %p110 = scmp.eq.s32.totalorder %s109, 0
    %s112 = sadd.s32 %s111, 1
    %s113 = scalar_select %p110, %s111, %s112
    %p116 = pneg %p110
    %p117 = scmp.eq.s32.totalorder %s9, 1
    %p118 = por %p116, %p117
    %p119 = scmp.ne.s32.totalorder %s111, %s114
    %p120 = scmp.eq.s32.totalorder %s9, 0
    %p121 = por %p119, %p120
    %p122 = scmp.ne.s32.totalorder %s111, %s114
    %p123 = scmp.eq.s32.totalorder %s14, 1
    %p124 = por %p122, %p123
    %p125 = scmp.ne.s32.totalorder %s114, %s115
    %p126 = scmp.eq.s32.totalorder %s14, 0
    %p127 = por %p125, %p126
    %p128 = scmp.ne.s32.totalorder %s114, %s115
    %p129 = scmp.eq.s32.totalorder %s15, 1
    %p130 = por %p128, %p129
    %p132 = scmp.ne.s32.totalorder %s115, %s131
    %p133 = scmp.eq.s32.totalorder %s15, 0
    %p134 = por %p132, %p133
    %p135 = scmp.le.s32.totalorder 1, %s9
    %p136 = scmp.lt.s32.totalorder %s9, 3
    %p137 = pnand %p135, %p136
    %p138 = pneg %p137
    // Predicated region
    $region9: #{gat_model_mll_forward.34} parent=5 // pred_check
      _
    $region10: #{gat_model_mll_forward.34} parent=5 // pred_check_branch
      %140 = sbr.rel (%p137) target = $region12
    $region11: #{gat_model_mll_forward.34} parent=5 // pred_region
      %s141 = ssub.s32 %s9, 1
      // Predicated region
      $region13: #{gat_model_mll_forward.34} parent=11 // pred_check
        %p142 = pneg %p73
      $region14: #{gat_model_mll_forward.34} parent=11 // pred_check_branch
        %144 = sbr.rel (%p142) target = $region16
      $region15: #{gat_model_mll_forward.34} parent=11 // pred_region
        %p145 = scmp.lt.s32.totalorder %s19, 0
        %s146 = scalar_select %p145, %s19, 0
        %s147 = smul.addr %s146, 4
        %s148 = scalar_lea.vmem %s1, %s147
      $region16: #{gat_model_mll_forward.34} parent=11 // pred_fallthru
        _
      // Predicated region
      $region17: #{gat_model_mll_forward.34} parent=11 // pred_check
        %p149 = pneg %p99
      $region18: #{gat_model_mll_forward.34} parent=11 // pred_check_branch
        %151 = sbr.rel (%p149) target = $region20
      $region19: #{gat_model_mll_forward.34} parent=11 // pred_region
        %p152 = scmp.lt.s32.totalorder %s19, 0
        %s153 = scalar_select %p152, %s19, 0
        %s154 = scalar_lea.vmem %s2, %s153
      $region20: #{gat_model_mll_forward.34} parent=11 // pred_fallthru
        _
    $region12: #{gat_model_mll_forward.34} parent=5 // pred_fallthru
      _
    %p155 = scmp.lt.s32.totalorder %s9, 2
    // Predicated region
    $region21: #{gat_model_mll_forward.34} parent=5 // pred_check
      %p156 = pneg %p155
    $region22: #{gat_model_mll_forward.34} parent=5 // pred_check_branch
      %158 = sbr.rel (%p156) target = $region24
    $region23: #{gat_model_mll_forward.34} parent=5 // pred_region
      // Predicated region
      $region25: #{gat_model_mll_forward.34} parent=23 // pred_check
        %p159 = pneg %p41
      $region26: #{gat_model_mll_forward.34} parent=23 // pred_check_branch
        %161 = sbr.rel (%p159) target = $region28
      $region27: #{gat_model_mll_forward.34} parent=23 // pred_region
        %p162 = scmp.lt.s32.totalorder %s16, 1
        %s163 = scalar_select %p162, %s16, 1
        %s164 = smul.addr %s163, 2
        %s165 = smul.addr %s164, 4
        %s166 = scalar_lea.vmem %s0, %s165
      $region28: #{gat_model_mll_forward.34} parent=23 // pred_fallthru
        _
    $region24: #{gat_model_mll_forward.34} parent=5 // pred_fallthru
      _
    %p167 = scmp.le.s32.totalorder 1, %s9
    %p168 = scmp.lt.s32.totalorder %s9, 3
    %p169 = pnand %p167, %p168
    %p170 = pneg %p169
    // Predicated region
    $region29: #{gat_model_mll_forward.34} parent=5 // pred_check
      _
    $region30: #{gat_model_mll_forward.34} parent=5 // pred_check_branch
      %172 = sbr.rel (%p169) target = $region32
    $region31: #{gat_model_mll_forward.34} parent=5 // pred_region
      %s173 = ssub.s32 %s9, 1
      %p174 = scmp.lt.s32.totalorder %s18, 1
      %s175 = scalar_select %p174, %s18, 1
      %s176 = smul.addr %s175, 2
      %s177 = smul.addr %s176, 4
      %s178 = scalar_lea.vmem %s0, %s177
      %p179 = pneg %p47
      %p180 = pneg %p44
      %p181 = scmp.lt.s32.totalorder %s19, 0
      %s182 = scalar_select %p181, %s19, 0
      %s183 = smul.addr %s182, 4
      %s184 = scalar_lea.vmem %s1, %s183
      %p185 = pneg %p73
      %p186 = pneg %p70
      %p187 = scmp.lt.s32.totalorder %s19, 0
      %s188 = scalar_select %p187, %s19, 0
      %s189 = scalar_lea.vmem %s2, %s188
      %p190 = pneg %p99
      %p191 = pneg %p96
      %p192 = pneg %p127
      %p193 = pneg %p124
      %p194 = scmp.lt.s32.totalorder %s18, 1
      %s195 = scalar_select %p194, %s18, 1
      %p196 = scmp.lt.s32.totalorder %s19, 0
      %s197 = scalar_select %p196, %s19, 0
      %s198 = sadd.s32 %s197, %s195
      %s199 = smul.addr %s198, 8
      %s200 = scalar_lea.vmem %s3, %s199
      %p201 = scmp.lt.s32.totalorder %s18, 1
      %s202 = scalar_select %p201, %s18, 1
      %s203 = smul.addr %s202, 2
      %s204 = smul.addr %s203, 4
      %s205 = scalar_lea.vmem %s0, %s204
      %p206 = scmp.lt.s32.totalorder %s19, 0
      %s207 = scalar_select %p206, %s19, 0
      %s208 = smul.addr %s207, 4
      %s209 = scalar_lea.vmem %s1, %s208
      %p210 = scmp.lt.s32.totalorder %s19, 0
      %s211 = scalar_select %p210, %s19, 0
      %s212 = scalar_lea.vmem %s2, %s211
      %p213 = scmp.lt.s32.totalorder %s18, 1
      %s214 = scalar_select %p213, %s18, 1
      %p215 = scmp.lt.s32.totalorder %s19, 0
      %s216 = scalar_select %p215, %s19, 0
      %s217 = sadd.s32 %s216, %s214
      %s218 = smul.addr %s217, 8
      %s219 = scalar_lea.vmem %s3, %s218
      %v221 = vld [vmem:[%s205] sm:$0xf]
      %v222 = vld [vmem:[%s209] sm:$0xf]
      %v223 = vld [vmem:[%s209 + $0x4] sm:$0xf]
      %v224 = vld [vmem:[%s205 + $0x4] sm:$0x1]
      %s225 = scalar_lea.vmem %s209, 8
      %v226 = vld [vmem:[%s225] sm:$0xf]
      %v227 = vld [vmem:[%s225 + $0x4] sm:$0xf]
      %v230 = vunpack.c.l.b16 %v221
      %v231 = vunpack.c.l.b16 %v224
      %v232 = vpack.c.b16 %v231, %v230
      %v234 = vshrl.u32 %v232, 16
      %v236 = vshll.u32 %v232, 16
      %v238 = vrot.slane %v236, 1
      %v239 = vor.u32 %v234, %v238
      %v242 = vunpack.c.l.b16 %v226
      %v243 = vunpack.c.l.b16 %v227
      %v244 = vpack.c.b16 %v243, %v242
      %vm246 = vcmask 130048
      %v248 = vsel %vm246, %v239, 0
      %250 = vmatprep.subr.bf16.mxu0 0
      %251 = vmatpush1.bf16.msra.mxu0 %v244
      %252 = vmatprep.subr.bf16.mxu0 0
      %253 = vmatpush1.bf16.msra.mxu0 0
      %254 = vmatprep.subr.bf16.mxu0 0
      %255 = vmatpush1.bf16.msra.mxu0 0
      %256 = vmatprep.subr.bf16.mxu0 0
      %257 = vmatpush1.bf16.msra.mxu0 0
      %258 = vmatprep.subr.bf16.mxu0 0
      %259 = vmatpush1.bf16.msra.mxu0 0
      %260 = vmatprep.subr.bf16.mxu0 0
      %261 = vmatpush1.bf16.msra.mxu0 0
      %262 = vmatprep.subr.bf16.mxu0 0
      %263 = vmatpush1.bf16.msra.mxu0 0
      %264 = vmatprep.subr.bf16.mxu0 0
      %265 = vmatpush1.bf16.msra.mxu0 0
      %266 = vmatprep.subr.bf16.mxu0 0
      %267 = vmatpush1.bf16.msra.mxu0 0
      %268 = vmatprep.subr.bf16.mxu0 0
      %269 = vmatpush1.bf16.msra.mxu0 0
      %270 = vmatprep.subr.bf16.mxu0 0
      %271 = vmatpush1.bf16.msra.mxu0 0
      %272 = vmatprep.subr.bf16.mxu0 0
      %273 = vmatpush1.bf16.msra.mxu0 0
      %274 = vmatprep.subr.bf16.mxu0 0
      %275 = vmatpush1.bf16.msra.mxu0 0
      %276 = vmatprep.subr.bf16.mxu0 0
      %277 = vmatpush1.bf16.msra.mxu0 0
      %278 = vmatprep.subr.bf16.mxu0 0
      %279 = vmatpush1.bf16.msra.mxu0 0
      %280 = vmatprep.subr.bf16.mxu0 0
      %281 = vmatpush1.bf16.msra.mxu0 0
      %282 = vmatprep.mubr.bf16.mxu0 0
      %283 = vmatmul.mubr.bf16.gmra.mrb[0].mxu0 %v248
      %v284 = vpop.f32.mrb[0].mxu0
      %v285 = vadd.f32 0.0, %v284
      %v286 = vpop.f32.mrb[0].mxu0
      %v287 = vpop.f32.mrb[0].mxu0
      %v288 = vpop.f32.mrb[0].mxu0
      %289 = vdwg.mxu0
      %v292 = vunpack.c.l.b16 %v222
      %v293 = vunpack.c.l.b16 %v223
      %v294 = vpack.c.b16 %v293, %v292
      %v297 = vsel %vm246, %v221, 0
      %299 = vmatprep.subr.bf16.mxu0 0
      %300 = vmatpush1.bf16.msra.mxu0 %v294
      %301 = vmatprep.subr.bf16.mxu0 0
      %302 = vmatpush1.bf16.msra.mxu0 0
      %303 = vmatprep.subr.bf16.mxu0 0
      %304 = vmatpush1.bf16.msra.mxu0 0
      %305 = vmatprep.subr.bf16.mxu0 0
      %306 = vmatpush1.bf16.msra.mxu0 0
      %307 = vmatprep.subr.bf16.mxu0 0
      %308 = vmatpush1.bf16.msra.mxu0 0
      %309 = vmatprep.subr.bf16.mxu0 0
      %310 = vmatpush1.bf16.msra.mxu0 0
      %311 = vmatprep.subr.bf16.mxu0 0
      %312 = vmatpush1.bf16.msra.mxu0 0
      %313 = vmatprep.subr.bf16.mxu0 0
      %314 = vmatpush1.bf16.msra.mxu0 0
      %315 = vmatprep.subr.bf16.mxu0 0
      %316 = vmatpush1.bf16.msra.mxu0 0
      %317 = vmatprep.subr.bf16.mxu0 0
      %318 = vmatpush1.bf16.msra.mxu0 0
      %319 = vmatprep.subr.bf16.mxu0 0
      %320 = vmatpush1.bf16.msra.mxu0 0
      %321 = vmatprep.subr.bf16.mxu0 0
      %322 = vmatpush1.bf16.msra.mxu0 0
      %323 = vmatprep.subr.bf16.mxu0 0
      %324 = vmatpush1.bf16.msra.mxu0 0
      %325 = vmatprep.subr.bf16.mxu0 0
      %326 = vmatpush1.bf16.msra.mxu0 0
      %327 = vmatprep.subr.bf16.mxu0 0
      %328 = vmatpush1.bf16.msra.mxu0 0
      %329 = vmatprep.subr.bf16.mxu0 0
      %330 = vmatpush1.bf16.msra.mxu0 0
      %331 = vmatprep.mubr.bf16.mxu0 0
      %332 = vmatmul.mubr.bf16.gmra.mrb[0].mxu0 %v297
      %v333 = vpop.f32.mrb[0].mxu0
      %v334 = vadd.f32 %v285, %v333
      %v335 = vpop.f32.mrb[0].mxu0
      %v336 = vpop.f32.mrb[0].mxu0
      %v337 = vpop.f32.mrb[0].mxu0
      %338 = vdwg.mxu0
      %v339 = vld [vmem:[%s205] sm:$0xe]
      %s340 = scalar_lea.vmem %s209, 16
      %v341 = vld [vmem:[%s340] sm:$0xf]
      %v342 = vld [vmem:[%s340 + $0x4] sm:$0xf]
      %v344 = vunpack.c.l.b16 %v339
      %v345 = vpack.c.b16 %v231, %v344
      %v346 = vrot.slane %v345, 1
      %v349 = vunpack.c.l.b16 %v341
      %v350 = vunpack.c.l.b16 %v342
      %v351 = vpack.c.b16 %v350, %v349
      %v354 = vsel %vm246, %v346, 0
      %356 = vmatprep.subr.bf16.mxu0 0
      %357 = vmatpush1.bf16.msra.mxu0 %v351
      %358 = vmatprep.subr.bf16.mxu0 0
      %359 = vmatpush1.bf16.msra.mxu0 0
      %360 = vmatprep.subr.bf16.mxu0 0
      %361 = vmatpush1.bf16.msra.mxu0 0
      %362 = vmatprep.subr.bf16.mxu0 0
      %363 = vmatpush1.bf16.msra.mxu0 0
      %364 = vmatprep.subr.bf16.mxu0 0
      %365 = vmatpush1.bf16.msra.mxu0 0
      %366 = vmatprep.subr.bf16.mxu0 0
      %367 = vmatpush1.bf16.msra.mxu0 0
      %368 = vmatprep.subr.bf16.mxu0 0
      %369 = vmatpush1.bf16.msra.mxu0 0
      %370 = vmatprep.subr.bf16.mxu0 0
      %371 = vmatpush1.bf16.msra.mxu0 0
      %372 = vmatprep.subr.bf16.mxu0 0
      %373 = vmatpush1.bf16.msra.mxu0 0
      %374 = vmatprep.subr.bf16.mxu0 0
      %375 = vmatpush1.bf16.msra.mxu0 0
      %376 = vmatprep.subr.bf16.mxu0 0
      %377 = vmatpush1.bf16.msra.mxu0 0
      %378 = vmatprep.subr.bf16.mxu0 0
      %379 = vmatpush1.bf16.msra.mxu0 0
      %380 = vmatprep.subr.bf16.mxu0 0
      %381 = vmatpush1.bf16.msra.mxu0 0
      %382 = vmatprep.subr.bf16.mxu0 0
      %383 = vmatpush1.bf16.msra.mxu0 0
      %384 = vmatprep.subr.bf16.mxu0 0
      %385 = vmatpush1.bf16.msra.mxu0 0
      %386 = vmatprep.subr.bf16.mxu0 0
      %387 = vmatpush1.bf16.msra.mxu0 0
      %388 = vmatprep.mubr.bf16.mxu0 0
      %389 = vmatmul.mubr.bf16.gmra.mrb[0].mxu0 %v354
      %v390 = vpop.f32.mrb[0].mxu0
      %v391 = vadd.f32 0.0, %v390
      %v392 = vpop.f32.mrb[0].mxu0
      %v393 = vpop.f32.mrb[0].mxu0
      %v394 = vpop.f32.mrb[0].mxu0
      %395 = vdwg.mxu0
      %v396 = vadd.f32 %v334, %v391
      %v397 = vld [vmem:[%s212] sm:$0x1]
      %v399 = vlaneseq
      %v400 = vshrl.u32 %v399, 7
      %v401 = vsub.s32 0, %v400
      %v402 = vrot.slane %v397, %v401
      %v404 = vadd.f32 %v396, %v402
      %v405 = vmax.f32 %v404, 0.0
      %406 = vst.msk [vmem:[%s219] sm:$0xff] %vm246, %v405
      %p407 = scmp.lt.s32.totalorder %s18, 1
      %s408 = scalar_select %p407, %s18, 1
      %p409 = scmp.lt.s32.totalorder %s19, 0
      %s410 = scalar_select %p409, %s19, 0
      %s411 = sadd.s32 %s410, %s408
      %s412 = smul.addr %s411, 8
      %s413 = scalar_lea.vmem %s3, %s412
      // Predicated region
      $region33: #{gat_model_mll_forward.34} parent=31 // pred_check
        %p414 = pneg %p124
      $region34: #{gat_model_mll_forward.34} parent=31 // pred_check_branch
        %416 = sbr.rel (%p414) target = $region36
      $region35: #{gat_model_mll_forward.34} parent=31 // pred_region
        _
      $region36: #{gat_model_mll_forward.34} parent=31 // pred_fallthru
        _
    $region32: #{gat_model_mll_forward.34} parent=5 // pred_fallthru
      _
    %p417 = scmp.le.s32.totalorder 2, %s9
    // Predicated region
    $region37: #{gat_model_mll_forward.34} parent=5 // pred_check
      %p418 = pneg %p417
    $region38: #{gat_model_mll_forward.34} parent=5 // pred_check_branch
      %420 = sbr.rel (%p418) target = $region40
    $region39: #{gat_model_mll_forward.34} parent=5 // pred_region
      %s421 = ssub.s32 %s9, 2
      // Predicated region
      $region41: #{gat_model_mll_forward.34} parent=39 // pred_check
        %p422 = pneg %p130
      $region42: #{gat_model_mll_forward.34} parent=39 // pred_check_branch
        %424 = sbr.rel (%p422) target = $region44
      $region43: #{gat_model_mll_forward.34} parent=39 // pred_region
        %p425 = scmp.lt.s32.totalorder %s20, 1
        %s426 = scalar_select %p425, %s20, 1
        %p427 = scmp.lt.s32.totalorder %s21, 0
        %s428 = scalar_select %p427, %s21, 0
        %s429 = sadd.s32 %s428, %s426
        %s430 = smul.addr %s429, 8
        %s431 = scalar_lea.vmem %s3, %s430
      $region44: #{gat_model_mll_forward.34} parent=39 // pred_fallthru
        _
    $region40: #{gat_model_mll_forward.34} parent=5 // pred_fallthru
      _
  $region6: #{gat_model_mll_forward.34} parent=0 // loop_footer
    %s13 = sadd.s32 1, %s9
  $region7: #{gat_model_mll_forward.34} parent=0 // loop_footer_branch
    %8 = sbr.rel target = $region3
  $region8: #{gat_model_mll_forward.34} parent=0 // loop_exit
    _

// kernel: gat_model_mll_forward.40
$region0: #{gat_model_mll_forward.40}
  #allocation0 [shape = 'u32[]', space=smem, size = 0x4, offset = 0x4, fixed_abs, tag = 'smem constant byte address 0x4 - core index']
  #allocation1 [shape = 'u32[144,128]{1,0:T(1,128)}', space=vmem, size = 0x12000, scoped, tag = 'internal scratch']
  %s0 = inlined_call_operand.vmem [shape: f32[16,160], index: 0, kind: input, shape index: {}]
  %s1 = inlined_call_operand.vmem [shape: f32[160,16], index: 1, kind: input, shape index: {}]
  %s2 = inlined_call_operand.vmem [shape: f32[1,16], index: 2, kind: input, shape index: {}]
  %s3 = inlined_call_operand.vmem [shape: f32[1,16], index: 3, kind: input, shape index: {}]
  %s4 = inlined_call_operand.vmem [shape: f32[1,16], index: 4, kind: input, shape index: {}]
  %s5 = inlined_call_operand.vmem [shape: bf16[16,16], index: 5, kind: input, shape index: {}]
  %s6 = inlined_call_operand.vmem [shape: f32[16,2], index: 6, kind: input, shape index: {}]
  %s7 = inlined_call_operand.vmem [shape: f32[1,16], index: 7, kind: input, shape index: {}]
  %s8 = inlined_call_operand.vmem [shape: f32[1,16], index: 8, kind: input, shape index: {}]
  %s9 = inlined_call_operand.vmem [shape: f32[16,16], index: 9, kind: output, shape index: {}]
  %s10 = sld [smem:[#allocation0]]
  $region46: #{gat_model_mll_forward.40} parent=0
    _
  %s12 = ssub.s32 1, %s10
  %s13 = scalar_select 0, %s12, %s10
  // Predicated region
  $region2: #{gat_model_mll_forward.40} parent=0 // pred_check
    _
  $region3: #{gat_model_mll_forward.40} parent=0 // pred_check_branch
    %15 = sbr.rel (0) target = $region5
  $region4: #{gat_model_mll_forward.40} parent=0 // pred_region
    _
  $region5: #{gat_model_mll_forward.40} parent=0 // pred_fallthru
    _
  // Predicated region
  $region6: #{gat_model_mll_forward.40} parent=0 // pred_check
    _
  $region7: #{gat_model_mll_forward.40} parent=0 // pred_check_branch
    %17 = sbr.rel (0) target = $region9
  $region8: #{gat_model_mll_forward.40} parent=0 // pred_region
    _
  $region9: #{gat_model_mll_forward.40} parent=0 // pred_fallthru
    _
  // Predicated region
  $region10: #{gat_model_mll_forward.40} parent=0 // pred_check
    _
  $region11: #{gat_model_mll_forward.40} parent=0 // pred_check_branch
    %19 = sbr.rel (0) target = $region13
  $region12: #{gat_model_mll_forward.40} parent=0 // pred_region
    _
  $region13: #{gat_model_mll_forward.40} parent=0 // pred_fallthru
    _
  // Predicated region
  $region14: #{gat_model_mll_forward.40} parent=0 // pred_check
    _
  $region15: #{gat_model_mll_forward.40} parent=0 // pred_check_branch
    %21 = sbr.rel (0) target = $region17
  $region16: #{gat_model_mll_forward.40} parent=0 // pred_region
    _
  $region17: #{gat_model_mll_forward.40} parent=0 // pred_fallthru
    _
  // Predicated region
  $region18: #{gat_model_mll_forward.40} parent=0 // pred_check
    _
  $region19: #{gat_model_mll_forward.40} parent=0 // pred_check_branch
    %23 = sbr.rel (0) target = $region21
  $region20: #{gat_model_mll_forward.40} parent=0 // pred_region
    _
  $region21: #{gat_model_mll_forward.40} parent=0 // pred_fallthru
    _
  // Predicated region
  $region22: #{gat_model_mll_forward.40} parent=0 // pred_check
    _
  $region23: #{gat_model_mll_forward.40} parent=0 // pred_check_branch
    %25 = sbr.rel (0) target = $region25
  $region24: #{gat_model_mll_forward.40} parent=0 // pred_region
    _
  $region25: #{gat_model_mll_forward.40} parent=0 // pred_fallthru
    _
  // Predicated region
  $region26: #{gat_model_mll_forward.40} parent=0 // pred_check
    _
  $region27: #{gat_model_mll_forward.40} parent=0 // pred_check_branch
    %27 = sbr.rel (0) target = $region29
  $region28: #{gat_model_mll_forward.40} parent=0 // pred_region
    _
  $region29: #{gat_model_mll_forward.40} parent=0 // pred_fallthru
    _
  // Predicated region
  $region30: #{gat_model_mll_forward.40} parent=0 // pred_check
    _
  $region31: #{gat_model_mll_forward.40} parent=0 // pred_check_branch
    %29 = sbr.rel (0) target = $region33
  $region32: #{gat_model_mll_forward.40} parent=0 // pred_region
    _
  $region33: #{gat_model_mll_forward.40} parent=0 // pred_fallthru
    _
  // Predicated region
  $region34: #{gat_model_mll_forward.40} parent=0 // pred_check
    _
  $region35: #{gat_model_mll_forward.40} parent=0 // pred_check_branch
    %31 = sbr.rel (0) target = $region37
  $region36: #{gat_model_mll_forward.40} parent=0 // pred_region
    _
  $region37: #{gat_model_mll_forward.40} parent=0 // pred_fallthru
    _
  %v32 = vld [vmem:[%s0] sm:$0xff]
  %v33 = vld [vmem:[%s0 + $0x8] sm:$0xff]
  %v34 = vld [vmem:[%s0 + $0x10] sm:$0xff]
  %v35 = vld [vmem:[%s0 + $0x18] sm:$0xff]
  %v36 = vld [vmem:[%s1] sm:$0xff]
  %v37 = vld [vmem:[%s1 + $0x8] sm:$0xff]
  %v38 = vld [vmem:[%s1 + $0x10] sm:$0xff]
  %v39 = vld [vmem:[%s1 + $0x18] sm:$0xff]
  %v40 = vld [vmem:[%s1 + $0x20] sm:$0xff]
  %v41 = vld [vmem:[%s1 + $0x28] sm:$0xff]
  %v42 = vld [vmem:[%s1 + $0x30] sm:$0xff]
  %v43 = vld [vmem:[%s1 + $0x38] sm:$0xff]
  %v44 = vld [vmem:[%s1 + $0x40] sm:$0xff]
  %v45 = vld [vmem:[%s1 + $0x48] sm:$0xff]
  %v46 = vld [vmem:[%s1 + $0x50] sm:$0xff]
  %v47 = vld [vmem:[%s1 + $0x58] sm:$0xff]
  %v48 = vld [vmem:[%s1 + $0x60] sm:$0xff]
  %v49 = vld [vmem:[%s1 + $0x68] sm:$0xff]
  %v50 = vld [vmem:[%s1 + $0x70] sm:$0xff]
  %v51 = vld [vmem:[%s1 + $0x78] sm:$0xff]
  %v52 = vld [vmem:[%s1 + $0x80] sm:$0xff]
  %v53 = vld [vmem:[%s1 + $0x88] sm:$0xff]
  %v54 = vld [vmem:[%s1 + $0x90] sm:$0xff]
  %v55 = vld [vmem:[%s1 + $0x98] sm:$0xff]
  %vm56 = vcmask 261120
  %v58 = vsel %vm56, %v33, 0
  %v61 = vsel %vm56, %v35, 0
  %63 = vmatprep.subr.mxu0 0.0
  %64 = vmatpush1.msra.mxu0 %v36
  %65 = vmatprep.subr.mxu0 0.0
  %66 = vmatpush1.msra.mxu0 %v37
  %67 = vmatprep.subr.mxu0 0.0
  %68 = vmatpush1.msra.mxu0 %v38
  %69 = vmatprep.subr.mxu0 0.0
  %70 = vmatpush1.msra.mxu0 %v39
  %71 = vmatprep.subr.mxu0 0.0
  %72 = vmatpush1.msra.mxu0 %v40
  %73 = vmatprep.subr.mxu0 0.0
  %74 = vmatpush1.msra.mxu0 %v41
  %75 = vmatprep.subr.mxu0 0.0
  %76 = vmatpush1.msra.mxu0 %v42
  %77 = vmatprep.subr.mxu0 0.0
  %78 = vmatpush1.msra.mxu0 %v43
  %79 = vmatprep.subr.mxu0 0.0
  %80 = vmatpush1.msra.mxu0 %v44
  %81 = vmatprep.subr.mxu0 0.0
  %82 = vmatpush1.msra.mxu0 %v45
  %83 = vmatprep.subr.mxu0 0.0
  %84 = vmatpush1.msra.mxu0 %v46
  %85 = vmatprep.subr.mxu0 0.0
  %86 = vmatpush1.msra.mxu0 %v47
  %87 = vmatprep.subr.mxu0 0.0
  %88 = vmatpush1.msra.mxu0 %v48
  %89 = vmatprep.subr.mxu0 0.0
  %90 = vmatpush1.msra.mxu0 %v49
  %91 = vmatprep.subr.mxu0 0.0
  %92 = vmatpush1.msra.mxu0 %v50
  %93 = vmatprep.subr.mxu0 0.0
  %94 = vmatpush1.msra.mxu0 %v51
  %95 = vmatprep.subr.mxu0 0.0
  %96 = vmatpush1.msra.mxu0 %v52
  %97 = vmatprep.subr.mxu0 0.0
  %98 = vmatpush1.msra.mxu0 %v53
  %99 = vmatprep.subr.mxu0 0.0
  %100 = vmatpush1.msra.mxu0 %v54
  %101 = vmatprep.subr.mxu0 0.0
  %102 = vmatpush1.msra.mxu0 %v55
  %103 = vmatprep.subr.mxu0 0.0
  %104 = vmatpush1.msra.mxu0 0.0
  %105 = vmatprep.subr.mxu0 0.0
  %106 = vmatpush1.msra.mxu0 0.0
  %107 = vmatprep.subr.mxu0 0.0
  %108 = vmatpush1.msra.mxu0 0.0
  %109 = vmatprep.subr.mxu0 0.0
  %110 = vmatpush1.msra.mxu0 0.0
  %111 = vmatprep.subr.mxu0 0.0
  %112 = vmatpush1.msra.mxu0 0.0
  %113 = vmatprep.subr.mxu0 0.0
  %114 = vmatpush1.msra.mxu0 0.0
  %115 = vmatprep.subr.mxu0 0.0
  %116 = vmatpush1.msra.mxu0 0.0
  %117 = vmatprep.subr.mxu0 0.0
  %118 = vmatpush1.msra.mxu0 0.0
  %119 = vmatprep.subr.mxu0 0.0
  %120 = vmatpush1.msra.mxu0 0.0
  %121 = vmatprep.subr.mxu0 0.0
  %122 = vmatpush1.msra.mxu0 0.0
  %123 = vmatprep.subr.mxu0 0.0
  %124 = vmatpush1.msra.mxu0 0.0
  %125 = vmatprep.subr.mxu0 0.0
  %126 = vmatpush1.msra.mxu0 0.0
  %127 = vmatprep.mubr.f32.mxu0 %v58
  %128 = vmatmul.mubr.f32.gmra.mrb[0].mxu0 %v32
  %v129 = vpop.f32.mrb[0].mxu0
  %v130 = vadd.f32 0.0, %v129
  %v131 = vpop.f32.mrb[0].mxu0
  %132 = vmatprep.mubr.f32.mxu0 %v61
  %133 = vmatmul.mubr.f32.gmra.mrb[0].mxu0 %v34
  %v134 = vpop.f32.mrb[0].mxu0
  %v135 = vadd.f32 0.0, %v134
  %v136 = vpop.f32.mrb[0].mxu0
  %137 = vdwg.mxu0
  %v138 = vld [vmem:[%s3] sm:$0x1]
  %v140 = vlaneseq
  %v141 = vshrl.u32 %v140, 7
  %v142 = vsub.s32 0, %v141
  %v143 = vrot.slane %v138, %v142
  %v145 = vmul.f32 %v130, %v143
  %v146 = vmul.f32 %v135, %v143
  %vm147 = vcmask 130048
  %v148 = vsel %vm147, %v145, 0.0
  %149 = vadd.xlane.f32.xlu0 %v148
  %v150 = vpop.xlane.xlu0 %149
  %v151 = vsel %vm147, %v146, 0.0
  %152 = vadd.xlane.f32.xlu0 %v151
  %v153 = vpop.xlane.xlu0 %152
  %v154 = vld [vmem:[%s2] sm:$0x1]
  %v156 = vsel %vm147, %v154, 0
  %v159 = vsel %vm147, %v130, 0
  %v162 = vsel %vm147, %v135, 0
  %164 = vmatprep.subr.mxu0 0.0
  %165 = vmatpush1.xpose.msra.mxu0 %v159
  %166 = vmatprep.subr.mxu0 0.0
  %167 = vmatpush1.xpose.msra.mxu0 %v162
  %168 = vmatprep.subr.mxu0 0.0
  %169 = vmatpush1.xpose.msra.mxu0 0.0
  %170 = vmatprep.subr.mxu0 0.0
  %171 = vmatpush1.xpose.msra.mxu0 0.0
  %172 = vmatprep.subr.mxu0 0.0
  %173 = vmatpush1.xpose.msra.mxu0 0.0
  %174 = vmatprep.subr.mxu0 0.0
  %175 = vmatpush1.xpose.msra.mxu0 0.0
  %176 = vmatprep.subr.mxu0 0.0
  %177 = vmatpush1.xpose.msra.mxu0 0.0
  %178 = vmatprep.subr.mxu0 0.0
  %179 = vmatpush1.xpose.msra.mxu0 0.0
  %180 = vmatprep.subr.mxu0 0.0
  %181 = vmatpush1.xpose.msra.mxu0 0.0
  %182 = vmatprep.subr.mxu0 0.0
  %183 = vmatpush1.xpose.msra.mxu0 0.0
  %184 = vmatprep.subr.mxu0 0.0
  %185 = vmatpush1.xpose.msra.mxu0 0.0
  %186 = vmatprep.subr.mxu0 0.0
  %187 = vmatpush1.xpose.msra.mxu0 0.0
  %188 = vmatprep.subr.mxu0 0.0
  %189 = vmatpush1.xpose.msra.mxu0 0.0
  %190 = vmatprep.subr.mxu0 0.0
  %191 = vmatpush1.xpose.msra.mxu0 0.0
  %192 = vmatprep.subr.mxu0 0.0
  %193 = vmatpush1.xpose.msra.mxu0 0.0
  %194 = vmatprep.subr.mxu0 0.0
  %195 = vmatpush1.xpose.msra.mxu0 0.0
  %196 = vmatprep.subr.mxu0 0.0
  %197 = vmatpush1.xpose.msra.mxu0 0.0
  %198 = vmatprep.subr.mxu0 0.0
  %199 = vmatpush1.xpose.msra.mxu0 0.0
  %200 = vmatprep.subr.mxu0 0.0
  %201 = vmatpush1.xpose.msra.mxu0 0.0
  %202 = vmatprep.subr.mxu0 0.0
  %203 = vmatpush1.xpose.msra.mxu0 0.0
  %204 = vmatprep.subr.mxu0 0.0
  %205 = vmatpush1.xpose.msra.mxu0 0.0
  %206 = vmatprep.subr.mxu0 0.0
  %207 = vmatpush1.xpose.msra.mxu0 0.0
  %208 = vmatprep.subr.mxu0 0.0
  %209 = vmatpush1.xpose.msra.mxu0 0.0
  %210 = vmatprep.subr.mxu0 0.0
  %211 = vmatpush1.xpose.msra.mxu0 0.0
  %212 = vmatprep.subr.mxu0 0.0
  %213 = vmatpush1.xpose.msra.mxu0 0.0
  %214 = vmatprep.subr.mxu0 0.0
  %215 = vmatpush1.xpose.msra.mxu0 0.0
  %216 = vmatprep.subr.mxu0 0.0
  %217 = vmatpush1.xpose.msra.mxu0 0.0
  %218 = vmatprep.subr.mxu0 0.0
  %219 = vmatpush1.xpose.msra.mxu0 0.0
  %220 = vmatprep.subr.mxu0 0.0
  %221 = vmatpush1.xpose.msra.mxu0 0.0
  %222 = vmatprep.subr.mxu0 0.0
  %223 = vmatpush1.xpose.msra.mxu0 0.0
  %224 = vmatprep.subr.mxu0 0.0
  %225 = vmatpush1.xpose.msra.mxu0 0.0
  %226 = vmatprep.subr.mxu0 0.0
  %227 = vmatpush1.xpose.msra.mxu0 0.0
  %228 = vmatprep.mubr.f32.mxu0 0.0
  %229 = vmatmul.mubr.f32.gmra.mrb[0].mxu0 %v156
  %v230 = vpop.f32.mrb[0].mxu0
  %v231 = vadd.f32 0.0, %v230
  %v232 = vpop.f32.mrb[0].mxu0
  %233 = vdwg.mxu0
  %v234 = vlaneseq
  %v235 = vshrl.u32 %v234, 7
  %v236 = vsub.s32 0, %v235
  %v237 = vrot.slane %v231, %v236
  %v238 = vadd.f32 %v150, %v237
  %v239 = vadd.f32 %v153, %v237
  %vm240 = vcmp.gt.f32.partialorder %v238, 0.0
  %vm241 = vcmp.gt.f32.partialorder %v239, 0.0
  %v242 = vmul.f32 %v238, 0.2
  %v243 = vmul.f32 %v239, 0.2
  %v244 = vsel %vm240, %v238, %v242
  %v245 = vsel %vm241, %v239, %v243
  %v246 = vld [vmem:[%s5] sm:$0xf]
  %v247 = vld [vmem:[%s5 + $0x4] sm:$0xf]
  %v248 = vunpack.c.l.bf16 %v246
  %v249 = vunpack.c.l.bf16 %v247
  %v250 = vadd.f32 %v244, %v248
  %v251 = vadd.f32 %v245, %v249
  %v252 = vsel %vm147, %v250, -inf
  %253 = vmax.xlane.f32.xlu0 %v252
  %v254 = vpop.xlane.xlu0 %253
  %v255 = vsel %vm147, %v251, -inf
  %256 = vmax.xlane.f32.xlu0 %v255
  %v257 = vpop.xlane.xlu0 %256
  %v258 = vsub.f32 %v250, %v254
  %v259 = vsub.f32 %v251, %v257
  %v260 = vmul.f32 %v258, 1.442695
  %v261 = vpow.pop %v260
  %v262 = vmul.f32 %v259, 1.442695
  %v263 = vpow.pop %v262
  %v264 = vsel %vm147, %v261, 0.0
  %265 = vadd.xlane.f32.xlu0 %v264
  %v266 = vpop.xlane.xlu0 %265
  %v267 = vsel %vm147, %v263, 0.0
  %268 = vadd.xlane.f32.xlu0 %v267
  %v269 = vpop.xlane.xlu0 %268
  %v270 = vrcp.pop %v266
  %v271 = vrcp.pop %v269
  %v272 = vmul.f32 %v261, %v270
  %v273 = vmul.f32 %v263, %v271
  %v274 = vld [vmem:[%s4] sm:$0x1]
  %v276 = vlaneseq
  %v277 = vshrl.u32 %v276, 7
  %v278 = vsub.s32 0, %v277
  %v279 = vrot.slane %v274, %v278
  %v282 = vsel %vm147, %v272, 0
  %v285 = vsel %vm147, %v273, 0
  %287 = vmatprep.subr.mxu0 0.0
  %288 = vmatpush1.msra.mxu0 %v130
  %289 = vmatprep.subr.mxu0 0.0
  %290 = vmatpush1.msra.mxu0 %v135
  %291 = vmatprep.subr.mxu0 0.0
  %292 = vmatpush1.msra.mxu0 0.0
  %293 = vmatprep.subr.mxu0 0.0
  %294 = vmatpush1.msra.mxu0 0.0
  %295 = vmatprep.subr.mxu0 0.0
  %296 = vmatpush1.msra.mxu0 0.0
  %297 = vmatprep.subr.mxu0 0.0
  %298 = vmatpush1.msra.mxu0 0.0
  %299 = vmatprep.subr.mxu0 0.0
  %300 = vmatpush1.msra.mxu0 0.0
  %301 = vmatprep.subr.mxu0 0.0
  %302 = vmatpush1.msra.mxu0 0.0
  %303 = vmatprep.subr.mxu0 0.0
  %304 = vmatpush1.msra.mxu0 0.0
  %305 = vmatprep.subr.mxu0 0.0
  %306 = vmatpush1.msra.mxu0 0.0
  %307 = vmatprep.subr.mxu0 0.0
  %308 = vmatpush1.msra.mxu0 0.0
  %309 = vmatprep.subr.mxu0 0.0
  %310 = vmatpush1.msra.mxu0 0.0
  %311 = vmatprep.subr.mxu0 0.0
  %312 = vmatpush1.msra.mxu0 0.0
  %313 = vmatprep.subr.mxu0 0.0
  %314 = vmatpush1.msra.mxu0 0.0
  %315 = vmatprep.subr.mxu0 0.0
  %316 = vmatpush1.msra.mxu0 0.0
  %317 = vmatprep.subr.mxu0 0.0
  %318 = vmatpush1.msra.mxu0 0.0
  %319 = vmatprep.subr.mxu0 0.0
  %320 = vmatpush1.msra.mxu0 0.0
  %321 = vmatprep.subr.mxu0 0.0
  %322 = vmatpush1.msra.mxu0 0.0
  %323 = vmatprep.subr.mxu0 0.0
  %324 = vmatpush1.msra.mxu0 0.0
  %325 = vmatprep.subr.mxu0 0.0
  %326 = vmatpush1.msra.mxu0 0.0
  %327 = vmatprep.subr.mxu0 0.0
  %328 = vmatpush1.msra.mxu0 0.0
  %329 = vmatprep.subr.mxu0 0.0
  %330 = vmatpush1.msra.mxu0 0.0
  %331 = vmatprep.subr.mxu0 0.0
  %332 = vmatpush1.msra.mxu0 0.0
  %333 = vmatprep.subr.mxu0 0.0
  %334 = vmatpush1.msra.mxu0 0.0
  %335 = vmatprep.subr.mxu0 0.0
  %336 = vmatpush1.msra.mxu0 0.0
  %337 = vmatprep.subr.mxu0 0.0
  %338 = vmatpush1.msra.mxu0 0.0
  %339 = vmatprep.subr.mxu0 0.0
  %340 = vmatpush1.msra.mxu0 0.0
  %341 = vmatprep.subr.mxu0 0.0
  %342 = vmatpush1.msra.mxu0 0.0
  %343 = vmatprep.subr.mxu0 0.0
  %344 = vmatpush1.msra.mxu0 0.0
  %345 = vmatprep.subr.mxu0 0.0
  %346 = vmatpush1.msra.mxu0 0.0
  %347 = vmatprep.subr.mxu0 0.0
  %348 = vmatpush1.msra.mxu0 0.0
  %349 = vmatprep.subr.mxu0 0.0
  %350 = vmatpush1.msra.mxu0 0.0
  %351 = vmatprep.mubr.f32.mxu0 0.0
  %352 = vmatmul.mubr.f32.gmra.mrb[0].mxu0 %v282
  %v353 = vpop.f32.mrb[0].mxu0
  %v354 = vadd.f32 %v279, %v353
  %v355 = vpop.f32.mrb[0].mxu0
  %356 = vmatprep.mubr.f32.mxu0 0.0
  %357 = vmatmul.mubr.f32.gmra.mrb[0].mxu0 %v285
  %v358 = vpop.f32.mrb[0].mxu0
  %v359 = vadd.f32 %v279, %v358
  %v360 = vpop.f32.mrb[0].mxu0
  %361 = vdwg.mxu0
  %v362 = vld [vmem:[%s6] sm:$0xff]
  %v363 = vld [vmem:[%s6 + $0x8] sm:$0xff]
  %vm364 = vcmask 7168
  %v365 = vsel %vm364, %v362, 0.0
  %v366 = vsel %vm364, %v363, 0.0
  %v367 = vadd.f32 %v365, %v366
  %368 = vadd.xlane.f32.xlu0 %v367
  %v369 = vpop.xlane.xlu0 %368
  %v370 = vrot.slane %v369, 4
  %v371 = vadd.f32 %v369, %v370
  %v372 = vrot.slane %v371, 2
  %v373 = vadd.f32 %v371, %v372
  %v374 = vrot.slane %v373, 1
  %v375 = vadd.f32 %v373, %v374
  %s376 = vtos %v375
  %s377 = smax.f32 %s376, 1.0
  %379 = vset.pattern.permute.xlu0 0
  %380 = vperm.xlu0 %379, %v362
  %v381 = vpop.permute.xlu0 %380
  %384 = vset.pattern.permute.xlu0 0
  %385 = vperm.xlu0 %384, %v363
  %v386 = vpop.permute.xlu0 %385
  %v388 = vmul.f32 %v354, %v381
  %v389 = vmul.f32 %v359, %v386
  %v390 = vsel %vm147, %v388, 0.0
  %v391 = vsel %vm147, %v389, 0.0
  %v392 = vadd.f32 %v390, %v391
  %393 = vadd.xlane.f32.xlu0 %v392
  %v394 = vpop.xlane.xlu0 %393
  %v395 = vrot.slane %v394, 4
  %v396 = vadd.f32 %v394, %v395
  %v397 = vrot.slane %v396, 2
  %v398 = vadd.f32 %v396, %v397
  %v399 = vrot.slane %v398, 1
  %v400 = vadd.f32 %v398, %v399
  %s401 = vtos %v400
  %s402 = smul.f32 %s377, 16.0
  %v403 = vstv %s402
  %v404 = vrcp.pop %v403
  %s405 = vtos %v404
  %s406 = smul.f32 %s401, %s405
  %v407 = vstv %s406
  %v408 = vmul.f32 %v362, %v407
  %v409 = vmul.f32 %v363, %v407
  %v410 = vadd.f32 %v408, 0.0
  %v411 = vadd.f32 %v409, 0.0
  %412 = vrot.lane.b32.xlu0 %v362, 127
  %v413 = vpop.permute.xlu0 %412
  %414 = vrot.lane.b32.xlu0 %v363, 127
  %v415 = vpop.permute.xlu0 %414
  %v418 = vsel %vm364, %v413, 0.0
  %v419 = vsel %vm364, %v415, 0.0
  %v420 = vadd.f32 %v418, %v419
  %421 = vadd.xlane.f32.xlu0 %v420
  %v422 = vpop.xlane.xlu0 %421
  %v423 = vrot.slane %v422, 4
  %v424 = vadd.f32 %v422, %v423
  %v425 = vrot.slane %v424, 2
  %v426 = vadd.f32 %v424, %v425
  %v427 = vrot.slane %v426, 1
  %v428 = vadd.f32 %v426, %v427
  %s429 = vtos %v428
  %s430 = smax.f32 %s429, 1.0
  %431 = vset.pattern.permute.xlu0 1
  %432 = vperm.xlu0 %431, %v362
  %v433 = vpop.permute.xlu0 %432
  %435 = vset.pattern.permute.xlu0 1
  %436 = vperm.xlu0 %435, %v363
  %v437 = vpop.permute.xlu0 %436
  %v439 = vmul.f32 %v354, %v433
  %v440 = vmul.f32 %v359, %v437
  %v441 = vsel %vm147, %v439, 0.0
  %v442 = vsel %vm147, %v440, 0.0
  %v443 = vadd.f32 %v441, %v442
  %444 = vadd.xlane.f32.xlu0 %v443
  %v445 = vpop.xlane.xlu0 %444
  %v446 = vrot.slane %v445, 4
  %v447 = vadd.f32 %v445, %v446
  %v448 = vrot.slane %v447, 2
  %v449 = vadd.f32 %v447, %v448
  %v450 = vrot.slane %v449, 1
  %v451 = vadd.f32 %v449, %v450
  %s452 = vtos %v451
  %s453 = smul.f32 %s430, 16.0
  %v454 = vstv %s453
  %v455 = vrcp.pop %v454
  %s456 = vtos %v455
  %s457 = smul.f32 %s452, %s456
  %v458 = vstv %s457
  %v459 = vmul.f32 %v362, %v458
  %v460 = vmul.f32 %v363, %v458
  %463 = vrot.lane.b32.xlu0 %v459, 127
  %v464 = vpop.permute.xlu0 %463
  %465 = vrot.lane.b32.xlu0 %v460, 127
  %v466 = vpop.permute.xlu0 %465
  %v469 = vadd.f32 %v410, %v464
  %v470 = vadd.f32 %v411, %v466
  %472 = vset.pattern.permute.xlu0 0
  %473 = vperm.xlu0 %472, %v469
  %v474 = vpop.permute.xlu0 %473
  %477 = vset.pattern.permute.xlu0 0
  %478 = vperm.xlu0 %477, %v470
  %v479 = vpop.permute.xlu0 %478
  %v481 = vsub.f32 %v354, %v474
  %v482 = vsub.f32 %v359, %v479
  %v483 = vmul.f32 %v481, %v481
  %v484 = vmul.f32 %v482, %v482
  %v485 = vmul.f32 %v483, %v381
  %v486 = vmul.f32 %v484, %v386
  %v487 = vsel %vm147, %v485, 0.0
  %v488 = vsel %vm147, %v486, 0.0
  %v489 = vadd.f32 %v487, %v488
  %490 = vadd.xlane.f32.xlu0 %v489
  %v491 = vpop.xlane.xlu0 %490
  %v492 = vrot.slane %v491, 4
  %v493 = vadd.f32 %v491, %v492
  %v494 = vrot.slane %v493, 2
  %v495 = vadd.f32 %v493, %v494
  %v496 = vrot.slane %v495, 1
  %v497 = vadd.f32 %v495, %v496
  %s498 = vtos %v497
  %v499 = vstv %s402
  %v500 = vrcp.pop %v499
  %s501 = vtos %v500
  %s502 = smul.f32 %s498, %s501
  %s503 = sadd.f32 %s502, 1e-05
  %v504 = vstv %s503
  %v505 = vrsqrt.pop %v504
  %s506 = vtos %v505
  %v507 = vstv %s506
  %v508 = vmul.f32 %v362, %v507
  %v509 = vmul.f32 %v363, %v507
  %v510 = vadd.f32 %v508, 0.0
  %v511 = vadd.f32 %v509, 0.0
  %v512 = vmul.f32 %v483, %v433
  %v513 = vmul.f32 %v484, %v437
  %v514 = vsel %vm147, %v512, 0.0
  %v515 = vsel %vm147, %v513, 0.0
  %v516 = vadd.f32 %v514, %v515
  %517 = vadd.xlane.f32.xlu0 %v516
  %v518 = vpop.xlane.xlu0 %517
  %v519 = vrot.slane %v518, 4
  %v520 = vadd.f32 %v518, %v519
  %v521 = vrot.slane %v520, 2
  %v522 = vadd.f32 %v520, %v521
  %v523 = vrot.slane %v522, 1
  %v524 = vadd.f32 %v522, %v523
  %s525 = vtos %v524
  %v526 = vstv %s453
  %v527 = vrcp.pop %v526
  %s528 = vtos %v527
  %s529 = smul.f32 %s525, %s528
  %s530 = sadd.f32 %s529, 1e-05
  %v531 = vstv %s530
  %v532 = vrsqrt.pop %v531
  %s533 = vtos %v532
  %v534 = vstv %s533
  %v535 = vmul.f32 %v362, %v534
  %v536 = vmul.f32 %v363, %v534
  %539 = vrot.lane.b32.xlu0 %v535, 127
  %v540 = vpop.permute.xlu0 %539
  %541 = vrot.lane.b32.xlu0 %v536, 127
  %v542 = vpop.permute.xlu0 %541
  %v545 = vadd.f32 %v510, %v540
  %v546 = vadd.f32 %v511, %v542
  %548 = vset.pattern.permute.xlu0 0
  %549 = vperm.xlu0 %548, %v545
  %v550 = vpop.permute.xlu0 %549
  %553 = vset.pattern.permute.xlu0 0
  %554 = vperm.xlu0 %553, %v546
  %v555 = vpop.permute.xlu0 %554
  %v557 = vmul.f32 %v481, %v550
  %v558 = vmul.f32 %v482, %v555
  %v559 = vld [vmem:[%s7] sm:$0x1]
  %v561 = vlaneseq
  %v562 = vshrl.u32 %v561, 7
  %v563 = vsub.s32 0, %v562
  %v564 = vrot.slane %v559, %v563
  %v566 = vmul.f32 %v557, %v564
  %v567 = vmul.f32 %v558, %v564
  %v568 = vld [vmem:[%s8] sm:$0x1]
  %v570 = vlaneseq
  %v571 = vshrl.u32 %v570, 7
  %v572 = vsub.s32 0, %v571
  %v573 = vrot.slane %v568, %v572
  %v575 = vadd.f32 %v566, %v573
  %v576 = vadd.f32 %v567, %v573
  %v577 = vmax.f32 %v575, 0.0
  %v578 = vmax.f32 %v576, 0.0
  %579 = vst.msk [vmem:[%s9] sm:$0xff] %vm147, %v577
  %580 = vst.msk [vmem:[%s9 + $0x8] sm:$0xff] %vm147, %v578
  // Predicated region
  $region38: #{gat_model_mll_forward.40} parent=0 // pred_check
    _
  $region39: #{gat_model_mll_forward.40} parent=0 // pred_check_branch
    %582 = sbr.rel (0) target = $region41
  $region40: #{gat_model_mll_forward.40} parent=0 // pred_region
    _
  $region41: #{gat_model_mll_forward.40} parent=0 // pred_fallthru
    _
  // Predicated region
  $region42: #{gat_model_mll_forward.40} parent=0 // pred_check
    _
  $region43: #{gat_model_mll_forward.40} parent=0 // pred_check_branch
    %584 = sbr.rel (0) target = $region45
  $region44: #{gat_model_mll_forward.40} parent=0 // pred_region
    _
  $region45: #{gat_model_mll_forward.40} parent=0 // pred_fallthru
    _

// kernel: gat_model_mll_forward.41
$region0: #{gat_model_mll_forward.41}
  #allocation0 [shape = 'u32[]', space=smem, size = 0x4, offset = 0x4, fixed_abs, tag = 'smem constant byte address 0x4 - core index']
  #allocation1 [shape = 'u32[144,128]{1,0:T(1,128)}', space=vmem, size = 0x12000, scoped, tag = 'internal scratch']
  %s0 = inlined_call_operand.vmem [shape: f32[16,16], index: 0, kind: input, shape index: {}]
  %s1 = inlined_call_operand.vmem [shape: f32[16,16], index: 1, kind: input, shape index: {}]
  %s2 = inlined_call_operand.vmem [shape: f32[1,16], index: 2, kind: input, shape index: {}]
  %s3 = inlined_call_operand.vmem [shape: f32[1,16], index: 3, kind: input, shape index: {}]
  %s4 = inlined_call_operand.vmem [shape: f32[1,16], index: 4, kind: input, shape index: {}]
  %s5 = inlined_call_operand.vmem [shape: bf16[16,16], index: 5, kind: input, shape index: {}]
  %s6 = inlined_call_operand.vmem [shape: f32[16,2], index: 6, kind: input, shape index: {}]
  %s7 = inlined_call_operand.vmem [shape: f32[1,16], index: 7, kind: input, shape index: {}]
  %s8 = inlined_call_operand.vmem [shape: f32[1,16], index: 8, kind: input, shape index: {}]
  %s9 = inlined_call_operand.vmem [shape: f32[16,16], index: 9, kind: output, shape index: {}]
  %s10 = sld [smem:[#allocation0]]
  $region46: #{gat_model_mll_forward.41} parent=0
    _
  %s12 = ssub.s32 1, %s10
  %s13 = scalar_select 0, %s12, %s10
  // Predicated region
  $region2: #{gat_model_mll_forward.41} parent=0 // pred_check
    _
  $region3: #{gat_model_mll_forward.41} parent=0 // pred_check_branch
    %15 = sbr.rel (0) target = $region5
  $region4: #{gat_model_mll_forward.41} parent=0 // pred_region
    _
  $region5: #{gat_model_mll_forward.41} parent=0 // pred_fallthru
    _
  // Predicated region
  $region6: #{gat_model_mll_forward.41} parent=0 // pred_check
    _
  $region7: #{gat_model_mll_forward.41} parent=0 // pred_check_branch
    %17 = sbr.rel (0) target = $region9
  $region8: #{gat_model_mll_forward.41} parent=0 // pred_region
    _
  $region9: #{gat_model_mll_forward.41} parent=0 // pred_fallthru
    _
  // Predicated region
  $region10: #{gat_model_mll_forward.41} parent=0 // pred_check
    _
  $region11: #{gat_model_mll_forward.41} parent=0 // pred_check_branch
    %19 = sbr.rel (0) target = $region13
  $region12: #{gat_model_mll_forward.41} parent=0 // pred_region
    _
  $region13: #{gat_model_mll_forward.41} parent=0 // pred_fallthru
    _
  // Predicated region
  $region14: #{gat_model_mll_forward.41} parent=0 // pred_check
    _
  $region15: #{gat_model_mll_forward.41} parent=0 // pred_check_branch
    %21 = sbr.rel (0) target = $region17
  $region16: #{gat_model_mll_forward.41} parent=0 // pred_region
    _
  $region17: #{gat_model_mll_forward.41} parent=0 // pred_fallthru
    _
  // Predicated region
  $region18: #{gat_model_mll_forward.41} parent=0 // pred_check
    _
  $region19: #{gat_model_mll_forward.41} parent=0 // pred_check_branch
    %23 = sbr.rel (0) target = $region21
  $region20: #{gat_model_mll_forward.41} parent=0 // pred_region
    _
  $region21: #{gat_model_mll_forward.41} parent=0 // pred_fallthru
    _
  // Predicated region
  $region22: #{gat_model_mll_forward.41} parent=0 // pred_check
    _
  $region23: #{gat_model_mll_forward.41} parent=0 // pred_check_branch
    %25 = sbr.rel (0) target = $region25
  $region24: #{gat_model_mll_forward.41} parent=0 // pred_region
    _
  $region25: #{gat_model_mll_forward.41} parent=0 // pred_fallthru
    _
  // Predicated region
  $region26: #{gat_model_mll_forward.41} parent=0 // pred_check
    _
  $region27: #{gat_model_mll_forward.41} parent=0 // pred_check_branch
    %27 = sbr.rel (0) target = $region29
  $region28: #{gat_model_mll_forward.41} parent=0 // pred_region
    _
  $region29: #{gat_model_mll_forward.41} parent=0 // pred_fallthru
    _
  // Predicated region
  $region30: #{gat_model_mll_forward.41} parent=0 // pred_check
    _
  $region31: #{gat_model_mll_forward.41} parent=0 // pred_check_branch
    %29 = sbr.rel (0) target = $region33
  $region32: #{gat_model_mll_forward.41} parent=0 // pred_region
    _
  $region33: #{gat_model_mll_forward.41} parent=0 // pred_fallthru
    _
  // Predicated region
  $region34: #{gat_model_mll_forward.41} parent=0 // pred_check
    _
  $region35: #{gat_model_mll_forward.41} parent=0 // pred_check_branch
    %31 = sbr.rel (0) target = $region37
  $region36: #{gat_model_mll_forward.41} parent=0 // pred_region
    _
  $region37: #{gat_model_mll_forward.41} parent=0 // pred_fallthru
    _
  %v32 = vld [vmem:[%s0] sm:$0xff]
  %v33 = vld [vmem:[%s0 + $0x8] sm:$0xff]
  %v34 = vld [vmem:[%s1] sm:$0xff]
  %v35 = vld [vmem:[%s1 + $0x8] sm:$0xff]
  %vm36 = vcmask 130048
  %v38 = vsel %vm36, %v32, 0
  %v41 = vsel %vm36, %v33, 0
  %43 = vmatprep.subr.mxu0 0.0
  %44 = vmatpush1.msra.mxu0 %v34
  %45 = vmatprep.subr.mxu0 0.0
  %46 = vmatpush1.msra.mxu0 %v35
  %47 = vmatprep.subr.mxu0 0.0
  %48 = vmatpush1.msra.mxu0 0.0
  %49 = vmatprep.subr.mxu0 0.0
  %50 = vmatpush1.msra.mxu0 0.0
  %51 = vmatprep.subr.mxu0 0.0
  %52 = vmatpush1.msra.mxu0 0.0
  %53 = vmatprep.subr.mxu0 0.0
  %54 = vmatpush1.msra.mxu0 0.0
  %55 = vmatprep.subr.mxu0 0.0
  %56 = vmatpush1.msra.mxu0 0.0
  %57 = vmatprep.subr.mxu0 0.0
  %58 = vmatpush1.msra.mxu0 0.0
  %59 = vmatprep.subr.mxu0 0.0
  %60 = vmatpush1.msra.mxu0 0.0
  %61 = vmatprep.subr.mxu0 0.0
  %62 = vmatpush1.msra.mxu0 0.0
  %63 = vmatprep.subr.mxu0 0.0
  %64 = vmatpush1.msra.mxu0 0.0
  %65 = vmatprep.subr.mxu0 0.0
  %66 = vmatpush1.msra.mxu0 0.0
  %67 = vmatprep.subr.mxu0 0.0
  %68 = vmatpush1.msra.mxu0 0.0
  %69 = vmatprep.subr.mxu0 0.0
  %70 = vmatpush1.msra.mxu0 0.0
  %71 = vmatprep.subr.mxu0 0.0
  %72 = vmatpush1.msra.mxu0 0.0
  %73 = vmatprep.subr.mxu0 0.0
  %74 = vmatpush1.msra.mxu0 0.0
  %75 = vmatprep.subr.mxu0 0.0
  %76 = vmatpush1.msra.mxu0 0.0
  %77 = vmatprep.subr.mxu0 0.0
  %78 = vmatpush1.msra.mxu0 0.0
  %79 = vmatprep.subr.mxu0 0.0
  %80 = vmatpush1.msra.mxu0 0.0
  %81 = vmatprep.subr.mxu0 0.0
  %82 = vmatpush1.msra.mxu0 0.0
  %83 = vmatprep.subr.mxu0 0.0
  %84 = vmatpush1.msra.mxu0 0.0
  %85 = vmatprep.subr.mxu0 0.0
  %86 = vmatpush1.msra.mxu0 0.0
  %87 = vmatprep.subr.mxu0 0.0
  %88 = vmatpush1.msra.mxu0 0.0
  %89 = vmatprep.subr.mxu0 0.0
  %90 = vmatpush1.msra.mxu0 0.0
  %91 = vmatprep.subr.mxu0 0.0
  %92 = vmatpush1.msra.mxu0 0.0
  %93 = vmatprep.subr.mxu0 0.0
  %94 = vmatpush1.msra.mxu0 0.0
  %95 = vmatprep.subr.mxu0 0.0
  %96 = vmatpush1.msra.mxu0 0.0
  %97 = vmatprep.subr.mxu0 0.0
  %98 = vmatpush1.msra.mxu0 0.0
  %99 = vmatprep.subr.mxu0 0.0
  %100 = vmatpush1.msra.mxu0 0.0
  %101 = vmatprep.subr.mxu0 0.0
  %102 = vmatpush1.msra.mxu0 0.0
  %103 = vmatprep.subr.mxu0 0.0
  %104 = vmatpush1.msra.mxu0 0.0
  %105 = vmatprep.subr.mxu0 0.0
  %106 = vmatpush1.msra.mxu0 0.0
  %107 = vmatprep.mubr.f32.mxu0 0.0
  %108 = vmatmul.mubr.f32.gmra.mrb[0].mxu0 %v38
  %v109 = vpop.f32.mrb[0].mxu0
  %v110 = vadd.f32 0.0, %v109
  %v111 = vpop.f32.mrb[0].mxu0
  %112 = vmatprep.mubr.f32.mxu0 0.0
  %113 = vmatmul.mubr.f32.gmra.mrb[0].mxu0 %v41
  %v114 = vpop.f32.mrb[0].mxu0
  %v115 = vadd.f32 0.0, %v114
  %v116 = vpop.f32.mrb[0].mxu0
  %117 = vdwg.mxu0
  %v118 = vld [vmem:[%s3] sm:$0x1]
  %v120 = vlaneseq
  %v121 = vshrl.u32 %v120, 7
  %v122 = vsub.s32 0, %v121
  %v123 = vrot.slane %v118, %v122
  %v125 = vmul.f32 %v110, %v123
  %v126 = vmul.f32 %v115, %v123
  %v127 = vsel %vm36, %v125, 0.0
  %128 = vadd.xlane.f32.xlu0 %v127
  %v129 = vpop.xlane.xlu0 %128
  %v130 = vsel %vm36, %v126, 0.0
  %131 = vadd.xlane.f32.xlu0 %v130
  %v132 = vpop.xlane.xlu0 %131
  %v133 = vld [vmem:[%s2] sm:$0x1]
  %v135 = vsel %vm36, %v133, 0
  %v138 = vsel %vm36, %v110, 0
  %v141 = vsel %vm36, %v115, 0
  %143 = vmatprep.subr.mxu0 0.0
  %144 = vmatpush1.xpose.msra.mxu0 %v138
  %145 = vmatprep.subr.mxu0 0.0
  %146 = vmatpush1.xpose.msra.mxu0 %v141
  %147 = vmatprep.subr.mxu0 0.0
  %148 = vmatpush1.xpose.msra.mxu0 0.0
  %149 = vmatprep.subr.mxu0 0.0
  %150 = vmatpush1.xpose.msra.mxu0 0.0
  %151 = vmatprep.subr.mxu0 0.0
  %152 = vmatpush1.xpose.msra.mxu0 0.0
  %153 = vmatprep.subr.mxu0 0.0
  %154 = vmatpush1.xpose.msra.mxu0 0.0
  %155 = vmatprep.subr.mxu0 0.0
  %156 = vmatpush1.xpose.msra.mxu0 0.0
  %157 = vmatprep.subr.mxu0 0.0
  %158 = vmatpush1.xpose.msra.mxu0 0.0
  %159 = vmatprep.subr.mxu0 0.0
  %160 = vmatpush1.xpose.msra.mxu0 0.0
  %161 = vmatprep.subr.mxu0 0.0
  %162 = vmatpush1.xpose.msra.mxu0 0.0
  %163 = vmatprep.subr.mxu0 0.0
  %164 = vmatpush1.xpose.msra.mxu0 0.0
  %165 = vmatprep.subr.mxu0 0.0
  %166 = vmatpush1.xpose.msra.mxu0 0.0
  %167 = vmatprep.subr.mxu0 0.0
  %168 = vmatpush1.xpose.msra.mxu0 0.0
  %169 = vmatprep.subr.mxu0 0.0
  %170 = vmatpush1.xpose.msra.mxu0 0.0
  %171 = vmatprep.subr.mxu0 0.0
  %172 = vmatpush1.xpose.msra.mxu0 0.0
  %173 = vmatprep.subr.mxu0 0.0
  %174 = vmatpush1.xpose.msra.mxu0 0.0
  %175 = vmatprep.subr.mxu0 0.0
  %176 = vmatpush1.xpose.msra.mxu0 0.0
  %177 = vmatprep.subr.mxu0 0.0
  %178 = vmatpush1.xpose.msra.mxu0 0.0
  %179 = vmatprep.subr.mxu0 0.0
  %180 = vmatpush1.xpose.msra.mxu0 0.0
  %181 = vmatprep.subr.mxu0 0.0
  %182 = vmatpush1.xpose.msra.mxu0 0.0
  %183 = vmatprep.subr.mxu0 0.0
  %184 = vmatpush1.xpose.msra.mxu0 0.0
  %185 = vmatprep.subr.mxu0 0.0
  %186 = vmatpush1.xpose.msra.mxu0 0.0
  %187 = vmatprep.subr.mxu0 0.0
  %188 = vmatpush1.xpose.msra.mxu0 0.0
  %189 = vmatprep.subr.mxu0 0.0
  %190 = vmatpush1.xpose.msra.mxu0 0.0
  %191 = vmatprep.subr.mxu0 0.0
  %192 = vmatpush1.xpose.msra.mxu0 0.0
  %193 = vmatprep.subr.mxu0 0.0
  %194 = vmatpush1.xpose.msra.mxu0 0.0
  %195 = vmatprep.subr.mxu0 0.0
  %196 = vmatpush1.xpose.msra.mxu0 0.0
  %197 = vmatprep.subr.mxu0 0.0
  %198 = vmatpush1.xpose.msra.mxu0 0.0
  %199 = vmatprep.subr.mxu0 0.0
  %200 = vmatpush1.xpose.msra.mxu0 0.0
  %201 = vmatprep.subr.mxu0 0.0
  %202 = vmatpush1.xpose.msra.mxu0 0.0
  %203 = vmatprep.subr.mxu0 0.0
  %204 = vmatpush1.xpose.msra.mxu0 0.0
  %205 = vmatprep.subr.mxu0 0.0
  %206 = vmatpush1.xpose.msra.mxu0 0.0
  %207 = vmatprep.mubr.f32.mxu0 0.0
  %208 = vmatmul.mubr.f32.gmra.mrb[0].mxu0 %v135
  %v209 = vpop.f32.mrb[0].mxu0
  %v210 = vadd.f32 0.0, %v209
  %v211 = vpop.f32.mrb[0].mxu0
  %212 = vdwg.mxu0
  %v213 = vlaneseq
  %v214 = vshrl.u32 %v213, 7
  %v215 = vsub.s32 0, %v214
  %v216 = vrot.slane %v210, %v215
  %v217 = vadd.f32 %v129, %v216
  %v218 = vadd.f32 %v132, %v216
  %vm219 = vcmp.gt.f32.partialorder %v217, 0.0
  %vm220 = vcmp.gt.f32.partialorder %v218, 0.0
  %v221 = vmul.f32 %v217, 0.2
  %v222 = vmul.f32 %v218, 0.2
  %v223 = vsel %vm219, %v217, %v221
  %v224 = vsel %vm220, %v218, %v222
  %v225 = vld [vmem:[%s5] sm:$0xf]
  %v226 = vld [vmem:[%s5 + $0x4] sm:$0xf]
  %v227 = vunpack.c.l.bf16 %v225
  %v228 = vunpack.c.l.bf16 %v226
  %v229 = vadd.f32 %v223, %v227
  %v230 = vadd.f32 %v224, %v228
  %v231 = vsel %vm36, %v229, -inf
  %232 = vmax.xlane.f32.xlu0 %v231
  %v233 = vpop.xlane.xlu0 %232
  %v234 = vsel %vm36, %v230, -inf
  %235 = vmax.xlane.f32.xlu0 %v234
  %v236 = vpop.xlane.xlu0 %235
  %v237 = vsub.f32 %v229, %v233
  %v238 = vsub.f32 %v230, %v236
  %v239 = vmul.f32 %v237, 1.442695
  %v240 = vpow.pop %v239
  %v241 = vmul.f32 %v238, 1.442695
  %v242 = vpow.pop %v241
  %v243 = vsel %vm36, %v240, 0.0
  %244 = vadd.xlane.f32.xlu0 %v243
  %v245 = vpop.xlane.xlu0 %244
  %v246 = vsel %vm36, %v242, 0.0
  %247 = vadd.xlane.f32.xlu0 %v246
  %v248 = vpop.xlane.xlu0 %247
  %v249 = vrcp.pop %v245
  %v250 = vrcp.pop %v248
  %v251 = vmul.f32 %v240, %v249
  %v252 = vmul.f32 %v242, %v250
  %v253 = vld [vmem:[%s4] sm:$0x1]
  %v255 = vlaneseq
  %v256 = vshrl.u32 %v255, 7
  %v257 = vsub.s32 0, %v256
  %v258 = vrot.slane %v253, %v257
  %v261 = vsel %vm36, %v251, 0
  %v264 = vsel %vm36, %v252, 0
  %266 = vmatprep.subr.mxu0 0.0
  %267 = vmatpush1.msra.mxu0 %v110
  %268 = vmatprep.subr.mxu0 0.0
  %269 = vmatpush1.msra.mxu0 %v115
  %270 = vmatprep.subr.mxu0 0.0
  %271 = vmatpush1.msra.mxu0 0.0
  %272 = vmatprep.subr.mxu0 0.0
  %273 = vmatpush1.msra.mxu0 0.0
  %274 = vmatprep.subr.mxu0 0.0
  %275 = vmatpush1.msra.mxu0 0.0
  %276 = vmatprep.subr.mxu0 0.0
  %277 = vmatpush1.msra.mxu0 0.0
  %278 = vmatprep.subr.mxu0 0.0
  %279 = vmatpush1.msra.mxu0 0.0
  %280 = vmatprep.subr.mxu0 0.0
  %281 = vmatpush1.msra.mxu0 0.0
  %282 = vmatprep.subr.mxu0 0.0
  %283 = vmatpush1.msra.mxu0 0.0
  %284 = vmatprep.subr.mxu0 0.0
  %285 = vmatpush1.msra.mxu0 0.0
  %286 = vmatprep.subr.mxu0 0.0
  %287 = vmatpush1.msra.mxu0 0.0
  %288 = vmatprep.subr.mxu0 0.0
  %289 = vmatpush1.msra.mxu0 0.0
  %290 = vmatprep.subr.mxu0 0.0
  %291 = vmatpush1.msra.mxu0 0.0
  %292 = vmatprep.subr.mxu0 0.0
  %293 = vmatpush1.msra.mxu0 0.0
  %294 = vmatprep.subr.mxu0 0.0
  %295 = vmatpush1.msra.mxu0 0.0
  %296 = vmatprep.subr.mxu0 0.0
  %297 = vmatpush1.msra.mxu0 0.0
  %298 = vmatprep.subr.mxu0 0.0
  %299 = vmatpush1.msra.mxu0 0.0
  %300 = vmatprep.subr.mxu0 0.0
  %301 = vmatpush1.msra.mxu0 0.0
  %302 = vmatprep.subr.mxu0 0.0
  %303 = vmatpush1.msra.mxu0 0.0
  %304 = vmatprep.subr.mxu0 0.0
  %305 = vmatpush1.msra.mxu0 0.0
  %306 = vmatprep.subr.mxu0 0.0
  %307 = vmatpush1.msra.mxu0 0.0
  %308 = vmatprep.subr.mxu0 0.0
  %309 = vmatpush1.msra.mxu0 0.0
  %310 = vmatprep.subr.mxu0 0.0
  %311 = vmatpush1.msra.mxu0 0.0
  %312 = vmatprep.subr.mxu0 0.0
  %313 = vmatpush1.msra.mxu0 0.0
  %314 = vmatprep.subr.mxu0 0.0
  %315 = vmatpush1.msra.mxu0 0.0
  %316 = vmatprep.subr.mxu0 0.0
  %317 = vmatpush1.msra.mxu0 0.0
  %318 = vmatprep.subr.mxu0 0.0
  %319 = vmatpush1.msra.mxu0 0.0
  %320 = vmatprep.subr.mxu0 0.0
  %321 = vmatpush1.msra.mxu0 0.0
  %322 = vmatprep.subr.mxu0 0.0
  %323 = vmatpush1.msra.mxu0 0.0
  %324 = vmatprep.subr.mxu0 0.0
  %325 = vmatpush1.msra.mxu0 0.0
  %326 = vmatprep.subr.mxu0 0.0
  %327 = vmatpush1.msra.mxu0 0.0
  %328 = vmatprep.subr.mxu0 0.0
  %329 = vmatpush1.msra.mxu0 0.0
  %330 = vmatprep.mubr.f32.mxu0 0.0
  %331 = vmatmul.mubr.f32.gmra.mrb[0].mxu0 %v261
  %v332 = vpop.f32.mrb[0].mxu0
  %v333 = vadd.f32 %v258, %v332
  %v334 = vpop.f32.mrb[0].mxu0
  %335 = vmatprep.mubr.f32.mxu0 0.0
  %336 = vmatmul.mubr.f32.gmra.mrb[0].mxu0 %v264
  %v337 = vpop.f32.mrb[0].mxu0
  %v338 = vadd.f32 %v258, %v337
  %v339 = vpop.f32.mrb[0].mxu0
  %340 = vdwg.mxu0
  %v341 = vld [vmem:[%s6] sm:$0xff]
  %v342 = vld [vmem:[%s6 + $0x8] sm:$0xff]
  %vm343 = vcmask 7168
  %v344 = vsel %vm343, %v341, 0.0
  %v345 = vsel %vm343, %v342, 0.0
  %v346 = vadd.f32 %v344, %v345
  %347 = vadd.xlane.f32.xlu0 %v346
  %v348 = vpop.xlane.xlu0 %347
  %v349 = vrot.slane %v348, 4
  %v350 = vadd.f32 %v348, %v349
  %v351 = vrot.slane %v350, 2
  %v352 = vadd.f32 %v350, %v351
  %v353 = vrot.slane %v352, 1
  %v354 = vadd.f32 %v352, %v353
  %s355 = vtos %v354
  %s356 = smax.f32 %s355, 1.0
  %358 = vset.pattern.permute.xlu0 0
  %359 = vperm.xlu0 %358, %v341
  %v360 = vpop.permute.xlu0 %359
  %363 = vset.pattern.permute.xlu0 0
  %364 = vperm.xlu0 %363, %v342
  %v365 = vpop.permute.xlu0 %364
  %v367 = vmul.f32 %v333, %v360
  %v368 = vmul.f32 %v338, %v365
  %v369 = vsel %vm36, %v367, 0.0
  %v370 = vsel %vm36, %v368, 0.0
  %v371 = vadd.f32 %v369, %v370
  %372 = vadd.xlane.f32.xlu0 %v371
  %v373 = vpop.xlane.xlu0 %372
  %v374 = vrot.slane %v373, 4
  %v375 = vadd.f32 %v373, %v374
  %v376 = vrot.slane %v375, 2
  %v377 = vadd.f32 %v375, %v376
  %v378 = vrot.slane %v377, 1
  %v379 = vadd.f32 %v377, %v378
  %s380 = vtos %v379
  %s381 = smul.f32 %s356, 16.0
  %v382 = vstv %s381
  %v383 = vrcp.pop %v382
  %s384 = vtos %v383
  %s385 = smul.f32 %s380, %s384
  %v386 = vstv %s385
  %v387 = vmul.f32 %v341, %v386
  %v388 = vmul.f32 %v342, %v386
  %v389 = vadd.f32 %v387, 0.0
  %v390 = vadd.f32 %v388, 0.0
  %391 = vrot.lane.b32.xlu0 %v341, 127
  %v392 = vpop.permute.xlu0 %391
  %393 = vrot.lane.b32.xlu0 %v342, 127
  %v394 = vpop.permute.xlu0 %393
  %v397 = vsel %vm343, %v392, 0.0
  %v398 = vsel %vm343, %v394, 0.0
  %v399 = vadd.f32 %v397, %v398
  %400 = vadd.xlane.f32.xlu0 %v399
  %v401 = vpop.xlane.xlu0 %400
  %v402 = vrot.slane %v401, 4
  %v403 = vadd.f32 %v401, %v402
  %v404 = vrot.slane %v403, 2
  %v405 = vadd.f32 %v403, %v404
  %v406 = vrot.slane %v405, 1
  %v407 = vadd.f32 %v405, %v406
  %s408 = vtos %v407
  %s409 = smax.f32 %s408, 1.0
  %410 = vset.pattern.permute.xlu0 1
  %411 = vperm.xlu0 %410, %v341
  %v412 = vpop.permute.xlu0 %411
  %414 = vset.pattern.permute.xlu0 1
  %415 = vperm.xlu0 %414, %v342
  %v416 = vpop.permute.xlu0 %415
  %v418 = vmul.f32 %v333, %v412
  %v419 = vmul.f32 %v338, %v416
  %v420 = vsel %vm36, %v418, 0.0
  %v421 = vsel %vm36, %v419, 0.0
  %v422 = vadd.f32 %v420, %v421
  %423 = vadd.xlane.f32.xlu0 %v422
  %v424 = vpop.xlane.xlu0 %423
  %v425 = vrot.slane %v424, 4
  %v426 = vadd.f32 %v424, %v425
  %v427 = vrot.slane %v426, 2
  %v428 = vadd.f32 %v426, %v427
  %v429 = vrot.slane %v428, 1
  %v430 = vadd.f32 %v428, %v429
  %s431 = vtos %v430
  %s432 = smul.f32 %s409, 16.0
  %v433 = vstv %s432
  %v434 = vrcp.pop %v433
  %s435 = vtos %v434
  %s436 = smul.f32 %s431, %s435
  %v437 = vstv %s436
  %v438 = vmul.f32 %v341, %v437
  %v439 = vmul.f32 %v342, %v437
  %442 = vrot.lane.b32.xlu0 %v438, 127
  %v443 = vpop.permute.xlu0 %442
  %444 = vrot.lane.b32.xlu0 %v439, 127
  %v445 = vpop.permute.xlu0 %444
  %v448 = vadd.f32 %v389, %v443
  %v449 = vadd.f32 %v390, %v445
  %451 = vset.pattern.permute.xlu0 0
  %452 = vperm.xlu0 %451, %v448
  %v453 = vpop.permute.xlu0 %452
  %456 = vset.pattern.permute.xlu0 0
  %457 = vperm.xlu0 %456, %v449
  %v458 = vpop.permute.xlu0 %457
  %v460 = vsub.f32 %v333, %v453
  %v461 = vsub.f32 %v338, %v458
  %v462 = vmul.f32 %v460, %v460
  %v463 = vmul.f32 %v461, %v461
  %v464 = vmul.f32 %v462, %v360
  %v465 = vmul.f32 %v463, %v365
  %v466 = vsel %vm36, %v464, 0.0
  %v467 = vsel %vm36, %v465, 0.0
  %v468 = vadd.f32 %v466, %v467
  %469 = vadd.xlane.f32.xlu0 %v468
  %v470 = vpop.xlane.xlu0 %469
  %v471 = vrot.slane %v470, 4
  %v472 = vadd.f32 %v470, %v471
  %v473 = vrot.slane %v472, 2
  %v474 = vadd.f32 %v472, %v473
  %v475 = vrot.slane %v474, 1
  %v476 = vadd.f32 %v474, %v475
  %s477 = vtos %v476
  %v478 = vstv %s381
  %v479 = vrcp.pop %v478
  %s480 = vtos %v479
  %s481 = smul.f32 %s477, %s480
  %s482 = sadd.f32 %s481, 1e-05
  %v483 = vstv %s482
  %v484 = vrsqrt.pop %v483
  %s485 = vtos %v484
  %v486 = vstv %s485
  %v487 = vmul.f32 %v341, %v486
  %v488 = vmul.f32 %v342, %v486
  %v489 = vadd.f32 %v487, 0.0
  %v490 = vadd.f32 %v488, 0.0
  %v491 = vmul.f32 %v462, %v412
  %v492 = vmul.f32 %v463, %v416
  %v493 = vsel %vm36, %v491, 0.0
  %v494 = vsel %vm36, %v492, 0.0
  %v495 = vadd.f32 %v493, %v494
  %496 = vadd.xlane.f32.xlu0 %v495
  %v497 = vpop.xlane.xlu0 %496
  %v498 = vrot.slane %v497, 4
  %v499 = vadd.f32 %v497, %v498
  %v500 = vrot.slane %v499, 2
  %v501 = vadd.f32 %v499, %v500
  %v502 = vrot.slane %v501, 1
  %v503 = vadd.f32 %v501, %v502
  %s504 = vtos %v503
  %v505 = vstv %s432
  %v506 = vrcp.pop %v505
  %s507 = vtos %v506
  %s508 = smul.f32 %s504, %s507
  %s509 = sadd.f32 %s508, 1e-05
  %v510 = vstv %s509
  %v511 = vrsqrt.pop %v510
  %s512 = vtos %v511
  %v513 = vstv %s512
  %v514 = vmul.f32 %v341, %v513
  %v515 = vmul.f32 %v342, %v513
  %518 = vrot.lane.b32.xlu0 %v514, 127
  %v519 = vpop.permute.xlu0 %518
  %520 = vrot.lane.b32.xlu0 %v515, 127
  %v521 = vpop.permute.xlu0 %520
  %v524 = vadd.f32 %v489, %v519
  %v525 = vadd.f32 %v490, %v521
  %527 = vset.pattern.permute.xlu0 0
  %528 = vperm.xlu0 %527, %v524
  %v529 = vpop.permute.xlu0 %528
  %532 = vset.pattern.permute.xlu0 0
  %533 = vperm.xlu0 %532, %v525
  %v534 = vpop.permute.xlu0 %533
  %v536 = vmul.f32 %v460, %v529
  %v537 = vmul.f32 %v461, %v534
  %v538 = vld [vmem:[%s7] sm:$0x1]
  %v540 = vlaneseq
  %v541 = vshrl.u32 %v540, 7
  %v542 = vsub.s32 0, %v541
  %v543 = vrot.slane %v538, %v542
  %v545 = vmul.f32 %v536, %v543
  %v546 = vmul.f32 %v537, %v543
  %v547 = vld [vmem:[%s8] sm:$0x1]
  %v549 = vlaneseq
  %v550 = vshrl.u32 %v549, 7
  %v551 = vsub.s32 0, %v550
  %v552 = vrot.slane %v547, %v551
  %v554 = vadd.f32 %v545, %v552
  %v555 = vadd.f32 %v546, %v552
  %v556 = vmax.f32 %v554, 0.0
  %v557 = vmax.f32 %v555, 0.0
  %558 = vst.msk [vmem:[%s9] sm:$0xff] %vm36, %v556
  %559 = vst.msk [vmem:[%s9 + $0x8] sm:$0xff] %vm36, %v557
  // Predicated region
  $region38: #{gat_model_mll_forward.41} parent=0 // pred_check
    _
  $region39: #{gat_model_mll_forward.41} parent=0 // pred_check_branch
    %561 = sbr.rel (0) target = $region41
  $region40: #{gat_model_mll_forward.41} parent=0 // pred_region
    _
  $region41: #{gat_model_mll_forward.41} parent=0 // pred_fallthru
    _
  // Predicated region
  $region42: #{gat_model_mll_forward.41} parent=0 // pred_check
    _
  $region43: #{gat_model_mll_forward.41} parent=0 // pred_check_branch
    %563 = sbr.rel (0) target = $region45
  $region44: #{gat_model_mll_forward.41} parent=0 // pred_region
    _
  $region45: #{gat_model_mll_forward.41} parent=0 // pred_fallthru
    _

// kernel: gat_model_mll_forward.42
$region0: #{gat_model_mll_forward.42}
  #allocation0 [shape = 'u32[]', space=smem, size = 0x4, offset = 0x4, fixed_abs, tag = 'smem constant byte address 0x4 - core index']
  #allocation1 [shape = 'u32[144,128]{1,0:T(1,128)}', space=vmem, size = 0x12000, scoped, tag = 'internal scratch']
  %s0 = inlined_call_operand.vmem [shape: f32[16,16], index: 0, kind: input, shape index: {}]
  %s1 = inlined_call_operand.vmem [shape: f32[16,16], index: 1, kind: input, shape index: {}]
  %s2 = inlined_call_operand.vmem [shape: f32[1,16], index: 2, kind: input, shape index: {}]
  %s3 = inlined_call_operand.vmem [shape: f32[1,16], index: 3, kind: input, shape index: {}]
  %s4 = inlined_call_operand.vmem [shape: f32[1,16], index: 4, kind: input, shape index: {}]
  %s5 = inlined_call_operand.vmem [shape: bf16[16,16], index: 5, kind: input, shape index: {}]
  %s6 = inlined_call_operand.vmem [shape: f32[16,2], index: 6, kind: input, shape index: {}]
  %s7 = inlined_call_operand.vmem [shape: f32[1,16], index: 7, kind: input, shape index: {}]
  %s8 = inlined_call_operand.vmem [shape: f32[1,16], index: 8, kind: input, shape index: {}]
  %s9 = inlined_call_operand.vmem [shape: f32[16,16], index: 9, kind: output, shape index: {}]
  %s10 = sld [smem:[#allocation0]]
  $region46: #{gat_model_mll_forward.42} parent=0
    _
  %s12 = ssub.s32 1, %s10
  %s13 = scalar_select 0, %s12, %s10
  // Predicated region
  $region2: #{gat_model_mll_forward.42} parent=0 // pred_check
    _
  $region3: #{gat_model_mll_forward.42} parent=0 // pred_check_branch
    %15 = sbr.rel (0) target = $region5
  $region4: #{gat_model_mll_forward.42} parent=0 // pred_region
    _
  $region5: #{gat_model_mll_forward.42} parent=0 // pred_fallthru
    _
  // Predicated region
  $region6: #{gat_model_mll_forward.42} parent=0 // pred_check
    _
  $region7: #{gat_model_mll_forward.42} parent=0 // pred_check_branch
    %17 = sbr.rel (0) target = $region9
  $region8: #{gat_model_mll_forward.42} parent=0 // pred_region
    _
  $region9: #{gat_model_mll_forward.42} parent=0 // pred_fallthru
    _
  // Predicated region
  $region10: #{gat_model_mll_forward.42} parent=0 // pred_check
    _
  $region11: #{gat_model_mll_forward.42} parent=0 // pred_check_branch
    %19 = sbr.rel (0) target = $region13
  $region12: #{gat_model_mll_forward.42} parent=0 // pred_region
    _
  $region13: #{gat_model_mll_forward.42} parent=0 // pred_fallthru
    _
  // Predicated region
  $region14: #{gat_model_mll_forward.42} parent=0 // pred_check
    _
  $region15: #{gat_model_mll_forward.42} parent=0 // pred_check_branch
    %21 = sbr.rel (0) target = $region17
  $region16: #{gat_model_mll_forward.42} parent=0 // pred_region
    _
  $region17: #{gat_model_mll_forward.42} parent=0 // pred_fallthru
    _
  // Predicated region
  $region18: #{gat_model_mll_forward.42} parent=0 // pred_check
    _
  $region19: #{gat_model_mll_forward.42} parent=0 // pred_check_branch
    %23 = sbr.rel (0) target = $region21
  $region20: #{gat_model_mll_forward.42} parent=0 // pred_region
    _
  $region21: #{gat_model_mll_forward.42} parent=0 // pred_fallthru
    _
  // Predicated region
  $region22: #{gat_model_mll_forward.42} parent=0 // pred_check
    _
  $region23: #{gat_model_mll_forward.42} parent=0 // pred_check_branch
    %25 = sbr.rel (0) target = $region25
  $region24: #{gat_model_mll_forward.42} parent=0 // pred_region
    _
  $region25: #{gat_model_mll_forward.42} parent=0 // pred_fallthru
    _
  // Predicated region
  $region26: #{gat_model_mll_forward.42} parent=0 // pred_check
    _
  $region27: #{gat_model_mll_forward.42} parent=0 // pred_check_branch
    %27 = sbr.rel (0) target = $region29
  $region28: #{gat_model_mll_forward.42} parent=0 // pred_region
    _
  $region29: #{gat_model_mll_forward.42} parent=0 // pred_fallthru
    _
  // Predicated region
  $region30: #{gat_model_mll_forward.42} parent=0 // pred_check
    _
  $region31: #{gat_model_mll_forward.42} parent=0 // pred_check_branch
    %29 = sbr.rel (0) target = $region33
  $region32: #{gat_model_mll_forward.42} parent=0 // pred_region
    _
  $region33: #{gat_model_mll_forward.42} parent=0 // pred_fallthru
    _
  // Predicated region
  $region34: #{gat_model_mll_forward.42} parent=0 // pred_check
    _
  $region35: #{gat_model_mll_forward.42} parent=0 // pred_check_branch
    %31 = sbr.rel (0) target = $region37
  $region36: #{gat_model_mll_forward.42} parent=0 // pred_region
    _
  $region37: #{gat_model_mll_forward.42} parent=0 // pred_fallthru
    _
  %v32 = vld [vmem:[%s0] sm:$0xff]
  %v33 = vld [vmem:[%s0 + $0x8] sm:$0xff]
  %v34 = vld [vmem:[%s1] sm:$0xff]
  %v35 = vld [vmem:[%s1 + $0x8] sm:$0xff]
  %vm36 = vcmask 130048
  %v38 = vsel %vm36, %v32, 0
  %v41 = vsel %vm36, %v33, 0
  %43 = vmatprep.subr.mxu0 0.0
  %44 = vmatpush1.msra.mxu0 %v34
  %45 = vmatprep.subr.mxu0 0.0
  %46 = vmatpush1.msra.mxu0 %v35
  %47 = vmatprep.subr.mxu0 0.0
  %48 = vmatpush1.msra.mxu0 0.0
  %49 = vmatprep.subr.mxu0 0.0
  %50 = vmatpush1.msra.mxu0 0.0
  %51 = vmatprep.subr.mxu0 0.0
  %52 = vmatpush1.msra.mxu0 0.0
  %53 = vmatprep.subr.mxu0 0.0
  %54 = vmatpush1.msra.mxu0 0.0
  %55 = vmatprep.subr.mxu0 0.0
  %56 = vmatpush1.msra.mxu0 0.0
  %57 = vmatprep.subr.mxu0 0.0
  %58 = vmatpush1.msra.mxu0 0.0
  %59 = vmatprep.subr.mxu0 0.0
  %60 = vmatpush1.msra.mxu0 0.0
  %61 = vmatprep.subr.mxu0 0.0
  %62 = vmatpush1.msra.mxu0 0.0
  %63 = vmatprep.subr.mxu0 0.0
  %64 = vmatpush1.msra.mxu0 0.0
  %65 = vmatprep.subr.mxu0 0.0
  %66 = vmatpush1.msra.mxu0 0.0
  %67 = vmatprep.subr.mxu0 0.0
  %68 = vmatpush1.msra.mxu0 0.0
  %69 = vmatprep.subr.mxu0 0.0
  %70 = vmatpush1.msra.mxu0 0.0
  %71 = vmatprep.subr.mxu0 0.0
  %72 = vmatpush1.msra.mxu0 0.0
  %73 = vmatprep.subr.mxu0 0.0
  %74 = vmatpush1.msra.mxu0 0.0
  %75 = vmatprep.subr.mxu0 0.0
  %76 = vmatpush1.msra.mxu0 0.0
  %77 = vmatprep.subr.mxu0 0.0
  %78 = vmatpush1.msra.mxu0 0.0
  %79 = vmatprep.subr.mxu0 0.0
  %80 = vmatpush1.msra.mxu0 0.0
  %81 = vmatprep.subr.mxu0 0.0
  %82 = vmatpush1.msra.mxu0 0.0
  %83 = vmatprep.subr.mxu0 0.0
  %84 = vmatpush1.msra.mxu0 0.0
  %85 = vmatprep.subr.mxu0 0.0
  %86 = vmatpush1.msra.mxu0 0.0
  %87 = vmatprep.subr.mxu0 0.0
  %88 = vmatpush1.msra.mxu0 0.0
  %89 = vmatprep.subr.mxu0 0.0
  %90 = vmatpush1.msra.mxu0 0.0
  %91 = vmatprep.subr.mxu0 0.0
  %92 = vmatpush1.msra.mxu0 0.0
  %93 = vmatprep.subr.mxu0 0.0
  %94 = vmatpush1.msra.mxu0 0.0
  %95 = vmatprep.subr.mxu0 0.0
  %96 = vmatpush1.msra.mxu0 0.0
  %97 = vmatprep.subr.mxu0 0.0
  %98 = vmatpush1.msra.mxu0 0.0
  %99 = vmatprep.subr.mxu0 0.0
  %100 = vmatpush1.msra.mxu0 0.0
  %101 = vmatprep.subr.mxu0 0.0
  %102 = vmatpush1.msra.mxu0 0.0
  %103 = vmatprep.subr.mxu0 0.0
  %104 = vmatpush1.msra.mxu0 0.0
  %105 = vmatprep.subr.mxu0 0.0
  %106 = vmatpush1.msra.mxu0 0.0
  %107 = vmatprep.mubr.f32.mxu0 0.0
  %108 = vmatmul.mubr.f32.gmra.mrb[0].mxu0 %v38
  %v109 = vpop.f32.mrb[0].mxu0
  %v110 = vadd.f32 0.0, %v109
  %v111 = vpop.f32.mrb[0].mxu0
  %112 = vmatprep.mubr.f32.mxu0 0.0
  %113 = vmatmul.mubr.f32.gmra.mrb[0].mxu0 %v41
  %v114 = vpop.f32.mrb[0].mxu0
  %v115 = vadd.f32 0.0, %v114
  %v116 = vpop.f32.mrb[0].mxu0
  %117 = vdwg.mxu0
  %v118 = vld [vmem:[%s3] sm:$0x1]
  %v120 = vlaneseq
  %v121 = vshrl.u32 %v120, 7
  %v122 = vsub.s32 0, %v121
  %v123 = vrot.slane %v118, %v122
  %v125 = vmul.f32 %v110, %v123
  %v126 = vmul.f32 %v115, %v123
  %v127 = vsel %vm36, %v125, 0.0
  %128 = vadd.xlane.f32.xlu0 %v127
  %v129 = vpop.xlane.xlu0 %128
  %v130 = vsel %vm36, %v126, 0.0
  %131 = vadd.xlane.f32.xlu0 %v130
  %v132 = vpop.xlane.xlu0 %131
  %v133 = vld [vmem:[%s2] sm:$0x1]
  %v135 = vsel %vm36, %v133, 0
  %v138 = vsel %vm36, %v110, 0
  %v141 = vsel %vm36, %v115, 0
  %143 = vmatprep.subr.mxu0 0.0
  %144 = vmatpush1.xpose.msra.mxu0 %v138
  %145 = vmatprep.subr.mxu0 0.0
  %146 = vmatpush1.xpose.msra.mxu0 %v141
  %147 = vmatprep.subr.mxu0 0.0
  %148 = vmatpush1.xpose.msra.mxu0 0.0
  %149 = vmatprep.subr.mxu0 0.0
  %150 = vmatpush1.xpose.msra.mxu0 0.0
  %151 = vmatprep.subr.mxu0 0.0
  %152 = vmatpush1.xpose.msra.mxu0 0.0
  %153 = vmatprep.subr.mxu0 0.0
  %154 = vmatpush1.xpose.msra.mxu0 0.0
  %155 = vmatprep.subr.mxu0 0.0
  %156 = vmatpush1.xpose.msra.mxu0 0.0
  %157 = vmatprep.subr.mxu0 0.0
  %158 = vmatpush1.xpose.msra.mxu0 0.0
  %159 = vmatprep.subr.mxu0 0.0
  %160 = vmatpush1.xpose.msra.mxu0 0.0
  %161 = vmatprep.subr.mxu0 0.0
  %162 = vmatpush1.xpose.msra.mxu0 0.0
  %163 = vmatprep.subr.mxu0 0.0
  %164 = vmatpush1.xpose.msra.mxu0 0.0
  %165 = vmatprep.subr.mxu0 0.0
  %166 = vmatpush1.xpose.msra.mxu0 0.0
  %167 = vmatprep.subr.mxu0 0.0
  %168 = vmatpush1.xpose.msra.mxu0 0.0
  %169 = vmatprep.subr.mxu0 0.0
  %170 = vmatpush1.xpose.msra.mxu0 0.0
  %171 = vmatprep.subr.mxu0 0.0
  %172 = vmatpush1.xpose.msra.mxu0 0.0
  %173 = vmatprep.subr.mxu0 0.0
  %174 = vmatpush1.xpose.msra.mxu0 0.0
  %175 = vmatprep.subr.mxu0 0.0
  %176 = vmatpush1.xpose.msra.mxu0 0.0
  %177 = vmatprep.subr.mxu0 0.0
  %178 = vmatpush1.xpose.msra.mxu0 0.0
  %179 = vmatprep.subr.mxu0 0.0
  %180 = vmatpush1.xpose.msra.mxu0 0.0
  %181 = vmatprep.subr.mxu0 0.0
  %182 = vmatpush1.xpose.msra.mxu0 0.0
  %183 = vmatprep.subr.mxu0 0.0
  %184 = vmatpush1.xpose.msra.mxu0 0.0
  %185 = vmatprep.subr.mxu0 0.0
  %186 = vmatpush1.xpose.msra.mxu0 0.0
  %187 = vmatprep.subr.mxu0 0.0
  %188 = vmatpush1.xpose.msra.mxu0 0.0
  %189 = vmatprep.subr.mxu0 0.0
  %190 = vmatpush1.xpose.msra.mxu0 0.0
  %191 = vmatprep.subr.mxu0 0.0
  %192 = vmatpush1.xpose.msra.mxu0 0.0
  %193 = vmatprep.subr.mxu0 0.0
  %194 = vmatpush1.xpose.msra.mxu0 0.0
  %195 = vmatprep.subr.mxu0 0.0
  %196 = vmatpush1.xpose.msra.mxu0 0.0
  %197 = vmatprep.subr.mxu0 0.0
  %198 = vmatpush1.xpose.msra.mxu0 0.0
  %199 = vmatprep.subr.mxu0 0.0
  %200 = vmatpush1.xpose.msra.mxu0 0.0
  %201 = vmatprep.subr.mxu0 0.0
  %202 = vmatpush1.xpose.msra.mxu0 0.0
  %203 = vmatprep.subr.mxu0 0.0
  %204 = vmatpush1.xpose.msra.mxu0 0.0
  %205 = vmatprep.subr.mxu0 0.0
  %206 = vmatpush1.xpose.msra.mxu0 0.0
  %207 = vmatprep.mubr.f32.mxu0 0.0
  %208 = vmatmul.mubr.f32.gmra.mrb[0].mxu0 %v135
  %v209 = vpop.f32.mrb[0].mxu0
  %v210 = vadd.f32 0.0, %v209
  %v211 = vpop.f32.mrb[0].mxu0
  %212 = vdwg.mxu0
  %v213 = vlaneseq
  %v214 = vshrl.u32 %v213, 7
  %v215 = vsub.s32 0, %v214
  %v216 = vrot.slane %v210, %v215
  %v217 = vadd.f32 %v129, %v216
  %v218 = vadd.f32 %v132, %v216
  %vm219 = vcmp.gt.f32.partialorder %v217, 0.0
  %vm220 = vcmp.gt.f32.partialorder %v218, 0.0
  %v221 = vmul.f32 %v217, 0.2
  %v222 = vmul.f32 %v218, 0.2
  %v223 = vsel %vm219, %v217, %v221
  %v224 = vsel %vm220, %v218, %v222
  %v225 = vld [vmem:[%s5] sm:$0xf]
  %v226 = vld [vmem:[%s5 + $0x4] sm:$0xf]
  %v227 = vunpack.c.l.bf16 %v225
  %v228 = vunpack.c.l.bf16 %v226
  %v229 = vadd.f32 %v223, %v227
  %v230 = vadd.f32 %v224, %v228
  %v231 = vsel %vm36, %v229, -inf
  %232 = vmax.xlane.f32.xlu0 %v231
  %v233 = vpop.xlane.xlu0 %232
  %v234 = vsel %vm36, %v230, -inf
  %235 = vmax.xlane.f32.xlu0 %v234
  %v236 = vpop.xlane.xlu0 %235
  %v237 = vsub.f32 %v229, %v233
  %v238 = vsub.f32 %v230, %v236
  %v239 = vmul.f32 %v237, 1.442695
  %v240 = vpow.pop %v239
  %v241 = vmul.f32 %v238, 1.442695
  %v242 = vpow.pop %v241
  %v243 = vsel %vm36, %v240, 0.0
  %244 = vadd.xlane.f32.xlu0 %v243
  %v245 = vpop.xlane.xlu0 %244
  %v246 = vsel %vm36, %v242, 0.0
  %247 = vadd.xlane.f32.xlu0 %v246
  %v248 = vpop.xlane.xlu0 %247
  %v249 = vrcp.pop %v245
  %v250 = vrcp.pop %v248
  %v251 = vmul.f32 %v240, %v249
  %v252 = vmul.f32 %v242, %v250
  %v253 = vld [vmem:[%s4] sm:$0x1]
  %v255 = vlaneseq
  %v256 = vshrl.u32 %v255, 7
  %v257 = vsub.s32 0, %v256
  %v258 = vrot.slane %v253, %v257
  %v261 = vsel %vm36, %v251, 0
  %v264 = vsel %vm36, %v252, 0
  %266 = vmatprep.subr.mxu0 0.0
  %267 = vmatpush1.msra.mxu0 %v110
  %268 = vmatprep.subr.mxu0 0.0
  %269 = vmatpush1.msra.mxu0 %v115
  %270 = vmatprep.subr.mxu0 0.0
  %271 = vmatpush1.msra.mxu0 0.0
  %272 = vmatprep.subr.mxu0 0.0
  %273 = vmatpush1.msra.mxu0 0.0
  %274 = vmatprep.subr.mxu0 0.0
  %275 = vmatpush1.msra.mxu0 0.0
  %276 = vmatprep.subr.mxu0 0.0
  %277 = vmatpush1.msra.mxu0 0.0
  %278 = vmatprep.subr.mxu0 0.0
  %279 = vmatpush1.msra.mxu0 0.0
  %280 = vmatprep.subr.mxu0 0.0
  %281 = vmatpush1.msra.mxu0 0.0
  %282 = vmatprep.subr.mxu0 0.0
  %283 = vmatpush1.msra.mxu0 0.0
  %284 = vmatprep.subr.mxu0 0.0
  %285 = vmatpush1.msra.mxu0 0.0
  %286 = vmatprep.subr.mxu0 0.0
  %287 = vmatpush1.msra.mxu0 0.0
  %288 = vmatprep.subr.mxu0 0.0
  %289 = vmatpush1.msra.mxu0 0.0
  %290 = vmatprep.subr.mxu0 0.0
  %291 = vmatpush1.msra.mxu0 0.0
  %292 = vmatprep.subr.mxu0 0.0
  %293 = vmatpush1.msra.mxu0 0.0
  %294 = vmatprep.subr.mxu0 0.0
  %295 = vmatpush1.msra.mxu0 0.0
  %296 = vmatprep.subr.mxu0 0.0
  %297 = vmatpush1.msra.mxu0 0.0
  %298 = vmatprep.subr.mxu0 0.0
  %299 = vmatpush1.msra.mxu0 0.0
  %300 = vmatprep.subr.mxu0 0.0
  %301 = vmatpush1.msra.mxu0 0.0
  %302 = vmatprep.subr.mxu0 0.0
  %303 = vmatpush1.msra.mxu0 0.0
  %304 = vmatprep.subr.mxu0 0.0
  %305 = vmatpush1.msra.mxu0 0.0
  %306 = vmatprep.subr.mxu0 0.0
  %307 = vmatpush1.msra.mxu0 0.0
  %308 = vmatprep.subr.mxu0 0.0
  %309 = vmatpush1.msra.mxu0 0.0
  %310 = vmatprep.subr.mxu0 0.0
  %311 = vmatpush1.msra.mxu0 0.0
  %312 = vmatprep.subr.mxu0 0.0
  %313 = vmatpush1.msra.mxu0 0.0
  %314 = vmatprep.subr.mxu0 0.0
  %315 = vmatpush1.msra.mxu0 0.0
  %316 = vmatprep.subr.mxu0 0.0
  %317 = vmatpush1.msra.mxu0 0.0
  %318 = vmatprep.subr.mxu0 0.0
  %319 = vmatpush1.msra.mxu0 0.0
  %320 = vmatprep.subr.mxu0 0.0
  %321 = vmatpush1.msra.mxu0 0.0
  %322 = vmatprep.subr.mxu0 0.0
  %323 = vmatpush1.msra.mxu0 0.0
  %324 = vmatprep.subr.mxu0 0.0
  %325 = vmatpush1.msra.mxu0 0.0
  %326 = vmatprep.subr.mxu0 0.0
  %327 = vmatpush1.msra.mxu0 0.0
  %328 = vmatprep.subr.mxu0 0.0
  %329 = vmatpush1.msra.mxu0 0.0
  %330 = vmatprep.mubr.f32.mxu0 0.0
  %331 = vmatmul.mubr.f32.gmra.mrb[0].mxu0 %v261
  %v332 = vpop.f32.mrb[0].mxu0
  %v333 = vadd.f32 %v258, %v332
  %v334 = vpop.f32.mrb[0].mxu0
  %335 = vmatprep.mubr.f32.mxu0 0.0
  %336 = vmatmul.mubr.f32.gmra.mrb[0].mxu0 %v264
  %v337 = vpop.f32.mrb[0].mxu0
  %v338 = vadd.f32 %v258, %v337
  %v339 = vpop.f32.mrb[0].mxu0
  %340 = vdwg.mxu0
  %v341 = vld [vmem:[%s6] sm:$0xff]
  %v342 = vld [vmem:[%s6 + $0x8] sm:$0xff]
  %vm343 = vcmask 7168
  %v344 = vsel %vm343, %v341, 0.0
  %v345 = vsel %vm343, %v342, 0.0
  %v346 = vadd.f32 %v344, %v345
  %347 = vadd.xlane.f32.xlu0 %v346
  %v348 = vpop.xlane.xlu0 %347
  %v349 = vrot.slane %v348, 4
  %v350 = vadd.f32 %v348, %v349
  %v351 = vrot.slane %v350, 2
  %v352 = vadd.f32 %v350, %v351
  %v353 = vrot.slane %v352, 1
  %v354 = vadd.f32 %v352, %v353
  %s355 = vtos %v354
  %s356 = smax.f32 %s355, 1.0
  %358 = vset.pattern.permute.xlu0 0
  %359 = vperm.xlu0 %358, %v341
  %v360 = vpop.permute.xlu0 %359
  %363 = vset.pattern.permute.xlu0 0
  %364 = vperm.xlu0 %363, %v342
  %v365 = vpop.permute.xlu0 %364
  %v367 = vmul.f32 %v333, %v360
  %v368 = vmul.f32 %v338, %v365
  %v369 = vsel %vm36, %v367, 0.0
  %v370 = vsel %vm36, %v368, 0.0
  %v371 = vadd.f32 %v369, %v370
  %372 = vadd.xlane.f32.xlu0 %v371
  %v373 = vpop.xlane.xlu0 %372
  %v374 = vrot.slane %v373, 4
  %v375 = vadd.f32 %v373, %v374
  %v376 = vrot.slane %v375, 2
  %v377 = vadd.f32 %v375, %v376
  %v378 = vrot.slane %v377, 1
  %v379 = vadd.f32 %v377, %v378
  %s380 = vtos %v379
  %s381 = smul.f32 %s356, 16.0
  %v382 = vstv %s381
  %v383 = vrcp.pop %v382
  %s384 = vtos %v383
  %s385 = smul.f32 %s380, %s384
  %v386 = vstv %s385
  %v387 = vmul.f32 %v341, %v386
  %v388 = vmul.f32 %v342, %v386
  %v389 = vadd.f32 %v387, 0.0
  %v390 = vadd.f32 %v388, 0.0
  %391 = vrot.lane.b32.xlu0 %v341, 127
  %v392 = vpop.permute.xlu0 %391
  %393 = vrot.lane.b32.xlu0 %v342, 127
  %v394 = vpop.permute.xlu0 %393
  %v397 = vsel %vm343, %v392, 0.0
  %v398 = vsel %vm343, %v394, 0.0
  %v399 = vadd.f32 %v397, %v398
  %400 = vadd.xlane.f32.xlu0 %v399
  %v401 = vpop.xlane.xlu0 %400
  %v402 = vrot.slane %v401, 4
  %v403 = vadd.f32 %v401, %v402
  %v404 = vrot.slane %v403, 2
  %v405 = vadd.f32 %v403, %v404
  %v406 = vrot.slane %v405, 1
  %v407 = vadd.f32 %v405, %v406
  %s408 = vtos %v407
  %s409 = smax.f32 %s408, 1.0
  %410 = vset.pattern.permute.xlu0 1
  %411 = vperm.xlu0 %410, %v341
  %v412 = vpop.permute.xlu0 %411
  %414 = vset.pattern.permute.xlu0 1
  %415 = vperm.xlu0 %414, %v342
  %v416 = vpop.permute.xlu0 %415
  %v418 = vmul.f32 %v333, %v412
  %v419 = vmul.f32 %v338, %v416
  %v420 = vsel %vm36, %v418, 0.0
  %v421 = vsel %vm36, %v419, 0.0
  %v422 = vadd.f32 %v420, %v421
  %423 = vadd.xlane.f32.xlu0 %v422
  %v424 = vpop.xlane.xlu0 %423
  %v425 = vrot.slane %v424, 4
  %v426 = vadd.f32 %v424, %v425
  %v427 = vrot.slane %v426, 2
  %v428 = vadd.f32 %v426, %v427
  %v429 = vrot.slane %v428, 1
  %v430 = vadd.f32 %v428, %v429
  %s431 = vtos %v430
  %s432 = smul.f32 %s409, 16.0
  %v433 = vstv %s432
  %v434 = vrcp.pop %v433
  %s435 = vtos %v434
  %s436 = smul.f32 %s431, %s435
  %v437 = vstv %s436
  %v438 = vmul.f32 %v341, %v437
  %v439 = vmul.f32 %v342, %v437
  %442 = vrot.lane.b32.xlu0 %v438, 127
  %v443 = vpop.permute.xlu0 %442
  %444 = vrot.lane.b32.xlu0 %v439, 127
  %v445 = vpop.permute.xlu0 %444
  %v448 = vadd.f32 %v389, %v443
  %v449 = vadd.f32 %v390, %v445
  %451 = vset.pattern.permute.xlu0 0
  %452 = vperm.xlu0 %451, %v448
  %v453 = vpop.permute.xlu0 %452
  %456 = vset.pattern.permute.xlu0 0
  %457 = vperm.xlu0 %456, %v449
  %v458 = vpop.permute.xlu0 %457
  %v460 = vsub.f32 %v333, %v453
  %v461 = vsub.f32 %v338, %v458
  %v462 = vmul.f32 %v460, %v460
  %v463 = vmul.f32 %v461, %v461
  %v464 = vmul.f32 %v462, %v360
  %v465 = vmul.f32 %v463, %v365
  %v466 = vsel %vm36, %v464, 0.0
  %v467 = vsel %vm36, %v465, 0.0
  %v468 = vadd.f32 %v466, %v467
  %469 = vadd.xlane.f32.xlu0 %v468
  %v470 = vpop.xlane.xlu0 %469
  %v471 = vrot.slane %v470, 4
  %v472 = vadd.f32 %v470, %v471
  %v473 = vrot.slane %v472, 2
  %v474 = vadd.f32 %v472, %v473
  %v475 = vrot.slane %v474, 1
  %v476 = vadd.f32 %v474, %v475
  %s477 = vtos %v476
  %v478 = vstv %s381
  %v479 = vrcp.pop %v478
  %s480 = vtos %v479
  %s481 = smul.f32 %s477, %s480
  %s482 = sadd.f32 %s481, 1e-05
  %v483 = vstv %s482
  %v484 = vrsqrt.pop %v483
  %s485 = vtos %v484
  %v486 = vstv %s485
  %v487 = vmul.f32 %v341, %v486
  %v488 = vmul.f32 %v342, %v486
  %v489 = vadd.f32 %v487, 0.0
  %v490 = vadd.f32 %v488, 0.0
  %v491 = vmul.f32 %v462, %v412
  %v492 = vmul.f32 %v463, %v416
  %v493 = vsel %vm36, %v491, 0.0
  %v494 = vsel %vm36, %v492, 0.0
  %v495 = vadd.f32 %v493, %v494
  %496 = vadd.xlane.f32.xlu0 %v495
  %v497 = vpop.xlane.xlu0 %496
  %v498 = vrot.slane %v497, 4
  %v499 = vadd.f32 %v497, %v498
  %v500 = vrot.slane %v499, 2
  %v501 = vadd.f32 %v499, %v500
  %v502 = vrot.slane %v501, 1
  %v503 = vadd.f32 %v501, %v502
  %s504 = vtos %v503
  %v505 = vstv %s432
  %v506 = vrcp.pop %v505
  %s507 = vtos %v506
  %s508 = smul.f32 %s504, %s507
  %s509 = sadd.f32 %s508, 1e-05
  %v510 = vstv %s509
  %v511 = vrsqrt.pop %v510
  %s512 = vtos %v511
  %v513 = vstv %s512
  %v514 = vmul.f32 %v341, %v513
  %v515 = vmul.f32 %v342, %v513
  %518 = vrot.lane.b32.xlu0 %v514, 127
  %v519 = vpop.permute.xlu0 %518
  %520 = vrot.lane.b32.xlu0 %v515, 127
  %v521 = vpop.permute.xlu0 %520
  %v524 = vadd.f32 %v489, %v519
  %v525 = vadd.f32 %v490, %v521
  %527 = vset.pattern.permute.xlu0 0
  %528 = vperm.xlu0 %527, %v524
  %v529 = vpop.permute.xlu0 %528
  %532 = vset.pattern.permute.xlu0 0
  %533 = vperm.xlu0 %532, %v525
  %v534 = vpop.permute.xlu0 %533
  %v536 = vmul.f32 %v460, %v529
  %v537 = vmul.f32 %v461, %v534
  %v538 = vld [vmem:[%s7] sm:$0x1]
  %v540 = vlaneseq
  %v541 = vshrl.u32 %v540, 7
  %v542 = vsub.s32 0, %v541
  %v543 = vrot.slane %v538, %v542
  %v545 = vmul.f32 %v536, %v543
  %v546 = vmul.f32 %v537, %v543
  %v547 = vld [vmem:[%s8] sm:$0x1]
  %v549 = vlaneseq
  %v550 = vshrl.u32 %v549, 7
  %v551 = vsub.s32 0, %v550
  %v552 = vrot.slane %v547, %v551
  %v554 = vadd.f32 %v545, %v552
  %v555 = vadd.f32 %v546, %v552
  %556 = vst.msk [vmem:[%s9] sm:$0xff] %vm36, %v554
  %557 = vst.msk [vmem:[%s9 + $0x8] sm:$0xff] %vm36, %v555
  // Predicated region
  $region38: #{gat_model_mll_forward.42} parent=0 // pred_check
    _
  $region39: #{gat_model_mll_forward.42} parent=0 // pred_check_branch
    %559 = sbr.rel (0) target = $region41
  $region40: #{gat_model_mll_forward.42} parent=0 // pred_region
    _
  $region41: #{gat_model_mll_forward.42} parent=0 // pred_fallthru
    _
  // Predicated region
  $region42: #{gat_model_mll_forward.42} parent=0 // pred_check
    _
  $region43: #{gat_model_mll_forward.42} parent=0 // pred_check_branch
    %561 = sbr.rel (0) target = $region45
  $region44: #{gat_model_mll_forward.42} parent=0 // pred_region
    _
  $region45: #{gat_model_mll_forward.42} parent=0 // pred_fallthru
    _

// kernel: mul.1
$region0: #{mul.1}
  #allocation0 [shape = 's32[1]{0}', space=sflag, size = 0x4, scoped, tag = 'scoped memory for mul.1']
  %s0 = inlined_call_operand.vmem [shape: f32[2,64], index: 0, kind: input, shape index: {}]
  %s1 = inlined_call_operand.vmem [shape: f32[2,64], index: 1, kind: input, shape index: {}]
  %s2 = inlined_call_operand.vmem [shape: f32[2,64], index: 2, kind: output, shape index: {}]
  %v3 = vld [vmem:[%s0] sm:$0x3]
  %v4 = vld [vmem:[%s1] sm:$0x3]
  %5 = xla_tuple %v3, %v4
  %6 = xla_tuple %5
  %v7 = vmul.f32 %v3, %v4
  %8 = xla_tuple %v7
  %9 = vst [vmem:[%s2] sm:$0x3] %v7

// kernel: gat_model_mll_forward.43
$region0: #{gat_model_mll_forward.43}
  #allocation0 [shape = 'u32[]', space=smem, size = 0x4, offset = 0x4, fixed_abs, tag = 'smem constant byte address 0x4 - core index']
  #allocation1 [shape = 'u32[144,128]{1,0:T(1,128)}', space=vmem, size = 0x12000, scoped, tag = 'internal scratch']
  %s0 = inlined_call_operand.vmem [shape: f32[2,64], index: 0, kind: input, shape index: {}]
  %s1 = inlined_call_operand.vmem [shape: f32[64,16], index: 1, kind: input, shape index: {}]
  %s2 = inlined_call_operand.vmem [shape: f32[1,16], index: 2, kind: input, shape index: {}]
  %s3 = inlined_call_operand.vmem [shape: f32[16,16], index: 3, kind: input, shape index: {}]
  %s4 = inlined_call_operand.vmem [shape: f32[1,16], index: 4, kind: input, shape index: {}]
  %s5 = inlined_call_operand.vmem [shape: f32[16,4], index: 5, kind: input, shape index: {}]
  %s6 = inlined_call_operand.vmem [shape: f32[1,4], index: 6, kind: input, shape index: {}]
  %s7 = inlined_call_operand.hbm [shape: f32[2,16], index: 7, kind: output, shape index: {0}]
  %s8 = inlined_call_operand.hbm [shape: f32[2,4], index: 8, kind: output, shape index: {1}]
  %9 = xla_tuple %s7, %s8
  %s10 = sld [smem:[#allocation0]]
  $region46: #{gat_model_mll_forward.43} parent=0
    _
  %s12 = ssub.s32 1, %s10
  %s13 = scalar_select 0, %s12, %s10
  $region1: #{gat_model_mll_forward.43} parent=0
    #allocation2 [shape = 'u8[1024]{0}', space=vmem, size = 0x400, scoped, tag = 'output window, operand 0, single buffered']
    #allocation3 [shape = 's32[1]{0}', space=sflag, size = 0x4, scoped, tag = 'scoped memory for gat_model_mll_forward.43']
    #allocation4 [shape = 'u8[1024]{0}', space=vmem, size = 0x400, scoped, tag = 'output window, operand 1, single buffered']
    #allocation5 [shape = 's32[1]{0}', space=sflag, size = 0x4, scoped, tag = 'scoped memory for gat_model_mll_forward.43']
    %14 = vsyncpa [#allocation3], 0
    %15 = vsyncpa [#allocation5], 0
    // Predicated region
    $region2: #{gat_model_mll_forward.43} parent=1 // pred_check
      _
    $region3: #{gat_model_mll_forward.43} parent=1 // pred_check_branch
      %17 = sbr.rel (0) target = $region5
    $region4: #{gat_model_mll_forward.43} parent=1 // pred_region
      _
    $region5: #{gat_model_mll_forward.43} parent=1 // pred_fallthru
      _
    // Predicated region
    $region6: #{gat_model_mll_forward.43} parent=1 // pred_check
      _
    $region7: #{gat_model_mll_forward.43} parent=1 // pred_check_branch
      %19 = sbr.rel (0) target = $region9
    $region8: #{gat_model_mll_forward.43} parent=1 // pred_region
      _
    $region9: #{gat_model_mll_forward.43} parent=1 // pred_fallthru
      _
    // Predicated region
    $region10: #{gat_model_mll_forward.43} parent=1 // pred_check
      _
    $region11: #{gat_model_mll_forward.43} parent=1 // pred_check_branch
      %21 = sbr.rel (0) target = $region13
    $region12: #{gat_model_mll_forward.43} parent=1 // pred_region
      _
    $region13: #{gat_model_mll_forward.43} parent=1 // pred_fallthru
      _
    // Predicated region
    $region14: #{gat_model_mll_forward.43} parent=1 // pred_check
      _
    $region15: #{gat_model_mll_forward.43} parent=1 // pred_check_branch
      %23 = sbr.rel (0) target = $region17
    $region16: #{gat_model_mll_forward.43} parent=1 // pred_region
      _
    $region17: #{gat_model_mll_forward.43} parent=1 // pred_fallthru
      _
    // Predicated region
    $region18: #{gat_model_mll_forward.43} parent=1 // pred_check
      _
    $region19: #{gat_model_mll_forward.43} parent=1 // pred_check_branch
      %25 = sbr.rel (0) target = $region21
    $region20: #{gat_model_mll_forward.43} parent=1 // pred_region
      _
    $region21: #{gat_model_mll_forward.43} parent=1 // pred_fallthru
      _
    // Predicated region
    $region22: #{gat_model_mll_forward.43} parent=1 // pred_check
      _
    $region23: #{gat_model_mll_forward.43} parent=1 // pred_check_branch
      %27 = sbr.rel (0) target = $region25
    $region24: #{gat_model_mll_forward.43} parent=1 // pred_region
      _
    $region25: #{gat_model_mll_forward.43} parent=1 // pred_fallthru
      _
    // Predicated region
    $region26: #{gat_model_mll_forward.43} parent=1 // pred_check
      _
    $region27: #{gat_model_mll_forward.43} parent=1 // pred_check_branch
      %29 = sbr.rel (0) target = $region29
    $region28: #{gat_model_mll_forward.43} parent=1 // pred_region
      _
    $region29: #{gat_model_mll_forward.43} parent=1 // pred_fallthru
      _
    %v30 = vld [vmem:[%s0] sm:$0x3]
    %v31 = vld [vmem:[%s1] sm:$0xff]
    %v32 = vld [vmem:[%s1 + $0x8] sm:$0xff]
    %v33 = vld [vmem:[%s1 + $0x10] sm:$0xff]
    %v34 = vld [vmem:[%s1 + $0x18] sm:$0xff]
    %v35 = vld [vmem:[%s1 + $0x20] sm:$0xff]
    %v36 = vld [vmem:[%s1 + $0x28] sm:$0xff]
    %v37 = vld [vmem:[%s1 + $0x30] sm:$0xff]
    %v38 = vld [vmem:[%s1 + $0x38] sm:$0xff]
    %v39 = vld [vmem:[%s2] sm:$0x1]
    %v41 = vlaneseq
    %v42 = vshrl.u32 %v41, 7
    %v43 = vsub.s32 0, %v42
    %v44 = vrot.slane %v39, %v43
    %vm46 = vcmask 523264
    %v48 = vsel %vm46, %v30, 0
    %50 = vmatprep.subr.mxu0 0.0
    %51 = vmatpush1.msra.mxu0 %v31
    %52 = vmatprep.subr.mxu0 0.0
    %53 = vmatpush1.msra.mxu0 %v32
    %54 = vmatprep.subr.mxu0 0.0
    %55 = vmatpush1.msra.mxu0 %v33
    %56 = vmatprep.subr.mxu0 0.0
    %57 = vmatpush1.msra.mxu0 %v34
    %58 = vmatprep.subr.mxu0 0.0
    %59 = vmatpush1.msra.mxu0 %v35
    %60 = vmatprep.subr.mxu0 0.0
    %61 = vmatpush1.msra.mxu0 %v36
    %62 = vmatprep.subr.mxu0 0.0
    %63 = vmatpush1.msra.mxu0 %v37
    %64 = vmatprep.subr.mxu0 0.0
    %65 = vmatpush1.msra.mxu0 %v38
    %66 = vmatprep.subr.mxu0 0.0
    %67 = vmatpush1.msra.mxu0 0.0
    %68 = vmatprep.subr.mxu0 0.0
    %69 = vmatpush1.msra.mxu0 0.0
    %70 = vmatprep.subr.mxu0 0.0
    %71 = vmatpush1.msra.mxu0 0.0
    %72 = vmatprep.subr.mxu0 0.0
    %73 = vmatpush1.msra.mxu0 0.0
    %74 = vmatprep.subr.mxu0 0.0
    %75 = vmatpush1.msra.mxu0 0.0
    %76 = vmatprep.subr.mxu0 0.0
    %77 = vmatpush1.msra.mxu0 0.0
    %78 = vmatprep.subr.mxu0 0.0
    %79 = vmatpush1.msra.mxu0 0.0
    %80 = vmatprep.subr.mxu0 0.0
    %81 = vmatpush1.msra.mxu0 0.0
    %82 = vmatprep.subr.mxu0 0.0
    %83 = vmatpush1.msra.mxu0 0.0
    %84 = vmatprep.subr.mxu0 0.0
    %85 = vmatpush1.msra.mxu0 0.0
    %86 = vmatprep.subr.mxu0 0.0
    %87 = vmatpush1.msra.mxu0 0.0
    %88 = vmatprep.subr.mxu0 0.0
    %89 = vmatpush1.msra.mxu0 0.0
    %90 = vmatprep.subr.mxu0 0.0
    %91 = vmatpush1.msra.mxu0 0.0
    %92 = vmatprep.subr.mxu0 0.0
    %93 = vmatpush1.msra.mxu0 0.0
    %94 = vmatprep.subr.mxu0 0.0
    %95 = vmatpush1.msra.mxu0 0.0
    %96 = vmatprep.subr.mxu0 0.0
    %97 = vmatpush1.msra.mxu0 0.0
    %98 = vmatprep.subr.mxu0 0.0
    %99 = vmatpush1.msra.mxu0 0.0
    %100 = vmatprep.subr.mxu0 0.0
    %101 = vmatpush1.msra.mxu0 0.0
    %102 = vmatprep.subr.mxu0 0.0
    %103 = vmatpush1.msra.mxu0 0.0
    %104 = vmatprep.subr.mxu0 0.0
    %105 = vmatpush1.msra.mxu0 0.0
    %106 = vmatprep.subr.mxu0 0.0
    %107 = vmatpush1.msra.mxu0 0.0
    %108 = vmatprep.subr.mxu0 0.0
    %109 = vmatpush1.msra.mxu0 0.0
    %110 = vmatprep.subr.mxu0 0.0
    %111 = vmatpush1.msra.mxu0 0.0
    %112 = vmatprep.subr.mxu0 0.0
    %113 = vmatpush1.msra.mxu0 0.0
    %114 = vmatprep.mubr.f32.mxu0 0.0
    %115 = vmatmul.mubr.f32.gmra.mrb[0].mxu0 %v48
    %v116 = vpop.f32.mrb[0].mxu0
    %v117 = vadd.f32 %v44, %v116
    %v118 = vpop.f32.mrb[0].mxu0
    %119 = vdwg.mxu0
    %v120 = vmax.f32 %v117, 0.0
    %v121 = vld [vmem:[%s3] sm:$0xff]
    %v122 = vld [vmem:[%s3 + $0x8] sm:$0xff]
    %v123 = vld [vmem:[%s4] sm:$0x1]
    %v125 = vlaneseq
    %v126 = vshrl.u32 %v125, 7
    %v127 = vsub.s32 0, %v126
    %v128 = vrot.slane %v123, %v127
    %vm130 = vcmask 130048
    %v132 = vsel %vm130, %v120, 0
    %134 = vmatprep.subr.mxu0 0.0
    %135 = vmatpush1.msra.mxu0 %v121
    %136 = vmatprep.subr.mxu0 0.0
    %137 = vmatpush1.msra.mxu0 %v122
    %138 = vmatprep.subr.mxu0 0.0
    %139 = vmatpush1.msra.mxu0 0.0
    %140 = vmatprep.subr.mxu0 0.0
    %141 = vmatpush1.msra.mxu0 0.0
    %142 = vmatprep.subr.mxu0 0.0
    %143 = vmatpush1.msra.mxu0 0.0
    %144 = vmatprep.subr.mxu0 0.0
    %145 = vmatpush1.msra.mxu0 0.0
    %146 = vmatprep.subr.mxu0 0.0
    %147 = vmatpush1.msra.mxu0 0.0
    %148 = vmatprep.subr.mxu0 0.0
    %149 = vmatpush1.msra.mxu0 0.0
    %150 = vmatprep.subr.mxu0 0.0
    %151 = vmatpush1.msra.mxu0 0.0
    %152 = vmatprep.subr.mxu0 0.0
    %153 = vmatpush1.msra.mxu0 0.0
    %154 = vmatprep.subr.mxu0 0.0
    %155 = vmatpush1.msra.mxu0 0.0
    %156 = vmatprep.subr.mxu0 0.0
    %157 = vmatpush1.msra.mxu0 0.0
    %158 = vmatprep.subr.mxu0 0.0
    %159 = vmatpush1.msra.mxu0 0.0
    %160 = vmatprep.subr.mxu0 0.0
    %161 = vmatpush1.msra.mxu0 0.0
    %162 = vmatprep.subr.mxu0 0.0
    %163 = vmatpush1.msra.mxu0 0.0
    %164 = vmatprep.subr.mxu0 0.0
    %165 = vmatpush1.msra.mxu0 0.0
    %166 = vmatprep.subr.mxu0 0.0
    %167 = vmatpush1.msra.mxu0 0.0
    %168 = vmatprep.subr.mxu0 0.0
    %169 = vmatpush1.msra.mxu0 0.0
    %170 = vmatprep.subr.mxu0 0.0
    %171 = vmatpush1.msra.mxu0 0.0
    %172 = vmatprep.subr.mxu0 0.0
    %173 = vmatpush1.msra.mxu0 0.0
    %174 = vmatprep.subr.mxu0 0.0
    %175 = vmatpush1.msra.mxu0 0.0
    %176 = vmatprep.subr.mxu0 0.0
    %177 = vmatpush1.msra.mxu0 0.0
    %178 = vmatprep.subr.mxu0 0.0
    %179 = vmatpush1.msra.mxu0 0.0
    %180 = vmatprep.subr.mxu0 0.0
    %181 = vmatpush1.msra.mxu0 0.0
    %182 = vmatprep.subr.mxu0 0.0
    %183 = vmatpush1.msra.mxu0 0.0
    %184 = vmatprep.subr.mxu0 0.0
    %185 = vmatpush1.msra.mxu0 0.0
    %186 = vmatprep.subr.mxu0 0.0
    %187 = vmatpush1.msra.mxu0 0.0
    %188 = vmatprep.subr.mxu0 0.0
    %189 = vmatpush1.msra.mxu0 0.0
    %190 = vmatprep.subr.mxu0 0.0
    %191 = vmatpush1.msra.mxu0 0.0
    %192 = vmatprep.subr.mxu0 0.0
    %193 = vmatpush1.msra.mxu0 0.0
    %194 = vmatprep.subr.mxu0 0.0
    %195 = vmatpush1.msra.mxu0 0.0
    %196 = vmatprep.subr.mxu0 0.0
    %197 = vmatpush1.msra.mxu0 0.0
    %198 = vmatprep.mubr.f32.mxu0 0.0
    %199 = vmatmul.mubr.f32.gmra.mrb[0].mxu0 %v132
    %v200 = vpop.f32.mrb[0].mxu0
    %v201 = vadd.f32 %v128, %v200
    %v202 = vpop.f32.mrb[0].mxu0
    %203 = vdwg.mxu0
    %v204 = vmax.f32 %v201, 0.0
    %v205 = vld [vmem:[%s5] sm:$0xff]
    %v206 = vld [vmem:[%s5 + $0x8] sm:$0xff]
    %v207 = vld [vmem:[%s6] sm:$0x1]
    %v209 = vlaneseq
    %v210 = vshrl.u32 %v209, 7
    %v211 = vsub.s32 0, %v210
    %v212 = vrot.slane %v207, %v211
    %v215 = vsel %vm130, %v204, 0
    %217 = vmatprep.subr.mxu0 0.0
    %218 = vmatpush1.msra.mxu0 %v205
    %219 = vmatprep.subr.mxu0 0.0
    %220 = vmatpush1.msra.mxu0 %v206
    %221 = vmatprep.subr.mxu0 0.0
    %222 = vmatpush1.msra.mxu0 0.0
    %223 = vmatprep.subr.mxu0 0.0
    %224 = vmatpush1.msra.mxu0 0.0
    %225 = vmatprep.subr.mxu0 0.0
    %226 = vmatpush1.msra.mxu0 0.0
    %227 = vmatprep.subr.mxu0 0.0
    %228 = vmatpush1.msra.mxu0 0.0
    %229 = vmatprep.subr.mxu0 0.0
    %230 = vmatpush1.msra.mxu0 0.0
    %231 = vmatprep.subr.mxu0 0.0
    %232 = vmatpush1.msra.mxu0 0.0
    %233 = vmatprep.subr.mxu0 0.0
    %234 = vmatpush1.msra.mxu0 0.0
    %235 = vmatprep.subr.mxu0 0.0
    %236 = vmatpush1.msra.mxu0 0.0
    %237 = vmatprep.subr.mxu0 0.0
    %238 = vmatpush1.msra.mxu0 0.0
    %239 = vmatprep.subr.mxu0 0.0
    %240 = vmatpush1.msra.mxu0 0.0
    %241 = vmatprep.subr.mxu0 0.0
    %242 = vmatpush1.msra.mxu0 0.0
    %243 = vmatprep.subr.mxu0 0.0
    %244 = vmatpush1.msra.mxu0 0.0
    %245 = vmatprep.subr.mxu0 0.0
    %246 = vmatpush1.msra.mxu0 0.0
    %247 = vmatprep.subr.mxu0 0.0
    %248 = vmatpush1.msra.mxu0 0.0
    %249 = vmatprep.subr.mxu0 0.0
    %250 = vmatpush1.msra.mxu0 0.0
    %251 = vmatprep.subr.mxu0 0.0
    %252 = vmatpush1.msra.mxu0 0.0
    %253 = vmatprep.subr.mxu0 0.0
    %254 = vmatpush1.msra.mxu0 0.0
    %255 = vmatprep.subr.mxu0 0.0
    %256 = vmatpush1.msra.mxu0 0.0
    %257 = vmatprep.subr.mxu0 0.0
    %258 = vmatpush1.msra.mxu0 0.0
    %259 = vmatprep.subr.mxu0 0.0
    %260 = vmatpush1.msra.mxu0 0.0
    %261 = vmatprep.subr.mxu0 0.0
    %262 = vmatpush1.msra.mxu0 0.0
    %263 = vmatprep.subr.mxu0 0.0
    %264 = vmatpush1.msra.mxu0 0.0
    %265 = vmatprep.subr.mxu0 0.0
    %266 = vmatpush1.msra.mxu0 0.0
    %267 = vmatprep.subr.mxu0 0.0
    %268 = vmatpush1.msra.mxu0 0.0
    %269 = vmatprep.subr.mxu0 0.0
    %270 = vmatpush1.msra.mxu0 0.0
    %271 = vmatprep.subr.mxu0 0.0
    %272 = vmatpush1.msra.mxu0 0.0
    %273 = vmatprep.subr.mxu0 0.0
    %274 = vmatpush1.msra.mxu0 0.0
    %275 = vmatprep.subr.mxu0 0.0
    %276 = vmatpush1.msra.mxu0 0.0
    %277 = vmatprep.subr.mxu0 0.0
    %278 = vmatpush1.msra.mxu0 0.0
    %279 = vmatprep.subr.mxu0 0.0
    %280 = vmatpush1.msra.mxu0 0.0
    %281 = vmatprep.mubr.f32.mxu0 0.0
    %282 = vmatmul.mubr.f32.gmra.mrb[0].mxu0 %v215
    %v283 = vpop.f32.mrb[0].mxu0
    %v284 = vadd.f32 %v212, %v283
    %v285 = vpop.f32.mrb[0].mxu0
    %286 = vdwg.mxu0
    %v287 = vsub.f32 0.0, %v284
    %v288 = vmul.f32 %v287, 1.442695
    %v289 = vpow.pop %v288
    %v290 = vadd.f32 %v289, 1.0
    %v291 = vrcp.pop %v290
    %v292 = vmul.f32 1.0, %v291
    %vm293 = vcmask 123904
    %294 = vst.msk [vmem:[#allocation2] sm:$0x3] %vm293, %v204
    %vm295 = vcmask 25600
    %296 = vst.msk [vmem:[#allocation4] sm:$0x3] %vm295, %v292
    // Predicated region
    $region30: #{gat_model_mll_forward.43} parent=1 // pred_check
      _
    $region31: #{gat_model_mll_forward.43} parent=1 // pred_check_branch
      %298 = sbr.rel (0) target = $region33
    $region32: #{gat_model_mll_forward.43} parent=1 // pred_region
      %s300 = ssub.s32 32, 32
      %301 = vsyncadd [#allocation3], %s300
      %s303 = sshll.u32 [#allocation2], 4
      %s304 = int_to_ptr.vmem [resolvable:$true] %s303
      %306 = dma.vmem_to_hbm [thread:$0]  %s304, 32, %s7, [#allocation3]
    $region33: #{gat_model_mll_forward.43} parent=1 // pred_fallthru
      _
    // Predicated region
    $region34: #{gat_model_mll_forward.43} parent=1 // pred_check
      _
    $region35: #{gat_model_mll_forward.43} parent=1 // pred_check_branch
      %308 = sbr.rel (0) target = $region37
    $region36: #{gat_model_mll_forward.43} parent=1 // pred_region
      %s310 = ssub.s32 32, 32
      %311 = vsyncadd [#allocation5], %s310
      %s313 = sshll.u32 [#allocation4], 4
      %s314 = int_to_ptr.vmem [resolvable:$true] %s313
      %316 = dma.vmem_to_hbm [thread:$0]  %s314, 32, %s8, [#allocation5]
    $region37: #{gat_model_mll_forward.43} parent=1 // pred_fallthru
      _
    // Predicated region
    $region38: #{gat_model_mll_forward.43} parent=1 // pred_check
      _
    $region39: #{gat_model_mll_forward.43} parent=1 // pred_check_branch
      %318 = sbr.rel (0) target = $region41
    $region40: #{gat_model_mll_forward.43} parent=1 // pred_region
      %319 = dma.done [#allocation3], 32
    $region41: #{gat_model_mll_forward.43} parent=1 // pred_fallthru
      _
    // Predicated region
    $region42: #{gat_model_mll_forward.43} parent=1 // pred_check
      _
    $region43: #{gat_model_mll_forward.43} parent=1 // pred_check_branch
      %321 = sbr.rel (0) target = $region45
    $region44: #{gat_model_mll_forward.43} parent=1 // pred_region
      %322 = dma.done [#allocation5], 32
    $region45: #{gat_model_mll_forward.43} parent=1 // pred_fallthru
      _
    %323 = vsyncpa [#allocation3], 1
    %324 = vsyncpa [#allocation5], 1

</llo_original>
